<compile_context>
chip_gen: v7x
topology: tpu7x:2x2x1
jax: 0.10.0
libtpu: 0.0.40
codegen_flags: <defaults>
</compile_context>

<pallas_src>
import jax
import jax.numpy as jnp
from jax.experimental import pallas as pl
from jax.experimental.pallas import tpu as pltpu

LATENT_DIM = 8
L2 = 2 * LATENT_DIM          # fused [mu | logvar] head width = 16
H = W = 64                   # input spatial size implied by the 32*32*32 flatten
OH = OW = 32                 # conv output spatial size (stride 2)
C_OUT = 32
KSIZE = 4
KK = KSIZE * KSIZE           # 16
P = OH * OW                  # 1024
FLAT = C_OUT * P             # 32768


# ----------------------------- fused Pallas kernel --------------------------

def encoder_fused_kernel(patches_ref, wc_ref, bc_ref, wh_ref, bh_ref,
                         out_ref, act_ref):
    # patches_ref: (Bt, KK, P)     f32   im2col patches of the batch tile
    # wc_ref:      (C_OUT, KK)     f32   conv weight
    # bc_ref:      (C_OUT, 1)      f32   conv bias
    # wh_ref:      (C_OUT, L2, P)  bf16  fused [mu|logvar] weight, resident
    # bh_ref:      (1, L2)         f32   fused head bias
    # out_ref:     (Bt, L2)        f32   heads for the batch tile
    # act_ref:     (Bt, C_OUT, P)  bf16  VMEM scratch: ReLU(conv) per image
    bt = patches_ref.shape[0]
    c_out = wh_ref.shape[0]

    # (a) conv + bias + ReLU per image: (C_OUT,KK) @ (KK,P) -> dense (32,1024)
    #     tile, one bulk f32->bf16 cast and one dense store per image.
    for i in range(bt):                                   # static, tiny (Bt<=8)
        a = jnp.dot(wc_ref[...], patches_ref[i],
                    preferred_element_type=jnp.float32)
        a = jnp.maximum(a + bc_ref[...], 0.0)
        act_ref[i] = a.astype(act_ref.dtype)

    # (b) fused heads: result[b,l] = sum_{c,p} act[b,c,p] * wh[c,l,p].
    #     Weight rows are already in PyTorch NCHW flatten order (c*P + p), so
    #     this is exactly flat @ [Wmu|Wlogvar]^T without materializing a flat
    #     buffer.  Each per-channel dot is a dense lane-major A @ B^T matmul
    #     with M = Bt batch rows; only acc (Bt,L2) stays live across iterations.
    acc = jnp.zeros((bt, out_ref.shape[1]), jnp.float32)
    for c in range(c_out):                                # static unroll (32)
        acc = acc + jax.lax.dot_general(
            act_ref[:, c, :], wh_ref[c],
            dimension_numbers=(((1,), (1,)), ((), ())),   # contract over P
            preferred_element_type=jnp.float32)
    out_ref[...] = acc + bh_ref[...]                      # single masked store


# ----------------------------- wrapper ---------------------------------------

def _im2col(x):
    # x: (B, 1, 64, 64) -> patches (B, KK, P);  k = kh*KSIZE + kw, p = oh*OW + ow
    xp = jnp.pad(x, ((0, 0), (0, 0), (1, 1), (1, 1)))
    taps = [xp[:, 0, kh:kh + 2 * OH:2, kw:kw + 2 * OW:2]
            for kh in range(KSIZE) for kw in range(KSIZE)]
    # TODO(synk): im2col could be fused into the kernel (DMA the 16 KiB padded
    # image per tile + strided pl.ds reads) to drop the 4x patch read
    # amplification; minor at B=2, left to XLA.
    return jnp.stack(taps, axis=1).reshape(x.shape[0], KK, P)


def prepare_params(params):
    """One-time (out-of-forward) weight re-layout for the kernel."""
    wconv, bconv, wmu, bmu, wlv, blv = params
    wc = wconv.reshape(C_OUT, KK).astype(jnp.float32)             # (32, 16)
    bc = bconv.reshape(C_OUT, 1).astype(jnp.float32)              # (32, 1)
    # Fused [mu | logvar] head weight, reshaped to (C_OUT, L2, P):
    #   wh[c, l, p] = W_fused[l, c*P + p]   (PyTorch NCHW flatten order)
    # Last two dims (16, 1024) are exactly one dense bf16 tile row -> 1 MiB
    # VMEM-resident, no lane padding.  bf16 halves the dominant HBM stream;
    # accumulation stays f32 in-kernel.
    w_fused = jnp.concatenate([wmu, wlv], axis=0)                 # (L2, FLAT)
    wh = (w_fused.reshape(L2, C_OUT, P)
          .transpose(1, 0, 2).astype(jnp.bfloat16))               # (32, 16, 1024)
    bh = jnp.concatenate([bmu, blv]).reshape(1, L2).astype(jnp.float32)
    return wc, bc, wh, bh


@jax.jit
def encoder2d_forward(x, wc, bc, wh, bh):
    b = x.shape[0]
    bt = b if b <= 8 else 8                   # batch tile (M of the head matmul)
    assert b % bt == 0
    nbt = b // bt
    patches = _im2col(x.astype(jnp.float32))                      # (B, KK, P)

    flops = 2 * b * (C_OUT * KK * P + FLAT * L2)
    bytes_accessed = (b * KK * P * 4          # patches (f32)
                      + FLAT * L2 * 2         # resident head weight (bf16), once
                      + C_OUT * KK * 4 + C_OUT * 4 + L2 * 4
                      + b * L2 * 4)

    heads = pl.pallas_call(
        encoder_fused_kernel,
        out_shape=jax.ShapeDtypeStruct((b, L2), jnp.float32),
        grid_spec=pltpu.PrefetchScalarGridSpec(
            num_scalar_prefetch=0,
            grid=(nbt,),                       # one step per batch tile
            in_specs=[
                pl.BlockSpec((bt, KK, P), lambda i: (i, 0, 0)),      # patches
                pl.BlockSpec((C_OUT, KK), lambda i: (0, 0)),         # wc
                pl.BlockSpec((C_OUT, 1), lambda i: (0, 0)),          # bc
                pl.BlockSpec((C_OUT, L2, P), lambda i: (0, 0, 0)),   # wh resident
                pl.BlockSpec((1, L2), lambda i: (0, 0)),             # bh
            ],
            out_specs=pl.BlockSpec((bt, L2), lambda i: (i, 0)),
            scratch_shapes=[pltpu.VMEM((bt, C_OUT, P), jnp.bfloat16)],
        ),
        compiler_params=pltpu.CompilerParams(
            dimension_semantics=("parallel",)),
        cost_estimate=pl.CostEstimate(flops=flops, transcendentals=0,
                                      bytes_accessed=bytes_accessed),
    )(patches, wc, bc, wh, bh)

    return heads[:, :LATENT_DIM], heads[:, LATENT_DIM:]


# ----------------------------- reference & test ------------------------------

def reference_forward(x, params):
    # Pure-JAX f32 reference mirroring the PyTorch module.
    wconv, bconv, wmu, bmu, wlv, blv = params
    y = jax.lax.conv_general_dilated(
        x, wconv, window_strides=(2, 2), padding=((1, 1), (1, 1)),
        dimension_numbers=("NCHW", "OIHW", "NCHW"))
    y = jnp.maximum(y + bconv[None, :, None, None], 0.0)
    flat = y.reshape(x.shape[0], -1)
    return flat @ wmu.T + bmu, flat @ wlv.T + blv


def init_params(key):
    ks = jax.random.split(key, 6)
    wconv = jax.random.normal(ks[0], (C_OUT, 1, KSIZE, KSIZE), jnp.float32) * 0.1
    bconv = jax.random.normal(ks[1], (C_OUT,), jnp.float32) * 0.1
    wmu = jax.random.normal(ks[2], (LATENT_DIM, FLAT), jnp.float32) * 0.01
    bmu = jax.random.normal(ks[3], (LATENT_DIM,), jnp.float32) * 0.01
    wlv = jax.random.normal(ks[4], (LATENT_DIM, FLAT), jnp.float32) * 0.01
    blv = jax.random.normal(ks[5], (LATENT_DIM,), jnp.float32) * 0.01
    return wconv, bconv, wmu, bmu, wlv, blv


if __name__ == "__main__":
    key = jax.random.PRNGKey(0)
    kx, kp = jax.random.split(key)
    # input spatial size is fixed by the module (flatten dim 32*32*32 => 64x64)
    x = jax.random.normal(kx, (2, 1, H, W), jnp.float32)
    params = init_params(kp)
    wc, bc, wh, bh = prepare_params(params)      # one-time weight re-layout

    mu, logvar = encoder2d_forward(x, wc, bc, wh, bh)
    mu = jax.block_until_ready(mu)
    logvar = jax.block_until_ready(logvar)

    mu_ref, lv_ref = reference_forward(x, params)
    # bf16 head weights + bf16 activations over a 32768-long reduction give
    # ~1e-3 rms deviation from the f32 reference, so compare at 1e-2.
    assert jnp.allclose(mu, mu_ref, rtol=1e-2, atol=1e-2), \
        float(jnp.max(jnp.abs(mu - mu_ref)))
    assert jnp.allclose(logvar, lv_ref, rtol=1e-2, atol=1e-2), \
        float(jnp.max(jnp.abs(logvar - lv_ref)))

    print("KERNEL_OK")
</pallas_src>

<mosaic_0001>
module attributes {stable_mosaic.version = 11 : i64} {
  func.func @encoder_fused_kernel(%arg0: i32, %arg1: memref<2x16x1024xf32, #tpu.memory_space<vmem>>, %arg2: memref<32x16xf32, #tpu.memory_space<vmem>>, %arg3: memref<32x1xf32, #tpu.memory_space<vmem>>, %arg4: memref<32x16x1024xbf16, #tpu.memory_space<vmem>>, %arg5: memref<1x16xf32, #tpu.memory_space<vmem>>, %arg6: memref<2x16xf32, #tpu.memory_space<vmem>>, %arg7: memref<2x32x1024xbf16, #tpu.memory_space<vmem>>) attributes {dimension_semantics = [#tpu.dimension_semantics<parallel>], iteration_bounds = array<i64: 1>, scalar_prefetch = 0 : i64, scratch_operands = 1 : i64, tpu.core_type = #tpu.core_type<tc>, window_params = [{transform_indices = @transform_0, window_bounds = array<i64: 2, 16, 1024>}, {pipeline_mode = #tpu.pipeline_mode<synchronous>, transform_indices = @transform_1, window_bounds = array<i64: 32, 16>}, {pipeline_mode = #tpu.pipeline_mode<synchronous>, transform_indices = @transform_2, window_bounds = array<i64: 32, 1>}, {pipeline_mode = #tpu.pipeline_mode<synchronous>, transform_indices = @transform_3, window_bounds = array<i64: 32, 16, 1024>}, {pipeline_mode = #tpu.pipeline_mode<synchronous>, transform_indices = @transform_4, window_bounds = array<i64: 1, 16>}, {transform_indices = @transform_5, window_bounds = array<i64: 2, 16>}]} {
    %c0 = arith.constant 0 : index
    %c0_0 = arith.constant 0 : index
    %0 = vector.load %arg2[%c0, %c0_0] : memref<32x16xf32, #tpu.memory_space<vmem>>, vector<32x16xf32>
    %c0_1 = arith.constant 0 : index
    %c0_2 = arith.constant 0 : index
    %c0_3 = arith.constant 0 : index
    %1 = vector.load %arg1[%c0_1, %c0_2, %c0_3] : memref<2x16x1024xf32, #tpu.memory_space<vmem>>, vector<1x16x1024xf32>
    %2 = vector.shape_cast %1 : vector<1x16x1024xf32> to vector<16x1024xf32>
    %cst = arith.constant dense<0.000000e+00> : vector<32x1024xf32>
    %3 = tpu.matmul %0, %2, %cst {dimension_numbers = #tpu.dot_dimension_numbers<[1], [0], [0], [1], [0, 0, 1, 1], [], []>} : vector<32x16xf32>, vector<16x1024xf32>, vector<32x1024xf32> -> vector<32x1024xf32>
    %c0_4 = arith.constant 0 : index
    %c0_5 = arith.constant 0 : index
    %4 = vector.load %arg3[%c0_4, %c0_5] : memref<32x1xf32, #tpu.memory_space<vmem>>, vector<32x1xf32>
    %5 = vector.broadcast %4 : vector<32x1xf32> to vector<32x1024xf32>
    %6 = arith.addf %3, %5 : vector<32x1024xf32>
    %cst_6 = arith.constant 0.000000e+00 : f32
    %7 = vector.broadcast %cst_6 : f32 to vector<32x1024xf32>
    %8 = arith.maximumf %6, %7 : vector<32x1024xf32>
    %9 = arith.truncf %8 : vector<32x1024xf32> to vector<32x1024xbf16>
    %c0_7 = arith.constant 0 : index
    %c0_8 = arith.constant 0 : index
    %c0_9 = arith.constant 0 : index
    %10 = vector.load %arg7[%c0_7, %c0_8, %c0_9] : memref<2x32x1024xbf16, #tpu.memory_space<vmem>>, vector<1x32x1024xbf16>
    %11 = vector.shape_cast %10 : vector<1x32x1024xbf16> to vector<32x1024xbf16>
    %12 = vector.shape_cast %9 : vector<32x1024xbf16> to vector<1x32x1024xbf16>
    tpu.vector_store %arg7[%c0_7, %c0_8, %c0_9], %12 {strides = array<i32>} : memref<2x32x1024xbf16, #tpu.memory_space<vmem>>, vector<1x32x1024xbf16>,
    %c0_10 = arith.constant 0 : index
    %c0_11 = arith.constant 0 : index
    %13 = vector.load %arg2[%c0_10, %c0_11] : memref<32x16xf32, #tpu.memory_space<vmem>>, vector<32x16xf32>
    %c1 = arith.constant 1 : index
    %c0_12 = arith.constant 0 : index
    %c0_13 = arith.constant 0 : index
    %14 = vector.load %arg1[%c1, %c0_12, %c0_13] : memref<2x16x1024xf32, #tpu.memory_space<vmem>>, vector<1x16x1024xf32>
    %15 = vector.shape_cast %14 : vector<1x16x1024xf32> to vector<16x1024xf32>
    %cst_14 = arith.constant dense<0.000000e+00> : vector<32x1024xf32>
    %16 = tpu.matmul %13, %15, %cst_14 {dimension_numbers = #tpu.dot_dimension_numbers<[1], [0], [0], [1], [0, 0, 1, 1], [], []>} : vector<32x16xf32>, vector<16x1024xf32>, vector<32x1024xf32> -> vector<32x1024xf32>
    %c0_15 = arith.constant 0 : index
    %c0_16 = arith.constant 0 : index
    %17 = vector.load %arg3[%c0_15, %c0_16] : memref<32x1xf32, #tpu.memory_space<vmem>>, vector<32x1xf32>
    %18 = vector.broadcast %17 : vector<32x1xf32> to vector<32x1024xf32>
    %19 = arith.addf %16, %18 : vector<32x1024xf32>
    %cst_17 = arith.constant 0.000000e+00 : f32
    %20 = vector.broadcast %cst_17 : f32 to vector<32x1024xf32>
    %21 = arith.maximumf %19, %20 : vector<32x1024xf32>
    %22 = arith.truncf %21 : vector<32x1024xf32> to vector<32x1024xbf16>
    %c1_18 = arith.constant 1 : index
    %c0_19 = arith.constant 0 : index
    %c0_20 = arith.constant 0 : index
    %23 = vector.load %arg7[%c1_18, %c0_19, %c0_20] : memref<2x32x1024xbf16, #tpu.memory_space<vmem>>, vector<1x32x1024xbf16>
    %24 = vector.shape_cast %23 : vector<1x32x1024xbf16> to vector<32x1024xbf16>
    %25 = vector.shape_cast %22 : vector<32x1024xbf16> to vector<1x32x1024xbf16>
    tpu.vector_store %arg7[%c1_18, %c0_19, %c0_20], %25 {strides = array<i32>} : memref<2x32x1024xbf16, #tpu.memory_space<vmem>>, vector<1x32x1024xbf16>,
    %cst_21 = arith.constant 0.000000e+00 : f32
    %26 = vector.broadcast %cst_21 : f32 to vector<2x16xf32>
    %c0_22 = arith.constant 0 : index
    %c0_23 = arith.constant 0 : index
    %c0_24 = arith.constant 0 : index
    %27 = vector.load %arg7[%c0_22, %c0_23, %c0_24] : memref<2x32x1024xbf16, #tpu.memory_space<vmem>>, vector<2x1x1024xbf16>
    %28 = vector.shape_cast %27 : vector<2x1x1024xbf16> to vector<2x1024xbf16>
    %c0_25 = arith.constant 0 : index
    %c0_26 = arith.constant 0 : index
    %c0_27 = arith.constant 0 : index
    %29 = vector.load %arg4[%c0_25, %c0_26, %c0_27] : memref<32x16x1024xbf16, #tpu.memory_space<vmem>>, vector<1x16x1024xbf16>
    %30 = vector.shape_cast %29 : vector<1x16x1024xbf16> to vector<16x1024xbf16>
    %cst_28 = arith.constant dense<0.000000e+00> : vector<2x16xf32>
    %31 = tpu.matmul %28, %30, %cst_28 {dimension_numbers = #tpu.dot_dimension_numbers<[1], [1], [0], [0], [0, 0, 1, 0], [], []>} : vector<2x1024xbf16>, vector<16x1024xbf16>, vector<2x16xf32> -> vector<2x16xf32>
    %32 = arith.addf %26, %31 : vector<2x16xf32>
    %c0_29 = arith.constant 0 : index
    %c1_30 = arith.constant 1 : index
    %c0_31 = arith.constant 0 : index
    %33 = vector.load %arg7[%c0_29, %c1_30, %c0_31] : memref<2x32x1024xbf16, #tpu.memory_space<vmem>>, vector<2x1x1024xbf16>
    %34 = vector.shape_cast %33 : vector<2x1x1024xbf16> to vector<2x1024xbf16>
    %c1_32 = arith.constant 1 : index
    %c0_33 = arith.constant 0 : index
    %c0_34 = arith.constant 0 : index
    %35 = vector.load %arg4[%c1_32, %c0_33, %c0_34] : memref<32x16x1024xbf16, #tpu.memory_space<vmem>>, vector<1x16x1024xbf16>
    %36 = vector.shape_cast %35 : vector<1x16x1024xbf16> to vector<16x1024xbf16>
    %cst_35 = arith.constant dense<0.000000e+00> : vector<2x16xf32>
    %37 = tpu.matmul %34, %36, %cst_35 {dimension_numbers = #tpu.dot_dimension_numbers<[1], [1], [0], [0], [0, 0, 1, 0], [], []>} : vector<2x1024xbf16>, vector<16x1024xbf16>, vector<2x16xf32> -> vector<2x16xf32>
    %38 = arith.addf %32, %37 : vector<2x16xf32>
    %c0_36 = arith.constant 0 : index
    %c2 = arith.constant 2 : index
    %c0_37 = arith.constant 0 : index
    %39 = vector.load %arg7[%c0_36, %c2, %c0_37] : memref<2x32x1024xbf16, #tpu.memory_space<vmem>>, vector<2x1x1024xbf16>
    %40 = vector.shape_cast %39 : vector<2x1x1024xbf16> to vector<2x1024xbf16>
    %c2_38 = arith.constant 2 : index
    %c0_39 = arith.constant 0 : index
    %c0_40 = arith.constant 0 : index
    %41 = vector.load %arg4[%c2_38, %c0_39, %c0_40] : memref<32x16x1024xbf16, #tpu.memory_space<vmem>>, vector<1x16x1024xbf16>
    %42 = vector.shape_cast %41 : vector<1x16x1024xbf16> to vector<16x1024xbf16>
    %cst_41 = arith.constant dense<0.000000e+00> : vector<2x16xf32>
    %43 = tpu.matmul %40, %42, %cst_41 {dimension_numbers = #tpu.dot_dimension_numbers<[1], [1], [0], [0], [0, 0, 1, 0], [], []>} : vector<2x1024xbf16>, vector<16x1024xbf16>, vector<2x16xf32> -> vector<2x16xf32>
    %44 = arith.addf %38, %43 : vector<2x16xf32>
    %c0_42 = arith.constant 0 : index
    %c3 = arith.constant 3 : index
    %c0_43 = arith.constant 0 : index
    %45 = vector.load %arg7[%c0_42, %c3, %c0_43] : memref<2x32x1024xbf16, #tpu.memory_space<vmem>>, vector<2x1x1024xbf16>
    %46 = vector.shape_cast %45 : vector<2x1x1024xbf16> to vector<2x1024xbf16>
    %c3_44 = arith.constant 3 : index
    %c0_45 = arith.constant 0 : index
    %c0_46 = arith.constant 0 : index
    %47 = vector.load %arg4[%c3_44, %c0_45, %c0_46] : memref<32x16x1024xbf16, #tpu.memory_space<vmem>>, vector<1x16x1024xbf16>
    %48 = vector.shape_cast %47 : vector<1x16x1024xbf16> to vector<16x1024xbf16>
    %cst_47 = arith.constant dense<0.000000e+00> : vector<2x16xf32>
    %49 = tpu.matmul %46, %48, %cst_47 {dimension_numbers = #tpu.dot_dimension_numbers<[1], [1], [0], [0], [0, 0, 1, 0], [], []>} : vector<2x1024xbf16>, vector<16x1024xbf16>, vector<2x16xf32> -> vector<2x16xf32>
    %50 = arith.addf %44, %49 : vector<2x16xf32>
    %c0_48 = arith.constant 0 : index
    %c4 = arith.constant 4 : index
    %c0_49 = arith.constant 0 : index
    %51 = vector.load %arg7[%c0_48, %c4, %c0_49] : memref<2x32x1024xbf16, #tpu.memory_space<vmem>>, vector<2x1x1024xbf16>
    %52 = vector.shape_cast %51 : vector<2x1x1024xbf16> to vector<2x1024xbf16>
    %c4_50 = arith.constant 4 : index
    %c0_51 = arith.constant 0 : index
    %c0_52 = arith.constant 0 : index
    %53 = vector.load %arg4[%c4_50, %c0_51, %c0_52] : memref<32x16x1024xbf16, #tpu.memory_space<vmem>>, vector<1x16x1024xbf16>
    %54 = vector.shape_cast %53 : vector<1x16x1024xbf16> to vector<16x1024xbf16>
    %cst_53 = arith.constant dense<0.000000e+00> : vector<2x16xf32>
    %55 = tpu.matmul %52, %54, %cst_53 {dimension_numbers = #tpu.dot_dimension_numbers<[1], [1], [0], [0], [0, 0, 1, 0], [], []>} : vector<2x1024xbf16>, vector<16x1024xbf16>, vector<2x16xf32> -> vector<2x16xf32>
    %56 = arith.addf %50, %55 : vector<2x16xf32>
    %c0_54 = arith.constant 0 : index
    %c5 = arith.constant 5 : index
    %c0_55 = arith.constant 0 : index
    %57 = vector.load %arg7[%c0_54, %c5, %c0_55] : memref<2x32x1024xbf16, #tpu.memory_space<vmem>>, vector<2x1x1024xbf16>
    %58 = vector.shape_cast %57 : vector<2x1x1024xbf16> to vector<2x1024xbf16>
    %c5_56 = arith.constant 5 : index
    %c0_57 = arith.constant 0 : index
    %c0_58 = arith.constant 0 : index
    %59 = vector.load %arg4[%c5_56, %c0_57, %c0_58] : memref<32x16x1024xbf16, #tpu.memory_space<vmem>>, vector<1x16x1024xbf16>
    %60 = vector.shape_cast %59 : vector<1x16x1024xbf16> to vector<16x1024xbf16>
    %cst_59 = arith.constant dense<0.000000e+00> : vector<2x16xf32>
    %61 = tpu.matmul %58, %60, %cst_59 {dimension_numbers = #tpu.dot_dimension_numbers<[1], [1], [0], [0], [0, 0, 1, 0], [], []>} : vector<2x1024xbf16>, vector<16x1024xbf16>, vector<2x16xf32> -> vector<2x16xf32>
    %62 = arith.addf %56, %61 : vector<2x16xf32>
    %c0_60 = arith.constant 0 : index
    %c6 = arith.constant 6 : index
    %c0_61 = arith.constant 0 : index
    %63 = vector.load %arg7[%c0_60, %c6, %c0_61] : memref<2x32x1024xbf16, #tpu.memory_space<vmem>>, vector<2x1x1024xbf16>
    %64 = vector.shape_cast %63 : vector<2x1x1024xbf16> to vector<2x1024xbf16>
    %c6_62 = arith.constant 6 : index
    %c0_63 = arith.constant 0 : index
    %c0_64 = arith.constant 0 : index
    %65 = vector.load %arg4[%c6_62, %c0_63, %c0_64] : memref<32x16x1024xbf16, #tpu.memory_space<vmem>>, vector<1x16x1024xbf16>
    %66 = vector.shape_cast %65 : vector<1x16x1024xbf16> to vector<16x1024xbf16>
    %cst_65 = arith.constant dense<0.000000e+00> : vector<2x16xf32>
    %67 = tpu.matmul %64, %66, %cst_65 {dimension_numbers = #tpu.dot_dimension_numbers<[1], [1], [0], [0], [0, 0, 1, 0], [], []>} : vector<2x1024xbf16>, vector<16x1024xbf16>, vector<2x16xf32> -> vector<2x16xf32>
    %68 = arith.addf %62, %67 : vector<2x16xf32>
    %c0_66 = arith.constant 0 : index
    %c7 = arith.constant 7 : index
    %c0_67 = arith.constant 0 : index
    %69 = vector.load %arg7[%c0_66, %c7, %c0_67] : memref<2x32x1024xbf16, #tpu.memory_space<vmem>>, vector<2x1x1024xbf16>
    %70 = vector.shape_cast %69 : vector<2x1x1024xbf16> to vector<2x1024xbf16>
    %c7_68 = arith.constant 7 : index
    %c0_69 = arith.constant 0 : index
    %c0_70 = arith.constant 0 : index
    %71 = vector.load %arg4[%c7_68, %c0_69, %c0_70] : memref<32x16x1024xbf16, #tpu.memory_space<vmem>>, vector<1x16x1024xbf16>
    %72 = vector.shape_cast %71 : vector<1x16x1024xbf16> to vector<16x1024xbf16>
    %cst_71 = arith.constant dense<0.000000e+00> : vector<2x16xf32>
    %73 = tpu.matmul %70, %72, %cst_71 {dimension_numbers = #tpu.dot_dimension_numbers<[1], [1], [0], [0], [0, 0, 1, 0], [], []>} : vector<2x1024xbf16>, vector<16x1024xbf16>, vector<2x16xf32> -> vector<2x16xf32>
    %74 = arith.addf %68, %73 : vector<2x16xf32>
    %c0_72 = arith.constant 0 : index
    %c8 = arith.constant 8 : index
    %c0_73 = arith.constant 0 : index
    %75 = vector.load %arg7[%c0_72, %c8, %c0_73] : memref<2x32x1024xbf16, #tpu.memory_space<vmem>>, vector<2x1x1024xbf16>
    %76 = vector.shape_cast %75 : vector<2x1x1024xbf16> to vector<2x1024xbf16>
    %c8_74 = arith.constant 8 : index
    %c0_75 = arith.constant 0 : index
    %c0_76 = arith.constant 0 : index
    %77 = vector.load %arg4[%c8_74, %c0_75, %c0_76] : memref<32x16x1024xbf16, #tpu.memory_space<vmem>>, vector<1x16x1024xbf16>
    %78 = vector.shape_cast %77 : vector<1x16x1024xbf16> to vector<16x1024xbf16>
    %cst_77 = arith.constant dense<0.000000e+00> : vector<2x16xf32>
    %79 = tpu.matmul %76, %78, %cst_77 {dimension_numbers = #tpu.dot_dimension_numbers<[1], [1], [0], [0], [0, 0, 1, 0], [], []>} : vector<2x1024xbf16>, vector<16x1024xbf16>, vector<2x16xf32> -> vector<2x16xf32>
    %80 = arith.addf %74, %79 : vector<2x16xf32>
    %c0_78 = arith.constant 0 : index
    %c9 = arith.constant 9 : index
    %c0_79 = arith.constant 0 : index
    %81 = vector.load %arg7[%c0_78, %c9, %c0_79] : memref<2x32x1024xbf16, #tpu.memory_space<vmem>>, vector<2x1x1024xbf16>
    %82 = vector.shape_cast %81 : vector<2x1x1024xbf16> to vector<2x1024xbf16>
    %c9_80 = arith.constant 9 : index
    %c0_81 = arith.constant 0 : index
    %c0_82 = arith.constant 0 : index
    %83 = vector.load %arg4[%c9_80, %c0_81, %c0_82] : memref<32x16x1024xbf16, #tpu.memory_space<vmem>>, vector<1x16x1024xbf16>
    %84 = vector.shape_cast %83 : vector<1x16x1024xbf16> to vector<16x1024xbf16>
    %cst_83 = arith.constant dense<0.000000e+00> : vector<2x16xf32>
    %85 = tpu.matmul %82, %84, %cst_83 {dimension_numbers = #tpu.dot_dimension_numbers<[1], [1], [0], [0], [0, 0, 1, 0], [], []>} : vector<2x1024xbf16>, vector<16x1024xbf16>, vector<2x16xf32> -> vector<2x16xf32>
    %86 = arith.addf %80, %85 : vector<2x16xf32>
    %c0_84 = arith.constant 0 : index
    %c10 = arith.constant 10 : index
    %c0_85 = arith.constant 0 : index
    %87 = vector.load %arg7[%c0_84, %c10, %c0_85] : memref<2x32x1024xbf16, #tpu.memory_space<vmem>>, vector<2x1x1024xbf16>
    %88 = vector.shape_cast %87 : vector<2x1x1024xbf16> to vector<2x1024xbf16>
    %c10_86 = arith.constant 10 : index
    %c0_87 = arith.constant 0 : index
    %c0_88 = arith.constant 0 : index
    %89 = vector.load %arg4[%c10_86, %c0_87, %c0_88] : memref<32x16x1024xbf16, #tpu.memory_space<vmem>>, vector<1x16x1024xbf16>
    %90 = vector.shape_cast %89 : vector<1x16x1024xbf16> to vector<16x1024xbf16>
    %cst_89 = arith.constant dense<0.000000e+00> : vector<2x16xf32>
    %91 = tpu.matmul %88, %90, %cst_89 {dimension_numbers = #tpu.dot_dimension_numbers<[1], [1], [0], [0], [0, 0, 1, 0], [], []>} : vector<2x1024xbf16>, vector<16x1024xbf16>, vector<2x16xf32> -> vector<2x16xf32>
    %92 = arith.addf %86, %91 : vector<2x16xf32>
    %c0_90 = arith.constant 0 : index
    %c11 = arith.constant 11 : index
    %c0_91 = arith.constant 0 : index
    %93 = vector.load %arg7[%c0_90, %c11, %c0_91] : memref<2x32x1024xbf16, #tpu.memory_space<vmem>>, vector<2x1x1024xbf16>
    %94 = vector.shape_cast %93 : vector<2x1x1024xbf16> to vector<2x1024xbf16>
    %c11_92 = arith.constant 11 : index
    %c0_93 = arith.constant 0 : index
    %c0_94 = arith.constant 0 : index
    %95 = vector.load %arg4[%c11_92, %c0_93, %c0_94] : memref<32x16x1024xbf16, #tpu.memory_space<vmem>>, vector<1x16x1024xbf16>
    %96 = vector.shape_cast %95 : vector<1x16x1024xbf16> to vector<16x1024xbf16>
    %cst_95 = arith.constant dense<0.000000e+00> : vector<2x16xf32>
    %97 = tpu.matmul %94, %96, %cst_95 {dimension_numbers = #tpu.dot_dimension_numbers<[1], [1], [0], [0], [0, 0, 1, 0], [], []>} : vector<2x1024xbf16>, vector<16x1024xbf16>, vector<2x16xf32> -> vector<2x16xf32>
    %98 = arith.addf %92, %97 : vector<2x16xf32>
    %c0_96 = arith.constant 0 : index
    %c12 = arith.constant 12 : index
    %c0_97 = arith.constant 0 : index
    %99 = vector.load %arg7[%c0_96, %c12, %c0_97] : memref<2x32x1024xbf16, #tpu.memory_space<vmem>>, vector<2x1x1024xbf16>
    %100 = vector.shape_cast %99 : vector<2x1x1024xbf16> to vector<2x1024xbf16>
    %c12_98 = arith.constant 12 : index
    %c0_99 = arith.constant 0 : index
    %c0_100 = arith.constant 0 : index
    %101 = vector.load %arg4[%c12_98, %c0_99, %c0_100] : memref<32x16x1024xbf16, #tpu.memory_space<vmem>>, vector<1x16x1024xbf16>
    %102 = vector.shape_cast %101 : vector<1x16x1024xbf16> to vector<16x1024xbf16>
    %cst_101 = arith.constant dense<0.000000e+00> : vector<2x16xf32>
    %103 = tpu.matmul %100, %102, %cst_101 {dimension_numbers = #tpu.dot_dimension_numbers<[1], [1], [0], [0], [0, 0, 1, 0], [], []>} : vector<2x1024xbf16>, vector<16x1024xbf16>, vector<2x16xf32> -> vector<2x16xf32>
    %104 = arith.addf %98, %103 : vector<2x16xf32>
    %c0_102 = arith.constant 0 : index
    %c13 = arith.constant 13 : index
    %c0_103 = arith.constant 0 : index
    %105 = vector.load %arg7[%c0_102, %c13, %c0_103] : memref<2x32x1024xbf16, #tpu.memory_space<vmem>>, vector<2x1x1024xbf16>
    %106 = vector.shape_cast %105 : vector<2x1x1024xbf16> to vector<2x1024xbf16>
    %c13_104 = arith.constant 13 : index
    %c0_105 = arith.constant 0 : index
    %c0_106 = arith.constant 0 : index
    %107 = vector.load %arg4[%c13_104, %c0_105, %c0_106] : memref<32x16x1024xbf16, #tpu.memory_space<vmem>>, vector<1x16x1024xbf16>
    %108 = vector.shape_cast %107 : vector<1x16x1024xbf16> to vector<16x1024xbf16>
    %cst_107 = arith.constant dense<0.000000e+00> : vector<2x16xf32>
    %109 = tpu.matmul %106, %108, %cst_107 {dimension_numbers = #tpu.dot_dimension_numbers<[1], [1], [0], [0], [0, 0, 1, 0], [], []>} : vector<2x1024xbf16>, vector<16x1024xbf16>, vector<2x16xf32> -> vector<2x16xf32>
    %110 = arith.addf %104, %109 : vector<2x16xf32>
    %c0_108 = arith.constant 0 : index
    %c14 = arith.constant 14 : index
    %c0_109 = arith.constant 0 : index
    %111 = vector.load %arg7[%c0_108, %c14, %c0_109] : memref<2x32x1024xbf16, #tpu.memory_space<vmem>>, vector<2x1x1024xbf16>
    %112 = vector.shape_cast %111 : vector<2x1x1024xbf16> to vector<2x1024xbf16>
    %c14_110 = arith.constant 14 : index
    %c0_111 = arith.constant 0 : index
    %c0_112 = arith.constant 0 : index
    %113 = vector.load %arg4[%c14_110, %c0_111, %c0_112] : memref<32x16x1024xbf16, #tpu.memory_space<vmem>>, vector<1x16x1024xbf16>
    %114 = vector.shape_cast %113 : vector<1x16x1024xbf16> to vector<16x1024xbf16>
    %cst_113 = arith.constant dense<0.000000e+00> : vector<2x16xf32>
    %115 = tpu.matmul %112, %114, %cst_113 {dimension_numbers = #tpu.dot_dimension_numbers<[1], [1], [0], [0], [0, 0, 1, 0], [], []>} : vector<2x1024xbf16>, vector<16x1024xbf16>, vector<2x16xf32> -> vector<2x16xf32>
    %116 = arith.addf %110, %115 : vector<2x16xf32>
    %c0_114 = arith.constant 0 : index
    %c15 = arith.constant 15 : index
    %c0_115 = arith.constant 0 : index
    %117 = vector.load %arg7[%c0_114, %c15, %c0_115] : memref<2x32x1024xbf16, #tpu.memory_space<vmem>>, vector<2x1x1024xbf16>
    %118 = vector.shape_cast %117 : vector<2x1x1024xbf16> to vector<2x1024xbf16>
    %c15_116 = arith.constant 15 : index
    %c0_117 = arith.constant 0 : index
    %c0_118 = arith.constant 0 : index
    %119 = vector.load %arg4[%c15_116, %c0_117, %c0_118] : memref<32x16x1024xbf16, #tpu.memory_space<vmem>>, vector<1x16x1024xbf16>
    %120 = vector.shape_cast %119 : vector<1x16x1024xbf16> to vector<16x1024xbf16>
    %cst_119 = arith.constant dense<0.000000e+00> : vector<2x16xf32>
    %121 = tpu.matmul %118, %120, %cst_119 {dimension_numbers = #tpu.dot_dimension_numbers<[1], [1], [0], [0], [0, 0, 1, 0], [], []>} : vector<2x1024xbf16>, vector<16x1024xbf16>, vector<2x16xf32> -> vector<2x16xf32>
    %122 = arith.addf %116, %121 : vector<2x16xf32>
    %c0_120 = arith.constant 0 : index
    %c16 = arith.constant 16 : index
    %c0_121 = arith.constant 0 : index
    %123 = vector.load %arg7[%c0_120, %c16, %c0_121] : memref<2x32x1024xbf16, #tpu.memory_space<vmem>>, vector<2x1x1024xbf16>
    %124 = vector.shape_cast %123 : vector<2x1x1024xbf16> to vector<2x1024xbf16>
    %c16_122 = arith.constant 16 : index
    %c0_123 = arith.constant 0 : index
    %c0_124 = arith.constant 0 : index
    %125 = vector.load %arg4[%c16_122, %c0_123, %c0_124] : memref<32x16x1024xbf16, #tpu.memory_space<vmem>>, vector<1x16x1024xbf16>
    %126 = vector.shape_cast %125 : vector<1x16x1024xbf16> to vector<16x1024xbf16>
    %cst_125 = arith.constant dense<0.000000e+00> : vector<2x16xf32>
    %127 = tpu.matmul %124, %126, %cst_125 {dimension_numbers = #tpu.dot_dimension_numbers<[1], [1], [0], [0], [0, 0, 1, 0], [], []>} : vector<2x1024xbf16>, vector<16x1024xbf16>, vector<2x16xf32> -> vector<2x16xf32>
    %128 = arith.addf %122, %127 : vector<2x16xf32>
    %c0_126 = arith.constant 0 : index
    %c17 = arith.constant 17 : index
    %c0_127 = arith.constant 0 : index
    %129 = vector.load %arg7[%c0_126, %c17, %c0_127] : memref<2x32x1024xbf16, #tpu.memory_space<vmem>>, vector<2x1x1024xbf16>
    %130 = vector.shape_cast %129 : vector<2x1x1024xbf16> to vector<2x1024xbf16>
    %c17_128 = arith.constant 17 : index
    %c0_129 = arith.constant 0 : index
    %c0_130 = arith.constant 0 : index
    %131 = vector.load %arg4[%c17_128, %c0_129, %c0_130] : memref<32x16x1024xbf16, #tpu.memory_space<vmem>>, vector<1x16x1024xbf16>
    %132 = vector.shape_cast %131 : vector<1x16x1024xbf16> to vector<16x1024xbf16>
    %cst_131 = arith.constant dense<0.000000e+00> : vector<2x16xf32>
    %133 = tpu.matmul %130, %132, %cst_131 {dimension_numbers = #tpu.dot_dimension_numbers<[1], [1], [0], [0], [0, 0, 1, 0], [], []>} : vector<2x1024xbf16>, vector<16x1024xbf16>, vector<2x16xf32> -> vector<2x16xf32>
    %134 = arith.addf %128, %133 : vector<2x16xf32>
    %c0_132 = arith.constant 0 : index
    %c18 = arith.constant 18 : index
    %c0_133 = arith.constant 0 : index
    %135 = vector.load %arg7[%c0_132, %c18, %c0_133] : memref<2x32x1024xbf16, #tpu.memory_space<vmem>>, vector<2x1x1024xbf16>
    %136 = vector.shape_cast %135 : vector<2x1x1024xbf16> to vector<2x1024xbf16>
    %c18_134 = arith.constant 18 : index
    %c0_135 = arith.constant 0 : index
    %c0_136 = arith.constant 0 : index
    %137 = vector.load %arg4[%c18_134, %c0_135, %c0_136] : memref<32x16x1024xbf16, #tpu.memory_space<vmem>>, vector<1x16x1024xbf16>
    %138 = vector.shape_cast %137 : vector<1x16x1024xbf16> to vector<16x1024xbf16>
    %cst_137 = arith.constant dense<0.000000e+00> : vector<2x16xf32>
    %139 = tpu.matmul %136, %138, %cst_137 {dimension_numbers = #tpu.dot_dimension_numbers<[1], [1], [0], [0], [0, 0, 1, 0], [], []>} : vector<2x1024xbf16>, vector<16x1024xbf16>, vector<2x16xf32> -> vector<2x16xf32>
    %140 = arith.addf %134, %139 : vector<2x16xf32>
    %c0_138 = arith.constant 0 : index
    %c19 = arith.constant 19 : index
    %c0_139 = arith.constant 0 : index
    %141 = vector.load %arg7[%c0_138, %c19, %c0_139] : memref<2x32x1024xbf16, #tpu.memory_space<vmem>>, vector<2x1x1024xbf16>
    %142 = vector.shape_cast %141 : vector<2x1x1024xbf16> to vector<2x1024xbf16>
    %c19_140 = arith.constant 19 : index
    %c0_141 = arith.constant 0 : index
    %c0_142 = arith.constant 0 : index
    %143 = vector.load %arg4[%c19_140, %c0_141, %c0_142] : memref<32x16x1024xbf16, #tpu.memory_space<vmem>>, vector<1x16x1024xbf16>
    %144 = vector.shape_cast %143 : vector<1x16x1024xbf16> to vector<16x1024xbf16>
    %cst_143 = arith.constant dense<0.000000e+00> : vector<2x16xf32>
    %145 = tpu.matmul %142, %144, %cst_143 {dimension_numbers = #tpu.dot_dimension_numbers<[1], [1], [0], [0], [0, 0, 1, 0], [], []>} : vector<2x1024xbf16>, vector<16x1024xbf16>, vector<2x16xf32> -> vector<2x16xf32>
    %146 = arith.addf %140, %145 : vector<2x16xf32>
    %c0_144 = arith.constant 0 : index
    %c20 = arith.constant 20 : index
    %c0_145 = arith.constant 0 : index
    %147 = vector.load %arg7[%c0_144, %c20, %c0_145] : memref<2x32x1024xbf16, #tpu.memory_space<vmem>>, vector<2x1x1024xbf16>
    %148 = vector.shape_cast %147 : vector<2x1x1024xbf16> to vector<2x1024xbf16>
    %c20_146 = arith.constant 20 : index
    %c0_147 = arith.constant 0 : index
    %c0_148 = arith.constant 0 : index
    %149 = vector.load %arg4[%c20_146, %c0_147, %c0_148] : memref<32x16x1024xbf16, #tpu.memory_space<vmem>>, vector<1x16x1024xbf16>
    %150 = vector.shape_cast %149 : vector<1x16x1024xbf16> to vector<16x1024xbf16>
    %cst_149 = arith.constant dense<0.000000e+00> : vector<2x16xf32>
    %151 = tpu.matmul %148, %150, %cst_149 {dimension_numbers = #tpu.dot_dimension_numbers<[1], [1], [0], [0], [0, 0, 1, 0], [], []>} : vector<2x1024xbf16>, vector<16x1024xbf16>, vector<2x16xf32> -> vector<2x16xf32>
    %152 = arith.addf %146, %151 : vector<2x16xf32>
    %c0_150 = arith.constant 0 : index
    %c21 = arith.constant 21 : index
    %c0_151 = arith.constant 0 : index
    %153 = vector.load %arg7[%c0_150, %c21, %c0_151] : memref<2x32x1024xbf16, #tpu.memory_space<vmem>>, vector<2x1x1024xbf16>
    %154 = vector.shape_cast %153 : vector<2x1x1024xbf16> to vector<2x1024xbf16>
    %c21_152 = arith.constant 21 : index
    %c0_153 = arith.constant 0 : index
    %c0_154 = arith.constant 0 : index
    %155 = vector.load %arg4[%c21_152, %c0_153, %c0_154] : memref<32x16x1024xbf16, #tpu.memory_space<vmem>>, vector<1x16x1024xbf16>
    %156 = vector.shape_cast %155 : vector<1x16x1024xbf16> to vector<16x1024xbf16>
    %cst_155 = arith.constant dense<0.000000e+00> : vector<2x16xf32>
    %157 = tpu.matmul %154, %156, %cst_155 {dimension_numbers = #tpu.dot_dimension_numbers<[1], [1], [0], [0], [0, 0, 1, 0], [], []>} : vector<2x1024xbf16>, vector<16x1024xbf16>, vector<2x16xf32> -> vector<2x16xf32>
    %158 = arith.addf %152, %157 : vector<2x16xf32>
    %c0_156 = arith.constant 0 : index
    %c22 = arith.constant 22 : index
    %c0_157 = arith.constant 0 : index
    %159 = vector.load %arg7[%c0_156, %c22, %c0_157] : memref<2x32x1024xbf16, #tpu.memory_space<vmem>>, vector<2x1x1024xbf16>
    %160 = vector.shape_cast %159 : vector<2x1x1024xbf16> to vector<2x1024xbf16>
    %c22_158 = arith.constant 22 : index
    %c0_159 = arith.constant 0 : index
    %c0_160 = arith.constant 0 : index
    %161 = vector.load %arg4[%c22_158, %c0_159, %c0_160] : memref<32x16x1024xbf16, #tpu.memory_space<vmem>>, vector<1x16x1024xbf16>
    %162 = vector.shape_cast %161 : vector<1x16x1024xbf16> to vector<16x1024xbf16>
    %cst_161 = arith.constant dense<0.000000e+00> : vector<2x16xf32>
    %163 = tpu.matmul %160, %162, %cst_161 {dimension_numbers = #tpu.dot_dimension_numbers<[1], [1], [0], [0], [0, 0, 1, 0], [], []>} : vector<2x1024xbf16>, vector<16x1024xbf16>, vector<2x16xf32> -> vector<2x16xf32>
    %164 = arith.addf %158, %163 : vector<2x16xf32>
    %c0_162 = arith.constant 0 : index
    %c23 = arith.constant 23 : index
    %c0_163 = arith.constant 0 : index
    %165 = vector.load %arg7[%c0_162, %c23, %c0_163] : memref<2x32x1024xbf16, #tpu.memory_space<vmem>>, vector<2x1x1024xbf16>
    %166 = vector.shape_cast %165 : vector<2x1x1024xbf16> to vector<2x1024xbf16>
    %c23_164 = arith.constant 23 : index
    %c0_165 = arith.constant 0 : index
    %c0_166 = arith.constant 0 : index
    %167 = vector.load %arg4[%c23_164, %c0_165, %c0_166] : memref<32x16x1024xbf16, #tpu.memory_space<vmem>>, vector<1x16x1024xbf16>
    %168 = vector.shape_cast %167 : vector<1x16x1024xbf16> to vector<16x1024xbf16>
    %cst_167 = arith.constant dense<0.000000e+00> : vector<2x16xf32>
    %169 = tpu.matmul %166, %168, %cst_167 {dimension_numbers = #tpu.dot_dimension_numbers<[1], [1], [0], [0], [0, 0, 1, 0], [], []>} : vector<2x1024xbf16>, vector<16x1024xbf16>, vector<2x16xf32> -> vector<2x16xf32>
    %170 = arith.addf %164, %169 : vector<2x16xf32>
    %c0_168 = arith.constant 0 : index
    %c24 = arith.constant 24 : index
    %c0_169 = arith.constant 0 : index
    %171 = vector.load %arg7[%c0_168, %c24, %c0_169] : memref<2x32x1024xbf16, #tpu.memory_space<vmem>>, vector<2x1x1024xbf16>
    %172 = vector.shape_cast %171 : vector<2x1x1024xbf16> to vector<2x1024xbf16>
    %c24_170 = arith.constant 24 : index
    %c0_171 = arith.constant 0 : index
    %c0_172 = arith.constant 0 : index
    %173 = vector.load %arg4[%c24_170, %c0_171, %c0_172] : memref<32x16x1024xbf16, #tpu.memory_space<vmem>>, vector<1x16x1024xbf16>
    %174 = vector.shape_cast %173 : vector<1x16x1024xbf16> to vector<16x1024xbf16>
    %cst_173 = arith.constant dense<0.000000e+00> : vector<2x16xf32>
    %175 = tpu.matmul %172, %174, %cst_173 {dimension_numbers = #tpu.dot_dimension_numbers<[1], [1], [0], [0], [0, 0, 1, 0], [], []>} : vector<2x1024xbf16>, vector<16x1024xbf16>, vector<2x16xf32> -> vector<2x16xf32>
    %176 = arith.addf %170, %175 : vector<2x16xf32>
    %c0_174 = arith.constant 0 : index
    %c25 = arith.constant 25 : index
    %c0_175 = arith.constant 0 : index
    %177 = vector.load %arg7[%c0_174, %c25, %c0_175] : memref<2x32x1024xbf16, #tpu.memory_space<vmem>>, vector<2x1x1024xbf16>
    %178 = vector.shape_cast %177 : vector<2x1x1024xbf16> to vector<2x1024xbf16>
    %c25_176 = arith.constant 25 : index
    %c0_177 = arith.constant 0 : index
    %c0_178 = arith.constant 0 : index
    %179 = vector.load %arg4[%c25_176, %c0_177, %c0_178] : memref<32x16x1024xbf16, #tpu.memory_space<vmem>>, vector<1x16x1024xbf16>
    %180 = vector.shape_cast %179 : vector<1x16x1024xbf16> to vector<16x1024xbf16>
    %cst_179 = arith.constant dense<0.000000e+00> : vector<2x16xf32>
    %181 = tpu.matmul %178, %180, %cst_179 {dimension_numbers = #tpu.dot_dimension_numbers<[1], [1], [0], [0], [0, 0, 1, 0], [], []>} : vector<2x1024xbf16>, vector<16x1024xbf16>, vector<2x16xf32> -> vector<2x16xf32>
    %182 = arith.addf %176, %181 : vector<2x16xf32>
    %c0_180 = arith.constant 0 : index
    %c26 = arith.constant 26 : index
    %c0_181 = arith.constant 0 : index
    %183 = vector.load %arg7[%c0_180, %c26, %c0_181] : memref<2x32x1024xbf16, #tpu.memory_space<vmem>>, vector<2x1x1024xbf16>
    %184 = vector.shape_cast %183 : vector<2x1x1024xbf16> to vector<2x1024xbf16>
    %c26_182 = arith.constant 26 : index
    %c0_183 = arith.constant 0 : index
    %c0_184 = arith.constant 0 : index
    %185 = vector.load %arg4[%c26_182, %c0_183, %c0_184] : memref<32x16x1024xbf16, #tpu.memory_space<vmem>>, vector<1x16x1024xbf16>
    %186 = vector.shape_cast %185 : vector<1x16x1024xbf16> to vector<16x1024xbf16>
    %cst_185 = arith.constant dense<0.000000e+00> : vector<2x16xf32>
    %187 = tpu.matmul %184, %186, %cst_185 {dimension_numbers = #tpu.dot_dimension_numbers<[1], [1], [0], [0], [0, 0, 1, 0], [], []>} : vector<2x1024xbf16>, vector<16x1024xbf16>, vector<2x16xf32> -> vector<2x16xf32>
    %188 = arith.addf %182, %187 : vector<2x16xf32>
    %c0_186 = arith.constant 0 : index
    %c27 = arith.constant 27 : index
    %c0_187 = arith.constant 0 : index
    %189 = vector.load %arg7[%c0_186, %c27, %c0_187] : memref<2x32x1024xbf16, #tpu.memory_space<vmem>>, vector<2x1x1024xbf16>
    %190 = vector.shape_cast %189 : vector<2x1x1024xbf16> to vector<2x1024xbf16>
    %c27_188 = arith.constant 27 : index
    %c0_189 = arith.constant 0 : index
    %c0_190 = arith.constant 0 : index
    %191 = vector.load %arg4[%c27_188, %c0_189, %c0_190] : memref<32x16x1024xbf16, #tpu.memory_space<vmem>>, vector<1x16x1024xbf16>
    %192 = vector.shape_cast %191 : vector<1x16x1024xbf16> to vector<16x1024xbf16>
    %cst_191 = arith.constant dense<0.000000e+00> : vector<2x16xf32>
    %193 = tpu.matmul %190, %192, %cst_191 {dimension_numbers = #tpu.dot_dimension_numbers<[1], [1], [0], [0], [0, 0, 1, 0], [], []>} : vector<2x1024xbf16>, vector<16x1024xbf16>, vector<2x16xf32> -> vector<2x16xf32>
    %194 = arith.addf %188, %193 : vector<2x16xf32>
    %c0_192 = arith.constant 0 : index
    %c28 = arith.constant 28 : index
    %c0_193 = arith.constant 0 : index
    %195 = vector.load %arg7[%c0_192, %c28, %c0_193] : memref<2x32x1024xbf16, #tpu.memory_space<vmem>>, vector<2x1x1024xbf16>
    %196 = vector.shape_cast %195 : vector<2x1x1024xbf16> to vector<2x1024xbf16>
    %c28_194 = arith.constant 28 : index
    %c0_195 = arith.constant 0 : index
    %c0_196 = arith.constant 0 : index
    %197 = vector.load %arg4[%c28_194, %c0_195, %c0_196] : memref<32x16x1024xbf16, #tpu.memory_space<vmem>>, vector<1x16x1024xbf16>
    %198 = vector.shape_cast %197 : vector<1x16x1024xbf16> to vector<16x1024xbf16>
    %cst_197 = arith.constant dense<0.000000e+00> : vector<2x16xf32>
    %199 = tpu.matmul %196, %198, %cst_197 {dimension_numbers = #tpu.dot_dimension_numbers<[1], [1], [0], [0], [0, 0, 1, 0], [], []>} : vector<2x1024xbf16>, vector<16x1024xbf16>, vector<2x16xf32> -> vector<2x16xf32>
    %200 = arith.addf %194, %199 : vector<2x16xf32>
    %c0_198 = arith.constant 0 : index
    %c29 = arith.constant 29 : index
    %c0_199 = arith.constant 0 : index
    %201 = vector.load %arg7[%c0_198, %c29, %c0_199] : memref<2x32x1024xbf16, #tpu.memory_space<vmem>>, vector<2x1x1024xbf16>
    %202 = vector.shape_cast %201 : vector<2x1x1024xbf16> to vector<2x1024xbf16>
    %c29_200 = arith.constant 29 : index
    %c0_201 = arith.constant 0 : index
    %c0_202 = arith.constant 0 : index
    %203 = vector.load %arg4[%c29_200, %c0_201, %c0_202] : memref<32x16x1024xbf16, #tpu.memory_space<vmem>>, vector<1x16x1024xbf16>
    %204 = vector.shape_cast %203 : vector<1x16x1024xbf16> to vector<16x1024xbf16>
    %cst_203 = arith.constant dense<0.000000e+00> : vector<2x16xf32>
    %205 = tpu.matmul %202, %204, %cst_203 {dimension_numbers = #tpu.dot_dimension_numbers<[1], [1], [0], [0], [0, 0, 1, 0], [], []>} : vector<2x1024xbf16>, vector<16x1024xbf16>, vector<2x16xf32> -> vector<2x16xf32>
    %206 = arith.addf %200, %205 : vector<2x16xf32>
    %c0_204 = arith.constant 0 : index
    %c30 = arith.constant 30 : index
    %c0_205 = arith.constant 0 : index
    %207 = vector.load %arg7[%c0_204, %c30, %c0_205] : memref<2x32x1024xbf16, #tpu.memory_space<vmem>>, vector<2x1x1024xbf16>
    %208 = vector.shape_cast %207 : vector<2x1x1024xbf16> to vector<2x1024xbf16>
    %c30_206 = arith.constant 30 : index
    %c0_207 = arith.constant 0 : index
    %c0_208 = arith.constant 0 : index
    %209 = vector.load %arg4[%c30_206, %c0_207, %c0_208] : memref<32x16x1024xbf16, #tpu.memory_space<vmem>>, vector<1x16x1024xbf16>
    %210 = vector.shape_cast %209 : vector<1x16x1024xbf16> to vector<16x1024xbf16>
    %cst_209 = arith.constant dense<0.000000e+00> : vector<2x16xf32>
    %211 = tpu.matmul %208, %210, %cst_209 {dimension_numbers = #tpu.dot_dimension_numbers<[1], [1], [0], [0], [0, 0, 1, 0], [], []>} : vector<2x1024xbf16>, vector<16x1024xbf16>, vector<2x16xf32> -> vector<2x16xf32>
    %212 = arith.addf %206, %211 : vector<2x16xf32>
    %c0_210 = arith.constant 0 : index
    %c31 = arith.constant 31 : index
    %c0_211 = arith.constant 0 : index
    %213 = vector.load %arg7[%c0_210, %c31, %c0_211] : memref<2x32x1024xbf16, #tpu.memory_space<vmem>>, vector<2x1x1024xbf16>
    %214 = vector.shape_cast %213 : vector<2x1x1024xbf16> to vector<2x1024xbf16>
    %c31_212 = arith.constant 31 : index
    %c0_213 = arith.constant 0 : index
    %c0_214 = arith.constant 0 : index
    %215 = vector.load %arg4[%c31_212, %c0_213, %c0_214] : memref<32x16x1024xbf16, #tpu.memory_space<vmem>>, vector<1x16x1024xbf16>
    %216 = vector.shape_cast %215 : vector<1x16x1024xbf16> to vector<16x1024xbf16>
    %cst_215 = arith.constant dense<0.000000e+00> : vector<2x16xf32>
    %217 = tpu.matmul %214, %216, %cst_215 {dimension_numbers = #tpu.dot_dimension_numbers<[1], [1], [0], [0], [0, 0, 1, 0], [], []>} : vector<2x1024xbf16>, vector<16x1024xbf16>, vector<2x16xf32> -> vector<2x16xf32>
    %218 = arith.addf %212, %217 : vector<2x16xf32>
    %c0_216 = arith.constant 0 : index
    %c0_217 = arith.constant 0 : index
    %219 = vector.load %arg5[%c0_216, %c0_217] : memref<1x16xf32, #tpu.memory_space<vmem>>, vector<1x16xf32>
    %220 = vector.broadcast %219 : vector<1x16xf32> to vector<2x16xf32>
    %221 = arith.addf %218, %220 : vector<2x16xf32>
    %c0_218 = arith.constant 0 : index
    %c0_219 = arith.constant 0 : index
    %222 = vector.load %arg6[%c0_218, %c0_219] : memref<2x16xf32, #tpu.memory_space<vmem>>, vector<2x16xf32>
    tpu.vector_store %arg6[%c0_218, %c0_219], %221 {strides = array<i32>} : memref<2x16xf32, #tpu.memory_space<vmem>>, vector<2x16xf32>,
    return
  }
  func.func @transform_0(%arg0: i32) -> (i32, i32, i32) {
    %c0_i32 = arith.constant 0 : i32
    %c0_i32_0 = arith.constant 0 : i32
    %c0_i32_1 = arith.constant 0 : i32
    return %arg0, %c0_i32, %c0_i32_0 : i32, i32, i32
  }
  func.func @transform_1(%arg0: i32) -> (i32, i32) {
    %c0_i32 = arith.constant 0 : i32
    %c0_i32_0 = arith.constant 0 : i32
    %c0_i32_1 = arith.constant 0 : i32
    return %c0_i32, %c0_i32_0 : i32, i32
  }
  func.func @transform_2(%arg0: i32) -> (i32, i32) {
    %c0_i32 = arith.constant 0 : i32
    %c0_i32_0 = arith.constant 0 : i32
    %c0_i32_1 = arith.constant 0 : i32
    return %c0_i32, %c0_i32_0 : i32, i32
  }
  func.func @transform_3(%arg0: i32) -> (i32, i32, i32) {
    %c0_i32 = arith.constant 0 : i32
    %c0_i32_0 = arith.constant 0 : i32
    %c0_i32_1 = arith.constant 0 : i32
    %c0_i32_2 = arith.constant 0 : i32
    return %c0_i32, %c0_i32_0, %c0_i32_1 : i32, i32, i32
  }
  func.func @transform_4(%arg0: i32) -> (i32, i32) {
    %c0_i32 = arith.constant 0 : i32
    %c0_i32_0 = arith.constant 0 : i32
    %c0_i32_1 = arith.constant 0 : i32
    return %c0_i32, %c0_i32_0 : i32, i32
  }
  func.func @transform_5(%arg0: i32) -> (i32, i32) {
    %c0_i32 = arith.constant 0 : i32
    %c0_i32_0 = arith.constant 0 : i32
    return %arg0, %c0_i32 : i32, i32
  }
}

</mosaic_0001>

<llo_original>
// kernel: encoder2d_forward.1
$region0: #{encoder2d_forward.1}
  #allocation0 [shape = 'u32[]', space=smem, size = 0x4, offset = 0x4, fixed_abs, tag = 'smem constant byte address 0x4 - core index']
  #allocation1 [shape = 'u32[144,128]{1,0:T(1,128)}', space=vmem, size = 0x12000, scoped, tag = 'internal scratch']
  #allocation2 [shape = 'bf16[2,32,1024]{2,1,0:T(16,128)(2,1)}', space=vmem, size = 0x20000, scoped, tag = 'scratch operand']
  %s0 = inlined_call_operand.vmem [shape: f32[2,16,1024], index: 0, kind: input, shape index: {}]
  %s1 = inlined_call_operand.vmem [shape: f32[32,16], index: 1, kind: input, shape index: {}]
  %s2 = inlined_call_operand.vmem [shape: f32[32,1], index: 2, kind: input, shape index: {}]
  %s3 = inlined_call_operand.vmem [shape: bf16[32,16,1024], index: 3, kind: input, shape index: {}]
  %s4 = inlined_call_operand.vmem [shape: f32[1,16], index: 4, kind: input, shape index: {}]
  %s5 = inlined_call_operand.vmem [shape: f32[2,16], index: 5, kind: output, shape index: {}]
  %s6 = sld [smem:[#allocation0]]
  $region30: #{encoder2d_forward.1} parent=0
    _
  %s8 = ssub.s32 1, %s6
  %s9 = scalar_select 0, %s8, %s6
  // Predicated region
  $region2: #{encoder2d_forward.1} parent=0 // pred_check
    _
  $region3: #{encoder2d_forward.1} parent=0 // pred_check_branch
    %11 = sbr.rel (0) target = $region5
  $region4: #{encoder2d_forward.1} parent=0 // pred_region
    _
  $region5: #{encoder2d_forward.1} parent=0 // pred_fallthru
    _
  // Predicated region
  $region6: #{encoder2d_forward.1} parent=0 // pred_check
    _
  $region7: #{encoder2d_forward.1} parent=0 // pred_check_branch
    %13 = sbr.rel (0) target = $region9
  $region8: #{encoder2d_forward.1} parent=0 // pred_region
    _
  $region9: #{encoder2d_forward.1} parent=0 // pred_fallthru
    _
  // Predicated region
  $region10: #{encoder2d_forward.1} parent=0 // pred_check
    _
  $region11: #{encoder2d_forward.1} parent=0 // pred_check_branch
    %15 = sbr.rel (0) target = $region13
  $region12: #{encoder2d_forward.1} parent=0 // pred_region
    _
  $region13: #{encoder2d_forward.1} parent=0 // pred_fallthru
    _
  // Predicated region
  $region14: #{encoder2d_forward.1} parent=0 // pred_check
    _
  $region15: #{encoder2d_forward.1} parent=0 // pred_check_branch
    %17 = sbr.rel (0) target = $region17
  $region16: #{encoder2d_forward.1} parent=0 // pred_region
    _
  $region17: #{encoder2d_forward.1} parent=0 // pred_fallthru
    _
  // Predicated region
  $region18: #{encoder2d_forward.1} parent=0 // pred_check
    _
  $region19: #{encoder2d_forward.1} parent=0 // pred_check_branch
    %19 = sbr.rel (0) target = $region21
  $region20: #{encoder2d_forward.1} parent=0 // pred_region
    _
  $region21: #{encoder2d_forward.1} parent=0 // pred_fallthru
    _
  %v21 = vld [vmem:[%s1] sm:$0xff]
  %v22 = vld [vmem:[%s1 + $0x8] sm:$0xff]
  %v23 = vld [vmem:[%s1 + $0x10] sm:$0xff]
  %v24 = vld [vmem:[%s1 + $0x18] sm:$0xff]
  %v25 = vld [vmem:[%s0] sm:$0xff]
  %v26 = vld [vmem:[%s0 + $0x8] sm:$0xff]
  %v27 = vld [vmem:[%s0 + $0x10] sm:$0xff]
  %v28 = vld [vmem:[%s0 + $0x18] sm:$0xff]
  %v29 = vld [vmem:[%s0 + $0x20] sm:$0xff]
  %v30 = vld [vmem:[%s0 + $0x28] sm:$0xff]
  %v31 = vld [vmem:[%s0 + $0x30] sm:$0xff]
  %v32 = vld [vmem:[%s0 + $0x38] sm:$0xff]
  %v33 = vld [vmem:[%s0 + $0x40] sm:$0xff]
  %v34 = vld [vmem:[%s0 + $0x48] sm:$0xff]
  %v35 = vld [vmem:[%s0 + $0x50] sm:$0xff]
  %v36 = vld [vmem:[%s0 + $0x58] sm:$0xff]
  %v37 = vld [vmem:[%s0 + $0x60] sm:$0xff]
  %v38 = vld [vmem:[%s0 + $0x68] sm:$0xff]
  %v39 = vld [vmem:[%s0 + $0x70] sm:$0xff]
  %v40 = vld [vmem:[%s0 + $0x78] sm:$0xff]
  %v41 = vld [vmem:[%s2] sm:$0xff]
  %v42 = vld [vmem:[%s2 + $0x8] sm:$0xff]
  %v43 = vld [vmem:[%s2 + $0x10] sm:$0xff]
  %v44 = vld [vmem:[%s2 + $0x18] sm:$0xff]
  %46 = vset.pattern.permute.xlu0 0
  %47 = vperm.xlu0 %46, %v41
  %v48 = vpop.permute.xlu0 %47
  %51 = vset.pattern.permute.xlu0 0
  %52 = vperm.xlu0 %51, %v42
  %v53 = vpop.permute.xlu0 %52
  %56 = vset.pattern.permute.xlu0 0
  %57 = vperm.xlu0 %56, %v43
  %v58 = vpop.permute.xlu0 %57
  %61 = vset.pattern.permute.xlu0 0
  %62 = vperm.xlu0 %61, %v44
  %v63 = vpop.permute.xlu0 %62
  %vm65 = vcmask 130048
  %v67 = vsel %vm65, %v21, 0
  %v70 = vsel %vm65, %v22, 0
  %v73 = vsel %vm65, %v23, 0
  %v76 = vsel %vm65, %v24, 0
  %78 = vmatprep.subr.mxu0 %v26
  %79 = vmatpush1.msra.mxu0 %v25
  %80 = vmatprep.subr.mxu0 %v34
  %81 = vmatpush1.msra.mxu0 %v33
  %82 = vmatprep.subr.mxu0 0.0
  %83 = vmatpush1.msra.mxu0 0.0
  %84 = vmatprep.subr.mxu0 0.0
  %85 = vmatpush1.msra.mxu0 0.0
  %86 = vmatprep.subr.mxu0 0.0
  %87 = vmatpush1.msra.mxu0 0.0
  %88 = vmatprep.subr.mxu0 0.0
  %89 = vmatpush1.msra.mxu0 0.0
  %90 = vmatprep.subr.mxu0 0.0
  %91 = vmatpush1.msra.mxu0 0.0
  %92 = vmatprep.subr.mxu0 0.0
  %93 = vmatpush1.msra.mxu0 0.0
  %94 = vmatprep.subr.mxu0 0.0
  %95 = vmatpush1.msra.mxu0 0.0
  %96 = vmatprep.subr.mxu0 0.0
  %97 = vmatpush1.msra.mxu0 0.0
  %98 = vmatprep.subr.mxu0 0.0
  %99 = vmatpush1.msra.mxu0 0.0
  %100 = vmatprep.subr.mxu0 0.0
  %101 = vmatpush1.msra.mxu0 0.0
  %102 = vmatprep.subr.mxu0 0.0
  %103 = vmatpush1.msra.mxu0 0.0
  %104 = vmatprep.subr.mxu0 0.0
  %105 = vmatpush1.msra.mxu0 0.0
  %106 = vmatprep.subr.mxu0 0.0
  %107 = vmatpush1.msra.mxu0 0.0
  %108 = vmatprep.subr.mxu0 0.0
  %109 = vmatpush1.msra.mxu0 0.0
  %110 = vmatprep.subr.mxu0 0.0
  %111 = vmatpush1.msra.mxu0 0.0
  %112 = vmatprep.subr.mxu0 0.0
  %113 = vmatpush1.msra.mxu0 0.0
  %114 = vmatprep.subr.mxu0 0.0
  %115 = vmatpush1.msra.mxu0 0.0
  %116 = vmatprep.subr.mxu0 0.0
  %117 = vmatpush1.msra.mxu0 0.0
  %118 = vmatprep.subr.mxu0 0.0
  %119 = vmatpush1.msra.mxu0 0.0
  %120 = vmatprep.subr.mxu0 0.0
  %121 = vmatpush1.msra.mxu0 0.0
  %122 = vmatprep.subr.mxu0 0.0
  %123 = vmatpush1.msra.mxu0 0.0
  %124 = vmatprep.subr.mxu0 0.0
  %125 = vmatpush1.msra.mxu0 0.0
  %126 = vmatprep.subr.mxu0 0.0
  %127 = vmatpush1.msra.mxu0 0.0
  %128 = vmatprep.subr.mxu0 0.0
  %129 = vmatpush1.msra.mxu0 0.0
  %130 = vmatprep.subr.mxu0 0.0
  %131 = vmatpush1.msra.mxu0 0.0
  %132 = vmatprep.subr.mxu0 0.0
  %133 = vmatpush1.msra.mxu0 0.0
  %134 = vmatprep.subr.mxu0 0.0
  %135 = vmatpush1.msra.mxu0 0.0
  %136 = vmatprep.subr.mxu0 0.0
  %137 = vmatpush1.msra.mxu0 0.0
  %138 = vmatprep.subr.mxu0 0.0
  %139 = vmatpush1.msra.mxu0 0.0
  %140 = vmatprep.subr.mxu0 0.0
  %141 = vmatpush1.msra.mxu0 0.0
  %142 = vmatprep.mubr.f32.mxu0 0.0
  %143 = vmatmul.mubr.f32.gmra.mrb[0].mxu0 %v67
  %v144 = vpop.f32.mrb[0].mxu0
  %v145 = vadd.f32 %v48, %v144
  %v146 = vpop.f32.mrb[0].mxu0
  %v147 = vadd.f32 %v48, %v146
  %148 = vmatprep.mubr.f32.mxu0 0.0
  %149 = vmatmul.mubr.f32.gmra.mrb[0].mxu0 %v70
  %v150 = vpop.f32.mrb[0].mxu0
  %v151 = vadd.f32 %v53, %v150
  %v152 = vpop.f32.mrb[0].mxu0
  %v153 = vadd.f32 %v53, %v152
  %154 = vmatprep.mubr.f32.mxu0 0.0
  %155 = vmatmul.mubr.f32.gmra.mrb[0].mxu0 %v73
  %v156 = vpop.f32.mrb[0].mxu0
  %v157 = vadd.f32 %v58, %v156
  %v158 = vpop.f32.mrb[0].mxu0
  %v159 = vadd.f32 %v58, %v158
  %160 = vmatprep.mubr.f32.mxu0 0.0
  %161 = vmatmul.mubr.f32.gmra.mrb[0].mxu0 %v76
  %v162 = vpop.f32.mrb[0].mxu0
  %v163 = vadd.f32 %v63, %v162
  %v164 = vpop.f32.mrb[0].mxu0
  %v165 = vadd.f32 %v63, %v164
  %166 = vdwg.mxu0
  %167 = vmatprep.subr.mxu0 %v28
  %168 = vmatpush1.msra.mxu0 %v27
  %169 = vmatprep.subr.mxu0 %v36
  %170 = vmatpush1.msra.mxu0 %v35
  %171 = vmatprep.subr.mxu0 0.0
  %172 = vmatpush1.msra.mxu0 0.0
  %173 = vmatprep.subr.mxu0 0.0
  %174 = vmatpush1.msra.mxu0 0.0
  %175 = vmatprep.subr.mxu0 0.0
  %176 = vmatpush1.msra.mxu0 0.0
  %177 = vmatprep.subr.mxu0 0.0
  %178 = vmatpush1.msra.mxu0 0.0
  %179 = vmatprep.subr.mxu0 0.0
  %180 = vmatpush1.msra.mxu0 0.0
  %181 = vmatprep.subr.mxu0 0.0
  %182 = vmatpush1.msra.mxu0 0.0
  %183 = vmatprep.subr.mxu0 0.0
  %184 = vmatpush1.msra.mxu0 0.0
  %185 = vmatprep.subr.mxu0 0.0
  %186 = vmatpush1.msra.mxu0 0.0
  %187 = vmatprep.subr.mxu0 0.0
  %188 = vmatpush1.msra.mxu0 0.0
  %189 = vmatprep.subr.mxu0 0.0
  %190 = vmatpush1.msra.mxu0 0.0
  %191 = vmatprep.subr.mxu0 0.0
  %192 = vmatpush1.msra.mxu0 0.0
  %193 = vmatprep.subr.mxu0 0.0
  %194 = vmatpush1.msra.mxu0 0.0
  %195 = vmatprep.subr.mxu0 0.0
  %196 = vmatpush1.msra.mxu0 0.0
  %197 = vmatprep.subr.mxu0 0.0
  %198 = vmatpush1.msra.mxu0 0.0
  %199 = vmatprep.subr.mxu0 0.0
  %200 = vmatpush1.msra.mxu0 0.0
  %201 = vmatprep.subr.mxu0 0.0
  %202 = vmatpush1.msra.mxu0 0.0
  %203 = vmatprep.subr.mxu0 0.0
  %204 = vmatpush1.msra.mxu0 0.0
  %205 = vmatprep.subr.mxu0 0.0
  %206 = vmatpush1.msra.mxu0 0.0
  %207 = vmatprep.subr.mxu0 0.0
  %208 = vmatpush1.msra.mxu0 0.0
  %209 = vmatprep.subr.mxu0 0.0
  %210 = vmatpush1.msra.mxu0 0.0
  %211 = vmatprep.subr.mxu0 0.0
  %212 = vmatpush1.msra.mxu0 0.0
  %213 = vmatprep.subr.mxu0 0.0
  %214 = vmatpush1.msra.mxu0 0.0
  %215 = vmatprep.subr.mxu0 0.0
  %216 = vmatpush1.msra.mxu0 0.0
  %217 = vmatprep.subr.mxu0 0.0
  %218 = vmatpush1.msra.mxu0 0.0
  %219 = vmatprep.subr.mxu0 0.0
  %220 = vmatpush1.msra.mxu0 0.0
  %221 = vmatprep.subr.mxu0 0.0
  %222 = vmatpush1.msra.mxu0 0.0
  %223 = vmatprep.subr.mxu0 0.0
  %224 = vmatpush1.msra.mxu0 0.0
  %225 = vmatprep.subr.mxu0 0.0
  %226 = vmatpush1.msra.mxu0 0.0
  %227 = vmatprep.subr.mxu0 0.0
  %228 = vmatpush1.msra.mxu0 0.0
  %229 = vmatprep.subr.mxu0 0.0
  %230 = vmatpush1.msra.mxu0 0.0
  %231 = vmatprep.mubr.f32.mxu0 0.0
  %232 = vmatmul.mubr.f32.gmra.mrb[0].mxu0 %v67
  %v233 = vpop.f32.mrb[0].mxu0
  %v234 = vadd.f32 %v48, %v233
  %v235 = vpop.f32.mrb[0].mxu0
  %v236 = vadd.f32 %v48, %v235
  %237 = vmatprep.mubr.f32.mxu0 0.0
  %238 = vmatmul.mubr.f32.gmra.mrb[0].mxu0 %v70
  %v239 = vpop.f32.mrb[0].mxu0
  %v240 = vadd.f32 %v53, %v239
  %v241 = vpop.f32.mrb[0].mxu0
  %v242 = vadd.f32 %v53, %v241
  %243 = vmatprep.mubr.f32.mxu0 0.0
  %244 = vmatmul.mubr.f32.gmra.mrb[0].mxu0 %v73
  %v245 = vpop.f32.mrb[0].mxu0
  %v246 = vadd.f32 %v58, %v245
  %v247 = vpop.f32.mrb[0].mxu0
  %v248 = vadd.f32 %v58, %v247
  %249 = vmatprep.mubr.f32.mxu0 0.0
  %250 = vmatmul.mubr.f32.gmra.mrb[0].mxu0 %v76
  %v251 = vpop.f32.mrb[0].mxu0
  %v252 = vadd.f32 %v63, %v251
  %v253 = vpop.f32.mrb[0].mxu0
  %v254 = vadd.f32 %v63, %v253
  %255 = vdwg.mxu0
  %256 = vmatprep.subr.mxu0 %v30
  %257 = vmatpush1.msra.mxu0 %v29
  %258 = vmatprep.subr.mxu0 %v38
  %259 = vmatpush1.msra.mxu0 %v37
  %260 = vmatprep.subr.mxu0 0.0
  %261 = vmatpush1.msra.mxu0 0.0
  %262 = vmatprep.subr.mxu0 0.0
  %263 = vmatpush1.msra.mxu0 0.0
  %264 = vmatprep.subr.mxu0 0.0
  %265 = vmatpush1.msra.mxu0 0.0
  %266 = vmatprep.subr.mxu0 0.0
  %267 = vmatpush1.msra.mxu0 0.0
  %268 = vmatprep.subr.mxu0 0.0
  %269 = vmatpush1.msra.mxu0 0.0
  %270 = vmatprep.subr.mxu0 0.0
  %271 = vmatpush1.msra.mxu0 0.0
  %272 = vmatprep.subr.mxu0 0.0
  %273 = vmatpush1.msra.mxu0 0.0
  %274 = vmatprep.subr.mxu0 0.0
  %275 = vmatpush1.msra.mxu0 0.0
  %276 = vmatprep.subr.mxu0 0.0
  %277 = vmatpush1.msra.mxu0 0.0
  %278 = vmatprep.subr.mxu0 0.0
  %279 = vmatpush1.msra.mxu0 0.0
  %280 = vmatprep.subr.mxu0 0.0
  %281 = vmatpush1.msra.mxu0 0.0
  %282 = vmatprep.subr.mxu0 0.0
  %283 = vmatpush1.msra.mxu0 0.0
  %284 = vmatprep.subr.mxu0 0.0
  %285 = vmatpush1.msra.mxu0 0.0
  %286 = vmatprep.subr.mxu0 0.0
  %287 = vmatpush1.msra.mxu0 0.0
  %288 = vmatprep.subr.mxu0 0.0
  %289 = vmatpush1.msra.mxu0 0.0
  %290 = vmatprep.subr.mxu0 0.0
  %291 = vmatpush1.msra.mxu0 0.0
  %292 = vmatprep.subr.mxu0 0.0
  %293 = vmatpush1.msra.mxu0 0.0
  %294 = vmatprep.subr.mxu0 0.0
  %295 = vmatpush1.msra.mxu0 0.0
  %296 = vmatprep.subr.mxu0 0.0
  %297 = vmatpush1.msra.mxu0 0.0
  %298 = vmatprep.subr.mxu0 0.0
  %299 = vmatpush1.msra.mxu0 0.0
  %300 = vmatprep.subr.mxu0 0.0
  %301 = vmatpush1.msra.mxu0 0.0
  %302 = vmatprep.subr.mxu0 0.0
  %303 = vmatpush1.msra.mxu0 0.0
  %304 = vmatprep.subr.mxu0 0.0
  %305 = vmatpush1.msra.mxu0 0.0
  %306 = vmatprep.subr.mxu0 0.0
  %307 = vmatpush1.msra.mxu0 0.0
  %308 = vmatprep.subr.mxu0 0.0
  %309 = vmatpush1.msra.mxu0 0.0
  %310 = vmatprep.subr.mxu0 0.0
  %311 = vmatpush1.msra.mxu0 0.0
  %312 = vmatprep.subr.mxu0 0.0
  %313 = vmatpush1.msra.mxu0 0.0
  %314 = vmatprep.subr.mxu0 0.0
  %315 = vmatpush1.msra.mxu0 0.0
  %316 = vmatprep.subr.mxu0 0.0
  %317 = vmatpush1.msra.mxu0 0.0
  %318 = vmatprep.subr.mxu0 0.0
  %319 = vmatpush1.msra.mxu0 0.0
  %320 = vmatprep.mubr.f32.mxu0 0.0
  %321 = vmatmul.mubr.f32.gmra.mrb[0].mxu0 %v67
  %v322 = vpop.f32.mrb[0].mxu0
  %v323 = vadd.f32 %v48, %v322
  %v324 = vpop.f32.mrb[0].mxu0
  %v325 = vadd.f32 %v48, %v324
  %326 = vmatprep.mubr.f32.mxu0 0.0
  %327 = vmatmul.mubr.f32.gmra.mrb[0].mxu0 %v70
  %v328 = vpop.f32.mrb[0].mxu0
  %v329 = vadd.f32 %v53, %v328
  %v330 = vpop.f32.mrb[0].mxu0
  %v331 = vadd.f32 %v53, %v330
  %332 = vmatprep.mubr.f32.mxu0 0.0
  %333 = vmatmul.mubr.f32.gmra.mrb[0].mxu0 %v73
  %v334 = vpop.f32.mrb[0].mxu0
  %v335 = vadd.f32 %v58, %v334
  %v336 = vpop.f32.mrb[0].mxu0
  %v337 = vadd.f32 %v58, %v336
  %338 = vmatprep.mubr.f32.mxu0 0.0
  %339 = vmatmul.mubr.f32.gmra.mrb[0].mxu0 %v76
  %v340 = vpop.f32.mrb[0].mxu0
  %v341 = vadd.f32 %v63, %v340
  %v342 = vpop.f32.mrb[0].mxu0
  %v343 = vadd.f32 %v63, %v342
  %344 = vdwg.mxu0
  %345 = vmatprep.subr.mxu0 %v32
  %346 = vmatpush1.msra.mxu0 %v31
  %347 = vmatprep.subr.mxu0 %v40
  %348 = vmatpush1.msra.mxu0 %v39
  %349 = vmatprep.subr.mxu0 0.0
  %350 = vmatpush1.msra.mxu0 0.0
  %351 = vmatprep.subr.mxu0 0.0
  %352 = vmatpush1.msra.mxu0 0.0
  %353 = vmatprep.subr.mxu0 0.0
  %354 = vmatpush1.msra.mxu0 0.0
  %355 = vmatprep.subr.mxu0 0.0
  %356 = vmatpush1.msra.mxu0 0.0
  %357 = vmatprep.subr.mxu0 0.0
  %358 = vmatpush1.msra.mxu0 0.0
  %359 = vmatprep.subr.mxu0 0.0
  %360 = vmatpush1.msra.mxu0 0.0
  %361 = vmatprep.subr.mxu0 0.0
  %362 = vmatpush1.msra.mxu0 0.0
  %363 = vmatprep.subr.mxu0 0.0
  %364 = vmatpush1.msra.mxu0 0.0
  %365 = vmatprep.subr.mxu0 0.0
  %366 = vmatpush1.msra.mxu0 0.0
  %367 = vmatprep.subr.mxu0 0.0
  %368 = vmatpush1.msra.mxu0 0.0
  %369 = vmatprep.subr.mxu0 0.0
  %370 = vmatpush1.msra.mxu0 0.0
  %371 = vmatprep.subr.mxu0 0.0
  %372 = vmatpush1.msra.mxu0 0.0
  %373 = vmatprep.subr.mxu0 0.0
  %374 = vmatpush1.msra.mxu0 0.0
  %375 = vmatprep.subr.mxu0 0.0
  %376 = vmatpush1.msra.mxu0 0.0
  %377 = vmatprep.subr.mxu0 0.0
  %378 = vmatpush1.msra.mxu0 0.0
  %379 = vmatprep.subr.mxu0 0.0
  %380 = vmatpush1.msra.mxu0 0.0
  %381 = vmatprep.subr.mxu0 0.0
  %382 = vmatpush1.msra.mxu0 0.0
  %383 = vmatprep.subr.mxu0 0.0
  %384 = vmatpush1.msra.mxu0 0.0
  %385 = vmatprep.subr.mxu0 0.0
  %386 = vmatpush1.msra.mxu0 0.0
  %387 = vmatprep.subr.mxu0 0.0
  %388 = vmatpush1.msra.mxu0 0.0
  %389 = vmatprep.subr.mxu0 0.0
  %390 = vmatpush1.msra.mxu0 0.0
  %391 = vmatprep.subr.mxu0 0.0
  %392 = vmatpush1.msra.mxu0 0.0
  %393 = vmatprep.subr.mxu0 0.0
  %394 = vmatpush1.msra.mxu0 0.0
  %395 = vmatprep.subr.mxu0 0.0
  %396 = vmatpush1.msra.mxu0 0.0
  %397 = vmatprep.subr.mxu0 0.0
  %398 = vmatpush1.msra.mxu0 0.0
  %399 = vmatprep.subr.mxu0 0.0
  %400 = vmatpush1.msra.mxu0 0.0
  %401 = vmatprep.subr.mxu0 0.0
  %402 = vmatpush1.msra.mxu0 0.0
  %403 = vmatprep.subr.mxu0 0.0
  %404 = vmatpush1.msra.mxu0 0.0
  %405 = vmatprep.subr.mxu0 0.0
  %406 = vmatpush1.msra.mxu0 0.0
  %407 = vmatprep.subr.mxu0 0.0
  %408 = vmatpush1.msra.mxu0 0.0
  %409 = vmatprep.mubr.f32.mxu0 0.0
  %410 = vmatmul.mubr.f32.gmra.mrb[0].mxu0 %v67
  %v411 = vpop.f32.mrb[0].mxu0
  %v412 = vadd.f32 %v48, %v411
  %v413 = vpop.f32.mrb[0].mxu0
  %v414 = vadd.f32 %v48, %v413
  %415 = vmatprep.mubr.f32.mxu0 0.0
  %416 = vmatmul.mubr.f32.gmra.mrb[0].mxu0 %v70
  %v417 = vpop.f32.mrb[0].mxu0
  %v418 = vadd.f32 %v53, %v417
  %v419 = vpop.f32.mrb[0].mxu0
  %v420 = vadd.f32 %v53, %v419
  %421 = vmatprep.mubr.f32.mxu0 0.0
  %422 = vmatmul.mubr.f32.gmra.mrb[0].mxu0 %v73
  %v423 = vpop.f32.mrb[0].mxu0
  %v424 = vadd.f32 %v58, %v423
  %v425 = vpop.f32.mrb[0].mxu0
  %v426 = vadd.f32 %v58, %v425
  %427 = vmatprep.mubr.f32.mxu0 0.0
  %428 = vmatmul.mubr.f32.gmra.mrb[0].mxu0 %v76
  %v429 = vpop.f32.mrb[0].mxu0
  %v430 = vadd.f32 %v63, %v429
  %v431 = vpop.f32.mrb[0].mxu0
  %v432 = vadd.f32 %v63, %v431
  %433 = vdwg.mxu0
  %v434 = vmax.f32 %v145, 0.0
  %v435 = vmax.f32 %v147, 0.0
  %v436 = vmax.f32 %v234, 0.0
  %v437 = vmax.f32 %v236, 0.0
  %v438 = vmax.f32 %v323, 0.0
  %v439 = vmax.f32 %v325, 0.0
  %v440 = vmax.f32 %v412, 0.0
  %v441 = vmax.f32 %v414, 0.0
  %v442 = vmax.f32 %v151, 0.0
  %v443 = vmax.f32 %v153, 0.0
  %v444 = vmax.f32 %v240, 0.0
  %v445 = vmax.f32 %v242, 0.0
  %v446 = vmax.f32 %v329, 0.0
  %v447 = vmax.f32 %v331, 0.0
  %v448 = vmax.f32 %v418, 0.0
  %v449 = vmax.f32 %v420, 0.0
  %v450 = vmax.f32 %v157, 0.0
  %v451 = vmax.f32 %v159, 0.0
  %v452 = vmax.f32 %v246, 0.0
  %v453 = vmax.f32 %v248, 0.0
  %v454 = vmax.f32 %v335, 0.0
  %v455 = vmax.f32 %v337, 0.0
  %v456 = vmax.f32 %v424, 0.0
  %v457 = vmax.f32 %v426, 0.0
  %v458 = vmax.f32 %v163, 0.0
  %v459 = vmax.f32 %v165, 0.0
  %v460 = vmax.f32 %v252, 0.0
  %v461 = vmax.f32 %v254, 0.0
  %v462 = vmax.f32 %v341, 0.0
  %v463 = vmax.f32 %v343, 0.0
  %v464 = vmax.f32 %v430, 0.0
  %v465 = vmax.f32 %v432, 0.0
  %v466 = vpack.c.bf16 %v442, %v434
  %v467 = vpack.c.bf16 %v443, %v435
  %v468 = vpack.c.bf16 %v444, %v436
  %v469 = vpack.c.bf16 %v445, %v437
  %v470 = vpack.c.bf16 %v446, %v438
  %v471 = vpack.c.bf16 %v447, %v439
  %v472 = vpack.c.bf16 %v448, %v440
  %v473 = vpack.c.bf16 %v449, %v441
  %v474 = vpack.c.bf16 %v458, %v450
  %v475 = vpack.c.bf16 %v459, %v451
  %v476 = vpack.c.bf16 %v460, %v452
  %v477 = vpack.c.bf16 %v461, %v453
  %v478 = vpack.c.bf16 %v462, %v454
  %v479 = vpack.c.bf16 %v463, %v455
  %v480 = vpack.c.bf16 %v464, %v456
  %v481 = vpack.c.bf16 %v465, %v457
  %482 = vst [vmem:[#allocation2] sm:$0xff] %v466
  %483 = vst [vmem:[#allocation2 + $0x8] sm:$0xff] %v467
  %484 = vst [vmem:[#allocation2 + $0x10] sm:$0xff] %v468
  %485 = vst [vmem:[#allocation2 + $0x18] sm:$0xff] %v469
  %486 = vst [vmem:[#allocation2 + $0x20] sm:$0xff] %v470
  %487 = vst [vmem:[#allocation2 + $0x28] sm:$0xff] %v471
  %488 = vst [vmem:[#allocation2 + $0x30] sm:$0xff] %v472
  %489 = vst [vmem:[#allocation2 + $0x38] sm:$0xff] %v473
  %490 = vst [vmem:[#allocation2 + $0x40] sm:$0xff] %v474
  %491 = vst [vmem:[#allocation2 + $0x48] sm:$0xff] %v475
  %492 = vst [vmem:[#allocation2 + $0x50] sm:$0xff] %v476
  %493 = vst [vmem:[#allocation2 + $0x58] sm:$0xff] %v477
  %494 = vst [vmem:[#allocation2 + $0x60] sm:$0xff] %v478
  %495 = vst [vmem:[#allocation2 + $0x68] sm:$0xff] %v479
  %496 = vst [vmem:[#allocation2 + $0x70] sm:$0xff] %v480
  %497 = vst [vmem:[#allocation2 + $0x78] sm:$0xff] %v481
  %v498 = vld [vmem:[%s1] sm:$0xff]
  %v499 = vld [vmem:[%s1 + $0x8] sm:$0xff]
  %v500 = vld [vmem:[%s1 + $0x10] sm:$0xff]
  %v501 = vld [vmem:[%s1 + $0x18] sm:$0xff]
  %s502 = scalar_lea.vmem %s0, 128
  %v503 = vld [vmem:[%s502] sm:$0xff]
  %v504 = vld [vmem:[%s502 + $0x8] sm:$0xff]
  %v505 = vld [vmem:[%s502 + $0x10] sm:$0xff]
  %v506 = vld [vmem:[%s502 + $0x18] sm:$0xff]
  %v507 = vld [vmem:[%s502 + $0x20] sm:$0xff]
  %v508 = vld [vmem:[%s502 + $0x28] sm:$0xff]
  %v509 = vld [vmem:[%s502 + $0x30] sm:$0xff]
  %v510 = vld [vmem:[%s502 + $0x38] sm:$0xff]
  %v511 = vld [vmem:[%s502 + $0x40] sm:$0xff]
  %v512 = vld [vmem:[%s502 + $0x48] sm:$0xff]
  %v513 = vld [vmem:[%s502 + $0x50] sm:$0xff]
  %v514 = vld [vmem:[%s502 + $0x58] sm:$0xff]
  %v515 = vld [vmem:[%s502 + $0x60] sm:$0xff]
  %v516 = vld [vmem:[%s502 + $0x68] sm:$0xff]
  %v517 = vld [vmem:[%s502 + $0x70] sm:$0xff]
  %v518 = vld [vmem:[%s502 + $0x78] sm:$0xff]
  %v519 = vld [vmem:[%s2] sm:$0xff]
  %v520 = vld [vmem:[%s2 + $0x8] sm:$0xff]
  %v521 = vld [vmem:[%s2 + $0x10] sm:$0xff]
  %v522 = vld [vmem:[%s2 + $0x18] sm:$0xff]
  %524 = vset.pattern.permute.xlu0 0
  %525 = vperm.xlu0 %524, %v519
  %v526 = vpop.permute.xlu0 %525
  %529 = vset.pattern.permute.xlu0 0
  %530 = vperm.xlu0 %529, %v520
  %v531 = vpop.permute.xlu0 %530
  %534 = vset.pattern.permute.xlu0 0
  %535 = vperm.xlu0 %534, %v521
  %v536 = vpop.permute.xlu0 %535
  %539 = vset.pattern.permute.xlu0 0
  %540 = vperm.xlu0 %539, %v522
  %v541 = vpop.permute.xlu0 %540
  %v544 = vsel %vm65, %v498, 0
  %v547 = vsel %vm65, %v499, 0
  %v550 = vsel %vm65, %v500, 0
  %v553 = vsel %vm65, %v501, 0
  %555 = vmatprep.subr.mxu0 %v504
  %556 = vmatpush1.msra.mxu0 %v503
  %557 = vmatprep.subr.mxu0 %v512
  %558 = vmatpush1.msra.mxu0 %v511
  %559 = vmatprep.subr.mxu0 0.0
  %560 = vmatpush1.msra.mxu0 0.0
  %561 = vmatprep.subr.mxu0 0.0
  %562 = vmatpush1.msra.mxu0 0.0
  %563 = vmatprep.subr.mxu0 0.0
  %564 = vmatpush1.msra.mxu0 0.0
  %565 = vmatprep.subr.mxu0 0.0
  %566 = vmatpush1.msra.mxu0 0.0
  %567 = vmatprep.subr.mxu0 0.0
  %568 = vmatpush1.msra.mxu0 0.0
  %569 = vmatprep.subr.mxu0 0.0
  %570 = vmatpush1.msra.mxu0 0.0
  %571 = vmatprep.subr.mxu0 0.0
  %572 = vmatpush1.msra.mxu0 0.0
  %573 = vmatprep.subr.mxu0 0.0
  %574 = vmatpush1.msra.mxu0 0.0
  %575 = vmatprep.subr.mxu0 0.0
  %576 = vmatpush1.msra.mxu0 0.0
  %577 = vmatprep.subr.mxu0 0.0
  %578 = vmatpush1.msra.mxu0 0.0
  %579 = vmatprep.subr.mxu0 0.0
  %580 = vmatpush1.msra.mxu0 0.0
  %581 = vmatprep.subr.mxu0 0.0
  %582 = vmatpush1.msra.mxu0 0.0
  %583 = vmatprep.subr.mxu0 0.0
  %584 = vmatpush1.msra.mxu0 0.0
  %585 = vmatprep.subr.mxu0 0.0
  %586 = vmatpush1.msra.mxu0 0.0
  %587 = vmatprep.subr.mxu0 0.0
  %588 = vmatpush1.msra.mxu0 0.0
  %589 = vmatprep.subr.mxu0 0.0
  %590 = vmatpush1.msra.mxu0 0.0
  %591 = vmatprep.subr.mxu0 0.0
  %592 = vmatpush1.msra.mxu0 0.0
  %593 = vmatprep.subr.mxu0 0.0
  %594 = vmatpush1.msra.mxu0 0.0
  %595 = vmatprep.subr.mxu0 0.0
  %596 = vmatpush1.msra.mxu0 0.0
  %597 = vmatprep.subr.mxu0 0.0
  %598 = vmatpush1.msra.mxu0 0.0
  %599 = vmatprep.subr.mxu0 0.0
  %600 = vmatpush1.msra.mxu0 0.0
  %601 = vmatprep.subr.mxu0 0.0
  %602 = vmatpush1.msra.mxu0 0.0
  %603 = vmatprep.subr.mxu0 0.0
  %604 = vmatpush1.msra.mxu0 0.0
  %605 = vmatprep.subr.mxu0 0.0
  %606 = vmatpush1.msra.mxu0 0.0
  %607 = vmatprep.subr.mxu0 0.0
  %608 = vmatpush1.msra.mxu0 0.0
  %609 = vmatprep.subr.mxu0 0.0
  %610 = vmatpush1.msra.mxu0 0.0
  %611 = vmatprep.subr.mxu0 0.0
  %612 = vmatpush1.msra.mxu0 0.0
  %613 = vmatprep.subr.mxu0 0.0
  %614 = vmatpush1.msra.mxu0 0.0
  %615 = vmatprep.subr.mxu0 0.0
  %616 = vmatpush1.msra.mxu0 0.0
  %617 = vmatprep.subr.mxu0 0.0
  %618 = vmatpush1.msra.mxu0 0.0
  %619 = vmatprep.mubr.f32.mxu0 0.0
  %620 = vmatmul.mubr.f32.gmra.mrb[0].mxu0 %v544
  %v621 = vpop.f32.mrb[0].mxu0
  %v622 = vadd.f32 %v526, %v621
  %v623 = vpop.f32.mrb[0].mxu0
  %v624 = vadd.f32 %v526, %v623
  %625 = vmatprep.mubr.f32.mxu0 0.0
  %626 = vmatmul.mubr.f32.gmra.mrb[0].mxu0 %v547
  %v627 = vpop.f32.mrb[0].mxu0
  %v628 = vadd.f32 %v531, %v627
  %v629 = vpop.f32.mrb[0].mxu0
  %v630 = vadd.f32 %v531, %v629
  %631 = vmatprep.mubr.f32.mxu0 0.0
  %632 = vmatmul.mubr.f32.gmra.mrb[0].mxu0 %v550
  %v633 = vpop.f32.mrb[0].mxu0
  %v634 = vadd.f32 %v536, %v633
  %v635 = vpop.f32.mrb[0].mxu0
  %v636 = vadd.f32 %v536, %v635
  %637 = vmatprep.mubr.f32.mxu0 0.0
  %638 = vmatmul.mubr.f32.gmra.mrb[0].mxu0 %v553
  %v639 = vpop.f32.mrb[0].mxu0
  %v640 = vadd.f32 %v541, %v639
  %v641 = vpop.f32.mrb[0].mxu0
  %v642 = vadd.f32 %v541, %v641
  %643 = vdwg.mxu0
  %644 = vmatprep.subr.mxu0 %v506
  %645 = vmatpush1.msra.mxu0 %v505
  %646 = vmatprep.subr.mxu0 %v514
  %647 = vmatpush1.msra.mxu0 %v513
  %648 = vmatprep.subr.mxu0 0.0
  %649 = vmatpush1.msra.mxu0 0.0
  %650 = vmatprep.subr.mxu0 0.0
  %651 = vmatpush1.msra.mxu0 0.0
  %652 = vmatprep.subr.mxu0 0.0
  %653 = vmatpush1.msra.mxu0 0.0
  %654 = vmatprep.subr.mxu0 0.0
  %655 = vmatpush1.msra.mxu0 0.0
  %656 = vmatprep.subr.mxu0 0.0
  %657 = vmatpush1.msra.mxu0 0.0
  %658 = vmatprep.subr.mxu0 0.0
  %659 = vmatpush1.msra.mxu0 0.0
  %660 = vmatprep.subr.mxu0 0.0
  %661 = vmatpush1.msra.mxu0 0.0
  %662 = vmatprep.subr.mxu0 0.0
  %663 = vmatpush1.msra.mxu0 0.0
  %664 = vmatprep.subr.mxu0 0.0
  %665 = vmatpush1.msra.mxu0 0.0
  %666 = vmatprep.subr.mxu0 0.0
  %667 = vmatpush1.msra.mxu0 0.0
  %668 = vmatprep.subr.mxu0 0.0
  %669 = vmatpush1.msra.mxu0 0.0
  %670 = vmatprep.subr.mxu0 0.0
  %671 = vmatpush1.msra.mxu0 0.0
  %672 = vmatprep.subr.mxu0 0.0
  %673 = vmatpush1.msra.mxu0 0.0
  %674 = vmatprep.subr.mxu0 0.0
  %675 = vmatpush1.msra.mxu0 0.0
  %676 = vmatprep.subr.mxu0 0.0
  %677 = vmatpush1.msra.mxu0 0.0
  %678 = vmatprep.subr.mxu0 0.0
  %679 = vmatpush1.msra.mxu0 0.0
  %680 = vmatprep.subr.mxu0 0.0
  %681 = vmatpush1.msra.mxu0 0.0
  %682 = vmatprep.subr.mxu0 0.0
  %683 = vmatpush1.msra.mxu0 0.0
  %684 = vmatprep.subr.mxu0 0.0
  %685 = vmatpush1.msra.mxu0 0.0
  %686 = vmatprep.subr.mxu0 0.0
  %687 = vmatpush1.msra.mxu0 0.0
  %688 = vmatprep.subr.mxu0 0.0
  %689 = vmatpush1.msra.mxu0 0.0
  %690 = vmatprep.subr.mxu0 0.0
  %691 = vmatpush1.msra.mxu0 0.0
  %692 = vmatprep.subr.mxu0 0.0
  %693 = vmatpush1.msra.mxu0 0.0
  %694 = vmatprep.subr.mxu0 0.0
  %695 = vmatpush1.msra.mxu0 0.0
  %696 = vmatprep.subr.mxu0 0.0
  %697 = vmatpush1.msra.mxu0 0.0
  %698 = vmatprep.subr.mxu0 0.0
  %699 = vmatpush1.msra.mxu0 0.0
  %700 = vmatprep.subr.mxu0 0.0
  %701 = vmatpush1.msra.mxu0 0.0
  %702 = vmatprep.subr.mxu0 0.0
  %703 = vmatpush1.msra.mxu0 0.0
  %704 = vmatprep.subr.mxu0 0.0
  %705 = vmatpush1.msra.mxu0 0.0
  %706 = vmatprep.subr.mxu0 0.0
  %707 = vmatpush1.msra.mxu0 0.0
  %708 = vmatprep.mubr.f32.mxu0 0.0
  %709 = vmatmul.mubr.f32.gmra.mrb[0].mxu0 %v544
  %v710 = vpop.f32.mrb[0].mxu0
  %v711 = vadd.f32 %v526, %v710
  %v712 = vpop.f32.mrb[0].mxu0
  %v713 = vadd.f32 %v526, %v712
  %714 = vmatprep.mubr.f32.mxu0 0.0
  %715 = vmatmul.mubr.f32.gmra.mrb[0].mxu0 %v547
  %v716 = vpop.f32.mrb[0].mxu0
  %v717 = vadd.f32 %v531, %v716
  %v718 = vpop.f32.mrb[0].mxu0
  %v719 = vadd.f32 %v531, %v718
  %720 = vmatprep.mubr.f32.mxu0 0.0
  %721 = vmatmul.mubr.f32.gmra.mrb[0].mxu0 %v550
  %v722 = vpop.f32.mrb[0].mxu0
  %v723 = vadd.f32 %v536, %v722
  %v724 = vpop.f32.mrb[0].mxu0
  %v725 = vadd.f32 %v536, %v724
  %726 = vmatprep.mubr.f32.mxu0 0.0
  %727 = vmatmul.mubr.f32.gmra.mrb[0].mxu0 %v553
  %v728 = vpop.f32.mrb[0].mxu0
  %v729 = vadd.f32 %v541, %v728
  %v730 = vpop.f32.mrb[0].mxu0
  %v731 = vadd.f32 %v541, %v730
  %732 = vdwg.mxu0
  %733 = vmatprep.subr.mxu0 %v508
  %734 = vmatpush1.msra.mxu0 %v507
  %735 = vmatprep.subr.mxu0 %v516
  %736 = vmatpush1.msra.mxu0 %v515
  %737 = vmatprep.subr.mxu0 0.0
  %738 = vmatpush1.msra.mxu0 0.0
  %739 = vmatprep.subr.mxu0 0.0
  %740 = vmatpush1.msra.mxu0 0.0
  %741 = vmatprep.subr.mxu0 0.0
  %742 = vmatpush1.msra.mxu0 0.0
  %743 = vmatprep.subr.mxu0 0.0
  %744 = vmatpush1.msra.mxu0 0.0
  %745 = vmatprep.subr.mxu0 0.0
  %746 = vmatpush1.msra.mxu0 0.0
  %747 = vmatprep.subr.mxu0 0.0
  %748 = vmatpush1.msra.mxu0 0.0
  %749 = vmatprep.subr.mxu0 0.0
  %750 = vmatpush1.msra.mxu0 0.0
  %751 = vmatprep.subr.mxu0 0.0
  %752 = vmatpush1.msra.mxu0 0.0
  %753 = vmatprep.subr.mxu0 0.0
  %754 = vmatpush1.msra.mxu0 0.0
  %755 = vmatprep.subr.mxu0 0.0
  %756 = vmatpush1.msra.mxu0 0.0
  %757 = vmatprep.subr.mxu0 0.0
  %758 = vmatpush1.msra.mxu0 0.0
  %759 = vmatprep.subr.mxu0 0.0
  %760 = vmatpush1.msra.mxu0 0.0
  %761 = vmatprep.subr.mxu0 0.0
  %762 = vmatpush1.msra.mxu0 0.0
  %763 = vmatprep.subr.mxu0 0.0
  %764 = vmatpush1.msra.mxu0 0.0
  %765 = vmatprep.subr.mxu0 0.0
  %766 = vmatpush1.msra.mxu0 0.0
  %767 = vmatprep.subr.mxu0 0.0
  %768 = vmatpush1.msra.mxu0 0.0
  %769 = vmatprep.subr.mxu0 0.0
  %770 = vmatpush1.msra.mxu0 0.0
  %771 = vmatprep.subr.mxu0 0.0
  %772 = vmatpush1.msra.mxu0 0.0
  %773 = vmatprep.subr.mxu0 0.0
  %774 = vmatpush1.msra.mxu0 0.0
  %775 = vmatprep.subr.mxu0 0.0
  %776 = vmatpush1.msra.mxu0 0.0
  %777 = vmatprep.subr.mxu0 0.0
  %778 = vmatpush1.msra.mxu0 0.0
  %779 = vmatprep.subr.mxu0 0.0
  %780 = vmatpush1.msra.mxu0 0.0
  %781 = vmatprep.subr.mxu0 0.0
  %782 = vmatpush1.msra.mxu0 0.0
  %783 = vmatprep.subr.mxu0 0.0
  %784 = vmatpush1.msra.mxu0 0.0
  %785 = vmatprep.subr.mxu0 0.0
  %786 = vmatpush1.msra.mxu0 0.0
  %787 = vmatprep.subr.mxu0 0.0
  %788 = vmatpush1.msra.mxu0 0.0
  %789 = vmatprep.subr.mxu0 0.0
  %790 = vmatpush1.msra.mxu0 0.0
  %791 = vmatprep.subr.mxu0 0.0
  %792 = vmatpush1.msra.mxu0 0.0
  %793 = vmatprep.subr.mxu0 0.0
  %794 = vmatpush1.msra.mxu0 0.0
  %795 = vmatprep.subr.mxu0 0.0
  %796 = vmatpush1.msra.mxu0 0.0
  %797 = vmatprep.mubr.f32.mxu0 0.0
  %798 = vmatmul.mubr.f32.gmra.mrb[0].mxu0 %v544
  %v799 = vpop.f32.mrb[0].mxu0
  %v800 = vadd.f32 %v526, %v799
  %v801 = vpop.f32.mrb[0].mxu0
  %v802 = vadd.f32 %v526, %v801
  %803 = vmatprep.mubr.f32.mxu0 0.0
  %804 = vmatmul.mubr.f32.gmra.mrb[0].mxu0 %v547
  %v805 = vpop.f32.mrb[0].mxu0
  %v806 = vadd.f32 %v531, %v805
  %v807 = vpop.f32.mrb[0].mxu0
  %v808 = vadd.f32 %v531, %v807
  %809 = vmatprep.mubr.f32.mxu0 0.0
  %810 = vmatmul.mubr.f32.gmra.mrb[0].mxu0 %v550
  %v811 = vpop.f32.mrb[0].mxu0
  %v812 = vadd.f32 %v536, %v811
  %v813 = vpop.f32.mrb[0].mxu0
  %v814 = vadd.f32 %v536, %v813
  %815 = vmatprep.mubr.f32.mxu0 0.0
  %816 = vmatmul.mubr.f32.gmra.mrb[0].mxu0 %v553
  %v817 = vpop.f32.mrb[0].mxu0
  %v818 = vadd.f32 %v541, %v817
  %v819 = vpop.f32.mrb[0].mxu0
  %v820 = vadd.f32 %v541, %v819
  %821 = vdwg.mxu0
  %822 = vmatprep.subr.mxu0 %v510
  %823 = vmatpush1.msra.mxu0 %v509
  %824 = vmatprep.subr.mxu0 %v518
  %825 = vmatpush1.msra.mxu0 %v517
  %826 = vmatprep.subr.mxu0 0.0
  %827 = vmatpush1.msra.mxu0 0.0
  %828 = vmatprep.subr.mxu0 0.0
  %829 = vmatpush1.msra.mxu0 0.0
  %830 = vmatprep.subr.mxu0 0.0
  %831 = vmatpush1.msra.mxu0 0.0
  %832 = vmatprep.subr.mxu0 0.0
  %833 = vmatpush1.msra.mxu0 0.0
  %834 = vmatprep.subr.mxu0 0.0
  %835 = vmatpush1.msra.mxu0 0.0
  %836 = vmatprep.subr.mxu0 0.0
  %837 = vmatpush1.msra.mxu0 0.0
  %838 = vmatprep.subr.mxu0 0.0
  %839 = vmatpush1.msra.mxu0 0.0
  %840 = vmatprep.subr.mxu0 0.0
  %841 = vmatpush1.msra.mxu0 0.0
  %842 = vmatprep.subr.mxu0 0.0
  %843 = vmatpush1.msra.mxu0 0.0
  %844 = vmatprep.subr.mxu0 0.0
  %845 = vmatpush1.msra.mxu0 0.0
  %846 = vmatprep.subr.mxu0 0.0
  %847 = vmatpush1.msra.mxu0 0.0
  %848 = vmatprep.subr.mxu0 0.0
  %849 = vmatpush1.msra.mxu0 0.0
  %850 = vmatprep.subr.mxu0 0.0
  %851 = vmatpush1.msra.mxu0 0.0
  %852 = vmatprep.subr.mxu0 0.0
  %853 = vmatpush1.msra.mxu0 0.0
  %854 = vmatprep.subr.mxu0 0.0
  %855 = vmatpush1.msra.mxu0 0.0
  %856 = vmatprep.subr.mxu0 0.0
  %857 = vmatpush1.msra.mxu0 0.0
  %858 = vmatprep.subr.mxu0 0.0
  %859 = vmatpush1.msra.mxu0 0.0
  %860 = vmatprep.subr.mxu0 0.0
  %861 = vmatpush1.msra.mxu0 0.0
  %862 = vmatprep.subr.mxu0 0.0
  %863 = vmatpush1.msra.mxu0 0.0
  %864 = vmatprep.subr.mxu0 0.0
  %865 = vmatpush1.msra.mxu0 0.0
  %866 = vmatprep.subr.mxu0 0.0
  %867 = vmatpush1.msra.mxu0 0.0
  %868 = vmatprep.subr.mxu0 0.0
  %869 = vmatpush1.msra.mxu0 0.0
  %870 = vmatprep.subr.mxu0 0.0
  %871 = vmatpush1.msra.mxu0 0.0
  %872 = vmatprep.subr.mxu0 0.0
  %873 = vmatpush1.msra.mxu0 0.0
  %874 = vmatprep.subr.mxu0 0.0
  %875 = vmatpush1.msra.mxu0 0.0
  %876 = vmatprep.subr.mxu0 0.0
  %877 = vmatpush1.msra.mxu0 0.0
  %878 = vmatprep.subr.mxu0 0.0
  %879 = vmatpush1.msra.mxu0 0.0
  %880 = vmatprep.subr.mxu0 0.0
  %881 = vmatpush1.msra.mxu0 0.0
  %882 = vmatprep.subr.mxu0 0.0
  %883 = vmatpush1.msra.mxu0 0.0
  %884 = vmatprep.subr.mxu0 0.0
  %885 = vmatpush1.msra.mxu0 0.0
  %886 = vmatprep.mubr.f32.mxu0 0.0
  %887 = vmatmul.mubr.f32.gmra.mrb[0].mxu0 %v544
  %v888 = vpop.f32.mrb[0].mxu0
  %v889 = vadd.f32 %v526, %v888
  %v890 = vpop.f32.mrb[0].mxu0
  %v891 = vadd.f32 %v526, %v890
  %892 = vmatprep.mubr.f32.mxu0 0.0
  %893 = vmatmul.mubr.f32.gmra.mrb[0].mxu0 %v547
  %v894 = vpop.f32.mrb[0].mxu0
  %v895 = vadd.f32 %v531, %v894
  %v896 = vpop.f32.mrb[0].mxu0
  %v897 = vadd.f32 %v531, %v896
  %898 = vmatprep.mubr.f32.mxu0 0.0
  %899 = vmatmul.mubr.f32.gmra.mrb[0].mxu0 %v550
  %v900 = vpop.f32.mrb[0].mxu0
  %v901 = vadd.f32 %v536, %v900
  %v902 = vpop.f32.mrb[0].mxu0
  %v903 = vadd.f32 %v536, %v902
  %904 = vmatprep.mubr.f32.mxu0 0.0
  %905 = vmatmul.mubr.f32.gmra.mrb[0].mxu0 %v553
  %v906 = vpop.f32.mrb[0].mxu0
  %v907 = vadd.f32 %v541, %v906
  %v908 = vpop.f32.mrb[0].mxu0
  %v909 = vadd.f32 %v541, %v908
  %910 = vdwg.mxu0
  %v911 = vmax.f32 %v622, 0.0
  %v912 = vmax.f32 %v624, 0.0
  %v913 = vmax.f32 %v711, 0.0
  %v914 = vmax.f32 %v713, 0.0
  %v915 = vmax.f32 %v800, 0.0
  %v916 = vmax.f32 %v802, 0.0
  %v917 = vmax.f32 %v889, 0.0
  %v918 = vmax.f32 %v891, 0.0
  %v919 = vmax.f32 %v628, 0.0
  %v920 = vmax.f32 %v630, 0.0
  %v921 = vmax.f32 %v717, 0.0
  %v922 = vmax.f32 %v719, 0.0
  %v923 = vmax.f32 %v806, 0.0
  %v924 = vmax.f32 %v808, 0.0
  %v925 = vmax.f32 %v895, 0.0
  %v926 = vmax.f32 %v897, 0.0
  %v927 = vmax.f32 %v634, 0.0
  %v928 = vmax.f32 %v636, 0.0
  %v929 = vmax.f32 %v723, 0.0
  %v930 = vmax.f32 %v725, 0.0
  %v931 = vmax.f32 %v812, 0.0
  %v932 = vmax.f32 %v814, 0.0
  %v933 = vmax.f32 %v901, 0.0
  %v934 = vmax.f32 %v903, 0.0
  %v935 = vmax.f32 %v640, 0.0
  %v936 = vmax.f32 %v642, 0.0
  %v937 = vmax.f32 %v729, 0.0
  %v938 = vmax.f32 %v731, 0.0
  %v939 = vmax.f32 %v818, 0.0
  %v940 = vmax.f32 %v820, 0.0
  %v941 = vmax.f32 %v907, 0.0
  %v942 = vmax.f32 %v909, 0.0
  %v943 = vpack.c.bf16 %v919, %v911
  %v944 = vpack.c.bf16 %v920, %v912
  %v945 = vpack.c.bf16 %v921, %v913
  %v946 = vpack.c.bf16 %v922, %v914
  %v947 = vpack.c.bf16 %v923, %v915
  %v948 = vpack.c.bf16 %v924, %v916
  %v949 = vpack.c.bf16 %v925, %v917
  %v950 = vpack.c.bf16 %v926, %v918
  %v951 = vpack.c.bf16 %v935, %v927
  %v952 = vpack.c.bf16 %v936, %v928
  %v953 = vpack.c.bf16 %v937, %v929
  %v954 = vpack.c.bf16 %v938, %v930
  %v955 = vpack.c.bf16 %v939, %v931
  %v956 = vpack.c.bf16 %v940, %v932
  %v957 = vpack.c.bf16 %v941, %v933
  %v958 = vpack.c.bf16 %v942, %v934
  %s959 = scalar_lea.vmem [#allocation2], 128
  %960 = vst [vmem:[%s959] sm:$0xff] %v943
  %961 = vst [vmem:[%s959 + $0x8] sm:$0xff] %v944
  %962 = vst [vmem:[%s959 + $0x10] sm:$0xff] %v945
  %963 = vst [vmem:[%s959 + $0x18] sm:$0xff] %v946
  %964 = vst [vmem:[%s959 + $0x20] sm:$0xff] %v947
  %965 = vst [vmem:[%s959 + $0x28] sm:$0xff] %v948
  %966 = vst [vmem:[%s959 + $0x30] sm:$0xff] %v949
  %967 = vst [vmem:[%s959 + $0x38] sm:$0xff] %v950
  %968 = vst [vmem:[%s959 + $0x40] sm:$0xff] %v951
  %969 = vst [vmem:[%s959 + $0x48] sm:$0xff] %v952
  %970 = vst [vmem:[%s959 + $0x50] sm:$0xff] %v953
  %971 = vst [vmem:[%s959 + $0x58] sm:$0xff] %v954
  %972 = vst [vmem:[%s959 + $0x60] sm:$0xff] %v955
  %973 = vst [vmem:[%s959 + $0x68] sm:$0xff] %v956
  %974 = vst [vmem:[%s959 + $0x70] sm:$0xff] %v957
  %975 = vst [vmem:[%s959 + $0x78] sm:$0xff] %v958
  %v976 = vld [vmem:[#allocation2] sm:$0x1]
  %v977 = vld [vmem:[#allocation2 + $0x8] sm:$0x1]
  %v978 = vld [vmem:[#allocation2 + $0x10] sm:$0x1]
  %v979 = vld [vmem:[#allocation2 + $0x18] sm:$0x1]
  %v980 = vld [vmem:[#allocation2 + $0x20] sm:$0x1]
  %v981 = vld [vmem:[#allocation2 + $0x28] sm:$0x1]
  %v982 = vld [vmem:[#allocation2 + $0x30] sm:$0x1]
  %v983 = vld [vmem:[#allocation2 + $0x38] sm:$0x1]
  %v984 = vld [vmem:[#allocation2 + $0x80] sm:$0x1]
  %v985 = vld [vmem:[#allocation2 + $0x88] sm:$0x1]
  %v986 = vld [vmem:[#allocation2 + $0x90] sm:$0x1]
  %v987 = vld [vmem:[#allocation2 + $0x98] sm:$0x1]
  %v988 = vld [vmem:[#allocation2 + $0xa0] sm:$0x1]
  %v989 = vld [vmem:[#allocation2 + $0xa8] sm:$0x1]
  %v990 = vld [vmem:[#allocation2 + $0xb0] sm:$0x1]
  %v991 = vld [vmem:[#allocation2 + $0xb8] sm:$0x1]
  %v992 = vld [vmem:[%s3] sm:$0xff]
  %v993 = vld [vmem:[%s3 + $0x8] sm:$0xff]
  %v994 = vld [vmem:[%s3 + $0x10] sm:$0xff]
  %v995 = vld [vmem:[%s3 + $0x18] sm:$0xff]
  %v996 = vld [vmem:[%s3 + $0x20] sm:$0xff]
  %v997 = vld [vmem:[%s3 + $0x28] sm:$0xff]
  %v998 = vld [vmem:[%s3 + $0x30] sm:$0xff]
  %v999 = vld [vmem:[%s3 + $0x38] sm:$0xff]
  %s1000 = scalar_lea.vmem %s3, 64
  %v1001 = vld [vmem:[%s1000] sm:$0xff]
  %v1002 = vld [vmem:[%s1000 + $0x8] sm:$0xff]
  %v1003 = vld [vmem:[%s1000 + $0x10] sm:$0xff]
  %v1004 = vld [vmem:[%s1000 + $0x18] sm:$0xff]
  %v1005 = vld [vmem:[%s1000 + $0x20] sm:$0xff]
  %v1006 = vld [vmem:[%s1000 + $0x28] sm:$0xff]
  %v1007 = vld [vmem:[%s1000 + $0x30] sm:$0xff]
  %v1008 = vld [vmem:[%s1000 + $0x38] sm:$0xff]
  %v1025 = vunpack.c.l.b16 %v976
  %v1026 = vunpack.c.l.b16 %v977
  %v1027 = vunpack.c.l.b16 %v978
  %v1028 = vunpack.c.l.b16 %v979
  %v1029 = vunpack.c.l.b16 %v980
  %v1030 = vunpack.c.l.b16 %v981
  %v1031 = vunpack.c.l.b16 %v982
  %v1032 = vunpack.c.l.b16 %v983
  %v1033 = vunpack.c.l.b16 %v984
  %v1034 = vunpack.c.l.b16 %v985
  %v1035 = vunpack.c.l.b16 %v986
  %v1036 = vunpack.c.l.b16 %v987
  %v1037 = vunpack.c.l.b16 %v988
  %v1038 = vunpack.c.l.b16 %v989
  %v1039 = vunpack.c.l.b16 %v990
  %v1040 = vunpack.c.l.b16 %v991
  %v1041 = vrot.slane %v1025, 1
  %vm1042 = vcmask 1041409
  %v1043 = vsel %vm1042, %v1033, %v1041
  %v1044 = vrot.slane %v1026, 1
  %v1045 = vsel %vm1042, %v1034, %v1044
  %v1046 = vrot.slane %v1027, 1
  %v1047 = vsel %vm1042, %v1035, %v1046
  %v1048 = vrot.slane %v1028, 1
  %v1049 = vsel %vm1042, %v1036, %v1048
  %v1050 = vrot.slane %v1029, 1
  %v1051 = vsel %vm1042, %v1037, %v1050
  %v1052 = vrot.slane %v1030, 1
  %v1053 = vsel %vm1042, %v1038, %v1052
  %v1054 = vrot.slane %v1031, 1
  %v1055 = vsel %vm1042, %v1039, %v1054
  %v1056 = vrot.slane %v1032, 1
  %v1057 = vsel %vm1042, %v1040, %v1056
  %v1058 = vpack.c.b16 %v1043, %v1043
  %v1059 = vpack.c.b16 %v1045, %v1045
  %v1060 = vpack.c.b16 %v1047, %v1047
  %v1061 = vpack.c.b16 %v1049, %v1049
  %v1062 = vpack.c.b16 %v1051, %v1051
  %v1063 = vpack.c.b16 %v1053, %v1053
  %v1064 = vpack.c.b16 %v1055, %v1055
  %v1065 = vpack.c.b16 %v1057, %v1057
  %v1082 = vunpack.c.l.b16 %v1001
  %v1083 = vunpack.c.h.b16 %v1001
  %v1084 = vunpack.c.l.b16 %v1002
  %v1085 = vunpack.c.h.b16 %v1002
  %v1086 = vunpack.c.l.b16 %v1003
  %v1087 = vunpack.c.h.b16 %v1003
  %v1088 = vunpack.c.l.b16 %v1004
  %v1089 = vunpack.c.h.b16 %v1004
  %v1090 = vunpack.c.l.b16 %v1005
  %v1091 = vunpack.c.h.b16 %v1005
  %v1092 = vunpack.c.l.b16 %v1006
  %v1093 = vunpack.c.h.b16 %v1006
  %v1094 = vunpack.c.l.b16 %v1007
  %v1095 = vunpack.c.h.b16 %v1007
  %v1096 = vunpack.c.l.b16 %v1008
  %v1097 = vunpack.c.h.b16 %v1008
  %v1098 = vpack.c.b16 %v1090, %v1082
  %v1099 = vpack.c.b16 %v1091, %v1083
  %v1100 = vpack.c.b16 %v1092, %v1084
  %v1101 = vpack.c.b16 %v1093, %v1085
  %v1102 = vpack.c.b16 %v1094, %v1086
  %v1103 = vpack.c.b16 %v1095, %v1087
  %v1104 = vpack.c.b16 %v1096, %v1088
  %v1105 = vpack.c.b16 %v1097, %v1089
  %1114 = vmatprep.subr.bf16.mxu0 %v1099
  %1115 = vmatpush1.bf16.xpose.msra.mxu0 %v1098
  %1116 = vmatprep.subr.bf16.mxu0 0
  %1117 = vmatpush1.bf16.xpose.msra.mxu0 0
  %1118 = vmatprep.subr.bf16.mxu0 0
  %1119 = vmatpush1.bf16.xpose.msra.mxu0 0
  %1120 = vmatprep.subr.bf16.mxu0 0
  %1121 = vmatpush1.bf16.xpose.msra.mxu0 0
  %1122 = vmatprep.subr.bf16.mxu0 0
  %1123 = vmatpush1.bf16.xpose.msra.mxu0 0
  %1124 = vmatprep.subr.bf16.mxu0 0
  %1125 = vmatpush1.bf16.xpose.msra.mxu0 0
  %1126 = vmatprep.subr.bf16.mxu0 0
  %1127 = vmatpush1.bf16.xpose.msra.mxu0 0
  %1128 = vmatprep.subr.bf16.mxu0 0
  %1129 = vmatpush1.bf16.xpose.msra.mxu0 0
  %1130 = vmatprep.subr.bf16.mxu0 0
  %1131 = vmatpush1.bf16.xpose.msra.mxu0 0
  %1132 = vmatprep.subr.bf16.mxu0 0
  %1133 = vmatpush1.bf16.xpose.msra.mxu0 0
  %1134 = vmatprep.subr.bf16.mxu0 0
  %1135 = vmatpush1.bf16.xpose.msra.mxu0 0
  %1136 = vmatprep.subr.bf16.mxu0 0
  %1137 = vmatpush1.bf16.xpose.msra.mxu0 0
  %1138 = vmatprep.subr.bf16.mxu0 0
  %1139 = vmatpush1.bf16.xpose.msra.mxu0 0
  %1140 = vmatprep.subr.bf16.mxu0 0
  %1141 = vmatpush1.bf16.xpose.msra.mxu0 0
  %1142 = vmatprep.subr.bf16.mxu0 0
  %1143 = vmatpush1.bf16.xpose.msra.mxu0 0
  %1144 = vmatprep.subr.bf16.mxu0 0
  %1145 = vmatpush1.bf16.xpose.msra.mxu0 0
  %1146 = vmatprep.mubr.bf16.mxu0 %v1059
  %1147 = vmatmul.mubr.bf16.gmra.mrb[0].mxu0 %v1058
  %v1148 = vpop.f32.mrb[0].mxu0
  %v1149 = vadd.f32 0.0, %v1148
  %v1150 = vpop.f32.mrb[0].mxu0
  %v1151 = vpop.f32.mrb[0].mxu0
  %v1152 = vpop.f32.mrb[0].mxu0
  %1153 = vdwg.mxu0
  %1154 = vmatprep.subr.bf16.mxu0 %v1101
  %1155 = vmatpush1.bf16.xpose.msra.mxu0 %v1100
  %1156 = vmatprep.subr.bf16.mxu0 0
  %1157 = vmatpush1.bf16.xpose.msra.mxu0 0
  %1158 = vmatprep.subr.bf16.mxu0 0
  %1159 = vmatpush1.bf16.xpose.msra.mxu0 0
  %1160 = vmatprep.subr.bf16.mxu0 0
  %1161 = vmatpush1.bf16.xpose.msra.mxu0 0
  %1162 = vmatprep.subr.bf16.mxu0 0
  %1163 = vmatpush1.bf16.xpose.msra.mxu0 0
  %1164 = vmatprep.subr.bf16.mxu0 0
  %1165 = vmatpush1.bf16.xpose.msra.mxu0 0
  %1166 = vmatprep.subr.bf16.mxu0 0
  %1167 = vmatpush1.bf16.xpose.msra.mxu0 0
  %1168 = vmatprep.subr.bf16.mxu0 0
  %1169 = vmatpush1.bf16.xpose.msra.mxu0 0
  %1170 = vmatprep.subr.bf16.mxu0 0
  %1171 = vmatpush1.bf16.xpose.msra.mxu0 0
  %1172 = vmatprep.subr.bf16.mxu0 0
  %1173 = vmatpush1.bf16.xpose.msra.mxu0 0
  %1174 = vmatprep.subr.bf16.mxu0 0
  %1175 = vmatpush1.bf16.xpose.msra.mxu0 0
  %1176 = vmatprep.subr.bf16.mxu0 0
  %1177 = vmatpush1.bf16.xpose.msra.mxu0 0
  %1178 = vmatprep.subr.bf16.mxu0 0
  %1179 = vmatpush1.bf16.xpose.msra.mxu0 0
  %1180 = vmatprep.subr.bf16.mxu0 0
  %1181 = vmatpush1.bf16.xpose.msra.mxu0 0
  %1182 = vmatprep.subr.bf16.mxu0 0
  %1183 = vmatpush1.bf16.xpose.msra.mxu0 0
  %1184 = vmatprep.subr.bf16.mxu0 0
  %1185 = vmatpush1.bf16.xpose.msra.mxu0 0
  %1186 = vmatprep.mubr.bf16.mxu0 %v1061
  %1187 = vmatmul.mubr.bf16.gmra.mrb[0].mxu0 %v1060
  %v1188 = vpop.f32.mrb[0].mxu0
  %v1189 = vadd.f32 %v1149, %v1188
  %v1190 = vpop.f32.mrb[0].mxu0
  %v1191 = vpop.f32.mrb[0].mxu0
  %v1192 = vpop.f32.mrb[0].mxu0
  %1193 = vdwg.mxu0
  %1194 = vmatprep.subr.bf16.mxu0 %v1103
  %1195 = vmatpush1.bf16.xpose.msra.mxu0 %v1102
  %1196 = vmatprep.subr.bf16.mxu0 0
  %1197 = vmatpush1.bf16.xpose.msra.mxu0 0
  %1198 = vmatprep.subr.bf16.mxu0 0
  %1199 = vmatpush1.bf16.xpose.msra.mxu0 0
  %1200 = vmatprep.subr.bf16.mxu0 0
  %1201 = vmatpush1.bf16.xpose.msra.mxu0 0
  %1202 = vmatprep.subr.bf16.mxu0 0
  %1203 = vmatpush1.bf16.xpose.msra.mxu0 0
  %1204 = vmatprep.subr.bf16.mxu0 0
  %1205 = vmatpush1.bf16.xpose.msra.mxu0 0
  %1206 = vmatprep.subr.bf16.mxu0 0
  %1207 = vmatpush1.bf16.xpose.msra.mxu0 0
  %1208 = vmatprep.subr.bf16.mxu0 0
  %1209 = vmatpush1.bf16.xpose.msra.mxu0 0
  %1210 = vmatprep.subr.bf16.mxu0 0
  %1211 = vmatpush1.bf16.xpose.msra.mxu0 0
  %1212 = vmatprep.subr.bf16.mxu0 0
  %1213 = vmatpush1.bf16.xpose.msra.mxu0 0
  %1214 = vmatprep.subr.bf16.mxu0 0
  %1215 = vmatpush1.bf16.xpose.msra.mxu0 0
  %1216 = vmatprep.subr.bf16.mxu0 0
  %1217 = vmatpush1.bf16.xpose.msra.mxu0 0
  %1218 = vmatprep.subr.bf16.mxu0 0
  %1219 = vmatpush1.bf16.xpose.msra.mxu0 0
  %1220 = vmatprep.subr.bf16.mxu0 0
  %1221 = vmatpush1.bf16.xpose.msra.mxu0 0
  %1222 = vmatprep.subr.bf16.mxu0 0
  %1223 = vmatpush1.bf16.xpose.msra.mxu0 0
  %1224 = vmatprep.subr.bf16.mxu0 0
  %1225 = vmatpush1.bf16.xpose.msra.mxu0 0
  %1226 = vmatprep.mubr.bf16.mxu0 %v1063
  %1227 = vmatmul.mubr.bf16.gmra.mrb[0].mxu0 %v1062
  %v1228 = vpop.f32.mrb[0].mxu0
  %v1229 = vadd.f32 %v1189, %v1228
  %v1230 = vpop.f32.mrb[0].mxu0
  %v1231 = vpop.f32.mrb[0].mxu0
  %v1232 = vpop.f32.mrb[0].mxu0
  %1233 = vdwg.mxu0
  %1234 = vmatprep.subr.bf16.mxu0 %v1105
  %1235 = vmatpush1.bf16.xpose.msra.mxu0 %v1104
  %1236 = vmatprep.subr.bf16.mxu0 0
  %1237 = vmatpush1.bf16.xpose.msra.mxu0 0
  %1238 = vmatprep.subr.bf16.mxu0 0
  %1239 = vmatpush1.bf16.xpose.msra.mxu0 0
  %1240 = vmatprep.subr.bf16.mxu0 0
  %1241 = vmatpush1.bf16.xpose.msra.mxu0 0
  %1242 = vmatprep.subr.bf16.mxu0 0
  %1243 = vmatpush1.bf16.xpose.msra.mxu0 0
  %1244 = vmatprep.subr.bf16.mxu0 0
  %1245 = vmatpush1.bf16.xpose.msra.mxu0 0
  %1246 = vmatprep.subr.bf16.mxu0 0
  %1247 = vmatpush1.bf16.xpose.msra.mxu0 0
  %1248 = vmatprep.subr.bf16.mxu0 0
  %1249 = vmatpush1.bf16.xpose.msra.mxu0 0
  %1250 = vmatprep.subr.bf16.mxu0 0
  %1251 = vmatpush1.bf16.xpose.msra.mxu0 0
  %1252 = vmatprep.subr.bf16.mxu0 0
  %1253 = vmatpush1.bf16.xpose.msra.mxu0 0
  %1254 = vmatprep.subr.bf16.mxu0 0
  %1255 = vmatpush1.bf16.xpose.msra.mxu0 0
  %1256 = vmatprep.subr.bf16.mxu0 0
  %1257 = vmatpush1.bf16.xpose.msra.mxu0 0
  %1258 = vmatprep.subr.bf16.mxu0 0
  %1259 = vmatpush1.bf16.xpose.msra.mxu0 0
  %1260 = vmatprep.subr.bf16.mxu0 0
  %1261 = vmatpush1.bf16.xpose.msra.mxu0 0
  %1262 = vmatprep.subr.bf16.mxu0 0
  %1263 = vmatpush1.bf16.xpose.msra.mxu0 0
  %1264 = vmatprep.subr.bf16.mxu0 0
  %1265 = vmatpush1.bf16.xpose.msra.mxu0 0
  %1266 = vmatprep.mubr.bf16.mxu0 %v1065
  %1267 = vmatmul.mubr.bf16.gmra.mrb[0].mxu0 %v1064
  %v1268 = vpop.f32.mrb[0].mxu0
  %v1269 = vadd.f32 %v1229, %v1268
  %v1270 = vpop.f32.mrb[0].mxu0
  %v1271 = vpop.f32.mrb[0].mxu0
  %v1272 = vpop.f32.mrb[0].mxu0
  %1273 = vdwg.mxu0
  %v1274 = vrot.slane %v1033, 7
  %v1275 = vsel %vm1042, %v1274, %v1025
  %v1276 = vrot.slane %v1034, 7
  %v1277 = vsel %vm1042, %v1276, %v1026
  %v1278 = vrot.slane %v1035, 7
  %v1279 = vsel %vm1042, %v1278, %v1027
  %v1280 = vrot.slane %v1036, 7
  %v1281 = vsel %vm1042, %v1280, %v1028
  %v1282 = vrot.slane %v1037, 7
  %v1283 = vsel %vm1042, %v1282, %v1029
  %v1284 = vrot.slane %v1038, 7
  %v1285 = vsel %vm1042, %v1284, %v1030
  %v1286 = vrot.slane %v1039, 7
  %v1287 = vsel %vm1042, %v1286, %v1031
  %v1288 = vrot.slane %v1040, 7
  %v1289 = vsel %vm1042, %v1288, %v1032
  %v1290 = vpack.c.b16 %v1275, %v1275
  %v1291 = vpack.c.b16 %v1277, %v1277
  %v1292 = vpack.c.b16 %v1279, %v1279
  %v1293 = vpack.c.b16 %v1281, %v1281
  %v1294 = vpack.c.b16 %v1283, %v1283
  %v1295 = vpack.c.b16 %v1285, %v1285
  %v1296 = vpack.c.b16 %v1287, %v1287
  %v1297 = vpack.c.b16 %v1289, %v1289
  %v1314 = vunpack.c.l.b16 %v992
  %v1315 = vunpack.c.h.b16 %v992
  %v1316 = vunpack.c.l.b16 %v993
  %v1317 = vunpack.c.h.b16 %v993
  %v1318 = vunpack.c.l.b16 %v994
  %v1319 = vunpack.c.h.b16 %v994
  %v1320 = vunpack.c.l.b16 %v995
  %v1321 = vunpack.c.h.b16 %v995
  %v1322 = vunpack.c.l.b16 %v996
  %v1323 = vunpack.c.h.b16 %v996
  %v1324 = vunpack.c.l.b16 %v997
  %v1325 = vunpack.c.h.b16 %v997
  %v1326 = vunpack.c.l.b16 %v998
  %v1327 = vunpack.c.h.b16 %v998
  %v1328 = vunpack.c.l.b16 %v999
  %v1329 = vunpack.c.h.b16 %v999
  %v1330 = vpack.c.b16 %v1322, %v1314
  %v1331 = vpack.c.b16 %v1323, %v1315
  %v1332 = vpack.c.b16 %v1324, %v1316
  %v1333 = vpack.c.b16 %v1325, %v1317
  %v1334 = vpack.c.b16 %v1326, %v1318
  %v1335 = vpack.c.b16 %v1327, %v1319
  %v1336 = vpack.c.b16 %v1328, %v1320
  %v1337 = vpack.c.b16 %v1329, %v1321
  %1346 = vmatprep.subr.bf16.mxu0 %v1331
  %1347 = vmatpush1.bf16.xpose.msra.mxu0 %v1330
  %1348 = vmatprep.subr.bf16.mxu0 0
  %1349 = vmatpush1.bf16.xpose.msra.mxu0 0
  %1350 = vmatprep.subr.bf16.mxu0 0
  %1351 = vmatpush1.bf16.xpose.msra.mxu0 0
  %1352 = vmatprep.subr.bf16.mxu0 0
  %1353 = vmatpush1.bf16.xpose.msra.mxu0 0
  %1354 = vmatprep.subr.bf16.mxu0 0
  %1355 = vmatpush1.bf16.xpose.msra.mxu0 0
  %1356 = vmatprep.subr.bf16.mxu0 0
  %1357 = vmatpush1.bf16.xpose.msra.mxu0 0
  %1358 = vmatprep.subr.bf16.mxu0 0
  %1359 = vmatpush1.bf16.xpose.msra.mxu0 0
  %1360 = vmatprep.subr.bf16.mxu0 0
  %1361 = vmatpush1.bf16.xpose.msra.mxu0 0
  %1362 = vmatprep.subr.bf16.mxu0 0
  %1363 = vmatpush1.bf16.xpose.msra.mxu0 0
  %1364 = vmatprep.subr.bf16.mxu0 0
  %1365 = vmatpush1.bf16.xpose.msra.mxu0 0
  %1366 = vmatprep.subr.bf16.mxu0 0
  %1367 = vmatpush1.bf16.xpose.msra.mxu0 0
  %1368 = vmatprep.subr.bf16.mxu0 0
  %1369 = vmatpush1.bf16.xpose.msra.mxu0 0
  %1370 = vmatprep.subr.bf16.mxu0 0
  %1371 = vmatpush1.bf16.xpose.msra.mxu0 0
  %1372 = vmatprep.subr.bf16.mxu0 0
  %1373 = vmatpush1.bf16.xpose.msra.mxu0 0
  %1374 = vmatprep.subr.bf16.mxu0 0
  %1375 = vmatpush1.bf16.xpose.msra.mxu0 0
  %1376 = vmatprep.subr.bf16.mxu0 0
  %1377 = vmatpush1.bf16.xpose.msra.mxu0 0
  %1378 = vmatprep.mubr.bf16.mxu0 %v1291
  %1379 = vmatmul.mubr.bf16.gmra.mrb[0].mxu0 %v1290
  %v1380 = vpop.f32.mrb[0].mxu0
  %v1381 = vadd.f32 %v1269, %v1380
  %v1382 = vpop.f32.mrb[0].mxu0
  %v1383 = vpop.f32.mrb[0].mxu0
  %v1384 = vpop.f32.mrb[0].mxu0
  %1385 = vdwg.mxu0
  %1386 = vmatprep.subr.bf16.mxu0 %v1333
  %1387 = vmatpush1.bf16.xpose.msra.mxu0 %v1332
  %1388 = vmatprep.subr.bf16.mxu0 0
  %1389 = vmatpush1.bf16.xpose.msra.mxu0 0
  %1390 = vmatprep.subr.bf16.mxu0 0
  %1391 = vmatpush1.bf16.xpose.msra.mxu0 0
  %1392 = vmatprep.subr.bf16.mxu0 0
  %1393 = vmatpush1.bf16.xpose.msra.mxu0 0
  %1394 = vmatprep.subr.bf16.mxu0 0
  %1395 = vmatpush1.bf16.xpose.msra.mxu0 0
  %1396 = vmatprep.subr.bf16.mxu0 0
  %1397 = vmatpush1.bf16.xpose.msra.mxu0 0
  %1398 = vmatprep.subr.bf16.mxu0 0
  %1399 = vmatpush1.bf16.xpose.msra.mxu0 0
  %1400 = vmatprep.subr.bf16.mxu0 0
  %1401 = vmatpush1.bf16.xpose.msra.mxu0 0
  %1402 = vmatprep.subr.bf16.mxu0 0
  %1403 = vmatpush1.bf16.xpose.msra.mxu0 0
  %1404 = vmatprep.subr.bf16.mxu0 0
  %1405 = vmatpush1.bf16.xpose.msra.mxu0 0
  %1406 = vmatprep.subr.bf16.mxu0 0
  %1407 = vmatpush1.bf16.xpose.msra.mxu0 0
  %1408 = vmatprep.subr.bf16.mxu0 0
  %1409 = vmatpush1.bf16.xpose.msra.mxu0 0
  %1410 = vmatprep.subr.bf16.mxu0 0
  %1411 = vmatpush1.bf16.xpose.msra.mxu0 0
  %1412 = vmatprep.subr.bf16.mxu0 0
  %1413 = vmatpush1.bf16.xpose.msra.mxu0 0
  %1414 = vmatprep.subr.bf16.mxu0 0
  %1415 = vmatpush1.bf16.xpose.msra.mxu0 0
  %1416 = vmatprep.subr.bf16.mxu0 0
  %1417 = vmatpush1.bf16.xpose.msra.mxu0 0
  %1418 = vmatprep.mubr.bf16.mxu0 %v1293
  %1419 = vmatmul.mubr.bf16.gmra.mrb[0].mxu0 %v1292
  %v1420 = vpop.f32.mrb[0].mxu0
  %v1421 = vadd.f32 %v1381, %v1420
  %v1422 = vpop.f32.mrb[0].mxu0
  %v1423 = vpop.f32.mrb[0].mxu0
  %v1424 = vpop.f32.mrb[0].mxu0
  %1425 = vdwg.mxu0
  %1426 = vmatprep.subr.bf16.mxu0 %v1335
  %1427 = vmatpush1.bf16.xpose.msra.mxu0 %v1334
  %1428 = vmatprep.subr.bf16.mxu0 0
  %1429 = vmatpush1.bf16.xpose.msra.mxu0 0
  %1430 = vmatprep.subr.bf16.mxu0 0
  %1431 = vmatpush1.bf16.xpose.msra.mxu0 0
  %1432 = vmatprep.subr.bf16.mxu0 0
  %1433 = vmatpush1.bf16.xpose.msra.mxu0 0
  %1434 = vmatprep.subr.bf16.mxu0 0
  %1435 = vmatpush1.bf16.xpose.msra.mxu0 0
  %1436 = vmatprep.subr.bf16.mxu0 0
  %1437 = vmatpush1.bf16.xpose.msra.mxu0 0
  %1438 = vmatprep.subr.bf16.mxu0 0
  %1439 = vmatpush1.bf16.xpose.msra.mxu0 0
  %1440 = vmatprep.subr.bf16.mxu0 0
  %1441 = vmatpush1.bf16.xpose.msra.mxu0 0
  %1442 = vmatprep.subr.bf16.mxu0 0
  %1443 = vmatpush1.bf16.xpose.msra.mxu0 0
  %1444 = vmatprep.subr.bf16.mxu0 0
  %1445 = vmatpush1.bf16.xpose.msra.mxu0 0
  %1446 = vmatprep.subr.bf16.mxu0 0
  %1447 = vmatpush1.bf16.xpose.msra.mxu0 0
  %1448 = vmatprep.subr.bf16.mxu0 0
  %1449 = vmatpush1.bf16.xpose.msra.mxu0 0
  %1450 = vmatprep.subr.bf16.mxu0 0
  %1451 = vmatpush1.bf16.xpose.msra.mxu0 0
  %1452 = vmatprep.subr.bf16.mxu0 0
  %1453 = vmatpush1.bf16.xpose.msra.mxu0 0
  %1454 = vmatprep.subr.bf16.mxu0 0
  %1455 = vmatpush1.bf16.xpose.msra.mxu0 0
  %1456 = vmatprep.subr.bf16.mxu0 0
  %1457 = vmatpush1.bf16.xpose.msra.mxu0 0
  %1458 = vmatprep.mubr.bf16.mxu0 %v1295
  %1459 = vmatmul.mubr.bf16.gmra.mrb[0].mxu0 %v1294
  %v1460 = vpop.f32.mrb[0].mxu0
  %v1461 = vadd.f32 %v1421, %v1460
  %v1462 = vpop.f32.mrb[0].mxu0
  %v1463 = vpop.f32.mrb[0].mxu0
  %v1464 = vpop.f32.mrb[0].mxu0
  %1465 = vdwg.mxu0
  %1466 = vmatprep.subr.bf16.mxu0 %v1337
  %1467 = vmatpush1.bf16.xpose.msra.mxu0 %v1336
  %1468 = vmatprep.subr.bf16.mxu0 0
  %1469 = vmatpush1.bf16.xpose.msra.mxu0 0
  %1470 = vmatprep.subr.bf16.mxu0 0
  %1471 = vmatpush1.bf16.xpose.msra.mxu0 0
  %1472 = vmatprep.subr.bf16.mxu0 0
  %1473 = vmatpush1.bf16.xpose.msra.mxu0 0
  %1474 = vmatprep.subr.bf16.mxu0 0
  %1475 = vmatpush1.bf16.xpose.msra.mxu0 0
  %1476 = vmatprep.subr.bf16.mxu0 0
  %1477 = vmatpush1.bf16.xpose.msra.mxu0 0
  %1478 = vmatprep.subr.bf16.mxu0 0
  %1479 = vmatpush1.bf16.xpose.msra.mxu0 0
  %1480 = vmatprep.subr.bf16.mxu0 0
  %1481 = vmatpush1.bf16.xpose.msra.mxu0 0
  %1482 = vmatprep.subr.bf16.mxu0 0
  %1483 = vmatpush1.bf16.xpose.msra.mxu0 0
  %1484 = vmatprep.subr.bf16.mxu0 0
  %1485 = vmatpush1.bf16.xpose.msra.mxu0 0
  %1486 = vmatprep.subr.bf16.mxu0 0
  %1487 = vmatpush1.bf16.xpose.msra.mxu0 0
  %1488 = vmatprep.subr.bf16.mxu0 0
  %1489 = vmatpush1.bf16.xpose.msra.mxu0 0
  %1490 = vmatprep.subr.bf16.mxu0 0
  %1491 = vmatpush1.bf16.xpose.msra.mxu0 0
  %1492 = vmatprep.subr.bf16.mxu0 0
  %1493 = vmatpush1.bf16.xpose.msra.mxu0 0
  %1494 = vmatprep.subr.bf16.mxu0 0
  %1495 = vmatpush1.bf16.xpose.msra.mxu0 0
  %1496 = vmatprep.subr.bf16.mxu0 0
  %1497 = vmatpush1.bf16.xpose.msra.mxu0 0
  %1498 = vmatprep.mubr.bf16.mxu0 %v1297
  %1499 = vmatmul.mubr.bf16.gmra.mrb[0].mxu0 %v1296
  %v1500 = vpop.f32.mrb[0].mxu0
  %v1501 = vadd.f32 %v1461, %v1500
  %v1502 = vpop.f32.mrb[0].mxu0
  %v1503 = vpop.f32.mrb[0].mxu0
  %v1504 = vpop.f32.mrb[0].mxu0
  %1505 = vdwg.mxu0
  %v1506 = vld [vmem:[#allocation2] sm:$0x2]
  %v1507 = vld [vmem:[#allocation2 + $0x8] sm:$0x2]
  %v1508 = vld [vmem:[#allocation2 + $0x10] sm:$0x2]
  %v1509 = vld [vmem:[#allocation2 + $0x18] sm:$0x2]
  %v1510 = vld [vmem:[#allocation2 + $0x20] sm:$0x2]
  %v1511 = vld [vmem:[#allocation2 + $0x28] sm:$0x2]
  %v1512 = vld [vmem:[#allocation2 + $0x30] sm:$0x2]
  %v1513 = vld [vmem:[#allocation2 + $0x38] sm:$0x2]
  %v1514 = vld [vmem:[#allocation2 + $0x80] sm:$0x2]
  %v1515 = vld [vmem:[#allocation2 + $0x88] sm:$0x2]
  %v1516 = vld [vmem:[#allocation2 + $0x90] sm:$0x2]
  %v1517 = vld [vmem:[#allocation2 + $0x98] sm:$0x2]
  %v1518 = vld [vmem:[#allocation2 + $0xa0] sm:$0x2]
  %v1519 = vld [vmem:[#allocation2 + $0xa8] sm:$0x2]
  %v1520 = vld [vmem:[#allocation2 + $0xb0] sm:$0x2]
  %v1521 = vld [vmem:[#allocation2 + $0xb8] sm:$0x2]
  %s1522 = scalar_lea.vmem %s3, 128
  %v1523 = vld [vmem:[%s1522] sm:$0xff]
  %v1524 = vld [vmem:[%s1522 + $0x8] sm:$0xff]
  %v1525 = vld [vmem:[%s1522 + $0x10] sm:$0xff]
  %v1526 = vld [vmem:[%s1522 + $0x18] sm:$0xff]
  %v1527 = vld [vmem:[%s1522 + $0x20] sm:$0xff]
  %v1528 = vld [vmem:[%s1522 + $0x28] sm:$0xff]
  %v1529 = vld [vmem:[%s1522 + $0x30] sm:$0xff]
  %v1530 = vld [vmem:[%s1522 + $0x38] sm:$0xff]
  %v1547 = vunpack.c.l.b16 %v1506
  %v1548 = vunpack.c.l.b16 %v1507
  %v1549 = vunpack.c.l.b16 %v1508
  %v1550 = vunpack.c.l.b16 %v1509
  %v1551 = vunpack.c.l.b16 %v1510
  %v1552 = vunpack.c.l.b16 %v1511
  %v1553 = vunpack.c.l.b16 %v1512
  %v1554 = vunpack.c.l.b16 %v1513
  %v1555 = vunpack.c.l.b16 %v1514
  %v1556 = vunpack.c.l.b16 %v1515
  %v1557 = vunpack.c.l.b16 %v1516
  %v1558 = vunpack.c.l.b16 %v1517
  %v1559 = vunpack.c.l.b16 %v1518
  %v1560 = vunpack.c.l.b16 %v1519
  %v1561 = vunpack.c.l.b16 %v1520
  %v1562 = vunpack.c.l.b16 %v1521
  %v1563 = vrot.slane %v1547, 2
  %v1564 = vrot.slane %v1555, 1
  %v1565 = vsel %vm1042, %v1564, %v1563
  %v1566 = vrot.slane %v1548, 2
  %v1567 = vrot.slane %v1556, 1
  %v1568 = vsel %vm1042, %v1567, %v1566
  %v1569 = vrot.slane %v1549, 2
  %v1570 = vrot.slane %v1557, 1
  %v1571 = vsel %vm1042, %v1570, %v1569
  %v1572 = vrot.slane %v1550, 2
  %v1573 = vrot.slane %v1558, 1
  %v1574 = vsel %vm1042, %v1573, %v1572
  %v1575 = vrot.slane %v1551, 2
  %v1576 = vrot.slane %v1559, 1
  %v1577 = vsel %vm1042, %v1576, %v1575
  %v1578 = vrot.slane %v1552, 2
  %v1579 = vrot.slane %v1560, 1
  %v1580 = vsel %vm1042, %v1579, %v1578
  %v1581 = vrot.slane %v1553, 2
  %v1582 = vrot.slane %v1561, 1
  %v1583 = vsel %vm1042, %v1582, %v1581
  %v1584 = vrot.slane %v1554, 2
  %v1585 = vrot.slane %v1562, 1
  %v1586 = vsel %vm1042, %v1585, %v1584
  %v1587 = vpack.c.b16 %v1565, %v1565
  %v1588 = vpack.c.b16 %v1568, %v1568
  %v1589 = vpack.c.b16 %v1571, %v1571
  %v1590 = vpack.c.b16 %v1574, %v1574
  %v1591 = vpack.c.b16 %v1577, %v1577
  %v1592 = vpack.c.b16 %v1580, %v1580
  %v1593 = vpack.c.b16 %v1583, %v1583
  %v1594 = vpack.c.b16 %v1586, %v1586
  %v1611 = vunpack.c.l.b16 %v1523
  %v1612 = vunpack.c.h.b16 %v1523
  %v1613 = vunpack.c.l.b16 %v1524
  %v1614 = vunpack.c.h.b16 %v1524
  %v1615 = vunpack.c.l.b16 %v1525
  %v1616 = vunpack.c.h.b16 %v1525
  %v1617 = vunpack.c.l.b16 %v1526
  %v1618 = vunpack.c.h.b16 %v1526
  %v1619 = vunpack.c.l.b16 %v1527
  %v1620 = vunpack.c.h.b16 %v1527
  %v1621 = vunpack.c.l.b16 %v1528
  %v1622 = vunpack.c.h.b16 %v1528
  %v1623 = vunpack.c.l.b16 %v1529
  %v1624 = vunpack.c.h.b16 %v1529
  %v1625 = vunpack.c.l.b16 %v1530
  %v1626 = vunpack.c.h.b16 %v1530
  %v1627 = vpack.c.b16 %v1619, %v1611
  %v1628 = vpack.c.b16 %v1620, %v1612
  %v1629 = vpack.c.b16 %v1621, %v1613
  %v1630 = vpack.c.b16 %v1622, %v1614
  %v1631 = vpack.c.b16 %v1623, %v1615
  %v1632 = vpack.c.b16 %v1624, %v1616
  %v1633 = vpack.c.b16 %v1625, %v1617
  %v1634 = vpack.c.b16 %v1626, %v1618
  %1643 = vmatprep.subr.bf16.mxu0 %v1628
  %1644 = vmatpush1.bf16.xpose.msra.mxu0 %v1627
  %1645 = vmatprep.subr.bf16.mxu0 0
  %1646 = vmatpush1.bf16.xpose.msra.mxu0 0
  %1647 = vmatprep.subr.bf16.mxu0 0
  %1648 = vmatpush1.bf16.xpose.msra.mxu0 0
  %1649 = vmatprep.subr.bf16.mxu0 0
  %1650 = vmatpush1.bf16.xpose.msra.mxu0 0
  %1651 = vmatprep.subr.bf16.mxu0 0
  %1652 = vmatpush1.bf16.xpose.msra.mxu0 0
  %1653 = vmatprep.subr.bf16.mxu0 0
  %1654 = vmatpush1.bf16.xpose.msra.mxu0 0
  %1655 = vmatprep.subr.bf16.mxu0 0
  %1656 = vmatpush1.bf16.xpose.msra.mxu0 0
  %1657 = vmatprep.subr.bf16.mxu0 0
  %1658 = vmatpush1.bf16.xpose.msra.mxu0 0
  %1659 = vmatprep.subr.bf16.mxu0 0
  %1660 = vmatpush1.bf16.xpose.msra.mxu0 0
  %1661 = vmatprep.subr.bf16.mxu0 0
  %1662 = vmatpush1.bf16.xpose.msra.mxu0 0
  %1663 = vmatprep.subr.bf16.mxu0 0
  %1664 = vmatpush1.bf16.xpose.msra.mxu0 0
  %1665 = vmatprep.subr.bf16.mxu0 0
  %1666 = vmatpush1.bf16.xpose.msra.mxu0 0
  %1667 = vmatprep.subr.bf16.mxu0 0
  %1668 = vmatpush1.bf16.xpose.msra.mxu0 0
  %1669 = vmatprep.subr.bf16.mxu0 0
  %1670 = vmatpush1.bf16.xpose.msra.mxu0 0
  %1671 = vmatprep.subr.bf16.mxu0 0
  %1672 = vmatpush1.bf16.xpose.msra.mxu0 0
  %1673 = vmatprep.subr.bf16.mxu0 0
  %1674 = vmatpush1.bf16.xpose.msra.mxu0 0
  %1675 = vmatprep.mubr.bf16.mxu0 %v1588
  %1676 = vmatmul.mubr.bf16.gmra.mrb[0].mxu0 %v1587
  %v1677 = vpop.f32.mrb[0].mxu0
  %v1678 = vadd.f32 0.0, %v1677
  %v1679 = vpop.f32.mrb[0].mxu0
  %v1680 = vpop.f32.mrb[0].mxu0
  %v1681 = vpop.f32.mrb[0].mxu0
  %1682 = vdwg.mxu0
  %1683 = vmatprep.subr.bf16.mxu0 %v1630
  %1684 = vmatpush1.bf16.xpose.msra.mxu0 %v1629
  %1685 = vmatprep.subr.bf16.mxu0 0
  %1686 = vmatpush1.bf16.xpose.msra.mxu0 0
  %1687 = vmatprep.subr.bf16.mxu0 0
  %1688 = vmatpush1.bf16.xpose.msra.mxu0 0
  %1689 = vmatprep.subr.bf16.mxu0 0
  %1690 = vmatpush1.bf16.xpose.msra.mxu0 0
  %1691 = vmatprep.subr.bf16.mxu0 0
  %1692 = vmatpush1.bf16.xpose.msra.mxu0 0
  %1693 = vmatprep.subr.bf16.mxu0 0
  %1694 = vmatpush1.bf16.xpose.msra.mxu0 0
  %1695 = vmatprep.subr.bf16.mxu0 0
  %1696 = vmatpush1.bf16.xpose.msra.mxu0 0
  %1697 = vmatprep.subr.bf16.mxu0 0
  %1698 = vmatpush1.bf16.xpose.msra.mxu0 0
  %1699 = vmatprep.subr.bf16.mxu0 0
  %1700 = vmatpush1.bf16.xpose.msra.mxu0 0
  %1701 = vmatprep.subr.bf16.mxu0 0
  %1702 = vmatpush1.bf16.xpose.msra.mxu0 0
  %1703 = vmatprep.subr.bf16.mxu0 0
  %1704 = vmatpush1.bf16.xpose.msra.mxu0 0
  %1705 = vmatprep.subr.bf16.mxu0 0
  %1706 = vmatpush1.bf16.xpose.msra.mxu0 0
  %1707 = vmatprep.subr.bf16.mxu0 0
  %1708 = vmatpush1.bf16.xpose.msra.mxu0 0
  %1709 = vmatprep.subr.bf16.mxu0 0
  %1710 = vmatpush1.bf16.xpose.msra.mxu0 0
  %1711 = vmatprep.subr.bf16.mxu0 0
  %1712 = vmatpush1.bf16.xpose.msra.mxu0 0
  %1713 = vmatprep.subr.bf16.mxu0 0
  %1714 = vmatpush1.bf16.xpose.msra.mxu0 0
  %1715 = vmatprep.mubr.bf16.mxu0 %v1590
  %1716 = vmatmul.mubr.bf16.gmra.mrb[0].mxu0 %v1589
  %v1717 = vpop.f32.mrb[0].mxu0
  %v1718 = vadd.f32 %v1678, %v1717
  %v1719 = vpop.f32.mrb[0].mxu0
  %v1720 = vpop.f32.mrb[0].mxu0
  %v1721 = vpop.f32.mrb[0].mxu0
  %1722 = vdwg.mxu0
  %1723 = vmatprep.subr.bf16.mxu0 %v1632
  %1724 = vmatpush1.bf16.xpose.msra.mxu0 %v1631
  %1725 = vmatprep.subr.bf16.mxu0 0
  %1726 = vmatpush1.bf16.xpose.msra.mxu0 0
  %1727 = vmatprep.subr.bf16.mxu0 0
  %1728 = vmatpush1.bf16.xpose.msra.mxu0 0
  %1729 = vmatprep.subr.bf16.mxu0 0
  %1730 = vmatpush1.bf16.xpose.msra.mxu0 0
  %1731 = vmatprep.subr.bf16.mxu0 0
  %1732 = vmatpush1.bf16.xpose.msra.mxu0 0
  %1733 = vmatprep.subr.bf16.mxu0 0
  %1734 = vmatpush1.bf16.xpose.msra.mxu0 0
  %1735 = vmatprep.subr.bf16.mxu0 0
  %1736 = vmatpush1.bf16.xpose.msra.mxu0 0
  %1737 = vmatprep.subr.bf16.mxu0 0
  %1738 = vmatpush1.bf16.xpose.msra.mxu0 0
  %1739 = vmatprep.subr.bf16.mxu0 0
  %1740 = vmatpush1.bf16.xpose.msra.mxu0 0
  %1741 = vmatprep.subr.bf16.mxu0 0
  %1742 = vmatpush1.bf16.xpose.msra.mxu0 0
  %1743 = vmatprep.subr.bf16.mxu0 0
  %1744 = vmatpush1.bf16.xpose.msra.mxu0 0
  %1745 = vmatprep.subr.bf16.mxu0 0
  %1746 = vmatpush1.bf16.xpose.msra.mxu0 0
  %1747 = vmatprep.subr.bf16.mxu0 0
  %1748 = vmatpush1.bf16.xpose.msra.mxu0 0
  %1749 = vmatprep.subr.bf16.mxu0 0
  %1750 = vmatpush1.bf16.xpose.msra.mxu0 0
  %1751 = vmatprep.subr.bf16.mxu0 0
  %1752 = vmatpush1.bf16.xpose.msra.mxu0 0
  %1753 = vmatprep.subr.bf16.mxu0 0
  %1754 = vmatpush1.bf16.xpose.msra.mxu0 0
  %1755 = vmatprep.mubr.bf16.mxu0 %v1592
  %1756 = vmatmul.mubr.bf16.gmra.mrb[0].mxu0 %v1591
  %v1757 = vpop.f32.mrb[0].mxu0
  %v1758 = vadd.f32 %v1718, %v1757
  %v1759 = vpop.f32.mrb[0].mxu0
  %v1760 = vpop.f32.mrb[0].mxu0
  %v1761 = vpop.f32.mrb[0].mxu0
  %1762 = vdwg.mxu0
  %1763 = vmatprep.subr.bf16.mxu0 %v1634
  %1764 = vmatpush1.bf16.xpose.msra.mxu0 %v1633
  %1765 = vmatprep.subr.bf16.mxu0 0
  %1766 = vmatpush1.bf16.xpose.msra.mxu0 0
  %1767 = vmatprep.subr.bf16.mxu0 0
  %1768 = vmatpush1.bf16.xpose.msra.mxu0 0
  %1769 = vmatprep.subr.bf16.mxu0 0
  %1770 = vmatpush1.bf16.xpose.msra.mxu0 0
  %1771 = vmatprep.subr.bf16.mxu0 0
  %1772 = vmatpush1.bf16.xpose.msra.mxu0 0
  %1773 = vmatprep.subr.bf16.mxu0 0
  %1774 = vmatpush1.bf16.xpose.msra.mxu0 0
  %1775 = vmatprep.subr.bf16.mxu0 0
  %1776 = vmatpush1.bf16.xpose.msra.mxu0 0
  %1777 = vmatprep.subr.bf16.mxu0 0
  %1778 = vmatpush1.bf16.xpose.msra.mxu0 0
  %1779 = vmatprep.subr.bf16.mxu0 0
  %1780 = vmatpush1.bf16.xpose.msra.mxu0 0
  %1781 = vmatprep.subr.bf16.mxu0 0
  %1782 = vmatpush1.bf16.xpose.msra.mxu0 0
  %1783 = vmatprep.subr.bf16.mxu0 0
  %1784 = vmatpush1.bf16.xpose.msra.mxu0 0
  %1785 = vmatprep.subr.bf16.mxu0 0
  %1786 = vmatpush1.bf16.xpose.msra.mxu0 0
  %1787 = vmatprep.subr.bf16.mxu0 0
  %1788 = vmatpush1.bf16.xpose.msra.mxu0 0
  %1789 = vmatprep.subr.bf16.mxu0 0
  %1790 = vmatpush1.bf16.xpose.msra.mxu0 0
  %1791 = vmatprep.subr.bf16.mxu0 0
  %1792 = vmatpush1.bf16.xpose.msra.mxu0 0
  %1793 = vmatprep.subr.bf16.mxu0 0
  %1794 = vmatpush1.bf16.xpose.msra.mxu0 0
  %1795 = vmatprep.mubr.bf16.mxu0 %v1594
  %1796 = vmatmul.mubr.bf16.gmra.mrb[0].mxu0 %v1593
  %v1797 = vpop.f32.mrb[0].mxu0
  %v1798 = vadd.f32 %v1758, %v1797
  %v1799 = vpop.f32.mrb[0].mxu0
  %v1800 = vpop.f32.mrb[0].mxu0
  %v1801 = vpop.f32.mrb[0].mxu0
  %1802 = vdwg.mxu0
  %v1803 = vadd.f32 %v1501, %v1798
  %s1804 = scalar_lea.vmem %s3, 192
  %v1805 = vld [vmem:[%s1804] sm:$0xff]
  %v1806 = vld [vmem:[%s1804 + $0x8] sm:$0xff]
  %v1807 = vld [vmem:[%s1804 + $0x10] sm:$0xff]
  %v1808 = vld [vmem:[%s1804 + $0x18] sm:$0xff]
  %v1809 = vld [vmem:[%s1804 + $0x20] sm:$0xff]
  %v1810 = vld [vmem:[%s1804 + $0x28] sm:$0xff]
  %v1811 = vld [vmem:[%s1804 + $0x30] sm:$0xff]
  %v1812 = vld [vmem:[%s1804 + $0x38] sm:$0xff]
  %v1813 = vrot.slane %v1547, 3
  %v1814 = vrot.slane %v1555, 2
  %v1815 = vsel %vm1042, %v1814, %v1813
  %v1816 = vrot.slane %v1548, 3
  %v1817 = vrot.slane %v1556, 2
  %v1818 = vsel %vm1042, %v1817, %v1816
  %v1819 = vrot.slane %v1549, 3
  %v1820 = vrot.slane %v1557, 2
  %v1821 = vsel %vm1042, %v1820, %v1819
  %v1822 = vrot.slane %v1550, 3
  %v1823 = vrot.slane %v1558, 2
  %v1824 = vsel %vm1042, %v1823, %v1822
  %v1825 = vrot.slane %v1551, 3
  %v1826 = vrot.slane %v1559, 2
  %v1827 = vsel %vm1042, %v1826, %v1825
  %v1828 = vrot.slane %v1552, 3
  %v1829 = vrot.slane %v1560, 2
  %v1830 = vsel %vm1042, %v1829, %v1828
  %v1831 = vrot.slane %v1553, 3
  %v1832 = vrot.slane %v1561, 2
  %v1833 = vsel %vm1042, %v1832, %v1831
  %v1834 = vrot.slane %v1554, 3
  %v1835 = vrot.slane %v1562, 2
  %v1836 = vsel %vm1042, %v1835, %v1834
  %v1837 = vpack.c.b16 %v1815, %v1815
  %v1838 = vpack.c.b16 %v1818, %v1818
  %v1839 = vpack.c.b16 %v1821, %v1821
  %v1840 = vpack.c.b16 %v1824, %v1824
  %v1841 = vpack.c.b16 %v1827, %v1827
  %v1842 = vpack.c.b16 %v1830, %v1830
  %v1843 = vpack.c.b16 %v1833, %v1833
  %v1844 = vpack.c.b16 %v1836, %v1836
  %v1861 = vunpack.c.l.b16 %v1805
  %v1862 = vunpack.c.h.b16 %v1805
  %v1863 = vunpack.c.l.b16 %v1806
  %v1864 = vunpack.c.h.b16 %v1806
  %v1865 = vunpack.c.l.b16 %v1807
  %v1866 = vunpack.c.h.b16 %v1807
  %v1867 = vunpack.c.l.b16 %v1808
  %v1868 = vunpack.c.h.b16 %v1808
  %v1869 = vunpack.c.l.b16 %v1809
  %v1870 = vunpack.c.h.b16 %v1809
  %v1871 = vunpack.c.l.b16 %v1810
  %v1872 = vunpack.c.h.b16 %v1810
  %v1873 = vunpack.c.l.b16 %v1811
  %v1874 = vunpack.c.h.b16 %v1811
  %v1875 = vunpack.c.l.b16 %v1812
  %v1876 = vunpack.c.h.b16 %v1812
  %v1877 = vpack.c.b16 %v1869, %v1861
  %v1878 = vpack.c.b16 %v1870, %v1862
  %v1879 = vpack.c.b16 %v1871, %v1863
  %v1880 = vpack.c.b16 %v1872, %v1864
  %v1881 = vpack.c.b16 %v1873, %v1865
  %v1882 = vpack.c.b16 %v1874, %v1866
  %v1883 = vpack.c.b16 %v1875, %v1867
  %v1884 = vpack.c.b16 %v1876, %v1868
  %1893 = vmatprep.subr.bf16.mxu0 %v1878
  %1894 = vmatpush1.bf16.xpose.msra.mxu0 %v1877
  %1895 = vmatprep.subr.bf16.mxu0 0
  %1896 = vmatpush1.bf16.xpose.msra.mxu0 0
  %1897 = vmatprep.subr.bf16.mxu0 0
  %1898 = vmatpush1.bf16.xpose.msra.mxu0 0
  %1899 = vmatprep.subr.bf16.mxu0 0
  %1900 = vmatpush1.bf16.xpose.msra.mxu0 0
  %1901 = vmatprep.subr.bf16.mxu0 0
  %1902 = vmatpush1.bf16.xpose.msra.mxu0 0
  %1903 = vmatprep.subr.bf16.mxu0 0
  %1904 = vmatpush1.bf16.xpose.msra.mxu0 0
  %1905 = vmatprep.subr.bf16.mxu0 0
  %1906 = vmatpush1.bf16.xpose.msra.mxu0 0
  %1907 = vmatprep.subr.bf16.mxu0 0
  %1908 = vmatpush1.bf16.xpose.msra.mxu0 0
  %1909 = vmatprep.subr.bf16.mxu0 0
  %1910 = vmatpush1.bf16.xpose.msra.mxu0 0
  %1911 = vmatprep.subr.bf16.mxu0 0
  %1912 = vmatpush1.bf16.xpose.msra.mxu0 0
  %1913 = vmatprep.subr.bf16.mxu0 0
  %1914 = vmatpush1.bf16.xpose.msra.mxu0 0
  %1915 = vmatprep.subr.bf16.mxu0 0
  %1916 = vmatpush1.bf16.xpose.msra.mxu0 0
  %1917 = vmatprep.subr.bf16.mxu0 0
  %1918 = vmatpush1.bf16.xpose.msra.mxu0 0
  %1919 = vmatprep.subr.bf16.mxu0 0
  %1920 = vmatpush1.bf16.xpose.msra.mxu0 0
  %1921 = vmatprep.subr.bf16.mxu0 0
  %1922 = vmatpush1.bf16.xpose.msra.mxu0 0
  %1923 = vmatprep.subr.bf16.mxu0 0
  %1924 = vmatpush1.bf16.xpose.msra.mxu0 0
  %1925 = vmatprep.mubr.bf16.mxu0 %v1838
  %1926 = vmatmul.mubr.bf16.gmra.mrb[0].mxu0 %v1837
  %v1927 = vpop.f32.mrb[0].mxu0
  %v1928 = vadd.f32 0.0, %v1927
  %v1929 = vpop.f32.mrb[0].mxu0
  %v1930 = vpop.f32.mrb[0].mxu0
  %v1931 = vpop.f32.mrb[0].mxu0
  %1932 = vdwg.mxu0
  %1933 = vmatprep.subr.bf16.mxu0 %v1880
  %1934 = vmatpush1.bf16.xpose.msra.mxu0 %v1879
  %1935 = vmatprep.subr.bf16.mxu0 0
  %1936 = vmatpush1.bf16.xpose.msra.mxu0 0
  %1937 = vmatprep.subr.bf16.mxu0 0
  %1938 = vmatpush1.bf16.xpose.msra.mxu0 0
  %1939 = vmatprep.subr.bf16.mxu0 0
  %1940 = vmatpush1.bf16.xpose.msra.mxu0 0
  %1941 = vmatprep.subr.bf16.mxu0 0
  %1942 = vmatpush1.bf16.xpose.msra.mxu0 0
  %1943 = vmatprep.subr.bf16.mxu0 0
  %1944 = vmatpush1.bf16.xpose.msra.mxu0 0
  %1945 = vmatprep.subr.bf16.mxu0 0
  %1946 = vmatpush1.bf16.xpose.msra.mxu0 0
  %1947 = vmatprep.subr.bf16.mxu0 0
  %1948 = vmatpush1.bf16.xpose.msra.mxu0 0
  %1949 = vmatprep.subr.bf16.mxu0 0
  %1950 = vmatpush1.bf16.xpose.msra.mxu0 0
  %1951 = vmatprep.subr.bf16.mxu0 0
  %1952 = vmatpush1.bf16.xpose.msra.mxu0 0
  %1953 = vmatprep.subr.bf16.mxu0 0
  %1954 = vmatpush1.bf16.xpose.msra.mxu0 0
  %1955 = vmatprep.subr.bf16.mxu0 0
  %1956 = vmatpush1.bf16.xpose.msra.mxu0 0
  %1957 = vmatprep.subr.bf16.mxu0 0
  %1958 = vmatpush1.bf16.xpose.msra.mxu0 0
  %1959 = vmatprep.subr.bf16.mxu0 0
  %1960 = vmatpush1.bf16.xpose.msra.mxu0 0
  %1961 = vmatprep.subr.bf16.mxu0 0
  %1962 = vmatpush1.bf16.xpose.msra.mxu0 0
  %1963 = vmatprep.subr.bf16.mxu0 0
  %1964 = vmatpush1.bf16.xpose.msra.mxu0 0
  %1965 = vmatprep.mubr.bf16.mxu0 %v1840
  %1966 = vmatmul.mubr.bf16.gmra.mrb[0].mxu0 %v1839
  %v1967 = vpop.f32.mrb[0].mxu0
  %v1968 = vadd.f32 %v1928, %v1967
  %v1969 = vpop.f32.mrb[0].mxu0
  %v1970 = vpop.f32.mrb[0].mxu0
  %v1971 = vpop.f32.mrb[0].mxu0
  %1972 = vdwg.mxu0
  %1973 = vmatprep.subr.bf16.mxu0 %v1882
  %1974 = vmatpush1.bf16.xpose.msra.mxu0 %v1881
  %1975 = vmatprep.subr.bf16.mxu0 0
  %1976 = vmatpush1.bf16.xpose.msra.mxu0 0
  %1977 = vmatprep.subr.bf16.mxu0 0
  %1978 = vmatpush1.bf16.xpose.msra.mxu0 0
  %1979 = vmatprep.subr.bf16.mxu0 0
  %1980 = vmatpush1.bf16.xpose.msra.mxu0 0
  %1981 = vmatprep.subr.bf16.mxu0 0
  %1982 = vmatpush1.bf16.xpose.msra.mxu0 0
  %1983 = vmatprep.subr.bf16.mxu0 0
  %1984 = vmatpush1.bf16.xpose.msra.mxu0 0
  %1985 = vmatprep.subr.bf16.mxu0 0
  %1986 = vmatpush1.bf16.xpose.msra.mxu0 0
  %1987 = vmatprep.subr.bf16.mxu0 0
  %1988 = vmatpush1.bf16.xpose.msra.mxu0 0
  %1989 = vmatprep.subr.bf16.mxu0 0
  %1990 = vmatpush1.bf16.xpose.msra.mxu0 0
  %1991 = vmatprep.subr.bf16.mxu0 0
  %1992 = vmatpush1.bf16.xpose.msra.mxu0 0
  %1993 = vmatprep.subr.bf16.mxu0 0
  %1994 = vmatpush1.bf16.xpose.msra.mxu0 0
  %1995 = vmatprep.subr.bf16.mxu0 0
  %1996 = vmatpush1.bf16.xpose.msra.mxu0 0
  %1997 = vmatprep.subr.bf16.mxu0 0
  %1998 = vmatpush1.bf16.xpose.msra.mxu0 0
  %1999 = vmatprep.subr.bf16.mxu0 0
  %2000 = vmatpush1.bf16.xpose.msra.mxu0 0
  %2001 = vmatprep.subr.bf16.mxu0 0
  %2002 = vmatpush1.bf16.xpose.msra.mxu0 0
  %2003 = vmatprep.subr.bf16.mxu0 0
  %2004 = vmatpush1.bf16.xpose.msra.mxu0 0
  %2005 = vmatprep.mubr.bf16.mxu0 %v1842
  %2006 = vmatmul.mubr.bf16.gmra.mrb[0].mxu0 %v1841
  %v2007 = vpop.f32.mrb[0].mxu0
  %v2008 = vadd.f32 %v1968, %v2007
  %v2009 = vpop.f32.mrb[0].mxu0
  %v2010 = vpop.f32.mrb[0].mxu0
  %v2011 = vpop.f32.mrb[0].mxu0
  %2012 = vdwg.mxu0
  %2013 = vmatprep.subr.bf16.mxu0 %v1884
  %2014 = vmatpush1.bf16.xpose.msra.mxu0 %v1883
  %2015 = vmatprep.subr.bf16.mxu0 0
  %2016 = vmatpush1.bf16.xpose.msra.mxu0 0
  %2017 = vmatprep.subr.bf16.mxu0 0
  %2018 = vmatpush1.bf16.xpose.msra.mxu0 0
  %2019 = vmatprep.subr.bf16.mxu0 0
  %2020 = vmatpush1.bf16.xpose.msra.mxu0 0
  %2021 = vmatprep.subr.bf16.mxu0 0
  %2022 = vmatpush1.bf16.xpose.msra.mxu0 0
  %2023 = vmatprep.subr.bf16.mxu0 0
  %2024 = vmatpush1.bf16.xpose.msra.mxu0 0
  %2025 = vmatprep.subr.bf16.mxu0 0
  %2026 = vmatpush1.bf16.xpose.msra.mxu0 0
  %2027 = vmatprep.subr.bf16.mxu0 0
  %2028 = vmatpush1.bf16.xpose.msra.mxu0 0
  %2029 = vmatprep.subr.bf16.mxu0 0
  %2030 = vmatpush1.bf16.xpose.msra.mxu0 0
  %2031 = vmatprep.subr.bf16.mxu0 0
  %2032 = vmatpush1.bf16.xpose.msra.mxu0 0
  %2033 = vmatprep.subr.bf16.mxu0 0
  %2034 = vmatpush1.bf16.xpose.msra.mxu0 0
  %2035 = vmatprep.subr.bf16.mxu0 0
  %2036 = vmatpush1.bf16.xpose.msra.mxu0 0
  %2037 = vmatprep.subr.bf16.mxu0 0
  %2038 = vmatpush1.bf16.xpose.msra.mxu0 0
  %2039 = vmatprep.subr.bf16.mxu0 0
  %2040 = vmatpush1.bf16.xpose.msra.mxu0 0
  %2041 = vmatprep.subr.bf16.mxu0 0
  %2042 = vmatpush1.bf16.xpose.msra.mxu0 0
  %2043 = vmatprep.subr.bf16.mxu0 0
  %2044 = vmatpush1.bf16.xpose.msra.mxu0 0
  %2045 = vmatprep.mubr.bf16.mxu0 %v1844
  %2046 = vmatmul.mubr.bf16.gmra.mrb[0].mxu0 %v1843
  %v2047 = vpop.f32.mrb[0].mxu0
  %v2048 = vadd.f32 %v2008, %v2047
  %v2049 = vpop.f32.mrb[0].mxu0
  %v2050 = vpop.f32.mrb[0].mxu0
  %v2051 = vpop.f32.mrb[0].mxu0
  %2052 = vdwg.mxu0
  %v2053 = vadd.f32 %v1803, %v2048
  %v2054 = vld [vmem:[#allocation2] sm:$0x4]
  %v2055 = vld [vmem:[#allocation2 + $0x8] sm:$0x4]
  %v2056 = vld [vmem:[#allocation2 + $0x10] sm:$0x4]
  %v2057 = vld [vmem:[#allocation2 + $0x18] sm:$0x4]
  %v2058 = vld [vmem:[#allocation2 + $0x20] sm:$0x4]
  %v2059 = vld [vmem:[#allocation2 + $0x28] sm:$0x4]
  %v2060 = vld [vmem:[#allocation2 + $0x30] sm:$0x4]
  %v2061 = vld [vmem:[#allocation2 + $0x38] sm:$0x4]
  %v2062 = vld [vmem:[#allocation2 + $0x80] sm:$0x4]
  %v2063 = vld [vmem:[#allocation2 + $0x88] sm:$0x4]
  %v2064 = vld [vmem:[#allocation2 + $0x90] sm:$0x4]
  %v2065 = vld [vmem:[#allocation2 + $0x98] sm:$0x4]
  %v2066 = vld [vmem:[#allocation2 + $0xa0] sm:$0x4]
  %v2067 = vld [vmem:[#allocation2 + $0xa8] sm:$0x4]
  %v2068 = vld [vmem:[#allocation2 + $0xb0] sm:$0x4]
  %v2069 = vld [vmem:[#allocation2 + $0xb8] sm:$0x4]
  %s2070 = scalar_lea.vmem %s3, 256
  %v2071 = vld [vmem:[%s2070] sm:$0xff]
  %v2072 = vld [vmem:[%s2070 + $0x8] sm:$0xff]
  %v2073 = vld [vmem:[%s2070 + $0x10] sm:$0xff]
  %v2074 = vld [vmem:[%s2070 + $0x18] sm:$0xff]
  %v2075 = vld [vmem:[%s2070 + $0x20] sm:$0xff]
  %v2076 = vld [vmem:[%s2070 + $0x28] sm:$0xff]
  %v2077 = vld [vmem:[%s2070 + $0x30] sm:$0xff]
  %v2078 = vld [vmem:[%s2070 + $0x38] sm:$0xff]
  %v2095 = vunpack.c.l.b16 %v2054
  %v2096 = vunpack.c.l.b16 %v2055
  %v2097 = vunpack.c.l.b16 %v2056
  %v2098 = vunpack.c.l.b16 %v2057
  %v2099 = vunpack.c.l.b16 %v2058
  %v2100 = vunpack.c.l.b16 %v2059
  %v2101 = vunpack.c.l.b16 %v2060
  %v2102 = vunpack.c.l.b16 %v2061
  %v2103 = vunpack.c.l.b16 %v2062
  %v2104 = vunpack.c.l.b16 %v2063
  %v2105 = vunpack.c.l.b16 %v2064
  %v2106 = vunpack.c.l.b16 %v2065
  %v2107 = vunpack.c.l.b16 %v2066
  %v2108 = vunpack.c.l.b16 %v2067
  %v2109 = vunpack.c.l.b16 %v2068
  %v2110 = vunpack.c.l.b16 %v2069
  %v2111 = vrot.slane %v2095, 4
  %v2112 = vrot.slane %v2103, 3
  %v2113 = vsel %vm1042, %v2112, %v2111
  %v2114 = vrot.slane %v2096, 4
  %v2115 = vrot.slane %v2104, 3
  %v2116 = vsel %vm1042, %v2115, %v2114
  %v2117 = vrot.slane %v2097, 4
  %v2118 = vrot.slane %v2105, 3
  %v2119 = vsel %vm1042, %v2118, %v2117
  %v2120 = vrot.slane %v2098, 4
  %v2121 = vrot.slane %v2106, 3
  %v2122 = vsel %vm1042, %v2121, %v2120
  %v2123 = vrot.slane %v2099, 4
  %v2124 = vrot.slane %v2107, 3
  %v2125 = vsel %vm1042, %v2124, %v2123
  %v2126 = vrot.slane %v2100, 4
  %v2127 = vrot.slane %v2108, 3
  %v2128 = vsel %vm1042, %v2127, %v2126
  %v2129 = vrot.slane %v2101, 4
  %v2130 = vrot.slane %v2109, 3
  %v2131 = vsel %vm1042, %v2130, %v2129
  %v2132 = vrot.slane %v2102, 4
  %v2133 = vrot.slane %v2110, 3
  %v2134 = vsel %vm1042, %v2133, %v2132
  %v2135 = vpack.c.b16 %v2113, %v2113
  %v2136 = vpack.c.b16 %v2116, %v2116
  %v2137 = vpack.c.b16 %v2119, %v2119
  %v2138 = vpack.c.b16 %v2122, %v2122
  %v2139 = vpack.c.b16 %v2125, %v2125
  %v2140 = vpack.c.b16 %v2128, %v2128
  %v2141 = vpack.c.b16 %v2131, %v2131
  %v2142 = vpack.c.b16 %v2134, %v2134
  %v2159 = vunpack.c.l.b16 %v2071
  %v2160 = vunpack.c.h.b16 %v2071
  %v2161 = vunpack.c.l.b16 %v2072
  %v2162 = vunpack.c.h.b16 %v2072
  %v2163 = vunpack.c.l.b16 %v2073
  %v2164 = vunpack.c.h.b16 %v2073
  %v2165 = vunpack.c.l.b16 %v2074
  %v2166 = vunpack.c.h.b16 %v2074
  %v2167 = vunpack.c.l.b16 %v2075
  %v2168 = vunpack.c.h.b16 %v2075
  %v2169 = vunpack.c.l.b16 %v2076
  %v2170 = vunpack.c.h.b16 %v2076
  %v2171 = vunpack.c.l.b16 %v2077
  %v2172 = vunpack.c.h.b16 %v2077
  %v2173 = vunpack.c.l.b16 %v2078
  %v2174 = vunpack.c.h.b16 %v2078
  %v2175 = vpack.c.b16 %v2167, %v2159
  %v2176 = vpack.c.b16 %v2168, %v2160
  %v2177 = vpack.c.b16 %v2169, %v2161
  %v2178 = vpack.c.b16 %v2170, %v2162
  %v2179 = vpack.c.b16 %v2171, %v2163
  %v2180 = vpack.c.b16 %v2172, %v2164
  %v2181 = vpack.c.b16 %v2173, %v2165
  %v2182 = vpack.c.b16 %v2174, %v2166
  %2191 = vmatprep.subr.bf16.mxu0 %v2176
  %2192 = vmatpush1.bf16.xpose.msra.mxu0 %v2175
  %2193 = vmatprep.subr.bf16.mxu0 0
  %2194 = vmatpush1.bf16.xpose.msra.mxu0 0
  %2195 = vmatprep.subr.bf16.mxu0 0
  %2196 = vmatpush1.bf16.xpose.msra.mxu0 0
  %2197 = vmatprep.subr.bf16.mxu0 0
  %2198 = vmatpush1.bf16.xpose.msra.mxu0 0
  %2199 = vmatprep.subr.bf16.mxu0 0
  %2200 = vmatpush1.bf16.xpose.msra.mxu0 0
  %2201 = vmatprep.subr.bf16.mxu0 0
  %2202 = vmatpush1.bf16.xpose.msra.mxu0 0
  %2203 = vmatprep.subr.bf16.mxu0 0
  %2204 = vmatpush1.bf16.xpose.msra.mxu0 0
  %2205 = vmatprep.subr.bf16.mxu0 0
  %2206 = vmatpush1.bf16.xpose.msra.mxu0 0
  %2207 = vmatprep.subr.bf16.mxu0 0
  %2208 = vmatpush1.bf16.xpose.msra.mxu0 0
  %2209 = vmatprep.subr.bf16.mxu0 0
  %2210 = vmatpush1.bf16.xpose.msra.mxu0 0
  %2211 = vmatprep.subr.bf16.mxu0 0
  %2212 = vmatpush1.bf16.xpose.msra.mxu0 0
  %2213 = vmatprep.subr.bf16.mxu0 0
  %2214 = vmatpush1.bf16.xpose.msra.mxu0 0
  %2215 = vmatprep.subr.bf16.mxu0 0
  %2216 = vmatpush1.bf16.xpose.msra.mxu0 0
  %2217 = vmatprep.subr.bf16.mxu0 0
  %2218 = vmatpush1.bf16.xpose.msra.mxu0 0
  %2219 = vmatprep.subr.bf16.mxu0 0
  %2220 = vmatpush1.bf16.xpose.msra.mxu0 0
  %2221 = vmatprep.subr.bf16.mxu0 0
  %2222 = vmatpush1.bf16.xpose.msra.mxu0 0
  %2223 = vmatprep.mubr.bf16.mxu0 %v2136
  %2224 = vmatmul.mubr.bf16.gmra.mrb[0].mxu0 %v2135
  %v2225 = vpop.f32.mrb[0].mxu0
  %v2226 = vadd.f32 0.0, %v2225
  %v2227 = vpop.f32.mrb[0].mxu0
  %v2228 = vpop.f32.mrb[0].mxu0
  %v2229 = vpop.f32.mrb[0].mxu0
  %2230 = vdwg.mxu0
  %2231 = vmatprep.subr.bf16.mxu0 %v2178
  %2232 = vmatpush1.bf16.xpose.msra.mxu0 %v2177
  %2233 = vmatprep.subr.bf16.mxu0 0
  %2234 = vmatpush1.bf16.xpose.msra.mxu0 0
  %2235 = vmatprep.subr.bf16.mxu0 0
  %2236 = vmatpush1.bf16.xpose.msra.mxu0 0
  %2237 = vmatprep.subr.bf16.mxu0 0
  %2238 = vmatpush1.bf16.xpose.msra.mxu0 0
  %2239 = vmatprep.subr.bf16.mxu0 0
  %2240 = vmatpush1.bf16.xpose.msra.mxu0 0
  %2241 = vmatprep.subr.bf16.mxu0 0
  %2242 = vmatpush1.bf16.xpose.msra.mxu0 0
  %2243 = vmatprep.subr.bf16.mxu0 0
  %2244 = vmatpush1.bf16.xpose.msra.mxu0 0
  %2245 = vmatprep.subr.bf16.mxu0 0
  %2246 = vmatpush1.bf16.xpose.msra.mxu0 0
  %2247 = vmatprep.subr.bf16.mxu0 0
  %2248 = vmatpush1.bf16.xpose.msra.mxu0 0
  %2249 = vmatprep.subr.bf16.mxu0 0
  %2250 = vmatpush1.bf16.xpose.msra.mxu0 0
  %2251 = vmatprep.subr.bf16.mxu0 0
  %2252 = vmatpush1.bf16.xpose.msra.mxu0 0
  %2253 = vmatprep.subr.bf16.mxu0 0
  %2254 = vmatpush1.bf16.xpose.msra.mxu0 0
  %2255 = vmatprep.subr.bf16.mxu0 0
  %2256 = vmatpush1.bf16.xpose.msra.mxu0 0
  %2257 = vmatprep.subr.bf16.mxu0 0
  %2258 = vmatpush1.bf16.xpose.msra.mxu0 0
  %2259 = vmatprep.subr.bf16.mxu0 0
  %2260 = vmatpush1.bf16.xpose.msra.mxu0 0
  %2261 = vmatprep.subr.bf16.mxu0 0
  %2262 = vmatpush1.bf16.xpose.msra.mxu0 0
  %2263 = vmatprep.mubr.bf16.mxu0 %v2138
  %2264 = vmatmul.mubr.bf16.gmra.mrb[0].mxu0 %v2137
  %v2265 = vpop.f32.mrb[0].mxu0
  %v2266 = vadd.f32 %v2226, %v2265
  %v2267 = vpop.f32.mrb[0].mxu0
  %v2268 = vpop.f32.mrb[0].mxu0
  %v2269 = vpop.f32.mrb[0].mxu0
  %2270 = vdwg.mxu0
  %2271 = vmatprep.subr.bf16.mxu0 %v2180
  %2272 = vmatpush1.bf16.xpose.msra.mxu0 %v2179
  %2273 = vmatprep.subr.bf16.mxu0 0
  %2274 = vmatpush1.bf16.xpose.msra.mxu0 0
  %2275 = vmatprep.subr.bf16.mxu0 0
  %2276 = vmatpush1.bf16.xpose.msra.mxu0 0
  %2277 = vmatprep.subr.bf16.mxu0 0
  %2278 = vmatpush1.bf16.xpose.msra.mxu0 0
  %2279 = vmatprep.subr.bf16.mxu0 0
  %2280 = vmatpush1.bf16.xpose.msra.mxu0 0
  %2281 = vmatprep.subr.bf16.mxu0 0
  %2282 = vmatpush1.bf16.xpose.msra.mxu0 0
  %2283 = vmatprep.subr.bf16.mxu0 0
  %2284 = vmatpush1.bf16.xpose.msra.mxu0 0
  %2285 = vmatprep.subr.bf16.mxu0 0
  %2286 = vmatpush1.bf16.xpose.msra.mxu0 0
  %2287 = vmatprep.subr.bf16.mxu0 0
  %2288 = vmatpush1.bf16.xpose.msra.mxu0 0
  %2289 = vmatprep.subr.bf16.mxu0 0
  %2290 = vmatpush1.bf16.xpose.msra.mxu0 0
  %2291 = vmatprep.subr.bf16.mxu0 0
  %2292 = vmatpush1.bf16.xpose.msra.mxu0 0
  %2293 = vmatprep.subr.bf16.mxu0 0
  %2294 = vmatpush1.bf16.xpose.msra.mxu0 0
  %2295 = vmatprep.subr.bf16.mxu0 0
  %2296 = vmatpush1.bf16.xpose.msra.mxu0 0
  %2297 = vmatprep.subr.bf16.mxu0 0
  %2298 = vmatpush1.bf16.xpose.msra.mxu0 0
  %2299 = vmatprep.subr.bf16.mxu0 0
  %2300 = vmatpush1.bf16.xpose.msra.mxu0 0
  %2301 = vmatprep.subr.bf16.mxu0 0
  %2302 = vmatpush1.bf16.xpose.msra.mxu0 0
  %2303 = vmatprep.mubr.bf16.mxu0 %v2140
  %2304 = vmatmul.mubr.bf16.gmra.mrb[0].mxu0 %v2139
  %v2305 = vpop.f32.mrb[0].mxu0
  %v2306 = vadd.f32 %v2266, %v2305
  %v2307 = vpop.f32.mrb[0].mxu0
  %v2308 = vpop.f32.mrb[0].mxu0
  %v2309 = vpop.f32.mrb[0].mxu0
  %2310 = vdwg.mxu0
  %2311 = vmatprep.subr.bf16.mxu0 %v2182
  %2312 = vmatpush1.bf16.xpose.msra.mxu0 %v2181
  %2313 = vmatprep.subr.bf16.mxu0 0
  %2314 = vmatpush1.bf16.xpose.msra.mxu0 0
  %2315 = vmatprep.subr.bf16.mxu0 0
  %2316 = vmatpush1.bf16.xpose.msra.mxu0 0
  %2317 = vmatprep.subr.bf16.mxu0 0
  %2318 = vmatpush1.bf16.xpose.msra.mxu0 0
  %2319 = vmatprep.subr.bf16.mxu0 0
  %2320 = vmatpush1.bf16.xpose.msra.mxu0 0
  %2321 = vmatprep.subr.bf16.mxu0 0
  %2322 = vmatpush1.bf16.xpose.msra.mxu0 0
  %2323 = vmatprep.subr.bf16.mxu0 0
  %2324 = vmatpush1.bf16.xpose.msra.mxu0 0
  %2325 = vmatprep.subr.bf16.mxu0 0
  %2326 = vmatpush1.bf16.xpose.msra.mxu0 0
  %2327 = vmatprep.subr.bf16.mxu0 0
  %2328 = vmatpush1.bf16.xpose.msra.mxu0 0
  %2329 = vmatprep.subr.bf16.mxu0 0
  %2330 = vmatpush1.bf16.xpose.msra.mxu0 0
  %2331 = vmatprep.subr.bf16.mxu0 0
  %2332 = vmatpush1.bf16.xpose.msra.mxu0 0
  %2333 = vmatprep.subr.bf16.mxu0 0
  %2334 = vmatpush1.bf16.xpose.msra.mxu0 0
  %2335 = vmatprep.subr.bf16.mxu0 0
  %2336 = vmatpush1.bf16.xpose.msra.mxu0 0
  %2337 = vmatprep.subr.bf16.mxu0 0
  %2338 = vmatpush1.bf16.xpose.msra.mxu0 0
  %2339 = vmatprep.subr.bf16.mxu0 0
  %2340 = vmatpush1.bf16.xpose.msra.mxu0 0
  %2341 = vmatprep.subr.bf16.mxu0 0
  %2342 = vmatpush1.bf16.xpose.msra.mxu0 0
  %2343 = vmatprep.mubr.bf16.mxu0 %v2142
  %2344 = vmatmul.mubr.bf16.gmra.mrb[0].mxu0 %v2141
  %v2345 = vpop.f32.mrb[0].mxu0
  %v2346 = vadd.f32 %v2306, %v2345
  %v2347 = vpop.f32.mrb[0].mxu0
  %v2348 = vpop.f32.mrb[0].mxu0
  %v2349 = vpop.f32.mrb[0].mxu0
  %2350 = vdwg.mxu0
  %v2351 = vadd.f32 %v2053, %v2346
  %s2352 = scalar_lea.vmem %s3, 320
  %v2353 = vld [vmem:[%s2352] sm:$0xff]
  %v2354 = vld [vmem:[%s2352 + $0x8] sm:$0xff]
  %v2355 = vld [vmem:[%s2352 + $0x10] sm:$0xff]
  %v2356 = vld [vmem:[%s2352 + $0x18] sm:$0xff]
  %v2357 = vld [vmem:[%s2352 + $0x20] sm:$0xff]
  %v2358 = vld [vmem:[%s2352 + $0x28] sm:$0xff]
  %v2359 = vld [vmem:[%s2352 + $0x30] sm:$0xff]
  %v2360 = vld [vmem:[%s2352 + $0x38] sm:$0xff]
  %v2361 = vrot.slane %v2095, 5
  %v2362 = vrot.slane %v2103, 4
  %v2363 = vsel %vm1042, %v2362, %v2361
  %v2364 = vrot.slane %v2096, 5
  %v2365 = vrot.slane %v2104, 4
  %v2366 = vsel %vm1042, %v2365, %v2364
  %v2367 = vrot.slane %v2097, 5
  %v2368 = vrot.slane %v2105, 4
  %v2369 = vsel %vm1042, %v2368, %v2367
  %v2370 = vrot.slane %v2098, 5
  %v2371 = vrot.slane %v2106, 4
  %v2372 = vsel %vm1042, %v2371, %v2370
  %v2373 = vrot.slane %v2099, 5
  %v2374 = vrot.slane %v2107, 4
  %v2375 = vsel %vm1042, %v2374, %v2373
  %v2376 = vrot.slane %v2100, 5
  %v2377 = vrot.slane %v2108, 4
  %v2378 = vsel %vm1042, %v2377, %v2376
  %v2379 = vrot.slane %v2101, 5
  %v2380 = vrot.slane %v2109, 4
  %v2381 = vsel %vm1042, %v2380, %v2379
  %v2382 = vrot.slane %v2102, 5
  %v2383 = vrot.slane %v2110, 4
  %v2384 = vsel %vm1042, %v2383, %v2382
  %v2385 = vpack.c.b16 %v2363, %v2363
  %v2386 = vpack.c.b16 %v2366, %v2366
  %v2387 = vpack.c.b16 %v2369, %v2369
  %v2388 = vpack.c.b16 %v2372, %v2372
  %v2389 = vpack.c.b16 %v2375, %v2375
  %v2390 = vpack.c.b16 %v2378, %v2378
  %v2391 = vpack.c.b16 %v2381, %v2381
  %v2392 = vpack.c.b16 %v2384, %v2384
  %v2409 = vunpack.c.l.b16 %v2353
  %v2410 = vunpack.c.h.b16 %v2353
  %v2411 = vunpack.c.l.b16 %v2354
  %v2412 = vunpack.c.h.b16 %v2354
  %v2413 = vunpack.c.l.b16 %v2355
  %v2414 = vunpack.c.h.b16 %v2355
  %v2415 = vunpack.c.l.b16 %v2356
  %v2416 = vunpack.c.h.b16 %v2356
  %v2417 = vunpack.c.l.b16 %v2357
  %v2418 = vunpack.c.h.b16 %v2357
  %v2419 = vunpack.c.l.b16 %v2358
  %v2420 = vunpack.c.h.b16 %v2358
  %v2421 = vunpack.c.l.b16 %v2359
  %v2422 = vunpack.c.h.b16 %v2359
  %v2423 = vunpack.c.l.b16 %v2360
  %v2424 = vunpack.c.h.b16 %v2360
  %v2425 = vpack.c.b16 %v2417, %v2409
  %v2426 = vpack.c.b16 %v2418, %v2410
  %v2427 = vpack.c.b16 %v2419, %v2411
  %v2428 = vpack.c.b16 %v2420, %v2412
  %v2429 = vpack.c.b16 %v2421, %v2413
  %v2430 = vpack.c.b16 %v2422, %v2414
  %v2431 = vpack.c.b16 %v2423, %v2415
  %v2432 = vpack.c.b16 %v2424, %v2416
  %2441 = vmatprep.subr.bf16.mxu0 %v2426
  %2442 = vmatpush1.bf16.xpose.msra.mxu0 %v2425
  %2443 = vmatprep.subr.bf16.mxu0 0
  %2444 = vmatpush1.bf16.xpose.msra.mxu0 0
  %2445 = vmatprep.subr.bf16.mxu0 0
  %2446 = vmatpush1.bf16.xpose.msra.mxu0 0
  %2447 = vmatprep.subr.bf16.mxu0 0
  %2448 = vmatpush1.bf16.xpose.msra.mxu0 0
  %2449 = vmatprep.subr.bf16.mxu0 0
  %2450 = vmatpush1.bf16.xpose.msra.mxu0 0
  %2451 = vmatprep.subr.bf16.mxu0 0
  %2452 = vmatpush1.bf16.xpose.msra.mxu0 0
  %2453 = vmatprep.subr.bf16.mxu0 0
  %2454 = vmatpush1.bf16.xpose.msra.mxu0 0
  %2455 = vmatprep.subr.bf16.mxu0 0
  %2456 = vmatpush1.bf16.xpose.msra.mxu0 0
  %2457 = vmatprep.subr.bf16.mxu0 0
  %2458 = vmatpush1.bf16.xpose.msra.mxu0 0
  %2459 = vmatprep.subr.bf16.mxu0 0
  %2460 = vmatpush1.bf16.xpose.msra.mxu0 0
  %2461 = vmatprep.subr.bf16.mxu0 0
  %2462 = vmatpush1.bf16.xpose.msra.mxu0 0
  %2463 = vmatprep.subr.bf16.mxu0 0
  %2464 = vmatpush1.bf16.xpose.msra.mxu0 0
  %2465 = vmatprep.subr.bf16.mxu0 0
  %2466 = vmatpush1.bf16.xpose.msra.mxu0 0
  %2467 = vmatprep.subr.bf16.mxu0 0
  %2468 = vmatpush1.bf16.xpose.msra.mxu0 0
  %2469 = vmatprep.subr.bf16.mxu0 0
  %2470 = vmatpush1.bf16.xpose.msra.mxu0 0
  %2471 = vmatprep.subr.bf16.mxu0 0
  %2472 = vmatpush1.bf16.xpose.msra.mxu0 0
  %2473 = vmatprep.mubr.bf16.mxu0 %v2386
  %2474 = vmatmul.mubr.bf16.gmra.mrb[0].mxu0 %v2385
  %v2475 = vpop.f32.mrb[0].mxu0
  %v2476 = vadd.f32 0.0, %v2475
  %v2477 = vpop.f32.mrb[0].mxu0
  %v2478 = vpop.f32.mrb[0].mxu0
  %v2479 = vpop.f32.mrb[0].mxu0
  %2480 = vdwg.mxu0
  %2481 = vmatprep.subr.bf16.mxu0 %v2428
  %2482 = vmatpush1.bf16.xpose.msra.mxu0 %v2427
  %2483 = vmatprep.subr.bf16.mxu0 0
  %2484 = vmatpush1.bf16.xpose.msra.mxu0 0
  %2485 = vmatprep.subr.bf16.mxu0 0
  %2486 = vmatpush1.bf16.xpose.msra.mxu0 0
  %2487 = vmatprep.subr.bf16.mxu0 0
  %2488 = vmatpush1.bf16.xpose.msra.mxu0 0
  %2489 = vmatprep.subr.bf16.mxu0 0
  %2490 = vmatpush1.bf16.xpose.msra.mxu0 0
  %2491 = vmatprep.subr.bf16.mxu0 0
  %2492 = vmatpush1.bf16.xpose.msra.mxu0 0
  %2493 = vmatprep.subr.bf16.mxu0 0
  %2494 = vmatpush1.bf16.xpose.msra.mxu0 0
  %2495 = vmatprep.subr.bf16.mxu0 0
  %2496 = vmatpush1.bf16.xpose.msra.mxu0 0
  %2497 = vmatprep.subr.bf16.mxu0 0
  %2498 = vmatpush1.bf16.xpose.msra.mxu0 0
  %2499 = vmatprep.subr.bf16.mxu0 0
  %2500 = vmatpush1.bf16.xpose.msra.mxu0 0
  %2501 = vmatprep.subr.bf16.mxu0 0
  %2502 = vmatpush1.bf16.xpose.msra.mxu0 0
  %2503 = vmatprep.subr.bf16.mxu0 0
  %2504 = vmatpush1.bf16.xpose.msra.mxu0 0
  %2505 = vmatprep.subr.bf16.mxu0 0
  %2506 = vmatpush1.bf16.xpose.msra.mxu0 0
  %2507 = vmatprep.subr.bf16.mxu0 0
  %2508 = vmatpush1.bf16.xpose.msra.mxu0 0
  %2509 = vmatprep.subr.bf16.mxu0 0
  %2510 = vmatpush1.bf16.xpose.msra.mxu0 0
  %2511 = vmatprep.subr.bf16.mxu0 0
  %2512 = vmatpush1.bf16.xpose.msra.mxu0 0
  %2513 = vmatprep.mubr.bf16.mxu0 %v2388
  %2514 = vmatmul.mubr.bf16.gmra.mrb[0].mxu0 %v2387
  %v2515 = vpop.f32.mrb[0].mxu0
  %v2516 = vadd.f32 %v2476, %v2515
  %v2517 = vpop.f32.mrb[0].mxu0
  %v2518 = vpop.f32.mrb[0].mxu0
  %v2519 = vpop.f32.mrb[0].mxu0
  %2520 = vdwg.mxu0
  %2521 = vmatprep.subr.bf16.mxu0 %v2430
  %2522 = vmatpush1.bf16.xpose.msra.mxu0 %v2429
  %2523 = vmatprep.subr.bf16.mxu0 0
  %2524 = vmatpush1.bf16.xpose.msra.mxu0 0
  %2525 = vmatprep.subr.bf16.mxu0 0
  %2526 = vmatpush1.bf16.xpose.msra.mxu0 0
  %2527 = vmatprep.subr.bf16.mxu0 0
  %2528 = vmatpush1.bf16.xpose.msra.mxu0 0
  %2529 = vmatprep.subr.bf16.mxu0 0
  %2530 = vmatpush1.bf16.xpose.msra.mxu0 0
  %2531 = vmatprep.subr.bf16.mxu0 0
  %2532 = vmatpush1.bf16.xpose.msra.mxu0 0
  %2533 = vmatprep.subr.bf16.mxu0 0
  %2534 = vmatpush1.bf16.xpose.msra.mxu0 0
  %2535 = vmatprep.subr.bf16.mxu0 0
  %2536 = vmatpush1.bf16.xpose.msra.mxu0 0
  %2537 = vmatprep.subr.bf16.mxu0 0
  %2538 = vmatpush1.bf16.xpose.msra.mxu0 0
  %2539 = vmatprep.subr.bf16.mxu0 0
  %2540 = vmatpush1.bf16.xpose.msra.mxu0 0
  %2541 = vmatprep.subr.bf16.mxu0 0
  %2542 = vmatpush1.bf16.xpose.msra.mxu0 0
  %2543 = vmatprep.subr.bf16.mxu0 0
  %2544 = vmatpush1.bf16.xpose.msra.mxu0 0
  %2545 = vmatprep.subr.bf16.mxu0 0
  %2546 = vmatpush1.bf16.xpose.msra.mxu0 0
  %2547 = vmatprep.subr.bf16.mxu0 0
  %2548 = vmatpush1.bf16.xpose.msra.mxu0 0
  %2549 = vmatprep.subr.bf16.mxu0 0
  %2550 = vmatpush1.bf16.xpose.msra.mxu0 0
  %2551 = vmatprep.subr.bf16.mxu0 0
  %2552 = vmatpush1.bf16.xpose.msra.mxu0 0
  %2553 = vmatprep.mubr.bf16.mxu0 %v2390
  %2554 = vmatmul.mubr.bf16.gmra.mrb[0].mxu0 %v2389
  %v2555 = vpop.f32.mrb[0].mxu0
  %v2556 = vadd.f32 %v2516, %v2555
  %v2557 = vpop.f32.mrb[0].mxu0
  %v2558 = vpop.f32.mrb[0].mxu0
  %v2559 = vpop.f32.mrb[0].mxu0
  %2560 = vdwg.mxu0
  %2561 = vmatprep.subr.bf16.mxu0 %v2432
  %2562 = vmatpush1.bf16.xpose.msra.mxu0 %v2431
  %2563 = vmatprep.subr.bf16.mxu0 0
  %2564 = vmatpush1.bf16.xpose.msra.mxu0 0
  %2565 = vmatprep.subr.bf16.mxu0 0
  %2566 = vmatpush1.bf16.xpose.msra.mxu0 0
  %2567 = vmatprep.subr.bf16.mxu0 0
  %2568 = vmatpush1.bf16.xpose.msra.mxu0 0
  %2569 = vmatprep.subr.bf16.mxu0 0
  %2570 = vmatpush1.bf16.xpose.msra.mxu0 0
  %2571 = vmatprep.subr.bf16.mxu0 0
  %2572 = vmatpush1.bf16.xpose.msra.mxu0 0
  %2573 = vmatprep.subr.bf16.mxu0 0
  %2574 = vmatpush1.bf16.xpose.msra.mxu0 0
  %2575 = vmatprep.subr.bf16.mxu0 0
  %2576 = vmatpush1.bf16.xpose.msra.mxu0 0
  %2577 = vmatprep.subr.bf16.mxu0 0
  %2578 = vmatpush1.bf16.xpose.msra.mxu0 0
  %2579 = vmatprep.subr.bf16.mxu0 0
  %2580 = vmatpush1.bf16.xpose.msra.mxu0 0
  %2581 = vmatprep.subr.bf16.mxu0 0
  %2582 = vmatpush1.bf16.xpose.msra.mxu0 0
  %2583 = vmatprep.subr.bf16.mxu0 0
  %2584 = vmatpush1.bf16.xpose.msra.mxu0 0
  %2585 = vmatprep.subr.bf16.mxu0 0
  %2586 = vmatpush1.bf16.xpose.msra.mxu0 0
  %2587 = vmatprep.subr.bf16.mxu0 0
  %2588 = vmatpush1.bf16.xpose.msra.mxu0 0
  %2589 = vmatprep.subr.bf16.mxu0 0
  %2590 = vmatpush1.bf16.xpose.msra.mxu0 0
  %2591 = vmatprep.subr.bf16.mxu0 0
  %2592 = vmatpush1.bf16.xpose.msra.mxu0 0
  %2593 = vmatprep.mubr.bf16.mxu0 %v2392
  %2594 = vmatmul.mubr.bf16.gmra.mrb[0].mxu0 %v2391
  %v2595 = vpop.f32.mrb[0].mxu0
  %v2596 = vadd.f32 %v2556, %v2595
  %v2597 = vpop.f32.mrb[0].mxu0
  %v2598 = vpop.f32.mrb[0].mxu0
  %v2599 = vpop.f32.mrb[0].mxu0
  %2600 = vdwg.mxu0
  %v2601 = vadd.f32 %v2351, %v2596
  %v2602 = vld [vmem:[#allocation2] sm:$0x8]
  %v2603 = vld [vmem:[#allocation2 + $0x8] sm:$0x8]
  %v2604 = vld [vmem:[#allocation2 + $0x10] sm:$0x8]
  %v2605 = vld [vmem:[#allocation2 + $0x18] sm:$0x8]
  %v2606 = vld [vmem:[#allocation2 + $0x20] sm:$0x8]
  %v2607 = vld [vmem:[#allocation2 + $0x28] sm:$0x8]
  %v2608 = vld [vmem:[#allocation2 + $0x30] sm:$0x8]
  %v2609 = vld [vmem:[#allocation2 + $0x38] sm:$0x8]
  %v2610 = vld [vmem:[#allocation2 + $0x80] sm:$0x8]
  %v2611 = vld [vmem:[#allocation2 + $0x88] sm:$0x8]
  %v2612 = vld [vmem:[#allocation2 + $0x90] sm:$0x8]
  %v2613 = vld [vmem:[#allocation2 + $0x98] sm:$0x8]
  %v2614 = vld [vmem:[#allocation2 + $0xa0] sm:$0x8]
  %v2615 = vld [vmem:[#allocation2 + $0xa8] sm:$0x8]
  %v2616 = vld [vmem:[#allocation2 + $0xb0] sm:$0x8]
  %v2617 = vld [vmem:[#allocation2 + $0xb8] sm:$0x8]
  %s2618 = scalar_lea.vmem %s3, 384
  %v2619 = vld [vmem:[%s2618] sm:$0xff]
  %v2620 = vld [vmem:[%s2618 + $0x8] sm:$0xff]
  %v2621 = vld [vmem:[%s2618 + $0x10] sm:$0xff]
  %v2622 = vld [vmem:[%s2618 + $0x18] sm:$0xff]
  %v2623 = vld [vmem:[%s2618 + $0x20] sm:$0xff]
  %v2624 = vld [vmem:[%s2618 + $0x28] sm:$0xff]
  %v2625 = vld [vmem:[%s2618 + $0x30] sm:$0xff]
  %v2626 = vld [vmem:[%s2618 + $0x38] sm:$0xff]
  %v2643 = vunpack.c.l.b16 %v2602
  %v2644 = vunpack.c.l.b16 %v2603
  %v2645 = vunpack.c.l.b16 %v2604
  %v2646 = vunpack.c.l.b16 %v2605
  %v2647 = vunpack.c.l.b16 %v2606
  %v2648 = vunpack.c.l.b16 %v2607
  %v2649 = vunpack.c.l.b16 %v2608
  %v2650 = vunpack.c.l.b16 %v2609
  %v2651 = vunpack.c.l.b16 %v2610
  %v2652 = vunpack.c.l.b16 %v2611
  %v2653 = vunpack.c.l.b16 %v2612
  %v2654 = vunpack.c.l.b16 %v2613
  %v2655 = vunpack.c.l.b16 %v2614
  %v2656 = vunpack.c.l.b16 %v2615
  %v2657 = vunpack.c.l.b16 %v2616
  %v2658 = vunpack.c.l.b16 %v2617
  %v2659 = vrot.slane %v2643, 6
  %v2660 = vrot.slane %v2651, 5
  %v2661 = vsel %vm1042, %v2660, %v2659
  %v2662 = vrot.slane %v2644, 6
  %v2663 = vrot.slane %v2652, 5
  %v2664 = vsel %vm1042, %v2663, %v2662
  %v2665 = vrot.slane %v2645, 6
  %v2666 = vrot.slane %v2653, 5
  %v2667 = vsel %vm1042, %v2666, %v2665
  %v2668 = vrot.slane %v2646, 6
  %v2669 = vrot.slane %v2654, 5
  %v2670 = vsel %vm1042, %v2669, %v2668
  %v2671 = vrot.slane %v2647, 6
  %v2672 = vrot.slane %v2655, 5
  %v2673 = vsel %vm1042, %v2672, %v2671
  %v2674 = vrot.slane %v2648, 6
  %v2675 = vrot.slane %v2656, 5
  %v2676 = vsel %vm1042, %v2675, %v2674
  %v2677 = vrot.slane %v2649, 6
  %v2678 = vrot.slane %v2657, 5
  %v2679 = vsel %vm1042, %v2678, %v2677
  %v2680 = vrot.slane %v2650, 6
  %v2681 = vrot.slane %v2658, 5
  %v2682 = vsel %vm1042, %v2681, %v2680
  %v2683 = vpack.c.b16 %v2661, %v2661
  %v2684 = vpack.c.b16 %v2664, %v2664
  %v2685 = vpack.c.b16 %v2667, %v2667
  %v2686 = vpack.c.b16 %v2670, %v2670
  %v2687 = vpack.c.b16 %v2673, %v2673
  %v2688 = vpack.c.b16 %v2676, %v2676
  %v2689 = vpack.c.b16 %v2679, %v2679
  %v2690 = vpack.c.b16 %v2682, %v2682
  %v2707 = vunpack.c.l.b16 %v2619
  %v2708 = vunpack.c.h.b16 %v2619
  %v2709 = vunpack.c.l.b16 %v2620
  %v2710 = vunpack.c.h.b16 %v2620
  %v2711 = vunpack.c.l.b16 %v2621
  %v2712 = vunpack.c.h.b16 %v2621
  %v2713 = vunpack.c.l.b16 %v2622
  %v2714 = vunpack.c.h.b16 %v2622
  %v2715 = vunpack.c.l.b16 %v2623
  %v2716 = vunpack.c.h.b16 %v2623
  %v2717 = vunpack.c.l.b16 %v2624
  %v2718 = vunpack.c.h.b16 %v2624
  %v2719 = vunpack.c.l.b16 %v2625
  %v2720 = vunpack.c.h.b16 %v2625
  %v2721 = vunpack.c.l.b16 %v2626
  %v2722 = vunpack.c.h.b16 %v2626
  %v2723 = vpack.c.b16 %v2715, %v2707
  %v2724 = vpack.c.b16 %v2716, %v2708
  %v2725 = vpack.c.b16 %v2717, %v2709
  %v2726 = vpack.c.b16 %v2718, %v2710
  %v2727 = vpack.c.b16 %v2719, %v2711
  %v2728 = vpack.c.b16 %v2720, %v2712
  %v2729 = vpack.c.b16 %v2721, %v2713
  %v2730 = vpack.c.b16 %v2722, %v2714
  %2739 = vmatprep.subr.bf16.mxu0 %v2724
  %2740 = vmatpush1.bf16.xpose.msra.mxu0 %v2723
  %2741 = vmatprep.subr.bf16.mxu0 0
  %2742 = vmatpush1.bf16.xpose.msra.mxu0 0
  %2743 = vmatprep.subr.bf16.mxu0 0
  %2744 = vmatpush1.bf16.xpose.msra.mxu0 0
  %2745 = vmatprep.subr.bf16.mxu0 0
  %2746 = vmatpush1.bf16.xpose.msra.mxu0 0
  %2747 = vmatprep.subr.bf16.mxu0 0
  %2748 = vmatpush1.bf16.xpose.msra.mxu0 0
  %2749 = vmatprep.subr.bf16.mxu0 0
  %2750 = vmatpush1.bf16.xpose.msra.mxu0 0
  %2751 = vmatprep.subr.bf16.mxu0 0
  %2752 = vmatpush1.bf16.xpose.msra.mxu0 0
  %2753 = vmatprep.subr.bf16.mxu0 0
  %2754 = vmatpush1.bf16.xpose.msra.mxu0 0
  %2755 = vmatprep.subr.bf16.mxu0 0
  %2756 = vmatpush1.bf16.xpose.msra.mxu0 0
  %2757 = vmatprep.subr.bf16.mxu0 0
  %2758 = vmatpush1.bf16.xpose.msra.mxu0 0
  %2759 = vmatprep.subr.bf16.mxu0 0
  %2760 = vmatpush1.bf16.xpose.msra.mxu0 0
  %2761 = vmatprep.subr.bf16.mxu0 0
  %2762 = vmatpush1.bf16.xpose.msra.mxu0 0
  %2763 = vmatprep.subr.bf16.mxu0 0
  %2764 = vmatpush1.bf16.xpose.msra.mxu0 0
  %2765 = vmatprep.subr.bf16.mxu0 0
  %2766 = vmatpush1.bf16.xpose.msra.mxu0 0
  %2767 = vmatprep.subr.bf16.mxu0 0
  %2768 = vmatpush1.bf16.xpose.msra.mxu0 0
  %2769 = vmatprep.subr.bf16.mxu0 0
  %2770 = vmatpush1.bf16.xpose.msra.mxu0 0
  %2771 = vmatprep.mubr.bf16.mxu0 %v2684
  %2772 = vmatmul.mubr.bf16.gmra.mrb[0].mxu0 %v2683
  %v2773 = vpop.f32.mrb[0].mxu0
  %v2774 = vadd.f32 0.0, %v2773
  %v2775 = vpop.f32.mrb[0].mxu0
  %v2776 = vpop.f32.mrb[0].mxu0
  %v2777 = vpop.f32.mrb[0].mxu0
  %2778 = vdwg.mxu0
  %2779 = vmatprep.subr.bf16.mxu0 %v2726
  %2780 = vmatpush1.bf16.xpose.msra.mxu0 %v2725
  %2781 = vmatprep.subr.bf16.mxu0 0
  %2782 = vmatpush1.bf16.xpose.msra.mxu0 0
  %2783 = vmatprep.subr.bf16.mxu0 0
  %2784 = vmatpush1.bf16.xpose.msra.mxu0 0
  %2785 = vmatprep.subr.bf16.mxu0 0
  %2786 = vmatpush1.bf16.xpose.msra.mxu0 0
  %2787 = vmatprep.subr.bf16.mxu0 0
  %2788 = vmatpush1.bf16.xpose.msra.mxu0 0
  %2789 = vmatprep.subr.bf16.mxu0 0
  %2790 = vmatpush1.bf16.xpose.msra.mxu0 0
  %2791 = vmatprep.subr.bf16.mxu0 0
  %2792 = vmatpush1.bf16.xpose.msra.mxu0 0
  %2793 = vmatprep.subr.bf16.mxu0 0
  %2794 = vmatpush1.bf16.xpose.msra.mxu0 0
  %2795 = vmatprep.subr.bf16.mxu0 0
  %2796 = vmatpush1.bf16.xpose.msra.mxu0 0
  %2797 = vmatprep.subr.bf16.mxu0 0
  %2798 = vmatpush1.bf16.xpose.msra.mxu0 0
  %2799 = vmatprep.subr.bf16.mxu0 0
  %2800 = vmatpush1.bf16.xpose.msra.mxu0 0
  %2801 = vmatprep.subr.bf16.mxu0 0
  %2802 = vmatpush1.bf16.xpose.msra.mxu0 0
  %2803 = vmatprep.subr.bf16.mxu0 0
  %2804 = vmatpush1.bf16.xpose.msra.mxu0 0
  %2805 = vmatprep.subr.bf16.mxu0 0
  %2806 = vmatpush1.bf16.xpose.msra.mxu0 0
  %2807 = vmatprep.subr.bf16.mxu0 0
  %2808 = vmatpush1.bf16.xpose.msra.mxu0 0
  %2809 = vmatprep.subr.bf16.mxu0 0
  %2810 = vmatpush1.bf16.xpose.msra.mxu0 0
  %2811 = vmatprep.mubr.bf16.mxu0 %v2686
  %2812 = vmatmul.mubr.bf16.gmra.mrb[0].mxu0 %v2685
  %v2813 = vpop.f32.mrb[0].mxu0
  %v2814 = vadd.f32 %v2774, %v2813
  %v2815 = vpop.f32.mrb[0].mxu0
  %v2816 = vpop.f32.mrb[0].mxu0
  %v2817 = vpop.f32.mrb[0].mxu0
  %2818 = vdwg.mxu0
  %2819 = vmatprep.subr.bf16.mxu0 %v2728
  %2820 = vmatpush1.bf16.xpose.msra.mxu0 %v2727
  %2821 = vmatprep.subr.bf16.mxu0 0
  %2822 = vmatpush1.bf16.xpose.msra.mxu0 0
  %2823 = vmatprep.subr.bf16.mxu0 0
  %2824 = vmatpush1.bf16.xpose.msra.mxu0 0
  %2825 = vmatprep.subr.bf16.mxu0 0
  %2826 = vmatpush1.bf16.xpose.msra.mxu0 0
  %2827 = vmatprep.subr.bf16.mxu0 0
  %2828 = vmatpush1.bf16.xpose.msra.mxu0 0
  %2829 = vmatprep.subr.bf16.mxu0 0
  %2830 = vmatpush1.bf16.xpose.msra.mxu0 0
  %2831 = vmatprep.subr.bf16.mxu0 0
  %2832 = vmatpush1.bf16.xpose.msra.mxu0 0
  %2833 = vmatprep.subr.bf16.mxu0 0
  %2834 = vmatpush1.bf16.xpose.msra.mxu0 0
  %2835 = vmatprep.subr.bf16.mxu0 0
  %2836 = vmatpush1.bf16.xpose.msra.mxu0 0
  %2837 = vmatprep.subr.bf16.mxu0 0
  %2838 = vmatpush1.bf16.xpose.msra.mxu0 0
  %2839 = vmatprep.subr.bf16.mxu0 0
  %2840 = vmatpush1.bf16.xpose.msra.mxu0 0
  %2841 = vmatprep.subr.bf16.mxu0 0
  %2842 = vmatpush1.bf16.xpose.msra.mxu0 0
  %2843 = vmatprep.subr.bf16.mxu0 0
  %2844 = vmatpush1.bf16.xpose.msra.mxu0 0
  %2845 = vmatprep.subr.bf16.mxu0 0
  %2846 = vmatpush1.bf16.xpose.msra.mxu0 0
  %2847 = vmatprep.subr.bf16.mxu0 0
  %2848 = vmatpush1.bf16.xpose.msra.mxu0 0
  %2849 = vmatprep.subr.bf16.mxu0 0
  %2850 = vmatpush1.bf16.xpose.msra.mxu0 0
  %2851 = vmatprep.mubr.bf16.mxu0 %v2688
  %2852 = vmatmul.mubr.bf16.gmra.mrb[0].mxu0 %v2687
  %v2853 = vpop.f32.mrb[0].mxu0
  %v2854 = vadd.f32 %v2814, %v2853
  %v2855 = vpop.f32.mrb[0].mxu0
  %v2856 = vpop.f32.mrb[0].mxu0
  %v2857 = vpop.f32.mrb[0].mxu0
  %2858 = vdwg.mxu0
  %2859 = vmatprep.subr.bf16.mxu0 %v2730
  %2860 = vmatpush1.bf16.xpose.msra.mxu0 %v2729
  %2861 = vmatprep.subr.bf16.mxu0 0
  %2862 = vmatpush1.bf16.xpose.msra.mxu0 0
  %2863 = vmatprep.subr.bf16.mxu0 0
  %2864 = vmatpush1.bf16.xpose.msra.mxu0 0
  %2865 = vmatprep.subr.bf16.mxu0 0
  %2866 = vmatpush1.bf16.xpose.msra.mxu0 0
  %2867 = vmatprep.subr.bf16.mxu0 0
  %2868 = vmatpush1.bf16.xpose.msra.mxu0 0
  %2869 = vmatprep.subr.bf16.mxu0 0
  %2870 = vmatpush1.bf16.xpose.msra.mxu0 0
  %2871 = vmatprep.subr.bf16.mxu0 0
  %2872 = vmatpush1.bf16.xpose.msra.mxu0 0
  %2873 = vmatprep.subr.bf16.mxu0 0
  %2874 = vmatpush1.bf16.xpose.msra.mxu0 0
  %2875 = vmatprep.subr.bf16.mxu0 0
  %2876 = vmatpush1.bf16.xpose.msra.mxu0 0
  %2877 = vmatprep.subr.bf16.mxu0 0
  %2878 = vmatpush1.bf16.xpose.msra.mxu0 0
  %2879 = vmatprep.subr.bf16.mxu0 0
  %2880 = vmatpush1.bf16.xpose.msra.mxu0 0
  %2881 = vmatprep.subr.bf16.mxu0 0
  %2882 = vmatpush1.bf16.xpose.msra.mxu0 0
  %2883 = vmatprep.subr.bf16.mxu0 0
  %2884 = vmatpush1.bf16.xpose.msra.mxu0 0
  %2885 = vmatprep.subr.bf16.mxu0 0
  %2886 = vmatpush1.bf16.xpose.msra.mxu0 0
  %2887 = vmatprep.subr.bf16.mxu0 0
  %2888 = vmatpush1.bf16.xpose.msra.mxu0 0
  %2889 = vmatprep.subr.bf16.mxu0 0
  %2890 = vmatpush1.bf16.xpose.msra.mxu0 0
  %2891 = vmatprep.mubr.bf16.mxu0 %v2690
  %2892 = vmatmul.mubr.bf16.gmra.mrb[0].mxu0 %v2689
  %v2893 = vpop.f32.mrb[0].mxu0
  %v2894 = vadd.f32 %v2854, %v2893
  %v2895 = vpop.f32.mrb[0].mxu0
  %v2896 = vpop.f32.mrb[0].mxu0
  %v2897 = vpop.f32.mrb[0].mxu0
  %2898 = vdwg.mxu0
  %v2899 = vadd.f32 %v2601, %v2894
  %s2900 = scalar_lea.vmem %s3, 448
  %v2901 = vld [vmem:[%s2900] sm:$0xff]
  %v2902 = vld [vmem:[%s2900 + $0x8] sm:$0xff]
  %v2903 = vld [vmem:[%s2900 + $0x10] sm:$0xff]
  %v2904 = vld [vmem:[%s2900 + $0x18] sm:$0xff]
  %v2905 = vld [vmem:[%s2900 + $0x20] sm:$0xff]
  %v2906 = vld [vmem:[%s2900 + $0x28] sm:$0xff]
  %v2907 = vld [vmem:[%s2900 + $0x30] sm:$0xff]
  %v2908 = vld [vmem:[%s2900 + $0x38] sm:$0xff]
  %v2909 = vrot.slane %v2643, 7
  %v2910 = vrot.slane %v2651, 6
  %v2911 = vsel %vm1042, %v2910, %v2909
  %v2912 = vrot.slane %v2644, 7
  %v2913 = vrot.slane %v2652, 6
  %v2914 = vsel %vm1042, %v2913, %v2912
  %v2915 = vrot.slane %v2645, 7
  %v2916 = vrot.slane %v2653, 6
  %v2917 = vsel %vm1042, %v2916, %v2915
  %v2918 = vrot.slane %v2646, 7
  %v2919 = vrot.slane %v2654, 6
  %v2920 = vsel %vm1042, %v2919, %v2918
  %v2921 = vrot.slane %v2647, 7
  %v2922 = vrot.slane %v2655, 6
  %v2923 = vsel %vm1042, %v2922, %v2921
  %v2924 = vrot.slane %v2648, 7
  %v2925 = vrot.slane %v2656, 6
  %v2926 = vsel %vm1042, %v2925, %v2924
  %v2927 = vrot.slane %v2649, 7
  %v2928 = vrot.slane %v2657, 6
  %v2929 = vsel %vm1042, %v2928, %v2927
  %v2930 = vrot.slane %v2650, 7
  %v2931 = vrot.slane %v2658, 6
  %v2932 = vsel %vm1042, %v2931, %v2930
  %v2933 = vpack.c.b16 %v2911, %v2911
  %v2934 = vpack.c.b16 %v2914, %v2914
  %v2935 = vpack.c.b16 %v2917, %v2917
  %v2936 = vpack.c.b16 %v2920, %v2920
  %v2937 = vpack.c.b16 %v2923, %v2923
  %v2938 = vpack.c.b16 %v2926, %v2926
  %v2939 = vpack.c.b16 %v2929, %v2929
  %v2940 = vpack.c.b16 %v2932, %v2932
  %v2957 = vunpack.c.l.b16 %v2901
  %v2958 = vunpack.c.h.b16 %v2901
  %v2959 = vunpack.c.l.b16 %v2902
  %v2960 = vunpack.c.h.b16 %v2902
  %v2961 = vunpack.c.l.b16 %v2903
  %v2962 = vunpack.c.h.b16 %v2903
  %v2963 = vunpack.c.l.b16 %v2904
  %v2964 = vunpack.c.h.b16 %v2904
  %v2965 = vunpack.c.l.b16 %v2905
  %v2966 = vunpack.c.h.b16 %v2905
  %v2967 = vunpack.c.l.b16 %v2906
  %v2968 = vunpack.c.h.b16 %v2906
  %v2969 = vunpack.c.l.b16 %v2907
  %v2970 = vunpack.c.h.b16 %v2907
  %v2971 = vunpack.c.l.b16 %v2908
  %v2972 = vunpack.c.h.b16 %v2908
  %v2973 = vpack.c.b16 %v2965, %v2957
  %v2974 = vpack.c.b16 %v2966, %v2958
  %v2975 = vpack.c.b16 %v2967, %v2959
  %v2976 = vpack.c.b16 %v2968, %v2960
  %v2977 = vpack.c.b16 %v2969, %v2961
  %v2978 = vpack.c.b16 %v2970, %v2962
  %v2979 = vpack.c.b16 %v2971, %v2963
  %v2980 = vpack.c.b16 %v2972, %v2964
  %2989 = vmatprep.subr.bf16.mxu0 %v2974
  %2990 = vmatpush1.bf16.xpose.msra.mxu0 %v2973
  %2991 = vmatprep.subr.bf16.mxu0 0
  %2992 = vmatpush1.bf16.xpose.msra.mxu0 0
  %2993 = vmatprep.subr.bf16.mxu0 0
  %2994 = vmatpush1.bf16.xpose.msra.mxu0 0
  %2995 = vmatprep.subr.bf16.mxu0 0
  %2996 = vmatpush1.bf16.xpose.msra.mxu0 0
  %2997 = vmatprep.subr.bf16.mxu0 0
  %2998 = vmatpush1.bf16.xpose.msra.mxu0 0
  %2999 = vmatprep.subr.bf16.mxu0 0
  %3000 = vmatpush1.bf16.xpose.msra.mxu0 0
  %3001 = vmatprep.subr.bf16.mxu0 0
  %3002 = vmatpush1.bf16.xpose.msra.mxu0 0
  %3003 = vmatprep.subr.bf16.mxu0 0
  %3004 = vmatpush1.bf16.xpose.msra.mxu0 0
  %3005 = vmatprep.subr.bf16.mxu0 0
  %3006 = vmatpush1.bf16.xpose.msra.mxu0 0
  %3007 = vmatprep.subr.bf16.mxu0 0
  %3008 = vmatpush1.bf16.xpose.msra.mxu0 0
  %3009 = vmatprep.subr.bf16.mxu0 0
  %3010 = vmatpush1.bf16.xpose.msra.mxu0 0
  %3011 = vmatprep.subr.bf16.mxu0 0
  %3012 = vmatpush1.bf16.xpose.msra.mxu0 0
  %3013 = vmatprep.subr.bf16.mxu0 0
  %3014 = vmatpush1.bf16.xpose.msra.mxu0 0
  %3015 = vmatprep.subr.bf16.mxu0 0
  %3016 = vmatpush1.bf16.xpose.msra.mxu0 0
  %3017 = vmatprep.subr.bf16.mxu0 0
  %3018 = vmatpush1.bf16.xpose.msra.mxu0 0
  %3019 = vmatprep.subr.bf16.mxu0 0
  %3020 = vmatpush1.bf16.xpose.msra.mxu0 0
  %3021 = vmatprep.mubr.bf16.mxu0 %v2934
  %3022 = vmatmul.mubr.bf16.gmra.mrb[0].mxu0 %v2933
  %v3023 = vpop.f32.mrb[0].mxu0
  %v3024 = vadd.f32 0.0, %v3023
  %v3025 = vpop.f32.mrb[0].mxu0
  %v3026 = vpop.f32.mrb[0].mxu0
  %v3027 = vpop.f32.mrb[0].mxu0
  %3028 = vdwg.mxu0
  %3029 = vmatprep.subr.bf16.mxu0 %v2976
  %3030 = vmatpush1.bf16.xpose.msra.mxu0 %v2975
  %3031 = vmatprep.subr.bf16.mxu0 0
  %3032 = vmatpush1.bf16.xpose.msra.mxu0 0
  %3033 = vmatprep.subr.bf16.mxu0 0
  %3034 = vmatpush1.bf16.xpose.msra.mxu0 0
  %3035 = vmatprep.subr.bf16.mxu0 0
  %3036 = vmatpush1.bf16.xpose.msra.mxu0 0
  %3037 = vmatprep.subr.bf16.mxu0 0
  %3038 = vmatpush1.bf16.xpose.msra.mxu0 0
  %3039 = vmatprep.subr.bf16.mxu0 0
  %3040 = vmatpush1.bf16.xpose.msra.mxu0 0
  %3041 = vmatprep.subr.bf16.mxu0 0
  %3042 = vmatpush1.bf16.xpose.msra.mxu0 0
  %3043 = vmatprep.subr.bf16.mxu0 0
  %3044 = vmatpush1.bf16.xpose.msra.mxu0 0
  %3045 = vmatprep.subr.bf16.mxu0 0
  %3046 = vmatpush1.bf16.xpose.msra.mxu0 0
  %3047 = vmatprep.subr.bf16.mxu0 0
  %3048 = vmatpush1.bf16.xpose.msra.mxu0 0
  %3049 = vmatprep.subr.bf16.mxu0 0
  %3050 = vmatpush1.bf16.xpose.msra.mxu0 0
  %3051 = vmatprep.subr.bf16.mxu0 0
  %3052 = vmatpush1.bf16.xpose.msra.mxu0 0
  %3053 = vmatprep.subr.bf16.mxu0 0
  %3054 = vmatpush1.bf16.xpose.msra.mxu0 0
  %3055 = vmatprep.subr.bf16.mxu0 0
  %3056 = vmatpush1.bf16.xpose.msra.mxu0 0
  %3057 = vmatprep.subr.bf16.mxu0 0
  %3058 = vmatpush1.bf16.xpose.msra.mxu0 0
  %3059 = vmatprep.subr.bf16.mxu0 0
  %3060 = vmatpush1.bf16.xpose.msra.mxu0 0
  %3061 = vmatprep.mubr.bf16.mxu0 %v2936
  %3062 = vmatmul.mubr.bf16.gmra.mrb[0].mxu0 %v2935
  %v3063 = vpop.f32.mrb[0].mxu0
  %v3064 = vadd.f32 %v3024, %v3063
  %v3065 = vpop.f32.mrb[0].mxu0
  %v3066 = vpop.f32.mrb[0].mxu0
  %v3067 = vpop.f32.mrb[0].mxu0
  %3068 = vdwg.mxu0
  %3069 = vmatprep.subr.bf16.mxu0 %v2978
  %3070 = vmatpush1.bf16.xpose.msra.mxu0 %v2977
  %3071 = vmatprep.subr.bf16.mxu0 0
  %3072 = vmatpush1.bf16.xpose.msra.mxu0 0
  %3073 = vmatprep.subr.bf16.mxu0 0
  %3074 = vmatpush1.bf16.xpose.msra.mxu0 0
  %3075 = vmatprep.subr.bf16.mxu0 0
  %3076 = vmatpush1.bf16.xpose.msra.mxu0 0
  %3077 = vmatprep.subr.bf16.mxu0 0
  %3078 = vmatpush1.bf16.xpose.msra.mxu0 0
  %3079 = vmatprep.subr.bf16.mxu0 0
  %3080 = vmatpush1.bf16.xpose.msra.mxu0 0
  %3081 = vmatprep.subr.bf16.mxu0 0
  %3082 = vmatpush1.bf16.xpose.msra.mxu0 0
  %3083 = vmatprep.subr.bf16.mxu0 0
  %3084 = vmatpush1.bf16.xpose.msra.mxu0 0
  %3085 = vmatprep.subr.bf16.mxu0 0
  %3086 = vmatpush1.bf16.xpose.msra.mxu0 0
  %3087 = vmatprep.subr.bf16.mxu0 0
  %3088 = vmatpush1.bf16.xpose.msra.mxu0 0
  %3089 = vmatprep.subr.bf16.mxu0 0
  %3090 = vmatpush1.bf16.xpose.msra.mxu0 0
  %3091 = vmatprep.subr.bf16.mxu0 0
  %3092 = vmatpush1.bf16.xpose.msra.mxu0 0
  %3093 = vmatprep.subr.bf16.mxu0 0
  %3094 = vmatpush1.bf16.xpose.msra.mxu0 0
  %3095 = vmatprep.subr.bf16.mxu0 0
  %3096 = vmatpush1.bf16.xpose.msra.mxu0 0
  %3097 = vmatprep.subr.bf16.mxu0 0
  %3098 = vmatpush1.bf16.xpose.msra.mxu0 0
  %3099 = vmatprep.subr.bf16.mxu0 0
  %3100 = vmatpush1.bf16.xpose.msra.mxu0 0
  %3101 = vmatprep.mubr.bf16.mxu0 %v2938
  %3102 = vmatmul.mubr.bf16.gmra.mrb[0].mxu0 %v2937
  %v3103 = vpop.f32.mrb[0].mxu0
  %v3104 = vadd.f32 %v3064, %v3103
  %v3105 = vpop.f32.mrb[0].mxu0
  %v3106 = vpop.f32.mrb[0].mxu0
  %v3107 = vpop.f32.mrb[0].mxu0
  %3108 = vdwg.mxu0
  %3109 = vmatprep.subr.bf16.mxu0 %v2980
  %3110 = vmatpush1.bf16.xpose.msra.mxu0 %v2979
  %3111 = vmatprep.subr.bf16.mxu0 0
  %3112 = vmatpush1.bf16.xpose.msra.mxu0 0
  %3113 = vmatprep.subr.bf16.mxu0 0
  %3114 = vmatpush1.bf16.xpose.msra.mxu0 0
  %3115 = vmatprep.subr.bf16.mxu0 0
  %3116 = vmatpush1.bf16.xpose.msra.mxu0 0
  %3117 = vmatprep.subr.bf16.mxu0 0
  %3118 = vmatpush1.bf16.xpose.msra.mxu0 0
  %3119 = vmatprep.subr.bf16.mxu0 0
  %3120 = vmatpush1.bf16.xpose.msra.mxu0 0
  %3121 = vmatprep.subr.bf16.mxu0 0
  %3122 = vmatpush1.bf16.xpose.msra.mxu0 0
  %3123 = vmatprep.subr.bf16.mxu0 0
  %3124 = vmatpush1.bf16.xpose.msra.mxu0 0
  %3125 = vmatprep.subr.bf16.mxu0 0
  %3126 = vmatpush1.bf16.xpose.msra.mxu0 0
  %3127 = vmatprep.subr.bf16.mxu0 0
  %3128 = vmatpush1.bf16.xpose.msra.mxu0 0
  %3129 = vmatprep.subr.bf16.mxu0 0
  %3130 = vmatpush1.bf16.xpose.msra.mxu0 0
  %3131 = vmatprep.subr.bf16.mxu0 0
  %3132 = vmatpush1.bf16.xpose.msra.mxu0 0
  %3133 = vmatprep.subr.bf16.mxu0 0
  %3134 = vmatpush1.bf16.xpose.msra.mxu0 0
  %3135 = vmatprep.subr.bf16.mxu0 0
  %3136 = vmatpush1.bf16.xpose.msra.mxu0 0
  %3137 = vmatprep.subr.bf16.mxu0 0
  %3138 = vmatpush1.bf16.xpose.msra.mxu0 0
  %3139 = vmatprep.subr.bf16.mxu0 0
  %3140 = vmatpush1.bf16.xpose.msra.mxu0 0
  %3141 = vmatprep.mubr.bf16.mxu0 %v2940
  %3142 = vmatmul.mubr.bf16.gmra.mrb[0].mxu0 %v2939
  %v3143 = vpop.f32.mrb[0].mxu0
  %v3144 = vadd.f32 %v3104, %v3143
  %v3145 = vpop.f32.mrb[0].mxu0
  %v3146 = vpop.f32.mrb[0].mxu0
  %v3147 = vpop.f32.mrb[0].mxu0
  %3148 = vdwg.mxu0
  %v3149 = vadd.f32 %v2899, %v3144
  %v3150 = vld [vmem:[#allocation2] sm:$0x10]
  %v3151 = vld [vmem:[#allocation2 + $0x8] sm:$0x10]
  %v3152 = vld [vmem:[#allocation2 + $0x10] sm:$0x10]
  %v3153 = vld [vmem:[#allocation2 + $0x18] sm:$0x10]
  %v3154 = vld [vmem:[#allocation2 + $0x20] sm:$0x10]
  %v3155 = vld [vmem:[#allocation2 + $0x28] sm:$0x10]
  %v3156 = vld [vmem:[#allocation2 + $0x30] sm:$0x10]
  %v3157 = vld [vmem:[#allocation2 + $0x38] sm:$0x10]
  %v3158 = vld [vmem:[#allocation2 + $0x80] sm:$0x10]
  %v3159 = vld [vmem:[#allocation2 + $0x88] sm:$0x10]
  %v3160 = vld [vmem:[#allocation2 + $0x90] sm:$0x10]
  %v3161 = vld [vmem:[#allocation2 + $0x98] sm:$0x10]
  %v3162 = vld [vmem:[#allocation2 + $0xa0] sm:$0x10]
  %v3163 = vld [vmem:[#allocation2 + $0xa8] sm:$0x10]
  %v3164 = vld [vmem:[#allocation2 + $0xb0] sm:$0x10]
  %v3165 = vld [vmem:[#allocation2 + $0xb8] sm:$0x10]
  %s3166 = scalar_lea.vmem %s3, 512
  %v3167 = vld [vmem:[%s3166] sm:$0xff]
  %v3168 = vld [vmem:[%s3166 + $0x8] sm:$0xff]
  %v3169 = vld [vmem:[%s3166 + $0x10] sm:$0xff]
  %v3170 = vld [vmem:[%s3166 + $0x18] sm:$0xff]
  %v3171 = vld [vmem:[%s3166 + $0x20] sm:$0xff]
  %v3172 = vld [vmem:[%s3166 + $0x28] sm:$0xff]
  %v3173 = vld [vmem:[%s3166 + $0x30] sm:$0xff]
  %v3174 = vld [vmem:[%s3166 + $0x38] sm:$0xff]
  %v3191 = vunpack.c.h.b16 %v3150
  %v3192 = vunpack.c.h.b16 %v3151
  %v3193 = vunpack.c.h.b16 %v3152
  %v3194 = vunpack.c.h.b16 %v3153
  %v3195 = vunpack.c.h.b16 %v3154
  %v3196 = vunpack.c.h.b16 %v3155
  %v3197 = vunpack.c.h.b16 %v3156
  %v3198 = vunpack.c.h.b16 %v3157
  %v3199 = vunpack.c.h.b16 %v3158
  %v3200 = vunpack.c.h.b16 %v3159
  %v3201 = vunpack.c.h.b16 %v3160
  %v3202 = vunpack.c.h.b16 %v3161
  %v3203 = vunpack.c.h.b16 %v3162
  %v3204 = vunpack.c.h.b16 %v3163
  %v3205 = vunpack.c.h.b16 %v3164
  %v3206 = vunpack.c.h.b16 %v3165
  %v3207 = vrot.slane %v3199, 7
  %v3208 = vsel %vm1042, %v3207, %v3191
  %v3209 = vrot.slane %v3200, 7
  %v3210 = vsel %vm1042, %v3209, %v3192
  %v3211 = vrot.slane %v3201, 7
  %v3212 = vsel %vm1042, %v3211, %v3193
  %v3213 = vrot.slane %v3202, 7
  %v3214 = vsel %vm1042, %v3213, %v3194
  %v3215 = vrot.slane %v3203, 7
  %v3216 = vsel %vm1042, %v3215, %v3195
  %v3217 = vrot.slane %v3204, 7
  %v3218 = vsel %vm1042, %v3217, %v3196
  %v3219 = vrot.slane %v3205, 7
  %v3220 = vsel %vm1042, %v3219, %v3197
  %v3221 = vrot.slane %v3206, 7
  %v3222 = vsel %vm1042, %v3221, %v3198
  %v3223 = vpack.c.b16 %v3208, %v3208
  %v3224 = vpack.c.b16 %v3210, %v3210
  %v3225 = vpack.c.b16 %v3212, %v3212
  %v3226 = vpack.c.b16 %v3214, %v3214
  %v3227 = vpack.c.b16 %v3216, %v3216
  %v3228 = vpack.c.b16 %v3218, %v3218
  %v3229 = vpack.c.b16 %v3220, %v3220
  %v3230 = vpack.c.b16 %v3222, %v3222
  %v3247 = vunpack.c.l.b16 %v3167
  %v3248 = vunpack.c.h.b16 %v3167
  %v3249 = vunpack.c.l.b16 %v3168
  %v3250 = vunpack.c.h.b16 %v3168
  %v3251 = vunpack.c.l.b16 %v3169
  %v3252 = vunpack.c.h.b16 %v3169
  %v3253 = vunpack.c.l.b16 %v3170
  %v3254 = vunpack.c.h.b16 %v3170
  %v3255 = vunpack.c.l.b16 %v3171
  %v3256 = vunpack.c.h.b16 %v3171
  %v3257 = vunpack.c.l.b16 %v3172
  %v3258 = vunpack.c.h.b16 %v3172
  %v3259 = vunpack.c.l.b16 %v3173
  %v3260 = vunpack.c.h.b16 %v3173
  %v3261 = vunpack.c.l.b16 %v3174
  %v3262 = vunpack.c.h.b16 %v3174
  %v3263 = vpack.c.b16 %v3255, %v3247
  %v3264 = vpack.c.b16 %v3256, %v3248
  %v3265 = vpack.c.b16 %v3257, %v3249
  %v3266 = vpack.c.b16 %v3258, %v3250
  %v3267 = vpack.c.b16 %v3259, %v3251
  %v3268 = vpack.c.b16 %v3260, %v3252
  %v3269 = vpack.c.b16 %v3261, %v3253
  %v3270 = vpack.c.b16 %v3262, %v3254
  %3279 = vmatprep.subr.bf16.mxu0 %v3264
  %3280 = vmatpush1.bf16.xpose.msra.mxu0 %v3263
  %3281 = vmatprep.subr.bf16.mxu0 0
  %3282 = vmatpush1.bf16.xpose.msra.mxu0 0
  %3283 = vmatprep.subr.bf16.mxu0 0
  %3284 = vmatpush1.bf16.xpose.msra.mxu0 0
  %3285 = vmatprep.subr.bf16.mxu0 0
  %3286 = vmatpush1.bf16.xpose.msra.mxu0 0
  %3287 = vmatprep.subr.bf16.mxu0 0
  %3288 = vmatpush1.bf16.xpose.msra.mxu0 0
  %3289 = vmatprep.subr.bf16.mxu0 0
  %3290 = vmatpush1.bf16.xpose.msra.mxu0 0
  %3291 = vmatprep.subr.bf16.mxu0 0
  %3292 = vmatpush1.bf16.xpose.msra.mxu0 0
  %3293 = vmatprep.subr.bf16.mxu0 0
  %3294 = vmatpush1.bf16.xpose.msra.mxu0 0
  %3295 = vmatprep.subr.bf16.mxu0 0
  %3296 = vmatpush1.bf16.xpose.msra.mxu0 0
  %3297 = vmatprep.subr.bf16.mxu0 0
  %3298 = vmatpush1.bf16.xpose.msra.mxu0 0
  %3299 = vmatprep.subr.bf16.mxu0 0
  %3300 = vmatpush1.bf16.xpose.msra.mxu0 0
  %3301 = vmatprep.subr.bf16.mxu0 0
  %3302 = vmatpush1.bf16.xpose.msra.mxu0 0
  %3303 = vmatprep.subr.bf16.mxu0 0
  %3304 = vmatpush1.bf16.xpose.msra.mxu0 0
  %3305 = vmatprep.subr.bf16.mxu0 0
  %3306 = vmatpush1.bf16.xpose.msra.mxu0 0
  %3307 = vmatprep.subr.bf16.mxu0 0
  %3308 = vmatpush1.bf16.xpose.msra.mxu0 0
  %3309 = vmatprep.subr.bf16.mxu0 0
  %3310 = vmatpush1.bf16.xpose.msra.mxu0 0
  %3311 = vmatprep.mubr.bf16.mxu0 %v3224
  %3312 = vmatmul.mubr.bf16.gmra.mrb[0].mxu0 %v3223
  %v3313 = vpop.f32.mrb[0].mxu0
  %v3314 = vadd.f32 0.0, %v3313
  %v3315 = vpop.f32.mrb[0].mxu0
  %v3316 = vpop.f32.mrb[0].mxu0
  %v3317 = vpop.f32.mrb[0].mxu0
  %3318 = vdwg.mxu0
  %3319 = vmatprep.subr.bf16.mxu0 %v3266
  %3320 = vmatpush1.bf16.xpose.msra.mxu0 %v3265
  %3321 = vmatprep.subr.bf16.mxu0 0
  %3322 = vmatpush1.bf16.xpose.msra.mxu0 0
  %3323 = vmatprep.subr.bf16.mxu0 0
  %3324 = vmatpush1.bf16.xpose.msra.mxu0 0
  %3325 = vmatprep.subr.bf16.mxu0 0
  %3326 = vmatpush1.bf16.xpose.msra.mxu0 0
  %3327 = vmatprep.subr.bf16.mxu0 0
  %3328 = vmatpush1.bf16.xpose.msra.mxu0 0
  %3329 = vmatprep.subr.bf16.mxu0 0
  %3330 = vmatpush1.bf16.xpose.msra.mxu0 0
  %3331 = vmatprep.subr.bf16.mxu0 0
  %3332 = vmatpush1.bf16.xpose.msra.mxu0 0
  %3333 = vmatprep.subr.bf16.mxu0 0
  %3334 = vmatpush1.bf16.xpose.msra.mxu0 0
  %3335 = vmatprep.subr.bf16.mxu0 0
  %3336 = vmatpush1.bf16.xpose.msra.mxu0 0
  %3337 = vmatprep.subr.bf16.mxu0 0
  %3338 = vmatpush1.bf16.xpose.msra.mxu0 0
  %3339 = vmatprep.subr.bf16.mxu0 0
  %3340 = vmatpush1.bf16.xpose.msra.mxu0 0
  %3341 = vmatprep.subr.bf16.mxu0 0
  %3342 = vmatpush1.bf16.xpose.msra.mxu0 0
  %3343 = vmatprep.subr.bf16.mxu0 0
  %3344 = vmatpush1.bf16.xpose.msra.mxu0 0
  %3345 = vmatprep.subr.bf16.mxu0 0
  %3346 = vmatpush1.bf16.xpose.msra.mxu0 0
  %3347 = vmatprep.subr.bf16.mxu0 0
  %3348 = vmatpush1.bf16.xpose.msra.mxu0 0
  %3349 = vmatprep.subr.bf16.mxu0 0
  %3350 = vmatpush1.bf16.xpose.msra.mxu0 0
  %3351 = vmatprep.mubr.bf16.mxu0 %v3226
  %3352 = vmatmul.mubr.bf16.gmra.mrb[0].mxu0 %v3225
  %v3353 = vpop.f32.mrb[0].mxu0
  %v3354 = vadd.f32 %v3314, %v3353
  %v3355 = vpop.f32.mrb[0].mxu0
  %v3356 = vpop.f32.mrb[0].mxu0
  %v3357 = vpop.f32.mrb[0].mxu0
  %3358 = vdwg.mxu0
  %3359 = vmatprep.subr.bf16.mxu0 %v3268
  %3360 = vmatpush1.bf16.xpose.msra.mxu0 %v3267
  %3361 = vmatprep.subr.bf16.mxu0 0
  %3362 = vmatpush1.bf16.xpose.msra.mxu0 0
  %3363 = vmatprep.subr.bf16.mxu0 0
  %3364 = vmatpush1.bf16.xpose.msra.mxu0 0
  %3365 = vmatprep.subr.bf16.mxu0 0
  %3366 = vmatpush1.bf16.xpose.msra.mxu0 0
  %3367 = vmatprep.subr.bf16.mxu0 0
  %3368 = vmatpush1.bf16.xpose.msra.mxu0 0
  %3369 = vmatprep.subr.bf16.mxu0 0
  %3370 = vmatpush1.bf16.xpose.msra.mxu0 0
  %3371 = vmatprep.subr.bf16.mxu0 0
  %3372 = vmatpush1.bf16.xpose.msra.mxu0 0
  %3373 = vmatprep.subr.bf16.mxu0 0
  %3374 = vmatpush1.bf16.xpose.msra.mxu0 0
  %3375 = vmatprep.subr.bf16.mxu0 0
  %3376 = vmatpush1.bf16.xpose.msra.mxu0 0
  %3377 = vmatprep.subr.bf16.mxu0 0
  %3378 = vmatpush1.bf16.xpose.msra.mxu0 0
  %3379 = vmatprep.subr.bf16.mxu0 0
  %3380 = vmatpush1.bf16.xpose.msra.mxu0 0
  %3381 = vmatprep.subr.bf16.mxu0 0
  %3382 = vmatpush1.bf16.xpose.msra.mxu0 0
  %3383 = vmatprep.subr.bf16.mxu0 0
  %3384 = vmatpush1.bf16.xpose.msra.mxu0 0
  %3385 = vmatprep.subr.bf16.mxu0 0
  %3386 = vmatpush1.bf16.xpose.msra.mxu0 0
  %3387 = vmatprep.subr.bf16.mxu0 0
  %3388 = vmatpush1.bf16.xpose.msra.mxu0 0
  %3389 = vmatprep.subr.bf16.mxu0 0
  %3390 = vmatpush1.bf16.xpose.msra.mxu0 0
  %3391 = vmatprep.mubr.bf16.mxu0 %v3228
  %3392 = vmatmul.mubr.bf16.gmra.mrb[0].mxu0 %v3227
  %v3393 = vpop.f32.mrb[0].mxu0
  %v3394 = vadd.f32 %v3354, %v3393
  %v3395 = vpop.f32.mrb[0].mxu0
  %v3396 = vpop.f32.mrb[0].mxu0
  %v3397 = vpop.f32.mrb[0].mxu0
  %3398 = vdwg.mxu0
  %3399 = vmatprep.subr.bf16.mxu0 %v3270
  %3400 = vmatpush1.bf16.xpose.msra.mxu0 %v3269
  %3401 = vmatprep.subr.bf16.mxu0 0
  %3402 = vmatpush1.bf16.xpose.msra.mxu0 0
  %3403 = vmatprep.subr.bf16.mxu0 0
  %3404 = vmatpush1.bf16.xpose.msra.mxu0 0
  %3405 = vmatprep.subr.bf16.mxu0 0
  %3406 = vmatpush1.bf16.xpose.msra.mxu0 0
  %3407 = vmatprep.subr.bf16.mxu0 0
  %3408 = vmatpush1.bf16.xpose.msra.mxu0 0
  %3409 = vmatprep.subr.bf16.mxu0 0
  %3410 = vmatpush1.bf16.xpose.msra.mxu0 0
  %3411 = vmatprep.subr.bf16.mxu0 0
  %3412 = vmatpush1.bf16.xpose.msra.mxu0 0
  %3413 = vmatprep.subr.bf16.mxu0 0
  %3414 = vmatpush1.bf16.xpose.msra.mxu0 0
  %3415 = vmatprep.subr.bf16.mxu0 0
  %3416 = vmatpush1.bf16.xpose.msra.mxu0 0
  %3417 = vmatprep.subr.bf16.mxu0 0
  %3418 = vmatpush1.bf16.xpose.msra.mxu0 0
  %3419 = vmatprep.subr.bf16.mxu0 0
  %3420 = vmatpush1.bf16.xpose.msra.mxu0 0
  %3421 = vmatprep.subr.bf16.mxu0 0
  %3422 = vmatpush1.bf16.xpose.msra.mxu0 0
  %3423 = vmatprep.subr.bf16.mxu0 0
  %3424 = vmatpush1.bf16.xpose.msra.mxu0 0
  %3425 = vmatprep.subr.bf16.mxu0 0
  %3426 = vmatpush1.bf16.xpose.msra.mxu0 0
  %3427 = vmatprep.subr.bf16.mxu0 0
  %3428 = vmatpush1.bf16.xpose.msra.mxu0 0
  %3429 = vmatprep.subr.bf16.mxu0 0
  %3430 = vmatpush1.bf16.xpose.msra.mxu0 0
  %3431 = vmatprep.mubr.bf16.mxu0 %v3230
  %3432 = vmatmul.mubr.bf16.gmra.mrb[0].mxu0 %v3229
  %v3433 = vpop.f32.mrb[0].mxu0
  %v3434 = vadd.f32 %v3394, %v3433
  %v3435 = vpop.f32.mrb[0].mxu0
  %v3436 = vpop.f32.mrb[0].mxu0
  %v3437 = vpop.f32.mrb[0].mxu0
  %3438 = vdwg.mxu0
  %v3439 = vadd.f32 %v3149, %v3434
  %s3440 = scalar_lea.vmem %s3, 576
  %v3441 = vld [vmem:[%s3440] sm:$0xff]
  %v3442 = vld [vmem:[%s3440 + $0x8] sm:$0xff]
  %v3443 = vld [vmem:[%s3440 + $0x10] sm:$0xff]
  %v3444 = vld [vmem:[%s3440 + $0x18] sm:$0xff]
  %v3445 = vld [vmem:[%s3440 + $0x20] sm:$0xff]
  %v3446 = vld [vmem:[%s3440 + $0x28] sm:$0xff]
  %v3447 = vld [vmem:[%s3440 + $0x30] sm:$0xff]
  %v3448 = vld [vmem:[%s3440 + $0x38] sm:$0xff]
  %v3449 = vrot.slane %v3191, 1
  %v3450 = vsel %vm1042, %v3199, %v3449
  %v3451 = vrot.slane %v3192, 1
  %v3452 = vsel %vm1042, %v3200, %v3451
  %v3453 = vrot.slane %v3193, 1
  %v3454 = vsel %vm1042, %v3201, %v3453
  %v3455 = vrot.slane %v3194, 1
  %v3456 = vsel %vm1042, %v3202, %v3455
  %v3457 = vrot.slane %v3195, 1
  %v3458 = vsel %vm1042, %v3203, %v3457
  %v3459 = vrot.slane %v3196, 1
  %v3460 = vsel %vm1042, %v3204, %v3459
  %v3461 = vrot.slane %v3197, 1
  %v3462 = vsel %vm1042, %v3205, %v3461
  %v3463 = vrot.slane %v3198, 1
  %v3464 = vsel %vm1042, %v3206, %v3463
  %v3465 = vpack.c.b16 %v3450, %v3450
  %v3466 = vpack.c.b16 %v3452, %v3452
  %v3467 = vpack.c.b16 %v3454, %v3454
  %v3468 = vpack.c.b16 %v3456, %v3456
  %v3469 = vpack.c.b16 %v3458, %v3458
  %v3470 = vpack.c.b16 %v3460, %v3460
  %v3471 = vpack.c.b16 %v3462, %v3462
  %v3472 = vpack.c.b16 %v3464, %v3464
  %v3489 = vunpack.c.l.b16 %v3441
  %v3490 = vunpack.c.h.b16 %v3441
  %v3491 = vunpack.c.l.b16 %v3442
  %v3492 = vunpack.c.h.b16 %v3442
  %v3493 = vunpack.c.l.b16 %v3443
  %v3494 = vunpack.c.h.b16 %v3443
  %v3495 = vunpack.c.l.b16 %v3444
  %v3496 = vunpack.c.h.b16 %v3444
  %v3497 = vunpack.c.l.b16 %v3445
  %v3498 = vunpack.c.h.b16 %v3445
  %v3499 = vunpack.c.l.b16 %v3446
  %v3500 = vunpack.c.h.b16 %v3446
  %v3501 = vunpack.c.l.b16 %v3447
  %v3502 = vunpack.c.h.b16 %v3447
  %v3503 = vunpack.c.l.b16 %v3448
  %v3504 = vunpack.c.h.b16 %v3448
  %v3505 = vpack.c.b16 %v3497, %v3489
  %v3506 = vpack.c.b16 %v3498, %v3490
  %v3507 = vpack.c.b16 %v3499, %v3491
  %v3508 = vpack.c.b16 %v3500, %v3492
  %v3509 = vpack.c.b16 %v3501, %v3493
  %v3510 = vpack.c.b16 %v3502, %v3494
  %v3511 = vpack.c.b16 %v3503, %v3495
  %v3512 = vpack.c.b16 %v3504, %v3496
  %3521 = vmatprep.subr.bf16.mxu0 %v3506
  %3522 = vmatpush1.bf16.xpose.msra.mxu0 %v3505
  %3523 = vmatprep.subr.bf16.mxu0 0
  %3524 = vmatpush1.bf16.xpose.msra.mxu0 0
  %3525 = vmatprep.subr.bf16.mxu0 0
  %3526 = vmatpush1.bf16.xpose.msra.mxu0 0
  %3527 = vmatprep.subr.bf16.mxu0 0
  %3528 = vmatpush1.bf16.xpose.msra.mxu0 0
  %3529 = vmatprep.subr.bf16.mxu0 0
  %3530 = vmatpush1.bf16.xpose.msra.mxu0 0
  %3531 = vmatprep.subr.bf16.mxu0 0
  %3532 = vmatpush1.bf16.xpose.msra.mxu0 0
  %3533 = vmatprep.subr.bf16.mxu0 0
  %3534 = vmatpush1.bf16.xpose.msra.mxu0 0
  %3535 = vmatprep.subr.bf16.mxu0 0
  %3536 = vmatpush1.bf16.xpose.msra.mxu0 0
  %3537 = vmatprep.subr.bf16.mxu0 0
  %3538 = vmatpush1.bf16.xpose.msra.mxu0 0
  %3539 = vmatprep.subr.bf16.mxu0 0
  %3540 = vmatpush1.bf16.xpose.msra.mxu0 0
  %3541 = vmatprep.subr.bf16.mxu0 0
  %3542 = vmatpush1.bf16.xpose.msra.mxu0 0
  %3543 = vmatprep.subr.bf16.mxu0 0
  %3544 = vmatpush1.bf16.xpose.msra.mxu0 0
  %3545 = vmatprep.subr.bf16.mxu0 0
  %3546 = vmatpush1.bf16.xpose.msra.mxu0 0
  %3547 = vmatprep.subr.bf16.mxu0 0
  %3548 = vmatpush1.bf16.xpose.msra.mxu0 0
  %3549 = vmatprep.subr.bf16.mxu0 0
  %3550 = vmatpush1.bf16.xpose.msra.mxu0 0
  %3551 = vmatprep.subr.bf16.mxu0 0
  %3552 = vmatpush1.bf16.xpose.msra.mxu0 0
  %3553 = vmatprep.mubr.bf16.mxu0 %v3466
  %3554 = vmatmul.mubr.bf16.gmra.mrb[0].mxu0 %v3465
  %v3555 = vpop.f32.mrb[0].mxu0
  %v3556 = vadd.f32 0.0, %v3555
  %v3557 = vpop.f32.mrb[0].mxu0
  %v3558 = vpop.f32.mrb[0].mxu0
  %v3559 = vpop.f32.mrb[0].mxu0
  %3560 = vdwg.mxu0
  %3561 = vmatprep.subr.bf16.mxu0 %v3508
  %3562 = vmatpush1.bf16.xpose.msra.mxu0 %v3507
  %3563 = vmatprep.subr.bf16.mxu0 0
  %3564 = vmatpush1.bf16.xpose.msra.mxu0 0
  %3565 = vmatprep.subr.bf16.mxu0 0
  %3566 = vmatpush1.bf16.xpose.msra.mxu0 0
  %3567 = vmatprep.subr.bf16.mxu0 0
  %3568 = vmatpush1.bf16.xpose.msra.mxu0 0
  %3569 = vmatprep.subr.bf16.mxu0 0
  %3570 = vmatpush1.bf16.xpose.msra.mxu0 0
  %3571 = vmatprep.subr.bf16.mxu0 0
  %3572 = vmatpush1.bf16.xpose.msra.mxu0 0
  %3573 = vmatprep.subr.bf16.mxu0 0
  %3574 = vmatpush1.bf16.xpose.msra.mxu0 0
  %3575 = vmatprep.subr.bf16.mxu0 0
  %3576 = vmatpush1.bf16.xpose.msra.mxu0 0
  %3577 = vmatprep.subr.bf16.mxu0 0
  %3578 = vmatpush1.bf16.xpose.msra.mxu0 0
  %3579 = vmatprep.subr.bf16.mxu0 0
  %3580 = vmatpush1.bf16.xpose.msra.mxu0 0
  %3581 = vmatprep.subr.bf16.mxu0 0
  %3582 = vmatpush1.bf16.xpose.msra.mxu0 0
  %3583 = vmatprep.subr.bf16.mxu0 0
  %3584 = vmatpush1.bf16.xpose.msra.mxu0 0
  %3585 = vmatprep.subr.bf16.mxu0 0
  %3586 = vmatpush1.bf16.xpose.msra.mxu0 0
  %3587 = vmatprep.subr.bf16.mxu0 0
  %3588 = vmatpush1.bf16.xpose.msra.mxu0 0
  %3589 = vmatprep.subr.bf16.mxu0 0
  %3590 = vmatpush1.bf16.xpose.msra.mxu0 0
  %3591 = vmatprep.subr.bf16.mxu0 0
  %3592 = vmatpush1.bf16.xpose.msra.mxu0 0
  %3593 = vmatprep.mubr.bf16.mxu0 %v3468
  %3594 = vmatmul.mubr.bf16.gmra.mrb[0].mxu0 %v3467
  %v3595 = vpop.f32.mrb[0].mxu0
  %v3596 = vadd.f32 %v3556, %v3595
  %v3597 = vpop.f32.mrb[0].mxu0
  %v3598 = vpop.f32.mrb[0].mxu0
  %v3599 = vpop.f32.mrb[0].mxu0
  %3600 = vdwg.mxu0
  %3601 = vmatprep.subr.bf16.mxu0 %v3510
  %3602 = vmatpush1.bf16.xpose.msra.mxu0 %v3509
  %3603 = vmatprep.subr.bf16.mxu0 0
  %3604 = vmatpush1.bf16.xpose.msra.mxu0 0
  %3605 = vmatprep.subr.bf16.mxu0 0
  %3606 = vmatpush1.bf16.xpose.msra.mxu0 0
  %3607 = vmatprep.subr.bf16.mxu0 0
  %3608 = vmatpush1.bf16.xpose.msra.mxu0 0
  %3609 = vmatprep.subr.bf16.mxu0 0
  %3610 = vmatpush1.bf16.xpose.msra.mxu0 0
  %3611 = vmatprep.subr.bf16.mxu0 0
  %3612 = vmatpush1.bf16.xpose.msra.mxu0 0
  %3613 = vmatprep.subr.bf16.mxu0 0
  %3614 = vmatpush1.bf16.xpose.msra.mxu0 0
  %3615 = vmatprep.subr.bf16.mxu0 0
  %3616 = vmatpush1.bf16.xpose.msra.mxu0 0
  %3617 = vmatprep.subr.bf16.mxu0 0
  %3618 = vmatpush1.bf16.xpose.msra.mxu0 0
  %3619 = vmatprep.subr.bf16.mxu0 0
  %3620 = vmatpush1.bf16.xpose.msra.mxu0 0
  %3621 = vmatprep.subr.bf16.mxu0 0
  %3622 = vmatpush1.bf16.xpose.msra.mxu0 0
  %3623 = vmatprep.subr.bf16.mxu0 0
  %3624 = vmatpush1.bf16.xpose.msra.mxu0 0
  %3625 = vmatprep.subr.bf16.mxu0 0
  %3626 = vmatpush1.bf16.xpose.msra.mxu0 0
  %3627 = vmatprep.subr.bf16.mxu0 0
  %3628 = vmatpush1.bf16.xpose.msra.mxu0 0
  %3629 = vmatprep.subr.bf16.mxu0 0
  %3630 = vmatpush1.bf16.xpose.msra.mxu0 0
  %3631 = vmatprep.subr.bf16.mxu0 0
  %3632 = vmatpush1.bf16.xpose.msra.mxu0 0
  %3633 = vmatprep.mubr.bf16.mxu0 %v3470
  %3634 = vmatmul.mubr.bf16.gmra.mrb[0].mxu0 %v3469
  %v3635 = vpop.f32.mrb[0].mxu0
  %v3636 = vadd.f32 %v3596, %v3635
  %v3637 = vpop.f32.mrb[0].mxu0
  %v3638 = vpop.f32.mrb[0].mxu0
  %v3639 = vpop.f32.mrb[0].mxu0
  %3640 = vdwg.mxu0
  %3641 = vmatprep.subr.bf16.mxu0 %v3512
  %3642 = vmatpush1.bf16.xpose.msra.mxu0 %v3511
  %3643 = vmatprep.subr.bf16.mxu0 0
  %3644 = vmatpush1.bf16.xpose.msra.mxu0 0
  %3645 = vmatprep.subr.bf16.mxu0 0
  %3646 = vmatpush1.bf16.xpose.msra.mxu0 0
  %3647 = vmatprep.subr.bf16.mxu0 0
  %3648 = vmatpush1.bf16.xpose.msra.mxu0 0
  %3649 = vmatprep.subr.bf16.mxu0 0
  %3650 = vmatpush1.bf16.xpose.msra.mxu0 0
  %3651 = vmatprep.subr.bf16.mxu0 0
  %3652 = vmatpush1.bf16.xpose.msra.mxu0 0
  %3653 = vmatprep.subr.bf16.mxu0 0
  %3654 = vmatpush1.bf16.xpose.msra.mxu0 0
  %3655 = vmatprep.subr.bf16.mxu0 0
  %3656 = vmatpush1.bf16.xpose.msra.mxu0 0
  %3657 = vmatprep.subr.bf16.mxu0 0
  %3658 = vmatpush1.bf16.xpose.msra.mxu0 0
  %3659 = vmatprep.subr.bf16.mxu0 0
  %3660 = vmatpush1.bf16.xpose.msra.mxu0 0
  %3661 = vmatprep.subr.bf16.mxu0 0
  %3662 = vmatpush1.bf16.xpose.msra.mxu0 0
  %3663 = vmatprep.subr.bf16.mxu0 0
  %3664 = vmatpush1.bf16.xpose.msra.mxu0 0
  %3665 = vmatprep.subr.bf16.mxu0 0
  %3666 = vmatpush1.bf16.xpose.msra.mxu0 0
  %3667 = vmatprep.subr.bf16.mxu0 0
  %3668 = vmatpush1.bf16.xpose.msra.mxu0 0
  %3669 = vmatprep.subr.bf16.mxu0 0
  %3670 = vmatpush1.bf16.xpose.msra.mxu0 0
  %3671 = vmatprep.subr.bf16.mxu0 0
  %3672 = vmatpush1.bf16.xpose.msra.mxu0 0
  %3673 = vmatprep.mubr.bf16.mxu0 %v3472
  %3674 = vmatmul.mubr.bf16.gmra.mrb[0].mxu0 %v3471
  %v3675 = vpop.f32.mrb[0].mxu0
  %v3676 = vadd.f32 %v3636, %v3675
  %v3677 = vpop.f32.mrb[0].mxu0
  %v3678 = vpop.f32.mrb[0].mxu0
  %v3679 = vpop.f32.mrb[0].mxu0
  %3680 = vdwg.mxu0
  %v3681 = vadd.f32 %v3439, %v3676
  %v3682 = vld [vmem:[#allocation2] sm:$0x20]
  %v3683 = vld [vmem:[#allocation2 + $0x8] sm:$0x20]
  %v3684 = vld [vmem:[#allocation2 + $0x10] sm:$0x20]
  %v3685 = vld [vmem:[#allocation2 + $0x18] sm:$0x20]
  %v3686 = vld [vmem:[#allocation2 + $0x20] sm:$0x20]
  %v3687 = vld [vmem:[#allocation2 + $0x28] sm:$0x20]
  %v3688 = vld [vmem:[#allocation2 + $0x30] sm:$0x20]
  %v3689 = vld [vmem:[#allocation2 + $0x38] sm:$0x20]
  %v3690 = vld [vmem:[#allocation2 + $0x80] sm:$0x20]
  %v3691 = vld [vmem:[#allocation2 + $0x88] sm:$0x20]
  %v3692 = vld [vmem:[#allocation2 + $0x90] sm:$0x20]
  %v3693 = vld [vmem:[#allocation2 + $0x98] sm:$0x20]
  %v3694 = vld [vmem:[#allocation2 + $0xa0] sm:$0x20]
  %v3695 = vld [vmem:[#allocation2 + $0xa8] sm:$0x20]
  %v3696 = vld [vmem:[#allocation2 + $0xb0] sm:$0x20]
  %v3697 = vld [vmem:[#allocation2 + $0xb8] sm:$0x20]
  %s3698 = scalar_lea.vmem %s3, 640
  %v3699 = vld [vmem:[%s3698] sm:$0xff]
  %v3700 = vld [vmem:[%s3698 + $0x8] sm:$0xff]
  %v3701 = vld [vmem:[%s3698 + $0x10] sm:$0xff]
  %v3702 = vld [vmem:[%s3698 + $0x18] sm:$0xff]
  %v3703 = vld [vmem:[%s3698 + $0x20] sm:$0xff]
  %v3704 = vld [vmem:[%s3698 + $0x28] sm:$0xff]
  %v3705 = vld [vmem:[%s3698 + $0x30] sm:$0xff]
  %v3706 = vld [vmem:[%s3698 + $0x38] sm:$0xff]
  %v3723 = vunpack.c.h.b16 %v3682
  %v3724 = vunpack.c.h.b16 %v3683
  %v3725 = vunpack.c.h.b16 %v3684
  %v3726 = vunpack.c.h.b16 %v3685
  %v3727 = vunpack.c.h.b16 %v3686
  %v3728 = vunpack.c.h.b16 %v3687
  %v3729 = vunpack.c.h.b16 %v3688
  %v3730 = vunpack.c.h.b16 %v3689
  %v3731 = vunpack.c.h.b16 %v3690
  %v3732 = vunpack.c.h.b16 %v3691
  %v3733 = vunpack.c.h.b16 %v3692
  %v3734 = vunpack.c.h.b16 %v3693
  %v3735 = vunpack.c.h.b16 %v3694
  %v3736 = vunpack.c.h.b16 %v3695
  %v3737 = vunpack.c.h.b16 %v3696
  %v3738 = vunpack.c.h.b16 %v3697
  %v3739 = vrot.slane %v3723, 2
  %v3740 = vrot.slane %v3731, 1
  %v3741 = vsel %vm1042, %v3740, %v3739
  %v3742 = vrot.slane %v3724, 2
  %v3743 = vrot.slane %v3732, 1
  %v3744 = vsel %vm1042, %v3743, %v3742
  %v3745 = vrot.slane %v3725, 2
  %v3746 = vrot.slane %v3733, 1
  %v3747 = vsel %vm1042, %v3746, %v3745
  %v3748 = vrot.slane %v3726, 2
  %v3749 = vrot.slane %v3734, 1
  %v3750 = vsel %vm1042, %v3749, %v3748
  %v3751 = vrot.slane %v3727, 2
  %v3752 = vrot.slane %v3735, 1
  %v3753 = vsel %vm1042, %v3752, %v3751
  %v3754 = vrot.slane %v3728, 2
  %v3755 = vrot.slane %v3736, 1
  %v3756 = vsel %vm1042, %v3755, %v3754
  %v3757 = vrot.slane %v3729, 2
  %v3758 = vrot.slane %v3737, 1
  %v3759 = vsel %vm1042, %v3758, %v3757
  %v3760 = vrot.slane %v3730, 2
  %v3761 = vrot.slane %v3738, 1
  %v3762 = vsel %vm1042, %v3761, %v3760
  %v3763 = vpack.c.b16 %v3741, %v3741
  %v3764 = vpack.c.b16 %v3744, %v3744
  %v3765 = vpack.c.b16 %v3747, %v3747
  %v3766 = vpack.c.b16 %v3750, %v3750
  %v3767 = vpack.c.b16 %v3753, %v3753
  %v3768 = vpack.c.b16 %v3756, %v3756
  %v3769 = vpack.c.b16 %v3759, %v3759
  %v3770 = vpack.c.b16 %v3762, %v3762
  %v3787 = vunpack.c.l.b16 %v3699
  %v3788 = vunpack.c.h.b16 %v3699
  %v3789 = vunpack.c.l.b16 %v3700
  %v3790 = vunpack.c.h.b16 %v3700
  %v3791 = vunpack.c.l.b16 %v3701
  %v3792 = vunpack.c.h.b16 %v3701
  %v3793 = vunpack.c.l.b16 %v3702
  %v3794 = vunpack.c.h.b16 %v3702
  %v3795 = vunpack.c.l.b16 %v3703
  %v3796 = vunpack.c.h.b16 %v3703
  %v3797 = vunpack.c.l.b16 %v3704
  %v3798 = vunpack.c.h.b16 %v3704
  %v3799 = vunpack.c.l.b16 %v3705
  %v3800 = vunpack.c.h.b16 %v3705
  %v3801 = vunpack.c.l.b16 %v3706
  %v3802 = vunpack.c.h.b16 %v3706
  %v3803 = vpack.c.b16 %v3795, %v3787
  %v3804 = vpack.c.b16 %v3796, %v3788
  %v3805 = vpack.c.b16 %v3797, %v3789
  %v3806 = vpack.c.b16 %v3798, %v3790
  %v3807 = vpack.c.b16 %v3799, %v3791
  %v3808 = vpack.c.b16 %v3800, %v3792
  %v3809 = vpack.c.b16 %v3801, %v3793
  %v3810 = vpack.c.b16 %v3802, %v3794
  %3819 = vmatprep.subr.bf16.mxu0 %v3804
  %3820 = vmatpush1.bf16.xpose.msra.mxu0 %v3803
  %3821 = vmatprep.subr.bf16.mxu0 0
  %3822 = vmatpush1.bf16.xpose.msra.mxu0 0
  %3823 = vmatprep.subr.bf16.mxu0 0
  %3824 = vmatpush1.bf16.xpose.msra.mxu0 0
  %3825 = vmatprep.subr.bf16.mxu0 0
  %3826 = vmatpush1.bf16.xpose.msra.mxu0 0
  %3827 = vmatprep.subr.bf16.mxu0 0
  %3828 = vmatpush1.bf16.xpose.msra.mxu0 0
  %3829 = vmatprep.subr.bf16.mxu0 0
  %3830 = vmatpush1.bf16.xpose.msra.mxu0 0
  %3831 = vmatprep.subr.bf16.mxu0 0
  %3832 = vmatpush1.bf16.xpose.msra.mxu0 0
  %3833 = vmatprep.subr.bf16.mxu0 0
  %3834 = vmatpush1.bf16.xpose.msra.mxu0 0
  %3835 = vmatprep.subr.bf16.mxu0 0
  %3836 = vmatpush1.bf16.xpose.msra.mxu0 0
  %3837 = vmatprep.subr.bf16.mxu0 0
  %3838 = vmatpush1.bf16.xpose.msra.mxu0 0
  %3839 = vmatprep.subr.bf16.mxu0 0
  %3840 = vmatpush1.bf16.xpose.msra.mxu0 0
  %3841 = vmatprep.subr.bf16.mxu0 0
  %3842 = vmatpush1.bf16.xpose.msra.mxu0 0
  %3843 = vmatprep.subr.bf16.mxu0 0
  %3844 = vmatpush1.bf16.xpose.msra.mxu0 0
  %3845 = vmatprep.subr.bf16.mxu0 0
  %3846 = vmatpush1.bf16.xpose.msra.mxu0 0
  %3847 = vmatprep.subr.bf16.mxu0 0
  %3848 = vmatpush1.bf16.xpose.msra.mxu0 0
  %3849 = vmatprep.subr.bf16.mxu0 0
  %3850 = vmatpush1.bf16.xpose.msra.mxu0 0
  %3851 = vmatprep.mubr.bf16.mxu0 %v3764
  %3852 = vmatmul.mubr.bf16.gmra.mrb[0].mxu0 %v3763
  %v3853 = vpop.f32.mrb[0].mxu0
  %v3854 = vadd.f32 0.0, %v3853
  %v3855 = vpop.f32.mrb[0].mxu0
  %v3856 = vpop.f32.mrb[0].mxu0
  %v3857 = vpop.f32.mrb[0].mxu0
  %3858 = vdwg.mxu0
  %3859 = vmatprep.subr.bf16.mxu0 %v3806
  %3860 = vmatpush1.bf16.xpose.msra.mxu0 %v3805
  %3861 = vmatprep.subr.bf16.mxu0 0
  %3862 = vmatpush1.bf16.xpose.msra.mxu0 0
  %3863 = vmatprep.subr.bf16.mxu0 0
  %3864 = vmatpush1.bf16.xpose.msra.mxu0 0
  %3865 = vmatprep.subr.bf16.mxu0 0
  %3866 = vmatpush1.bf16.xpose.msra.mxu0 0
  %3867 = vmatprep.subr.bf16.mxu0 0
  %3868 = vmatpush1.bf16.xpose.msra.mxu0 0
  %3869 = vmatprep.subr.bf16.mxu0 0
  %3870 = vmatpush1.bf16.xpose.msra.mxu0 0
  %3871 = vmatprep.subr.bf16.mxu0 0
  %3872 = vmatpush1.bf16.xpose.msra.mxu0 0
  %3873 = vmatprep.subr.bf16.mxu0 0
  %3874 = vmatpush1.bf16.xpose.msra.mxu0 0
  %3875 = vmatprep.subr.bf16.mxu0 0
  %3876 = vmatpush1.bf16.xpose.msra.mxu0 0
  %3877 = vmatprep.subr.bf16.mxu0 0
  %3878 = vmatpush1.bf16.xpose.msra.mxu0 0
  %3879 = vmatprep.subr.bf16.mxu0 0
  %3880 = vmatpush1.bf16.xpose.msra.mxu0 0
  %3881 = vmatprep.subr.bf16.mxu0 0
  %3882 = vmatpush1.bf16.xpose.msra.mxu0 0
  %3883 = vmatprep.subr.bf16.mxu0 0
  %3884 = vmatpush1.bf16.xpose.msra.mxu0 0
  %3885 = vmatprep.subr.bf16.mxu0 0
  %3886 = vmatpush1.bf16.xpose.msra.mxu0 0
  %3887 = vmatprep.subr.bf16.mxu0 0
  %3888 = vmatpush1.bf16.xpose.msra.mxu0 0
  %3889 = vmatprep.subr.bf16.mxu0 0
  %3890 = vmatpush1.bf16.xpose.msra.mxu0 0
  %3891 = vmatprep.mubr.bf16.mxu0 %v3766
  %3892 = vmatmul.mubr.bf16.gmra.mrb[0].mxu0 %v3765
  %v3893 = vpop.f32.mrb[0].mxu0
  %v3894 = vadd.f32 %v3854, %v3893
  %v3895 = vpop.f32.mrb[0].mxu0
  %v3896 = vpop.f32.mrb[0].mxu0
  %v3897 = vpop.f32.mrb[0].mxu0
  %3898 = vdwg.mxu0
  %3899 = vmatprep.subr.bf16.mxu0 %v3808
  %3900 = vmatpush1.bf16.xpose.msra.mxu0 %v3807
  %3901 = vmatprep.subr.bf16.mxu0 0
  %3902 = vmatpush1.bf16.xpose.msra.mxu0 0
  %3903 = vmatprep.subr.bf16.mxu0 0
  %3904 = vmatpush1.bf16.xpose.msra.mxu0 0
  %3905 = vmatprep.subr.bf16.mxu0 0
  %3906 = vmatpush1.bf16.xpose.msra.mxu0 0
  %3907 = vmatprep.subr.bf16.mxu0 0
  %3908 = vmatpush1.bf16.xpose.msra.mxu0 0
  %3909 = vmatprep.subr.bf16.mxu0 0
  %3910 = vmatpush1.bf16.xpose.msra.mxu0 0
  %3911 = vmatprep.subr.bf16.mxu0 0
  %3912 = vmatpush1.bf16.xpose.msra.mxu0 0
  %3913 = vmatprep.subr.bf16.mxu0 0
  %3914 = vmatpush1.bf16.xpose.msra.mxu0 0
  %3915 = vmatprep.subr.bf16.mxu0 0
  %3916 = vmatpush1.bf16.xpose.msra.mxu0 0
  %3917 = vmatprep.subr.bf16.mxu0 0
  %3918 = vmatpush1.bf16.xpose.msra.mxu0 0
  %3919 = vmatprep.subr.bf16.mxu0 0
  %3920 = vmatpush1.bf16.xpose.msra.mxu0 0
  %3921 = vmatprep.subr.bf16.mxu0 0
  %3922 = vmatpush1.bf16.xpose.msra.mxu0 0
  %3923 = vmatprep.subr.bf16.mxu0 0
  %3924 = vmatpush1.bf16.xpose.msra.mxu0 0
  %3925 = vmatprep.subr.bf16.mxu0 0
  %3926 = vmatpush1.bf16.xpose.msra.mxu0 0
  %3927 = vmatprep.subr.bf16.mxu0 0
  %3928 = vmatpush1.bf16.xpose.msra.mxu0 0
  %3929 = vmatprep.subr.bf16.mxu0 0
  %3930 = vmatpush1.bf16.xpose.msra.mxu0 0
  %3931 = vmatprep.mubr.bf16.mxu0 %v3768
  %3932 = vmatmul.mubr.bf16.gmra.mrb[0].mxu0 %v3767
  %v3933 = vpop.f32.mrb[0].mxu0
  %v3934 = vadd.f32 %v3894, %v3933
  %v3935 = vpop.f32.mrb[0].mxu0
  %v3936 = vpop.f32.mrb[0].mxu0
  %v3937 = vpop.f32.mrb[0].mxu0
  %3938 = vdwg.mxu0
  %3939 = vmatprep.subr.bf16.mxu0 %v3810
  %3940 = vmatpush1.bf16.xpose.msra.mxu0 %v3809
  %3941 = vmatprep.subr.bf16.mxu0 0
  %3942 = vmatpush1.bf16.xpose.msra.mxu0 0
  %3943 = vmatprep.subr.bf16.mxu0 0
  %3944 = vmatpush1.bf16.xpose.msra.mxu0 0
  %3945 = vmatprep.subr.bf16.mxu0 0
  %3946 = vmatpush1.bf16.xpose.msra.mxu0 0
  %3947 = vmatprep.subr.bf16.mxu0 0
  %3948 = vmatpush1.bf16.xpose.msra.mxu0 0
  %3949 = vmatprep.subr.bf16.mxu0 0
  %3950 = vmatpush1.bf16.xpose.msra.mxu0 0
  %3951 = vmatprep.subr.bf16.mxu0 0
  %3952 = vmatpush1.bf16.xpose.msra.mxu0 0
  %3953 = vmatprep.subr.bf16.mxu0 0
  %3954 = vmatpush1.bf16.xpose.msra.mxu0 0
  %3955 = vmatprep.subr.bf16.mxu0 0
  %3956 = vmatpush1.bf16.xpose.msra.mxu0 0
  %3957 = vmatprep.subr.bf16.mxu0 0
  %3958 = vmatpush1.bf16.xpose.msra.mxu0 0
  %3959 = vmatprep.subr.bf16.mxu0 0
  %3960 = vmatpush1.bf16.xpose.msra.mxu0 0
  %3961 = vmatprep.subr.bf16.mxu0 0
  %3962 = vmatpush1.bf16.xpose.msra.mxu0 0
  %3963 = vmatprep.subr.bf16.mxu0 0
  %3964 = vmatpush1.bf16.xpose.msra.mxu0 0
  %3965 = vmatprep.subr.bf16.mxu0 0
  %3966 = vmatpush1.bf16.xpose.msra.mxu0 0
  %3967 = vmatprep.subr.bf16.mxu0 0
  %3968 = vmatpush1.bf16.xpose.msra.mxu0 0
  %3969 = vmatprep.subr.bf16.mxu0 0
  %3970 = vmatpush1.bf16.xpose.msra.mxu0 0
  %3971 = vmatprep.mubr.bf16.mxu0 %v3770
  %3972 = vmatmul.mubr.bf16.gmra.mrb[0].mxu0 %v3769
  %v3973 = vpop.f32.mrb[0].mxu0
  %v3974 = vadd.f32 %v3934, %v3973
  %v3975 = vpop.f32.mrb[0].mxu0
  %v3976 = vpop.f32.mrb[0].mxu0
  %v3977 = vpop.f32.mrb[0].mxu0
  %3978 = vdwg.mxu0
  %v3979 = vadd.f32 %v3681, %v3974
  %s3980 = scalar_lea.vmem %s3, 704
  %v3981 = vld [vmem:[%s3980] sm:$0xff]
  %v3982 = vld [vmem:[%s3980 + $0x8] sm:$0xff]
  %v3983 = vld [vmem:[%s3980 + $0x10] sm:$0xff]
  %v3984 = vld [vmem:[%s3980 + $0x18] sm:$0xff]
  %v3985 = vld [vmem:[%s3980 + $0x20] sm:$0xff]
  %v3986 = vld [vmem:[%s3980 + $0x28] sm:$0xff]
  %v3987 = vld [vmem:[%s3980 + $0x30] sm:$0xff]
  %v3988 = vld [vmem:[%s3980 + $0x38] sm:$0xff]
  %v3989 = vrot.slane %v3723, 3
  %v3990 = vrot.slane %v3731, 2
  %v3991 = vsel %vm1042, %v3990, %v3989
  %v3992 = vrot.slane %v3724, 3
  %v3993 = vrot.slane %v3732, 2
  %v3994 = vsel %vm1042, %v3993, %v3992
  %v3995 = vrot.slane %v3725, 3
  %v3996 = vrot.slane %v3733, 2
  %v3997 = vsel %vm1042, %v3996, %v3995
  %v3998 = vrot.slane %v3726, 3
  %v3999 = vrot.slane %v3734, 2
  %v4000 = vsel %vm1042, %v3999, %v3998
  %v4001 = vrot.slane %v3727, 3
  %v4002 = vrot.slane %v3735, 2
  %v4003 = vsel %vm1042, %v4002, %v4001
  %v4004 = vrot.slane %v3728, 3
  %v4005 = vrot.slane %v3736, 2
  %v4006 = vsel %vm1042, %v4005, %v4004
  %v4007 = vrot.slane %v3729, 3
  %v4008 = vrot.slane %v3737, 2
  %v4009 = vsel %vm1042, %v4008, %v4007
  %v4010 = vrot.slane %v3730, 3
  %v4011 = vrot.slane %v3738, 2
  %v4012 = vsel %vm1042, %v4011, %v4010
  %v4013 = vpack.c.b16 %v3991, %v3991
  %v4014 = vpack.c.b16 %v3994, %v3994
  %v4015 = vpack.c.b16 %v3997, %v3997
  %v4016 = vpack.c.b16 %v4000, %v4000
  %v4017 = vpack.c.b16 %v4003, %v4003
  %v4018 = vpack.c.b16 %v4006, %v4006
  %v4019 = vpack.c.b16 %v4009, %v4009
  %v4020 = vpack.c.b16 %v4012, %v4012
  %v4037 = vunpack.c.l.b16 %v3981
  %v4038 = vunpack.c.h.b16 %v3981
  %v4039 = vunpack.c.l.b16 %v3982
  %v4040 = vunpack.c.h.b16 %v3982
  %v4041 = vunpack.c.l.b16 %v3983
  %v4042 = vunpack.c.h.b16 %v3983
  %v4043 = vunpack.c.l.b16 %v3984
  %v4044 = vunpack.c.h.b16 %v3984
  %v4045 = vunpack.c.l.b16 %v3985
  %v4046 = vunpack.c.h.b16 %v3985
  %v4047 = vunpack.c.l.b16 %v3986
  %v4048 = vunpack.c.h.b16 %v3986
  %v4049 = vunpack.c.l.b16 %v3987
  %v4050 = vunpack.c.h.b16 %v3987
  %v4051 = vunpack.c.l.b16 %v3988
  %v4052 = vunpack.c.h.b16 %v3988
  %v4053 = vpack.c.b16 %v4045, %v4037
  %v4054 = vpack.c.b16 %v4046, %v4038
  %v4055 = vpack.c.b16 %v4047, %v4039
  %v4056 = vpack.c.b16 %v4048, %v4040
  %v4057 = vpack.c.b16 %v4049, %v4041
  %v4058 = vpack.c.b16 %v4050, %v4042
  %v4059 = vpack.c.b16 %v4051, %v4043
  %v4060 = vpack.c.b16 %v4052, %v4044
  %4069 = vmatprep.subr.bf16.mxu0 %v4054
  %4070 = vmatpush1.bf16.xpose.msra.mxu0 %v4053
  %4071 = vmatprep.subr.bf16.mxu0 0
  %4072 = vmatpush1.bf16.xpose.msra.mxu0 0
  %4073 = vmatprep.subr.bf16.mxu0 0
  %4074 = vmatpush1.bf16.xpose.msra.mxu0 0
  %4075 = vmatprep.subr.bf16.mxu0 0
  %4076 = vmatpush1.bf16.xpose.msra.mxu0 0
  %4077 = vmatprep.subr.bf16.mxu0 0
  %4078 = vmatpush1.bf16.xpose.msra.mxu0 0
  %4079 = vmatprep.subr.bf16.mxu0 0
  %4080 = vmatpush1.bf16.xpose.msra.mxu0 0
  %4081 = vmatprep.subr.bf16.mxu0 0
  %4082 = vmatpush1.bf16.xpose.msra.mxu0 0
  %4083 = vmatprep.subr.bf16.mxu0 0
  %4084 = vmatpush1.bf16.xpose.msra.mxu0 0
  %4085 = vmatprep.subr.bf16.mxu0 0
  %4086 = vmatpush1.bf16.xpose.msra.mxu0 0
  %4087 = vmatprep.subr.bf16.mxu0 0
  %4088 = vmatpush1.bf16.xpose.msra.mxu0 0
  %4089 = vmatprep.subr.bf16.mxu0 0
  %4090 = vmatpush1.bf16.xpose.msra.mxu0 0
  %4091 = vmatprep.subr.bf16.mxu0 0
  %4092 = vmatpush1.bf16.xpose.msra.mxu0 0
  %4093 = vmatprep.subr.bf16.mxu0 0
  %4094 = vmatpush1.bf16.xpose.msra.mxu0 0
  %4095 = vmatprep.subr.bf16.mxu0 0
  %4096 = vmatpush1.bf16.xpose.msra.mxu0 0
  %4097 = vmatprep.subr.bf16.mxu0 0
  %4098 = vmatpush1.bf16.xpose.msra.mxu0 0
  %4099 = vmatprep.subr.bf16.mxu0 0
  %4100 = vmatpush1.bf16.xpose.msra.mxu0 0
  %4101 = vmatprep.mubr.bf16.mxu0 %v4014
  %4102 = vmatmul.mubr.bf16.gmra.mrb[0].mxu0 %v4013
  %v4103 = vpop.f32.mrb[0].mxu0
  %v4104 = vadd.f32 0.0, %v4103
  %v4105 = vpop.f32.mrb[0].mxu0
  %v4106 = vpop.f32.mrb[0].mxu0
  %v4107 = vpop.f32.mrb[0].mxu0
  %4108 = vdwg.mxu0
  %4109 = vmatprep.subr.bf16.mxu0 %v4056
  %4110 = vmatpush1.bf16.xpose.msra.mxu0 %v4055
  %4111 = vmatprep.subr.bf16.mxu0 0
  %4112 = vmatpush1.bf16.xpose.msra.mxu0 0
  %4113 = vmatprep.subr.bf16.mxu0 0
  %4114 = vmatpush1.bf16.xpose.msra.mxu0 0
  %4115 = vmatprep.subr.bf16.mxu0 0
  %4116 = vmatpush1.bf16.xpose.msra.mxu0 0
  %4117 = vmatprep.subr.bf16.mxu0 0
  %4118 = vmatpush1.bf16.xpose.msra.mxu0 0
  %4119 = vmatprep.subr.bf16.mxu0 0
  %4120 = vmatpush1.bf16.xpose.msra.mxu0 0
  %4121 = vmatprep.subr.bf16.mxu0 0
  %4122 = vmatpush1.bf16.xpose.msra.mxu0 0
  %4123 = vmatprep.subr.bf16.mxu0 0
  %4124 = vmatpush1.bf16.xpose.msra.mxu0 0
  %4125 = vmatprep.subr.bf16.mxu0 0
  %4126 = vmatpush1.bf16.xpose.msra.mxu0 0
  %4127 = vmatprep.subr.bf16.mxu0 0
  %4128 = vmatpush1.bf16.xpose.msra.mxu0 0
  %4129 = vmatprep.subr.bf16.mxu0 0
  %4130 = vmatpush1.bf16.xpose.msra.mxu0 0
  %4131 = vmatprep.subr.bf16.mxu0 0
  %4132 = vmatpush1.bf16.xpose.msra.mxu0 0
  %4133 = vmatprep.subr.bf16.mxu0 0
  %4134 = vmatpush1.bf16.xpose.msra.mxu0 0
  %4135 = vmatprep.subr.bf16.mxu0 0
  %4136 = vmatpush1.bf16.xpose.msra.mxu0 0
  %4137 = vmatprep.subr.bf16.mxu0 0
  %4138 = vmatpush1.bf16.xpose.msra.mxu0 0
  %4139 = vmatprep.subr.bf16.mxu0 0
  %4140 = vmatpush1.bf16.xpose.msra.mxu0 0
  %4141 = vmatprep.mubr.bf16.mxu0 %v4016
  %4142 = vmatmul.mubr.bf16.gmra.mrb[0].mxu0 %v4015
  %v4143 = vpop.f32.mrb[0].mxu0
  %v4144 = vadd.f32 %v4104, %v4143
  %v4145 = vpop.f32.mrb[0].mxu0
  %v4146 = vpop.f32.mrb[0].mxu0
  %v4147 = vpop.f32.mrb[0].mxu0
  %4148 = vdwg.mxu0
  %4149 = vmatprep.subr.bf16.mxu0 %v4058
  %4150 = vmatpush1.bf16.xpose.msra.mxu0 %v4057
  %4151 = vmatprep.subr.bf16.mxu0 0
  %4152 = vmatpush1.bf16.xpose.msra.mxu0 0
  %4153 = vmatprep.subr.bf16.mxu0 0
  %4154 = vmatpush1.bf16.xpose.msra.mxu0 0
  %4155 = vmatprep.subr.bf16.mxu0 0
  %4156 = vmatpush1.bf16.xpose.msra.mxu0 0
  %4157 = vmatprep.subr.bf16.mxu0 0
  %4158 = vmatpush1.bf16.xpose.msra.mxu0 0
  %4159 = vmatprep.subr.bf16.mxu0 0
  %4160 = vmatpush1.bf16.xpose.msra.mxu0 0
  %4161 = vmatprep.subr.bf16.mxu0 0
  %4162 = vmatpush1.bf16.xpose.msra.mxu0 0
  %4163 = vmatprep.subr.bf16.mxu0 0
  %4164 = vmatpush1.bf16.xpose.msra.mxu0 0
  %4165 = vmatprep.subr.bf16.mxu0 0
  %4166 = vmatpush1.bf16.xpose.msra.mxu0 0
  %4167 = vmatprep.subr.bf16.mxu0 0
  %4168 = vmatpush1.bf16.xpose.msra.mxu0 0
  %4169 = vmatprep.subr.bf16.mxu0 0
  %4170 = vmatpush1.bf16.xpose.msra.mxu0 0
  %4171 = vmatprep.subr.bf16.mxu0 0
  %4172 = vmatpush1.bf16.xpose.msra.mxu0 0
  %4173 = vmatprep.subr.bf16.mxu0 0
  %4174 = vmatpush1.bf16.xpose.msra.mxu0 0
  %4175 = vmatprep.subr.bf16.mxu0 0
  %4176 = vmatpush1.bf16.xpose.msra.mxu0 0
  %4177 = vmatprep.subr.bf16.mxu0 0
  %4178 = vmatpush1.bf16.xpose.msra.mxu0 0
  %4179 = vmatprep.subr.bf16.mxu0 0
  %4180 = vmatpush1.bf16.xpose.msra.mxu0 0
  %4181 = vmatprep.mubr.bf16.mxu0 %v4018
  %4182 = vmatmul.mubr.bf16.gmra.mrb[0].mxu0 %v4017
  %v4183 = vpop.f32.mrb[0].mxu0
  %v4184 = vadd.f32 %v4144, %v4183
  %v4185 = vpop.f32.mrb[0].mxu0
  %v4186 = vpop.f32.mrb[0].mxu0
  %v4187 = vpop.f32.mrb[0].mxu0
  %4188 = vdwg.mxu0
  %4189 = vmatprep.subr.bf16.mxu0 %v4060
  %4190 = vmatpush1.bf16.xpose.msra.mxu0 %v4059
  %4191 = vmatprep.subr.bf16.mxu0 0
  %4192 = vmatpush1.bf16.xpose.msra.mxu0 0
  %4193 = vmatprep.subr.bf16.mxu0 0
  %4194 = vmatpush1.bf16.xpose.msra.mxu0 0
  %4195 = vmatprep.subr.bf16.mxu0 0
  %4196 = vmatpush1.bf16.xpose.msra.mxu0 0
  %4197 = vmatprep.subr.bf16.mxu0 0
  %4198 = vmatpush1.bf16.xpose.msra.mxu0 0
  %4199 = vmatprep.subr.bf16.mxu0 0
  %4200 = vmatpush1.bf16.xpose.msra.mxu0 0
  %4201 = vmatprep.subr.bf16.mxu0 0
  %4202 = vmatpush1.bf16.xpose.msra.mxu0 0
  %4203 = vmatprep.subr.bf16.mxu0 0
  %4204 = vmatpush1.bf16.xpose.msra.mxu0 0
  %4205 = vmatprep.subr.bf16.mxu0 0
  %4206 = vmatpush1.bf16.xpose.msra.mxu0 0
  %4207 = vmatprep.subr.bf16.mxu0 0
  %4208 = vmatpush1.bf16.xpose.msra.mxu0 0
  %4209 = vmatprep.subr.bf16.mxu0 0
  %4210 = vmatpush1.bf16.xpose.msra.mxu0 0
  %4211 = vmatprep.subr.bf16.mxu0 0
  %4212 = vmatpush1.bf16.xpose.msra.mxu0 0
  %4213 = vmatprep.subr.bf16.mxu0 0
  %4214 = vmatpush1.bf16.xpose.msra.mxu0 0
  %4215 = vmatprep.subr.bf16.mxu0 0
  %4216 = vmatpush1.bf16.xpose.msra.mxu0 0
  %4217 = vmatprep.subr.bf16.mxu0 0
  %4218 = vmatpush1.bf16.xpose.msra.mxu0 0
  %4219 = vmatprep.subr.bf16.mxu0 0
  %4220 = vmatpush1.bf16.xpose.msra.mxu0 0
  %4221 = vmatprep.mubr.bf16.mxu0 %v4020
  %4222 = vmatmul.mubr.bf16.gmra.mrb[0].mxu0 %v4019
  %v4223 = vpop.f32.mrb[0].mxu0
  %v4224 = vadd.f32 %v4184, %v4223
  %v4225 = vpop.f32.mrb[0].mxu0
  %v4226 = vpop.f32.mrb[0].mxu0
  %v4227 = vpop.f32.mrb[0].mxu0
  %4228 = vdwg.mxu0
  %v4229 = vadd.f32 %v3979, %v4224
  %v4230 = vld [vmem:[#allocation2] sm:$0x40]
  %v4231 = vld [vmem:[#allocation2 + $0x8] sm:$0x40]
  %v4232 = vld [vmem:[#allocation2 + $0x10] sm:$0x40]
  %v4233 = vld [vmem:[#allocation2 + $0x18] sm:$0x40]
  %v4234 = vld [vmem:[#allocation2 + $0x20] sm:$0x40]
  %v4235 = vld [vmem:[#allocation2 + $0x28] sm:$0x40]
  %v4236 = vld [vmem:[#allocation2 + $0x30] sm:$0x40]
  %v4237 = vld [vmem:[#allocation2 + $0x38] sm:$0x40]
  %v4238 = vld [vmem:[#allocation2 + $0x80] sm:$0x40]
  %v4239 = vld [vmem:[#allocation2 + $0x88] sm:$0x40]
  %v4240 = vld [vmem:[#allocation2 + $0x90] sm:$0x40]
  %v4241 = vld [vmem:[#allocation2 + $0x98] sm:$0x40]
  %v4242 = vld [vmem:[#allocation2 + $0xa0] sm:$0x40]
  %v4243 = vld [vmem:[#allocation2 + $0xa8] sm:$0x40]
  %v4244 = vld [vmem:[#allocation2 + $0xb0] sm:$0x40]
  %v4245 = vld [vmem:[#allocation2 + $0xb8] sm:$0x40]
  %s4246 = scalar_lea.vmem %s3, 768
  %v4247 = vld [vmem:[%s4246] sm:$0xff]
  %v4248 = vld [vmem:[%s4246 + $0x8] sm:$0xff]
  %v4249 = vld [vmem:[%s4246 + $0x10] sm:$0xff]
  %v4250 = vld [vmem:[%s4246 + $0x18] sm:$0xff]
  %v4251 = vld [vmem:[%s4246 + $0x20] sm:$0xff]
  %v4252 = vld [vmem:[%s4246 + $0x28] sm:$0xff]
  %v4253 = vld [vmem:[%s4246 + $0x30] sm:$0xff]
  %v4254 = vld [vmem:[%s4246 + $0x38] sm:$0xff]
  %v4271 = vunpack.c.h.b16 %v4230
  %v4272 = vunpack.c.h.b16 %v4231
  %v4273 = vunpack.c.h.b16 %v4232
  %v4274 = vunpack.c.h.b16 %v4233
  %v4275 = vunpack.c.h.b16 %v4234
  %v4276 = vunpack.c.h.b16 %v4235
  %v4277 = vunpack.c.h.b16 %v4236
  %v4278 = vunpack.c.h.b16 %v4237
  %v4279 = vunpack.c.h.b16 %v4238
  %v4280 = vunpack.c.h.b16 %v4239
  %v4281 = vunpack.c.h.b16 %v4240
  %v4282 = vunpack.c.h.b16 %v4241
  %v4283 = vunpack.c.h.b16 %v4242
  %v4284 = vunpack.c.h.b16 %v4243
  %v4285 = vunpack.c.h.b16 %v4244
  %v4286 = vunpack.c.h.b16 %v4245
  %v4287 = vrot.slane %v4271, 4
  %v4288 = vrot.slane %v4279, 3
  %v4289 = vsel %vm1042, %v4288, %v4287
  %v4290 = vrot.slane %v4272, 4
  %v4291 = vrot.slane %v4280, 3
  %v4292 = vsel %vm1042, %v4291, %v4290
  %v4293 = vrot.slane %v4273, 4
  %v4294 = vrot.slane %v4281, 3
  %v4295 = vsel %vm1042, %v4294, %v4293
  %v4296 = vrot.slane %v4274, 4
  %v4297 = vrot.slane %v4282, 3
  %v4298 = vsel %vm1042, %v4297, %v4296
  %v4299 = vrot.slane %v4275, 4
  %v4300 = vrot.slane %v4283, 3
  %v4301 = vsel %vm1042, %v4300, %v4299
  %v4302 = vrot.slane %v4276, 4
  %v4303 = vrot.slane %v4284, 3
  %v4304 = vsel %vm1042, %v4303, %v4302
  %v4305 = vrot.slane %v4277, 4
  %v4306 = vrot.slane %v4285, 3
  %v4307 = vsel %vm1042, %v4306, %v4305
  %v4308 = vrot.slane %v4278, 4
  %v4309 = vrot.slane %v4286, 3
  %v4310 = vsel %vm1042, %v4309, %v4308
  %v4311 = vpack.c.b16 %v4289, %v4289
  %v4312 = vpack.c.b16 %v4292, %v4292
  %v4313 = vpack.c.b16 %v4295, %v4295
  %v4314 = vpack.c.b16 %v4298, %v4298
  %v4315 = vpack.c.b16 %v4301, %v4301
  %v4316 = vpack.c.b16 %v4304, %v4304
  %v4317 = vpack.c.b16 %v4307, %v4307
  %v4318 = vpack.c.b16 %v4310, %v4310
  %v4335 = vunpack.c.l.b16 %v4247
  %v4336 = vunpack.c.h.b16 %v4247
  %v4337 = vunpack.c.l.b16 %v4248
  %v4338 = vunpack.c.h.b16 %v4248
  %v4339 = vunpack.c.l.b16 %v4249
  %v4340 = vunpack.c.h.b16 %v4249
  %v4341 = vunpack.c.l.b16 %v4250
  %v4342 = vunpack.c.h.b16 %v4250
  %v4343 = vunpack.c.l.b16 %v4251
  %v4344 = vunpack.c.h.b16 %v4251
  %v4345 = vunpack.c.l.b16 %v4252
  %v4346 = vunpack.c.h.b16 %v4252
  %v4347 = vunpack.c.l.b16 %v4253
  %v4348 = vunpack.c.h.b16 %v4253
  %v4349 = vunpack.c.l.b16 %v4254
  %v4350 = vunpack.c.h.b16 %v4254
  %v4351 = vpack.c.b16 %v4343, %v4335
  %v4352 = vpack.c.b16 %v4344, %v4336
  %v4353 = vpack.c.b16 %v4345, %v4337
  %v4354 = vpack.c.b16 %v4346, %v4338
  %v4355 = vpack.c.b16 %v4347, %v4339
  %v4356 = vpack.c.b16 %v4348, %v4340
  %v4357 = vpack.c.b16 %v4349, %v4341
  %v4358 = vpack.c.b16 %v4350, %v4342
  %4367 = vmatprep.subr.bf16.mxu0 %v4352
  %4368 = vmatpush1.bf16.xpose.msra.mxu0 %v4351
  %4369 = vmatprep.subr.bf16.mxu0 0
  %4370 = vmatpush1.bf16.xpose.msra.mxu0 0
  %4371 = vmatprep.subr.bf16.mxu0 0
  %4372 = vmatpush1.bf16.xpose.msra.mxu0 0
  %4373 = vmatprep.subr.bf16.mxu0 0
  %4374 = vmatpush1.bf16.xpose.msra.mxu0 0
  %4375 = vmatprep.subr.bf16.mxu0 0
  %4376 = vmatpush1.bf16.xpose.msra.mxu0 0
  %4377 = vmatprep.subr.bf16.mxu0 0
  %4378 = vmatpush1.bf16.xpose.msra.mxu0 0
  %4379 = vmatprep.subr.bf16.mxu0 0
  %4380 = vmatpush1.bf16.xpose.msra.mxu0 0
  %4381 = vmatprep.subr.bf16.mxu0 0
  %4382 = vmatpush1.bf16.xpose.msra.mxu0 0
  %4383 = vmatprep.subr.bf16.mxu0 0
  %4384 = vmatpush1.bf16.xpose.msra.mxu0 0
  %4385 = vmatprep.subr.bf16.mxu0 0
  %4386 = vmatpush1.bf16.xpose.msra.mxu0 0
  %4387 = vmatprep.subr.bf16.mxu0 0
  %4388 = vmatpush1.bf16.xpose.msra.mxu0 0
  %4389 = vmatprep.subr.bf16.mxu0 0
  %4390 = vmatpush1.bf16.xpose.msra.mxu0 0
  %4391 = vmatprep.subr.bf16.mxu0 0
  %4392 = vmatpush1.bf16.xpose.msra.mxu0 0
  %4393 = vmatprep.subr.bf16.mxu0 0
  %4394 = vmatpush1.bf16.xpose.msra.mxu0 0
  %4395 = vmatprep.subr.bf16.mxu0 0
  %4396 = vmatpush1.bf16.xpose.msra.mxu0 0
  %4397 = vmatprep.subr.bf16.mxu0 0
  %4398 = vmatpush1.bf16.xpose.msra.mxu0 0
  %4399 = vmatprep.mubr.bf16.mxu0 %v4312
  %4400 = vmatmul.mubr.bf16.gmra.mrb[0].mxu0 %v4311
  %v4401 = vpop.f32.mrb[0].mxu0
  %v4402 = vadd.f32 0.0, %v4401
  %v4403 = vpop.f32.mrb[0].mxu0
  %v4404 = vpop.f32.mrb[0].mxu0
  %v4405 = vpop.f32.mrb[0].mxu0
  %4406 = vdwg.mxu0
  %4407 = vmatprep.subr.bf16.mxu0 %v4354
  %4408 = vmatpush1.bf16.xpose.msra.mxu0 %v4353
  %4409 = vmatprep.subr.bf16.mxu0 0
  %4410 = vmatpush1.bf16.xpose.msra.mxu0 0
  %4411 = vmatprep.subr.bf16.mxu0 0
  %4412 = vmatpush1.bf16.xpose.msra.mxu0 0
  %4413 = vmatprep.subr.bf16.mxu0 0
  %4414 = vmatpush1.bf16.xpose.msra.mxu0 0
  %4415 = vmatprep.subr.bf16.mxu0 0
  %4416 = vmatpush1.bf16.xpose.msra.mxu0 0
  %4417 = vmatprep.subr.bf16.mxu0 0
  %4418 = vmatpush1.bf16.xpose.msra.mxu0 0
  %4419 = vmatprep.subr.bf16.mxu0 0
  %4420 = vmatpush1.bf16.xpose.msra.mxu0 0
  %4421 = vmatprep.subr.bf16.mxu0 0
  %4422 = vmatpush1.bf16.xpose.msra.mxu0 0
  %4423 = vmatprep.subr.bf16.mxu0 0
  %4424 = vmatpush1.bf16.xpose.msra.mxu0 0
  %4425 = vmatprep.subr.bf16.mxu0 0
  %4426 = vmatpush1.bf16.xpose.msra.mxu0 0
  %4427 = vmatprep.subr.bf16.mxu0 0
  %4428 = vmatpush1.bf16.xpose.msra.mxu0 0
  %4429 = vmatprep.subr.bf16.mxu0 0
  %4430 = vmatpush1.bf16.xpose.msra.mxu0 0
  %4431 = vmatprep.subr.bf16.mxu0 0
  %4432 = vmatpush1.bf16.xpose.msra.mxu0 0
  %4433 = vmatprep.subr.bf16.mxu0 0
  %4434 = vmatpush1.bf16.xpose.msra.mxu0 0
  %4435 = vmatprep.subr.bf16.mxu0 0
  %4436 = vmatpush1.bf16.xpose.msra.mxu0 0
  %4437 = vmatprep.subr.bf16.mxu0 0
  %4438 = vmatpush1.bf16.xpose.msra.mxu0 0
  %4439 = vmatprep.mubr.bf16.mxu0 %v4314
  %4440 = vmatmul.mubr.bf16.gmra.mrb[0].mxu0 %v4313
  %v4441 = vpop.f32.mrb[0].mxu0
  %v4442 = vadd.f32 %v4402, %v4441
  %v4443 = vpop.f32.mrb[0].mxu0
  %v4444 = vpop.f32.mrb[0].mxu0
  %v4445 = vpop.f32.mrb[0].mxu0
  %4446 = vdwg.mxu0
  %4447 = vmatprep.subr.bf16.mxu0 %v4356
  %4448 = vmatpush1.bf16.xpose.msra.mxu0 %v4355
  %4449 = vmatprep.subr.bf16.mxu0 0
  %4450 = vmatpush1.bf16.xpose.msra.mxu0 0
  %4451 = vmatprep.subr.bf16.mxu0 0
  %4452 = vmatpush1.bf16.xpose.msra.mxu0 0
  %4453 = vmatprep.subr.bf16.mxu0 0
  %4454 = vmatpush1.bf16.xpose.msra.mxu0 0
  %4455 = vmatprep.subr.bf16.mxu0 0
  %4456 = vmatpush1.bf16.xpose.msra.mxu0 0
  %4457 = vmatprep.subr.bf16.mxu0 0
  %4458 = vmatpush1.bf16.xpose.msra.mxu0 0
  %4459 = vmatprep.subr.bf16.mxu0 0
  %4460 = vmatpush1.bf16.xpose.msra.mxu0 0
  %4461 = vmatprep.subr.bf16.mxu0 0
  %4462 = vmatpush1.bf16.xpose.msra.mxu0 0
  %4463 = vmatprep.subr.bf16.mxu0 0
  %4464 = vmatpush1.bf16.xpose.msra.mxu0 0
  %4465 = vmatprep.subr.bf16.mxu0 0
  %4466 = vmatpush1.bf16.xpose.msra.mxu0 0
  %4467 = vmatprep.subr.bf16.mxu0 0
  %4468 = vmatpush1.bf16.xpose.msra.mxu0 0
  %4469 = vmatprep.subr.bf16.mxu0 0
  %4470 = vmatpush1.bf16.xpose.msra.mxu0 0
  %4471 = vmatprep.subr.bf16.mxu0 0
  %4472 = vmatpush1.bf16.xpose.msra.mxu0 0
  %4473 = vmatprep.subr.bf16.mxu0 0
  %4474 = vmatpush1.bf16.xpose.msra.mxu0 0
  %4475 = vmatprep.subr.bf16.mxu0 0
  %4476 = vmatpush1.bf16.xpose.msra.mxu0 0
  %4477 = vmatprep.subr.bf16.mxu0 0
  %4478 = vmatpush1.bf16.xpose.msra.mxu0 0
  %4479 = vmatprep.mubr.bf16.mxu0 %v4316
  %4480 = vmatmul.mubr.bf16.gmra.mrb[0].mxu0 %v4315
  %v4481 = vpop.f32.mrb[0].mxu0
  %v4482 = vadd.f32 %v4442, %v4481
  %v4483 = vpop.f32.mrb[0].mxu0
  %v4484 = vpop.f32.mrb[0].mxu0
  %v4485 = vpop.f32.mrb[0].mxu0
  %4486 = vdwg.mxu0
  %4487 = vmatprep.subr.bf16.mxu0 %v4358
  %4488 = vmatpush1.bf16.xpose.msra.mxu0 %v4357
  %4489 = vmatprep.subr.bf16.mxu0 0
  %4490 = vmatpush1.bf16.xpose.msra.mxu0 0
  %4491 = vmatprep.subr.bf16.mxu0 0
  %4492 = vmatpush1.bf16.xpose.msra.mxu0 0
  %4493 = vmatprep.subr.bf16.mxu0 0
  %4494 = vmatpush1.bf16.xpose.msra.mxu0 0
  %4495 = vmatprep.subr.bf16.mxu0 0
  %4496 = vmatpush1.bf16.xpose.msra.mxu0 0
  %4497 = vmatprep.subr.bf16.mxu0 0
  %4498 = vmatpush1.bf16.xpose.msra.mxu0 0
  %4499 = vmatprep.subr.bf16.mxu0 0
  %4500 = vmatpush1.bf16.xpose.msra.mxu0 0
  %4501 = vmatprep.subr.bf16.mxu0 0
  %4502 = vmatpush1.bf16.xpose.msra.mxu0 0
  %4503 = vmatprep.subr.bf16.mxu0 0
  %4504 = vmatpush1.bf16.xpose.msra.mxu0 0
  %4505 = vmatprep.subr.bf16.mxu0 0
  %4506 = vmatpush1.bf16.xpose.msra.mxu0 0
  %4507 = vmatprep.subr.bf16.mxu0 0
  %4508 = vmatpush1.bf16.xpose.msra.mxu0 0
  %4509 = vmatprep.subr.bf16.mxu0 0
  %4510 = vmatpush1.bf16.xpose.msra.mxu0 0
  %4511 = vmatprep.subr.bf16.mxu0 0
  %4512 = vmatpush1.bf16.xpose.msra.mxu0 0
  %4513 = vmatprep.subr.bf16.mxu0 0
  %4514 = vmatpush1.bf16.xpose.msra.mxu0 0
  %4515 = vmatprep.subr.bf16.mxu0 0
  %4516 = vmatpush1.bf16.xpose.msra.mxu0 0
  %4517 = vmatprep.subr.bf16.mxu0 0
  %4518 = vmatpush1.bf16.xpose.msra.mxu0 0
  %4519 = vmatprep.mubr.bf16.mxu0 %v4318
  %4520 = vmatmul.mubr.bf16.gmra.mrb[0].mxu0 %v4317
  %v4521 = vpop.f32.mrb[0].mxu0
  %v4522 = vadd.f32 %v4482, %v4521
  %v4523 = vpop.f32.mrb[0].mxu0
  %v4524 = vpop.f32.mrb[0].mxu0
  %v4525 = vpop.f32.mrb[0].mxu0
  %4526 = vdwg.mxu0
  %v4527 = vadd.f32 %v4229, %v4522
  %s4528 = scalar_lea.vmem %s3, 832
  %v4529 = vld [vmem:[%s4528] sm:$0xff]
  %v4530 = vld [vmem:[%s4528 + $0x8] sm:$0xff]
  %v4531 = vld [vmem:[%s4528 + $0x10] sm:$0xff]
  %v4532 = vld [vmem:[%s4528 + $0x18] sm:$0xff]
  %v4533 = vld [vmem:[%s4528 + $0x20] sm:$0xff]
  %v4534 = vld [vmem:[%s4528 + $0x28] sm:$0xff]
  %v4535 = vld [vmem:[%s4528 + $0x30] sm:$0xff]
  %v4536 = vld [vmem:[%s4528 + $0x38] sm:$0xff]
  %v4537 = vrot.slane %v4271, 5
  %v4538 = vrot.slane %v4279, 4
  %v4539 = vsel %vm1042, %v4538, %v4537
  %v4540 = vrot.slane %v4272, 5
  %v4541 = vrot.slane %v4280, 4
  %v4542 = vsel %vm1042, %v4541, %v4540
  %v4543 = vrot.slane %v4273, 5
  %v4544 = vrot.slane %v4281, 4
  %v4545 = vsel %vm1042, %v4544, %v4543
  %v4546 = vrot.slane %v4274, 5
  %v4547 = vrot.slane %v4282, 4
  %v4548 = vsel %vm1042, %v4547, %v4546
  %v4549 = vrot.slane %v4275, 5
  %v4550 = vrot.slane %v4283, 4
  %v4551 = vsel %vm1042, %v4550, %v4549
  %v4552 = vrot.slane %v4276, 5
  %v4553 = vrot.slane %v4284, 4
  %v4554 = vsel %vm1042, %v4553, %v4552
  %v4555 = vrot.slane %v4277, 5
  %v4556 = vrot.slane %v4285, 4
  %v4557 = vsel %vm1042, %v4556, %v4555
  %v4558 = vrot.slane %v4278, 5
  %v4559 = vrot.slane %v4286, 4
  %v4560 = vsel %vm1042, %v4559, %v4558
  %v4561 = vpack.c.b16 %v4539, %v4539
  %v4562 = vpack.c.b16 %v4542, %v4542
  %v4563 = vpack.c.b16 %v4545, %v4545
  %v4564 = vpack.c.b16 %v4548, %v4548
  %v4565 = vpack.c.b16 %v4551, %v4551
  %v4566 = vpack.c.b16 %v4554, %v4554
  %v4567 = vpack.c.b16 %v4557, %v4557
  %v4568 = vpack.c.b16 %v4560, %v4560
  %v4585 = vunpack.c.l.b16 %v4529
  %v4586 = vunpack.c.h.b16 %v4529
  %v4587 = vunpack.c.l.b16 %v4530
  %v4588 = vunpack.c.h.b16 %v4530
  %v4589 = vunpack.c.l.b16 %v4531
  %v4590 = vunpack.c.h.b16 %v4531
  %v4591 = vunpack.c.l.b16 %v4532
  %v4592 = vunpack.c.h.b16 %v4532
  %v4593 = vunpack.c.l.b16 %v4533
  %v4594 = vunpack.c.h.b16 %v4533
  %v4595 = vunpack.c.l.b16 %v4534
  %v4596 = vunpack.c.h.b16 %v4534
  %v4597 = vunpack.c.l.b16 %v4535
  %v4598 = vunpack.c.h.b16 %v4535
  %v4599 = vunpack.c.l.b16 %v4536
  %v4600 = vunpack.c.h.b16 %v4536
  %v4601 = vpack.c.b16 %v4593, %v4585
  %v4602 = vpack.c.b16 %v4594, %v4586
  %v4603 = vpack.c.b16 %v4595, %v4587
  %v4604 = vpack.c.b16 %v4596, %v4588
  %v4605 = vpack.c.b16 %v4597, %v4589
  %v4606 = vpack.c.b16 %v4598, %v4590
  %v4607 = vpack.c.b16 %v4599, %v4591
  %v4608 = vpack.c.b16 %v4600, %v4592
  %4617 = vmatprep.subr.bf16.mxu0 %v4602
  %4618 = vmatpush1.bf16.xpose.msra.mxu0 %v4601
  %4619 = vmatprep.subr.bf16.mxu0 0
  %4620 = vmatpush1.bf16.xpose.msra.mxu0 0
  %4621 = vmatprep.subr.bf16.mxu0 0
  %4622 = vmatpush1.bf16.xpose.msra.mxu0 0
  %4623 = vmatprep.subr.bf16.mxu0 0
  %4624 = vmatpush1.bf16.xpose.msra.mxu0 0
  %4625 = vmatprep.subr.bf16.mxu0 0
  %4626 = vmatpush1.bf16.xpose.msra.mxu0 0
  %4627 = vmatprep.subr.bf16.mxu0 0
  %4628 = vmatpush1.bf16.xpose.msra.mxu0 0
  %4629 = vmatprep.subr.bf16.mxu0 0
  %4630 = vmatpush1.bf16.xpose.msra.mxu0 0
  %4631 = vmatprep.subr.bf16.mxu0 0
  %4632 = vmatpush1.bf16.xpose.msra.mxu0 0
  %4633 = vmatprep.subr.bf16.mxu0 0
  %4634 = vmatpush1.bf16.xpose.msra.mxu0 0
  %4635 = vmatprep.subr.bf16.mxu0 0
  %4636 = vmatpush1.bf16.xpose.msra.mxu0 0
  %4637 = vmatprep.subr.bf16.mxu0 0
  %4638 = vmatpush1.bf16.xpose.msra.mxu0 0
  %4639 = vmatprep.subr.bf16.mxu0 0
  %4640 = vmatpush1.bf16.xpose.msra.mxu0 0
  %4641 = vmatprep.subr.bf16.mxu0 0
  %4642 = vmatpush1.bf16.xpose.msra.mxu0 0
  %4643 = vmatprep.subr.bf16.mxu0 0
  %4644 = vmatpush1.bf16.xpose.msra.mxu0 0
  %4645 = vmatprep.subr.bf16.mxu0 0
  %4646 = vmatpush1.bf16.xpose.msra.mxu0 0
  %4647 = vmatprep.subr.bf16.mxu0 0
  %4648 = vmatpush1.bf16.xpose.msra.mxu0 0
  %4649 = vmatprep.mubr.bf16.mxu0 %v4562
  %4650 = vmatmul.mubr.bf16.gmra.mrb[0].mxu0 %v4561
  %v4651 = vpop.f32.mrb[0].mxu0
  %v4652 = vadd.f32 0.0, %v4651
  %v4653 = vpop.f32.mrb[0].mxu0
  %v4654 = vpop.f32.mrb[0].mxu0
  %v4655 = vpop.f32.mrb[0].mxu0
  %4656 = vdwg.mxu0
  %4657 = vmatprep.subr.bf16.mxu0 %v4604
  %4658 = vmatpush1.bf16.xpose.msra.mxu0 %v4603
  %4659 = vmatprep.subr.bf16.mxu0 0
  %4660 = vmatpush1.bf16.xpose.msra.mxu0 0
  %4661 = vmatprep.subr.bf16.mxu0 0
  %4662 = vmatpush1.bf16.xpose.msra.mxu0 0
  %4663 = vmatprep.subr.bf16.mxu0 0
  %4664 = vmatpush1.bf16.xpose.msra.mxu0 0
  %4665 = vmatprep.subr.bf16.mxu0 0
  %4666 = vmatpush1.bf16.xpose.msra.mxu0 0
  %4667 = vmatprep.subr.bf16.mxu0 0
  %4668 = vmatpush1.bf16.xpose.msra.mxu0 0
  %4669 = vmatprep.subr.bf16.mxu0 0
  %4670 = vmatpush1.bf16.xpose.msra.mxu0 0
  %4671 = vmatprep.subr.bf16.mxu0 0
  %4672 = vmatpush1.bf16.xpose.msra.mxu0 0
  %4673 = vmatprep.subr.bf16.mxu0 0
  %4674 = vmatpush1.bf16.xpose.msra.mxu0 0
  %4675 = vmatprep.subr.bf16.mxu0 0
  %4676 = vmatpush1.bf16.xpose.msra.mxu0 0
  %4677 = vmatprep.subr.bf16.mxu0 0
  %4678 = vmatpush1.bf16.xpose.msra.mxu0 0
  %4679 = vmatprep.subr.bf16.mxu0 0
  %4680 = vmatpush1.bf16.xpose.msra.mxu0 0
  %4681 = vmatprep.subr.bf16.mxu0 0
  %4682 = vmatpush1.bf16.xpose.msra.mxu0 0
  %4683 = vmatprep.subr.bf16.mxu0 0
  %4684 = vmatpush1.bf16.xpose.msra.mxu0 0
  %4685 = vmatprep.subr.bf16.mxu0 0
  %4686 = vmatpush1.bf16.xpose.msra.mxu0 0
  %4687 = vmatprep.subr.bf16.mxu0 0
  %4688 = vmatpush1.bf16.xpose.msra.mxu0 0
  %4689 = vmatprep.mubr.bf16.mxu0 %v4564
  %4690 = vmatmul.mubr.bf16.gmra.mrb[0].mxu0 %v4563
  %v4691 = vpop.f32.mrb[0].mxu0
  %v4692 = vadd.f32 %v4652, %v4691
  %v4693 = vpop.f32.mrb[0].mxu0
  %v4694 = vpop.f32.mrb[0].mxu0
  %v4695 = vpop.f32.mrb[0].mxu0
  %4696 = vdwg.mxu0
  %4697 = vmatprep.subr.bf16.mxu0 %v4606
  %4698 = vmatpush1.bf16.xpose.msra.mxu0 %v4605
  %4699 = vmatprep.subr.bf16.mxu0 0
  %4700 = vmatpush1.bf16.xpose.msra.mxu0 0
  %4701 = vmatprep.subr.bf16.mxu0 0
  %4702 = vmatpush1.bf16.xpose.msra.mxu0 0
  %4703 = vmatprep.subr.bf16.mxu0 0
  %4704 = vmatpush1.bf16.xpose.msra.mxu0 0
  %4705 = vmatprep.subr.bf16.mxu0 0
  %4706 = vmatpush1.bf16.xpose.msra.mxu0 0
  %4707 = vmatprep.subr.bf16.mxu0 0
  %4708 = vmatpush1.bf16.xpose.msra.mxu0 0
  %4709 = vmatprep.subr.bf16.mxu0 0
  %4710 = vmatpush1.bf16.xpose.msra.mxu0 0
  %4711 = vmatprep.subr.bf16.mxu0 0
  %4712 = vmatpush1.bf16.xpose.msra.mxu0 0
  %4713 = vmatprep.subr.bf16.mxu0 0
  %4714 = vmatpush1.bf16.xpose.msra.mxu0 0
  %4715 = vmatprep.subr.bf16.mxu0 0
  %4716 = vmatpush1.bf16.xpose.msra.mxu0 0
  %4717 = vmatprep.subr.bf16.mxu0 0
  %4718 = vmatpush1.bf16.xpose.msra.mxu0 0
  %4719 = vmatprep.subr.bf16.mxu0 0
  %4720 = vmatpush1.bf16.xpose.msra.mxu0 0
  %4721 = vmatprep.subr.bf16.mxu0 0
  %4722 = vmatpush1.bf16.xpose.msra.mxu0 0
  %4723 = vmatprep.subr.bf16.mxu0 0
  %4724 = vmatpush1.bf16.xpose.msra.mxu0 0
  %4725 = vmatprep.subr.bf16.mxu0 0
  %4726 = vmatpush1.bf16.xpose.msra.mxu0 0
  %4727 = vmatprep.subr.bf16.mxu0 0
  %4728 = vmatpush1.bf16.xpose.msra.mxu0 0
  %4729 = vmatprep.mubr.bf16.mxu0 %v4566
  %4730 = vmatmul.mubr.bf16.gmra.mrb[0].mxu0 %v4565
  %v4731 = vpop.f32.mrb[0].mxu0
  %v4732 = vadd.f32 %v4692, %v4731
  %v4733 = vpop.f32.mrb[0].mxu0
  %v4734 = vpop.f32.mrb[0].mxu0
  %v4735 = vpop.f32.mrb[0].mxu0
  %4736 = vdwg.mxu0
  %4737 = vmatprep.subr.bf16.mxu0 %v4608
  %4738 = vmatpush1.bf16.xpose.msra.mxu0 %v4607
  %4739 = vmatprep.subr.bf16.mxu0 0
  %4740 = vmatpush1.bf16.xpose.msra.mxu0 0
  %4741 = vmatprep.subr.bf16.mxu0 0
  %4742 = vmatpush1.bf16.xpose.msra.mxu0 0
  %4743 = vmatprep.subr.bf16.mxu0 0
  %4744 = vmatpush1.bf16.xpose.msra.mxu0 0
  %4745 = vmatprep.subr.bf16.mxu0 0
  %4746 = vmatpush1.bf16.xpose.msra.mxu0 0
  %4747 = vmatprep.subr.bf16.mxu0 0
  %4748 = vmatpush1.bf16.xpose.msra.mxu0 0
  %4749 = vmatprep.subr.bf16.mxu0 0
  %4750 = vmatpush1.bf16.xpose.msra.mxu0 0
  %4751 = vmatprep.subr.bf16.mxu0 0
  %4752 = vmatpush1.bf16.xpose.msra.mxu0 0
  %4753 = vmatprep.subr.bf16.mxu0 0
  %4754 = vmatpush1.bf16.xpose.msra.mxu0 0
  %4755 = vmatprep.subr.bf16.mxu0 0
  %4756 = vmatpush1.bf16.xpose.msra.mxu0 0
  %4757 = vmatprep.subr.bf16.mxu0 0
  %4758 = vmatpush1.bf16.xpose.msra.mxu0 0
  %4759 = vmatprep.subr.bf16.mxu0 0
  %4760 = vmatpush1.bf16.xpose.msra.mxu0 0
  %4761 = vmatprep.subr.bf16.mxu0 0
  %4762 = vmatpush1.bf16.xpose.msra.mxu0 0
  %4763 = vmatprep.subr.bf16.mxu0 0
  %4764 = vmatpush1.bf16.xpose.msra.mxu0 0
  %4765 = vmatprep.subr.bf16.mxu0 0
  %4766 = vmatpush1.bf16.xpose.msra.mxu0 0
  %4767 = vmatprep.subr.bf16.mxu0 0
  %4768 = vmatpush1.bf16.xpose.msra.mxu0 0
  %4769 = vmatprep.mubr.bf16.mxu0 %v4568
  %4770 = vmatmul.mubr.bf16.gmra.mrb[0].mxu0 %v4567
  %v4771 = vpop.f32.mrb[0].mxu0
  %v4772 = vadd.f32 %v4732, %v4771
  %v4773 = vpop.f32.mrb[0].mxu0
  %v4774 = vpop.f32.mrb[0].mxu0
  %v4775 = vpop.f32.mrb[0].mxu0
  %4776 = vdwg.mxu0
  %v4777 = vadd.f32 %v4527, %v4772
  %v4778 = vld [vmem:[#allocation2] sm:$0x80]
  %v4779 = vld [vmem:[#allocation2 + $0x8] sm:$0x80]
  %v4780 = vld [vmem:[#allocation2 + $0x10] sm:$0x80]
  %v4781 = vld [vmem:[#allocation2 + $0x18] sm:$0x80]
  %v4782 = vld [vmem:[#allocation2 + $0x20] sm:$0x80]
  %v4783 = vld [vmem:[#allocation2 + $0x28] sm:$0x80]
  %v4784 = vld [vmem:[#allocation2 + $0x30] sm:$0x80]
  %v4785 = vld [vmem:[#allocation2 + $0x38] sm:$0x80]
  %v4786 = vld [vmem:[#allocation2 + $0x80] sm:$0x80]
  %v4787 = vld [vmem:[#allocation2 + $0x88] sm:$0x80]
  %v4788 = vld [vmem:[#allocation2 + $0x90] sm:$0x80]
  %v4789 = vld [vmem:[#allocation2 + $0x98] sm:$0x80]
  %v4790 = vld [vmem:[#allocation2 + $0xa0] sm:$0x80]
  %v4791 = vld [vmem:[#allocation2 + $0xa8] sm:$0x80]
  %v4792 = vld [vmem:[#allocation2 + $0xb0] sm:$0x80]
  %v4793 = vld [vmem:[#allocation2 + $0xb8] sm:$0x80]
  %s4794 = scalar_lea.vmem %s3, 896
  %v4795 = vld [vmem:[%s4794] sm:$0xff]
  %v4796 = vld [vmem:[%s4794 + $0x8] sm:$0xff]
  %v4797 = vld [vmem:[%s4794 + $0x10] sm:$0xff]
  %v4798 = vld [vmem:[%s4794 + $0x18] sm:$0xff]
  %v4799 = vld [vmem:[%s4794 + $0x20] sm:$0xff]
  %v4800 = vld [vmem:[%s4794 + $0x28] sm:$0xff]
  %v4801 = vld [vmem:[%s4794 + $0x30] sm:$0xff]
  %v4802 = vld [vmem:[%s4794 + $0x38] sm:$0xff]
  %v4819 = vunpack.c.h.b16 %v4778
  %v4820 = vunpack.c.h.b16 %v4779
  %v4821 = vunpack.c.h.b16 %v4780
  %v4822 = vunpack.c.h.b16 %v4781
  %v4823 = vunpack.c.h.b16 %v4782
  %v4824 = vunpack.c.h.b16 %v4783
  %v4825 = vunpack.c.h.b16 %v4784
  %v4826 = vunpack.c.h.b16 %v4785
  %v4827 = vunpack.c.h.b16 %v4786
  %v4828 = vunpack.c.h.b16 %v4787
  %v4829 = vunpack.c.h.b16 %v4788
  %v4830 = vunpack.c.h.b16 %v4789
  %v4831 = vunpack.c.h.b16 %v4790
  %v4832 = vunpack.c.h.b16 %v4791
  %v4833 = vunpack.c.h.b16 %v4792
  %v4834 = vunpack.c.h.b16 %v4793
  %v4835 = vrot.slane %v4819, 6
  %v4836 = vrot.slane %v4827, 5
  %v4837 = vsel %vm1042, %v4836, %v4835
  %v4838 = vrot.slane %v4820, 6
  %v4839 = vrot.slane %v4828, 5
  %v4840 = vsel %vm1042, %v4839, %v4838
  %v4841 = vrot.slane %v4821, 6
  %v4842 = vrot.slane %v4829, 5
  %v4843 = vsel %vm1042, %v4842, %v4841
  %v4844 = vrot.slane %v4822, 6
  %v4845 = vrot.slane %v4830, 5
  %v4846 = vsel %vm1042, %v4845, %v4844
  %v4847 = vrot.slane %v4823, 6
  %v4848 = vrot.slane %v4831, 5
  %v4849 = vsel %vm1042, %v4848, %v4847
  %v4850 = vrot.slane %v4824, 6
  %v4851 = vrot.slane %v4832, 5
  %v4852 = vsel %vm1042, %v4851, %v4850
  %v4853 = vrot.slane %v4825, 6
  %v4854 = vrot.slane %v4833, 5
  %v4855 = vsel %vm1042, %v4854, %v4853
  %v4856 = vrot.slane %v4826, 6
  %v4857 = vrot.slane %v4834, 5
  %v4858 = vsel %vm1042, %v4857, %v4856
  %v4859 = vpack.c.b16 %v4837, %v4837
  %v4860 = vpack.c.b16 %v4840, %v4840
  %v4861 = vpack.c.b16 %v4843, %v4843
  %v4862 = vpack.c.b16 %v4846, %v4846
  %v4863 = vpack.c.b16 %v4849, %v4849
  %v4864 = vpack.c.b16 %v4852, %v4852
  %v4865 = vpack.c.b16 %v4855, %v4855
  %v4866 = vpack.c.b16 %v4858, %v4858
  %v4883 = vunpack.c.l.b16 %v4795
  %v4884 = vunpack.c.h.b16 %v4795
  %v4885 = vunpack.c.l.b16 %v4796
  %v4886 = vunpack.c.h.b16 %v4796
  %v4887 = vunpack.c.l.b16 %v4797
  %v4888 = vunpack.c.h.b16 %v4797
  %v4889 = vunpack.c.l.b16 %v4798
  %v4890 = vunpack.c.h.b16 %v4798
  %v4891 = vunpack.c.l.b16 %v4799
  %v4892 = vunpack.c.h.b16 %v4799
  %v4893 = vunpack.c.l.b16 %v4800
  %v4894 = vunpack.c.h.b16 %v4800
  %v4895 = vunpack.c.l.b16 %v4801
  %v4896 = vunpack.c.h.b16 %v4801
  %v4897 = vunpack.c.l.b16 %v4802
  %v4898 = vunpack.c.h.b16 %v4802
  %v4899 = vpack.c.b16 %v4891, %v4883
  %v4900 = vpack.c.b16 %v4892, %v4884
  %v4901 = vpack.c.b16 %v4893, %v4885
  %v4902 = vpack.c.b16 %v4894, %v4886
  %v4903 = vpack.c.b16 %v4895, %v4887
  %v4904 = vpack.c.b16 %v4896, %v4888
  %v4905 = vpack.c.b16 %v4897, %v4889
  %v4906 = vpack.c.b16 %v4898, %v4890
  %4915 = vmatprep.subr.bf16.mxu0 %v4900
  %4916 = vmatpush1.bf16.xpose.msra.mxu0 %v4899
  %4917 = vmatprep.subr.bf16.mxu0 0
  %4918 = vmatpush1.bf16.xpose.msra.mxu0 0
  %4919 = vmatprep.subr.bf16.mxu0 0
  %4920 = vmatpush1.bf16.xpose.msra.mxu0 0
  %4921 = vmatprep.subr.bf16.mxu0 0
  %4922 = vmatpush1.bf16.xpose.msra.mxu0 0
  %4923 = vmatprep.subr.bf16.mxu0 0
  %4924 = vmatpush1.bf16.xpose.msra.mxu0 0
  %4925 = vmatprep.subr.bf16.mxu0 0
  %4926 = vmatpush1.bf16.xpose.msra.mxu0 0
  %4927 = vmatprep.subr.bf16.mxu0 0
  %4928 = vmatpush1.bf16.xpose.msra.mxu0 0
  %4929 = vmatprep.subr.bf16.mxu0 0
  %4930 = vmatpush1.bf16.xpose.msra.mxu0 0
  %4931 = vmatprep.subr.bf16.mxu0 0
  %4932 = vmatpush1.bf16.xpose.msra.mxu0 0
  %4933 = vmatprep.subr.bf16.mxu0 0
  %4934 = vmatpush1.bf16.xpose.msra.mxu0 0
  %4935 = vmatprep.subr.bf16.mxu0 0
  %4936 = vmatpush1.bf16.xpose.msra.mxu0 0
  %4937 = vmatprep.subr.bf16.mxu0 0
  %4938 = vmatpush1.bf16.xpose.msra.mxu0 0
  %4939 = vmatprep.subr.bf16.mxu0 0
  %4940 = vmatpush1.bf16.xpose.msra.mxu0 0
  %4941 = vmatprep.subr.bf16.mxu0 0
  %4942 = vmatpush1.bf16.xpose.msra.mxu0 0
  %4943 = vmatprep.subr.bf16.mxu0 0
  %4944 = vmatpush1.bf16.xpose.msra.mxu0 0
  %4945 = vmatprep.subr.bf16.mxu0 0
  %4946 = vmatpush1.bf16.xpose.msra.mxu0 0
  %4947 = vmatprep.mubr.bf16.mxu0 %v4860
  %4948 = vmatmul.mubr.bf16.gmra.mrb[0].mxu0 %v4859
  %v4949 = vpop.f32.mrb[0].mxu0
  %v4950 = vadd.f32 0.0, %v4949
  %v4951 = vpop.f32.mrb[0].mxu0
  %v4952 = vpop.f32.mrb[0].mxu0
  %v4953 = vpop.f32.mrb[0].mxu0
  %4954 = vdwg.mxu0
  %4955 = vmatprep.subr.bf16.mxu0 %v4902
  %4956 = vmatpush1.bf16.xpose.msra.mxu0 %v4901
  %4957 = vmatprep.subr.bf16.mxu0 0
  %4958 = vmatpush1.bf16.xpose.msra.mxu0 0
  %4959 = vmatprep.subr.bf16.mxu0 0
  %4960 = vmatpush1.bf16.xpose.msra.mxu0 0
  %4961 = vmatprep.subr.bf16.mxu0 0
  %4962 = vmatpush1.bf16.xpose.msra.mxu0 0
  %4963 = vmatprep.subr.bf16.mxu0 0
  %4964 = vmatpush1.bf16.xpose.msra.mxu0 0
  %4965 = vmatprep.subr.bf16.mxu0 0
  %4966 = vmatpush1.bf16.xpose.msra.mxu0 0
  %4967 = vmatprep.subr.bf16.mxu0 0
  %4968 = vmatpush1.bf16.xpose.msra.mxu0 0
  %4969 = vmatprep.subr.bf16.mxu0 0
  %4970 = vmatpush1.bf16.xpose.msra.mxu0 0
  %4971 = vmatprep.subr.bf16.mxu0 0
  %4972 = vmatpush1.bf16.xpose.msra.mxu0 0
  %4973 = vmatprep.subr.bf16.mxu0 0
  %4974 = vmatpush1.bf16.xpose.msra.mxu0 0
  %4975 = vmatprep.subr.bf16.mxu0 0
  %4976 = vmatpush1.bf16.xpose.msra.mxu0 0
  %4977 = vmatprep.subr.bf16.mxu0 0
  %4978 = vmatpush1.bf16.xpose.msra.mxu0 0
  %4979 = vmatprep.subr.bf16.mxu0 0
  %4980 = vmatpush1.bf16.xpose.msra.mxu0 0
  %4981 = vmatprep.subr.bf16.mxu0 0
  %4982 = vmatpush1.bf16.xpose.msra.mxu0 0
  %4983 = vmatprep.subr.bf16.mxu0 0
  %4984 = vmatpush1.bf16.xpose.msra.mxu0 0
  %4985 = vmatprep.subr.bf16.mxu0 0
  %4986 = vmatpush1.bf16.xpose.msra.mxu0 0
  %4987 = vmatprep.mubr.bf16.mxu0 %v4862
  %4988 = vmatmul.mubr.bf16.gmra.mrb[0].mxu0 %v4861
  %v4989 = vpop.f32.mrb[0].mxu0
  %v4990 = vadd.f32 %v4950, %v4989
  %v4991 = vpop.f32.mrb[0].mxu0
  %v4992 = vpop.f32.mrb[0].mxu0
  %v4993 = vpop.f32.mrb[0].mxu0
  %4994 = vdwg.mxu0
  %4995 = vmatprep.subr.bf16.mxu0 %v4904
  %4996 = vmatpush1.bf16.xpose.msra.mxu0 %v4903
  %4997 = vmatprep.subr.bf16.mxu0 0
  %4998 = vmatpush1.bf16.xpose.msra.mxu0 0
  %4999 = vmatprep.subr.bf16.mxu0 0
  %5000 = vmatpush1.bf16.xpose.msra.mxu0 0
  %5001 = vmatprep.subr.bf16.mxu0 0
  %5002 = vmatpush1.bf16.xpose.msra.mxu0 0
  %5003 = vmatprep.subr.bf16.mxu0 0
  %5004 = vmatpush1.bf16.xpose.msra.mxu0 0
  %5005 = vmatprep.subr.bf16.mxu0 0
  %5006 = vmatpush1.bf16.xpose.msra.mxu0 0
  %5007 = vmatprep.subr.bf16.mxu0 0
  %5008 = vmatpush1.bf16.xpose.msra.mxu0 0
  %5009 = vmatprep.subr.bf16.mxu0 0
  %5010 = vmatpush1.bf16.xpose.msra.mxu0 0
  %5011 = vmatprep.subr.bf16.mxu0 0
  %5012 = vmatpush1.bf16.xpose.msra.mxu0 0
  %5013 = vmatprep.subr.bf16.mxu0 0
  %5014 = vmatpush1.bf16.xpose.msra.mxu0 0
  %5015 = vmatprep.subr.bf16.mxu0 0
  %5016 = vmatpush1.bf16.xpose.msra.mxu0 0
  %5017 = vmatprep.subr.bf16.mxu0 0
  %5018 = vmatpush1.bf16.xpose.msra.mxu0 0
  %5019 = vmatprep.subr.bf16.mxu0 0
  %5020 = vmatpush1.bf16.xpose.msra.mxu0 0
  %5021 = vmatprep.subr.bf16.mxu0 0
  %5022 = vmatpush1.bf16.xpose.msra.mxu0 0
  %5023 = vmatprep.subr.bf16.mxu0 0
  %5024 = vmatpush1.bf16.xpose.msra.mxu0 0
  %5025 = vmatprep.subr.bf16.mxu0 0
  %5026 = vmatpush1.bf16.xpose.msra.mxu0 0
  %5027 = vmatprep.mubr.bf16.mxu0 %v4864
  %5028 = vmatmul.mubr.bf16.gmra.mrb[0].mxu0 %v4863
  %v5029 = vpop.f32.mrb[0].mxu0
  %v5030 = vadd.f32 %v4990, %v5029
  %v5031 = vpop.f32.mrb[0].mxu0
  %v5032 = vpop.f32.mrb[0].mxu0
  %v5033 = vpop.f32.mrb[0].mxu0
  %5034 = vdwg.mxu0
  %5035 = vmatprep.subr.bf16.mxu0 %v4906
  %5036 = vmatpush1.bf16.xpose.msra.mxu0 %v4905
  %5037 = vmatprep.subr.bf16.mxu0 0
  %5038 = vmatpush1.bf16.xpose.msra.mxu0 0
  %5039 = vmatprep.subr.bf16.mxu0 0
  %5040 = vmatpush1.bf16.xpose.msra.mxu0 0
  %5041 = vmatprep.subr.bf16.mxu0 0
  %5042 = vmatpush1.bf16.xpose.msra.mxu0 0
  %5043 = vmatprep.subr.bf16.mxu0 0
  %5044 = vmatpush1.bf16.xpose.msra.mxu0 0
  %5045 = vmatprep.subr.bf16.mxu0 0
  %5046 = vmatpush1.bf16.xpose.msra.mxu0 0
  %5047 = vmatprep.subr.bf16.mxu0 0
  %5048 = vmatpush1.bf16.xpose.msra.mxu0 0
  %5049 = vmatprep.subr.bf16.mxu0 0
  %5050 = vmatpush1.bf16.xpose.msra.mxu0 0
  %5051 = vmatprep.subr.bf16.mxu0 0
  %5052 = vmatpush1.bf16.xpose.msra.mxu0 0
  %5053 = vmatprep.subr.bf16.mxu0 0
  %5054 = vmatpush1.bf16.xpose.msra.mxu0 0
  %5055 = vmatprep.subr.bf16.mxu0 0
  %5056 = vmatpush1.bf16.xpose.msra.mxu0 0
  %5057 = vmatprep.subr.bf16.mxu0 0
  %5058 = vmatpush1.bf16.xpose.msra.mxu0 0
  %5059 = vmatprep.subr.bf16.mxu0 0
  %5060 = vmatpush1.bf16.xpose.msra.mxu0 0
  %5061 = vmatprep.subr.bf16.mxu0 0
  %5062 = vmatpush1.bf16.xpose.msra.mxu0 0
  %5063 = vmatprep.subr.bf16.mxu0 0
  %5064 = vmatpush1.bf16.xpose.msra.mxu0 0
  %5065 = vmatprep.subr.bf16.mxu0 0
  %5066 = vmatpush1.bf16.xpose.msra.mxu0 0
  %5067 = vmatprep.mubr.bf16.mxu0 %v4866
  %5068 = vmatmul.mubr.bf16.gmra.mrb[0].mxu0 %v4865
  %v5069 = vpop.f32.mrb[0].mxu0
  %v5070 = vadd.f32 %v5030, %v5069
  %v5071 = vpop.f32.mrb[0].mxu0
  %v5072 = vpop.f32.mrb[0].mxu0
  %v5073 = vpop.f32.mrb[0].mxu0
  %5074 = vdwg.mxu0
  %v5075 = vadd.f32 %v4777, %v5070
  %s5076 = scalar_lea.vmem %s3, 960
  %v5077 = vld [vmem:[%s5076] sm:$0xff]
  %v5078 = vld [vmem:[%s5076 + $0x8] sm:$0xff]
  %v5079 = vld [vmem:[%s5076 + $0x10] sm:$0xff]
  %v5080 = vld [vmem:[%s5076 + $0x18] sm:$0xff]
  %v5081 = vld [vmem:[%s5076 + $0x20] sm:$0xff]
  %v5082 = vld [vmem:[%s5076 + $0x28] sm:$0xff]
  %v5083 = vld [vmem:[%s5076 + $0x30] sm:$0xff]
  %v5084 = vld [vmem:[%s5076 + $0x38] sm:$0xff]
  %v5085 = vrot.slane %v4819, 7
  %v5086 = vrot.slane %v4827, 6
  %v5087 = vsel %vm1042, %v5086, %v5085
  %v5088 = vrot.slane %v4820, 7
  %v5089 = vrot.slane %v4828, 6
  %v5090 = vsel %vm1042, %v5089, %v5088
  %v5091 = vrot.slane %v4821, 7
  %v5092 = vrot.slane %v4829, 6
  %v5093 = vsel %vm1042, %v5092, %v5091
  %v5094 = vrot.slane %v4822, 7
  %v5095 = vrot.slane %v4830, 6
  %v5096 = vsel %vm1042, %v5095, %v5094
  %v5097 = vrot.slane %v4823, 7
  %v5098 = vrot.slane %v4831, 6
  %v5099 = vsel %vm1042, %v5098, %v5097
  %v5100 = vrot.slane %v4824, 7
  %v5101 = vrot.slane %v4832, 6
  %v5102 = vsel %vm1042, %v5101, %v5100
  %v5103 = vrot.slane %v4825, 7
  %v5104 = vrot.slane %v4833, 6
  %v5105 = vsel %vm1042, %v5104, %v5103
  %v5106 = vrot.slane %v4826, 7
  %v5107 = vrot.slane %v4834, 6
  %v5108 = vsel %vm1042, %v5107, %v5106
  %v5109 = vpack.c.b16 %v5087, %v5087
  %v5110 = vpack.c.b16 %v5090, %v5090
  %v5111 = vpack.c.b16 %v5093, %v5093
  %v5112 = vpack.c.b16 %v5096, %v5096
  %v5113 = vpack.c.b16 %v5099, %v5099
  %v5114 = vpack.c.b16 %v5102, %v5102
  %v5115 = vpack.c.b16 %v5105, %v5105
  %v5116 = vpack.c.b16 %v5108, %v5108
  %v5133 = vunpack.c.l.b16 %v5077
  %v5134 = vunpack.c.h.b16 %v5077
  %v5135 = vunpack.c.l.b16 %v5078
  %v5136 = vunpack.c.h.b16 %v5078
  %v5137 = vunpack.c.l.b16 %v5079
  %v5138 = vunpack.c.h.b16 %v5079
  %v5139 = vunpack.c.l.b16 %v5080
  %v5140 = vunpack.c.h.b16 %v5080
  %v5141 = vunpack.c.l.b16 %v5081
  %v5142 = vunpack.c.h.b16 %v5081
  %v5143 = vunpack.c.l.b16 %v5082
  %v5144 = vunpack.c.h.b16 %v5082
  %v5145 = vunpack.c.l.b16 %v5083
  %v5146 = vunpack.c.h.b16 %v5083
  %v5147 = vunpack.c.l.b16 %v5084
  %v5148 = vunpack.c.h.b16 %v5084
  %v5149 = vpack.c.b16 %v5141, %v5133
  %v5150 = vpack.c.b16 %v5142, %v5134
  %v5151 = vpack.c.b16 %v5143, %v5135
  %v5152 = vpack.c.b16 %v5144, %v5136
  %v5153 = vpack.c.b16 %v5145, %v5137
  %v5154 = vpack.c.b16 %v5146, %v5138
  %v5155 = vpack.c.b16 %v5147, %v5139
  %v5156 = vpack.c.b16 %v5148, %v5140
  %5165 = vmatprep.subr.bf16.mxu0 %v5150
  %5166 = vmatpush1.bf16.xpose.msra.mxu0 %v5149
  %5167 = vmatprep.subr.bf16.mxu0 0
  %5168 = vmatpush1.bf16.xpose.msra.mxu0 0
  %5169 = vmatprep.subr.bf16.mxu0 0
  %5170 = vmatpush1.bf16.xpose.msra.mxu0 0
  %5171 = vmatprep.subr.bf16.mxu0 0
  %5172 = vmatpush1.bf16.xpose.msra.mxu0 0
  %5173 = vmatprep.subr.bf16.mxu0 0
  %5174 = vmatpush1.bf16.xpose.msra.mxu0 0
  %5175 = vmatprep.subr.bf16.mxu0 0
  %5176 = vmatpush1.bf16.xpose.msra.mxu0 0
  %5177 = vmatprep.subr.bf16.mxu0 0
  %5178 = vmatpush1.bf16.xpose.msra.mxu0 0
  %5179 = vmatprep.subr.bf16.mxu0 0
  %5180 = vmatpush1.bf16.xpose.msra.mxu0 0
  %5181 = vmatprep.subr.bf16.mxu0 0
  %5182 = vmatpush1.bf16.xpose.msra.mxu0 0
  %5183 = vmatprep.subr.bf16.mxu0 0
  %5184 = vmatpush1.bf16.xpose.msra.mxu0 0
  %5185 = vmatprep.subr.bf16.mxu0 0
  %5186 = vmatpush1.bf16.xpose.msra.mxu0 0
  %5187 = vmatprep.subr.bf16.mxu0 0
  %5188 = vmatpush1.bf16.xpose.msra.mxu0 0
  %5189 = vmatprep.subr.bf16.mxu0 0
  %5190 = vmatpush1.bf16.xpose.msra.mxu0 0
  %5191 = vmatprep.subr.bf16.mxu0 0
  %5192 = vmatpush1.bf16.xpose.msra.mxu0 0
  %5193 = vmatprep.subr.bf16.mxu0 0
  %5194 = vmatpush1.bf16.xpose.msra.mxu0 0
  %5195 = vmatprep.subr.bf16.mxu0 0
  %5196 = vmatpush1.bf16.xpose.msra.mxu0 0
  %5197 = vmatprep.mubr.bf16.mxu0 %v5110
  %5198 = vmatmul.mubr.bf16.gmra.mrb[0].mxu0 %v5109
  %v5199 = vpop.f32.mrb[0].mxu0
  %v5200 = vadd.f32 0.0, %v5199
  %v5201 = vpop.f32.mrb[0].mxu0
  %v5202 = vpop.f32.mrb[0].mxu0
  %v5203 = vpop.f32.mrb[0].mxu0
  %5204 = vdwg.mxu0
  %5205 = vmatprep.subr.bf16.mxu0 %v5152
  %5206 = vmatpush1.bf16.xpose.msra.mxu0 %v5151
  %5207 = vmatprep.subr.bf16.mxu0 0
  %5208 = vmatpush1.bf16.xpose.msra.mxu0 0
  %5209 = vmatprep.subr.bf16.mxu0 0
  %5210 = vmatpush1.bf16.xpose.msra.mxu0 0
  %5211 = vmatprep.subr.bf16.mxu0 0
  %5212 = vmatpush1.bf16.xpose.msra.mxu0 0
  %5213 = vmatprep.subr.bf16.mxu0 0
  %5214 = vmatpush1.bf16.xpose.msra.mxu0 0
  %5215 = vmatprep.subr.bf16.mxu0 0
  %5216 = vmatpush1.bf16.xpose.msra.mxu0 0
  %5217 = vmatprep.subr.bf16.mxu0 0
  %5218 = vmatpush1.bf16.xpose.msra.mxu0 0
  %5219 = vmatprep.subr.bf16.mxu0 0
  %5220 = vmatpush1.bf16.xpose.msra.mxu0 0
  %5221 = vmatprep.subr.bf16.mxu0 0
  %5222 = vmatpush1.bf16.xpose.msra.mxu0 0
  %5223 = vmatprep.subr.bf16.mxu0 0
  %5224 = vmatpush1.bf16.xpose.msra.mxu0 0
  %5225 = vmatprep.subr.bf16.mxu0 0
  %5226 = vmatpush1.bf16.xpose.msra.mxu0 0
  %5227 = vmatprep.subr.bf16.mxu0 0
  %5228 = vmatpush1.bf16.xpose.msra.mxu0 0
  %5229 = vmatprep.subr.bf16.mxu0 0
  %5230 = vmatpush1.bf16.xpose.msra.mxu0 0
  %5231 = vmatprep.subr.bf16.mxu0 0
  %5232 = vmatpush1.bf16.xpose.msra.mxu0 0
  %5233 = vmatprep.subr.bf16.mxu0 0
  %5234 = vmatpush1.bf16.xpose.msra.mxu0 0
  %5235 = vmatprep.subr.bf16.mxu0 0
  %5236 = vmatpush1.bf16.xpose.msra.mxu0 0
  %5237 = vmatprep.mubr.bf16.mxu0 %v5112
  %5238 = vmatmul.mubr.bf16.gmra.mrb[0].mxu0 %v5111
  %v5239 = vpop.f32.mrb[0].mxu0
  %v5240 = vadd.f32 %v5200, %v5239
  %v5241 = vpop.f32.mrb[0].mxu0
  %v5242 = vpop.f32.mrb[0].mxu0
  %v5243 = vpop.f32.mrb[0].mxu0
  %5244 = vdwg.mxu0
  %5245 = vmatprep.subr.bf16.mxu0 %v5154
  %5246 = vmatpush1.bf16.xpose.msra.mxu0 %v5153
  %5247 = vmatprep.subr.bf16.mxu0 0
  %5248 = vmatpush1.bf16.xpose.msra.mxu0 0
  %5249 = vmatprep.subr.bf16.mxu0 0
  %5250 = vmatpush1.bf16.xpose.msra.mxu0 0
  %5251 = vmatprep.subr.bf16.mxu0 0
  %5252 = vmatpush1.bf16.xpose.msra.mxu0 0
  %5253 = vmatprep.subr.bf16.mxu0 0
  %5254 = vmatpush1.bf16.xpose.msra.mxu0 0
  %5255 = vmatprep.subr.bf16.mxu0 0
  %5256 = vmatpush1.bf16.xpose.msra.mxu0 0
  %5257 = vmatprep.subr.bf16.mxu0 0
  %5258 = vmatpush1.bf16.xpose.msra.mxu0 0
  %5259 = vmatprep.subr.bf16.mxu0 0
  %5260 = vmatpush1.bf16.xpose.msra.mxu0 0
  %5261 = vmatprep.subr.bf16.mxu0 0
  %5262 = vmatpush1.bf16.xpose.msra.mxu0 0
  %5263 = vmatprep.subr.bf16.mxu0 0
  %5264 = vmatpush1.bf16.xpose.msra.mxu0 0
  %5265 = vmatprep.subr.bf16.mxu0 0
  %5266 = vmatpush1.bf16.xpose.msra.mxu0 0
  %5267 = vmatprep.subr.bf16.mxu0 0
  %5268 = vmatpush1.bf16.xpose.msra.mxu0 0
  %5269 = vmatprep.subr.bf16.mxu0 0
  %5270 = vmatpush1.bf16.xpose.msra.mxu0 0
  %5271 = vmatprep.subr.bf16.mxu0 0
  %5272 = vmatpush1.bf16.xpose.msra.mxu0 0
  %5273 = vmatprep.subr.bf16.mxu0 0
  %5274 = vmatpush1.bf16.xpose.msra.mxu0 0
  %5275 = vmatprep.subr.bf16.mxu0 0
  %5276 = vmatpush1.bf16.xpose.msra.mxu0 0
  %5277 = vmatprep.mubr.bf16.mxu0 %v5114
  %5278 = vmatmul.mubr.bf16.gmra.mrb[0].mxu0 %v5113
  %v5279 = vpop.f32.mrb[0].mxu0
  %v5280 = vadd.f32 %v5240, %v5279
  %v5281 = vpop.f32.mrb[0].mxu0
  %v5282 = vpop.f32.mrb[0].mxu0
  %v5283 = vpop.f32.mrb[0].mxu0
  %5284 = vdwg.mxu0
  %5285 = vmatprep.subr.bf16.mxu0 %v5156
  %5286 = vmatpush1.bf16.xpose.msra.mxu0 %v5155
  %5287 = vmatprep.subr.bf16.mxu0 0
  %5288 = vmatpush1.bf16.xpose.msra.mxu0 0
  %5289 = vmatprep.subr.bf16.mxu0 0
  %5290 = vmatpush1.bf16.xpose.msra.mxu0 0
  %5291 = vmatprep.subr.bf16.mxu0 0
  %5292 = vmatpush1.bf16.xpose.msra.mxu0 0
  %5293 = vmatprep.subr.bf16.mxu0 0
  %5294 = vmatpush1.bf16.xpose.msra.mxu0 0
  %5295 = vmatprep.subr.bf16.mxu0 0
  %5296 = vmatpush1.bf16.xpose.msra.mxu0 0
  %5297 = vmatprep.subr.bf16.mxu0 0
  %5298 = vmatpush1.bf16.xpose.msra.mxu0 0
  %5299 = vmatprep.subr.bf16.mxu0 0
  %5300 = vmatpush1.bf16.xpose.msra.mxu0 0
  %5301 = vmatprep.subr.bf16.mxu0 0
  %5302 = vmatpush1.bf16.xpose.msra.mxu0 0
  %5303 = vmatprep.subr.bf16.mxu0 0
  %5304 = vmatpush1.bf16.xpose.msra.mxu0 0
  %5305 = vmatprep.subr.bf16.mxu0 0
  %5306 = vmatpush1.bf16.xpose.msra.mxu0 0
  %5307 = vmatprep.subr.bf16.mxu0 0
  %5308 = vmatpush1.bf16.xpose.msra.mxu0 0
  %5309 = vmatprep.subr.bf16.mxu0 0
  %5310 = vmatpush1.bf16.xpose.msra.mxu0 0
  %5311 = vmatprep.subr.bf16.mxu0 0
  %5312 = vmatpush1.bf16.xpose.msra.mxu0 0
  %5313 = vmatprep.subr.bf16.mxu0 0
  %5314 = vmatpush1.bf16.xpose.msra.mxu0 0
  %5315 = vmatprep.subr.bf16.mxu0 0
  %5316 = vmatpush1.bf16.xpose.msra.mxu0 0
  %5317 = vmatprep.mubr.bf16.mxu0 %v5116
  %5318 = vmatmul.mubr.bf16.gmra.mrb[0].mxu0 %v5115
  %v5319 = vpop.f32.mrb[0].mxu0
  %v5320 = vadd.f32 %v5280, %v5319
  %v5321 = vpop.f32.mrb[0].mxu0
  %v5322 = vpop.f32.mrb[0].mxu0
  %v5323 = vpop.f32.mrb[0].mxu0
  %5324 = vdwg.mxu0
  %v5325 = vadd.f32 %v5075, %v5320
  %v5326 = vld [vmem:[#allocation2 + $0x40] sm:$0x1]
  %v5327 = vld [vmem:[#allocation2 + $0x48] sm:$0x1]
  %v5328 = vld [vmem:[#allocation2 + $0x50] sm:$0x1]
  %v5329 = vld [vmem:[#allocation2 + $0x58] sm:$0x1]
  %v5330 = vld [vmem:[#allocation2 + $0x60] sm:$0x1]
  %v5331 = vld [vmem:[#allocation2 + $0x68] sm:$0x1]
  %v5332 = vld [vmem:[#allocation2 + $0x70] sm:$0x1]
  %v5333 = vld [vmem:[#allocation2 + $0x78] sm:$0x1]
  %v5334 = vld [vmem:[#allocation2 + $0xc0] sm:$0x1]
  %v5335 = vld [vmem:[#allocation2 + $0xc8] sm:$0x1]
  %v5336 = vld [vmem:[#allocation2 + $0xd0] sm:$0x1]
  %v5337 = vld [vmem:[#allocation2 + $0xd8] sm:$0x1]
  %v5338 = vld [vmem:[#allocation2 + $0xe0] sm:$0x1]
  %v5339 = vld [vmem:[#allocation2 + $0xe8] sm:$0x1]
  %v5340 = vld [vmem:[#allocation2 + $0xf0] sm:$0x1]
  %v5341 = vld [vmem:[#allocation2 + $0xf8] sm:$0x1]
  %s5342 = scalar_lea.vmem %s3, 1024
  %v5343 = vld [vmem:[%s5342] sm:$0xff]
  %v5344 = vld [vmem:[%s5342 + $0x8] sm:$0xff]
  %v5345 = vld [vmem:[%s5342 + $0x10] sm:$0xff]
  %v5346 = vld [vmem:[%s5342 + $0x18] sm:$0xff]
  %v5347 = vld [vmem:[%s5342 + $0x20] sm:$0xff]
  %v5348 = vld [vmem:[%s5342 + $0x28] sm:$0xff]
  %v5349 = vld [vmem:[%s5342 + $0x30] sm:$0xff]
  %v5350 = vld [vmem:[%s5342 + $0x38] sm:$0xff]
  %v5367 = vunpack.c.l.b16 %v5326
  %v5368 = vunpack.c.l.b16 %v5327
  %v5369 = vunpack.c.l.b16 %v5328
  %v5370 = vunpack.c.l.b16 %v5329
  %v5371 = vunpack.c.l.b16 %v5330
  %v5372 = vunpack.c.l.b16 %v5331
  %v5373 = vunpack.c.l.b16 %v5332
  %v5374 = vunpack.c.l.b16 %v5333
  %v5375 = vunpack.c.l.b16 %v5334
  %v5376 = vunpack.c.l.b16 %v5335
  %v5377 = vunpack.c.l.b16 %v5336
  %v5378 = vunpack.c.l.b16 %v5337
  %v5379 = vunpack.c.l.b16 %v5338
  %v5380 = vunpack.c.l.b16 %v5339
  %v5381 = vunpack.c.l.b16 %v5340
  %v5382 = vunpack.c.l.b16 %v5341
  %v5383 = vrot.slane %v5375, 7
  %v5384 = vsel %vm1042, %v5383, %v5367
  %v5385 = vrot.slane %v5376, 7
  %v5386 = vsel %vm1042, %v5385, %v5368
  %v5387 = vrot.slane %v5377, 7
  %v5388 = vsel %vm1042, %v5387, %v5369
  %v5389 = vrot.slane %v5378, 7
  %v5390 = vsel %vm1042, %v5389, %v5370
  %v5391 = vrot.slane %v5379, 7
  %v5392 = vsel %vm1042, %v5391, %v5371
  %v5393 = vrot.slane %v5380, 7
  %v5394 = vsel %vm1042, %v5393, %v5372
  %v5395 = vrot.slane %v5381, 7
  %v5396 = vsel %vm1042, %v5395, %v5373
  %v5397 = vrot.slane %v5382, 7
  %v5398 = vsel %vm1042, %v5397, %v5374
  %v5399 = vpack.c.b16 %v5384, %v5384
  %v5400 = vpack.c.b16 %v5386, %v5386
  %v5401 = vpack.c.b16 %v5388, %v5388
  %v5402 = vpack.c.b16 %v5390, %v5390
  %v5403 = vpack.c.b16 %v5392, %v5392
  %v5404 = vpack.c.b16 %v5394, %v5394
  %v5405 = vpack.c.b16 %v5396, %v5396
  %v5406 = vpack.c.b16 %v5398, %v5398
  %v5423 = vunpack.c.l.b16 %v5343
  %v5424 = vunpack.c.h.b16 %v5343
  %v5425 = vunpack.c.l.b16 %v5344
  %v5426 = vunpack.c.h.b16 %v5344
  %v5427 = vunpack.c.l.b16 %v5345
  %v5428 = vunpack.c.h.b16 %v5345
  %v5429 = vunpack.c.l.b16 %v5346
  %v5430 = vunpack.c.h.b16 %v5346
  %v5431 = vunpack.c.l.b16 %v5347
  %v5432 = vunpack.c.h.b16 %v5347
  %v5433 = vunpack.c.l.b16 %v5348
  %v5434 = vunpack.c.h.b16 %v5348
  %v5435 = vunpack.c.l.b16 %v5349
  %v5436 = vunpack.c.h.b16 %v5349
  %v5437 = vunpack.c.l.b16 %v5350
  %v5438 = vunpack.c.h.b16 %v5350
  %v5439 = vpack.c.b16 %v5431, %v5423
  %v5440 = vpack.c.b16 %v5432, %v5424
  %v5441 = vpack.c.b16 %v5433, %v5425
  %v5442 = vpack.c.b16 %v5434, %v5426
  %v5443 = vpack.c.b16 %v5435, %v5427
  %v5444 = vpack.c.b16 %v5436, %v5428
  %v5445 = vpack.c.b16 %v5437, %v5429
  %v5446 = vpack.c.b16 %v5438, %v5430
  %5455 = vmatprep.subr.bf16.mxu0 %v5440
  %5456 = vmatpush1.bf16.xpose.msra.mxu0 %v5439
  %5457 = vmatprep.subr.bf16.mxu0 0
  %5458 = vmatpush1.bf16.xpose.msra.mxu0 0
  %5459 = vmatprep.subr.bf16.mxu0 0
  %5460 = vmatpush1.bf16.xpose.msra.mxu0 0
  %5461 = vmatprep.subr.bf16.mxu0 0
  %5462 = vmatpush1.bf16.xpose.msra.mxu0 0
  %5463 = vmatprep.subr.bf16.mxu0 0
  %5464 = vmatpush1.bf16.xpose.msra.mxu0 0
  %5465 = vmatprep.subr.bf16.mxu0 0
  %5466 = vmatpush1.bf16.xpose.msra.mxu0 0
  %5467 = vmatprep.subr.bf16.mxu0 0
  %5468 = vmatpush1.bf16.xpose.msra.mxu0 0
  %5469 = vmatprep.subr.bf16.mxu0 0
  %5470 = vmatpush1.bf16.xpose.msra.mxu0 0
  %5471 = vmatprep.subr.bf16.mxu0 0
  %5472 = vmatpush1.bf16.xpose.msra.mxu0 0
  %5473 = vmatprep.subr.bf16.mxu0 0
  %5474 = vmatpush1.bf16.xpose.msra.mxu0 0
  %5475 = vmatprep.subr.bf16.mxu0 0
  %5476 = vmatpush1.bf16.xpose.msra.mxu0 0
  %5477 = vmatprep.subr.bf16.mxu0 0
  %5478 = vmatpush1.bf16.xpose.msra.mxu0 0
  %5479 = vmatprep.subr.bf16.mxu0 0
  %5480 = vmatpush1.bf16.xpose.msra.mxu0 0
  %5481 = vmatprep.subr.bf16.mxu0 0
  %5482 = vmatpush1.bf16.xpose.msra.mxu0 0
  %5483 = vmatprep.subr.bf16.mxu0 0
  %5484 = vmatpush1.bf16.xpose.msra.mxu0 0
  %5485 = vmatprep.subr.bf16.mxu0 0
  %5486 = vmatpush1.bf16.xpose.msra.mxu0 0
  %5487 = vmatprep.mubr.bf16.mxu0 %v5400
  %5488 = vmatmul.mubr.bf16.gmra.mrb[0].mxu0 %v5399
  %v5489 = vpop.f32.mrb[0].mxu0
  %v5490 = vadd.f32 0.0, %v5489
  %v5491 = vpop.f32.mrb[0].mxu0
  %v5492 = vpop.f32.mrb[0].mxu0
  %v5493 = vpop.f32.mrb[0].mxu0
  %5494 = vdwg.mxu0
  %5495 = vmatprep.subr.bf16.mxu0 %v5442
  %5496 = vmatpush1.bf16.xpose.msra.mxu0 %v5441
  %5497 = vmatprep.subr.bf16.mxu0 0
  %5498 = vmatpush1.bf16.xpose.msra.mxu0 0
  %5499 = vmatprep.subr.bf16.mxu0 0
  %5500 = vmatpush1.bf16.xpose.msra.mxu0 0
  %5501 = vmatprep.subr.bf16.mxu0 0
  %5502 = vmatpush1.bf16.xpose.msra.mxu0 0
  %5503 = vmatprep.subr.bf16.mxu0 0
  %5504 = vmatpush1.bf16.xpose.msra.mxu0 0
  %5505 = vmatprep.subr.bf16.mxu0 0
  %5506 = vmatpush1.bf16.xpose.msra.mxu0 0
  %5507 = vmatprep.subr.bf16.mxu0 0
  %5508 = vmatpush1.bf16.xpose.msra.mxu0 0
  %5509 = vmatprep.subr.bf16.mxu0 0
  %5510 = vmatpush1.bf16.xpose.msra.mxu0 0
  %5511 = vmatprep.subr.bf16.mxu0 0
  %5512 = vmatpush1.bf16.xpose.msra.mxu0 0
  %5513 = vmatprep.subr.bf16.mxu0 0
  %5514 = vmatpush1.bf16.xpose.msra.mxu0 0
  %5515 = vmatprep.subr.bf16.mxu0 0
  %5516 = vmatpush1.bf16.xpose.msra.mxu0 0
  %5517 = vmatprep.subr.bf16.mxu0 0
  %5518 = vmatpush1.bf16.xpose.msra.mxu0 0
  %5519 = vmatprep.subr.bf16.mxu0 0
  %5520 = vmatpush1.bf16.xpose.msra.mxu0 0
  %5521 = vmatprep.subr.bf16.mxu0 0
  %5522 = vmatpush1.bf16.xpose.msra.mxu0 0
  %5523 = vmatprep.subr.bf16.mxu0 0
  %5524 = vmatpush1.bf16.xpose.msra.mxu0 0
  %5525 = vmatprep.subr.bf16.mxu0 0
  %5526 = vmatpush1.bf16.xpose.msra.mxu0 0
  %5527 = vmatprep.mubr.bf16.mxu0 %v5402
  %5528 = vmatmul.mubr.bf16.gmra.mrb[0].mxu0 %v5401
  %v5529 = vpop.f32.mrb[0].mxu0
  %v5530 = vadd.f32 %v5490, %v5529
  %v5531 = vpop.f32.mrb[0].mxu0
  %v5532 = vpop.f32.mrb[0].mxu0
  %v5533 = vpop.f32.mrb[0].mxu0
  %5534 = vdwg.mxu0
  %5535 = vmatprep.subr.bf16.mxu0 %v5444
  %5536 = vmatpush1.bf16.xpose.msra.mxu0 %v5443
  %5537 = vmatprep.subr.bf16.mxu0 0
  %5538 = vmatpush1.bf16.xpose.msra.mxu0 0
  %5539 = vmatprep.subr.bf16.mxu0 0
  %5540 = vmatpush1.bf16.xpose.msra.mxu0 0
  %5541 = vmatprep.subr.bf16.mxu0 0
  %5542 = vmatpush1.bf16.xpose.msra.mxu0 0
  %5543 = vmatprep.subr.bf16.mxu0 0
  %5544 = vmatpush1.bf16.xpose.msra.mxu0 0
  %5545 = vmatprep.subr.bf16.mxu0 0
  %5546 = vmatpush1.bf16.xpose.msra.mxu0 0
  %5547 = vmatprep.subr.bf16.mxu0 0
  %5548 = vmatpush1.bf16.xpose.msra.mxu0 0
  %5549 = vmatprep.subr.bf16.mxu0 0
  %5550 = vmatpush1.bf16.xpose.msra.mxu0 0
  %5551 = vmatprep.subr.bf16.mxu0 0
  %5552 = vmatpush1.bf16.xpose.msra.mxu0 0
  %5553 = vmatprep.subr.bf16.mxu0 0
  %5554 = vmatpush1.bf16.xpose.msra.mxu0 0
  %5555 = vmatprep.subr.bf16.mxu0 0
  %5556 = vmatpush1.bf16.xpose.msra.mxu0 0
  %5557 = vmatprep.subr.bf16.mxu0 0
  %5558 = vmatpush1.bf16.xpose.msra.mxu0 0
  %5559 = vmatprep.subr.bf16.mxu0 0
  %5560 = vmatpush1.bf16.xpose.msra.mxu0 0
  %5561 = vmatprep.subr.bf16.mxu0 0
  %5562 = vmatpush1.bf16.xpose.msra.mxu0 0
  %5563 = vmatprep.subr.bf16.mxu0 0
  %5564 = vmatpush1.bf16.xpose.msra.mxu0 0
  %5565 = vmatprep.subr.bf16.mxu0 0
  %5566 = vmatpush1.bf16.xpose.msra.mxu0 0
  %5567 = vmatprep.mubr.bf16.mxu0 %v5404
  %5568 = vmatmul.mubr.bf16.gmra.mrb[0].mxu0 %v5403
  %v5569 = vpop.f32.mrb[0].mxu0
  %v5570 = vadd.f32 %v5530, %v5569
  %v5571 = vpop.f32.mrb[0].mxu0
  %v5572 = vpop.f32.mrb[0].mxu0
  %v5573 = vpop.f32.mrb[0].mxu0
  %5574 = vdwg.mxu0
  %5575 = vmatprep.subr.bf16.mxu0 %v5446
  %5576 = vmatpush1.bf16.xpose.msra.mxu0 %v5445
  %5577 = vmatprep.subr.bf16.mxu0 0
  %5578 = vmatpush1.bf16.xpose.msra.mxu0 0
  %5579 = vmatprep.subr.bf16.mxu0 0
  %5580 = vmatpush1.bf16.xpose.msra.mxu0 0
  %5581 = vmatprep.subr.bf16.mxu0 0
  %5582 = vmatpush1.bf16.xpose.msra.mxu0 0
  %5583 = vmatprep.subr.bf16.mxu0 0
  %5584 = vmatpush1.bf16.xpose.msra.mxu0 0
  %5585 = vmatprep.subr.bf16.mxu0 0
  %5586 = vmatpush1.bf16.xpose.msra.mxu0 0
  %5587 = vmatprep.subr.bf16.mxu0 0
  %5588 = vmatpush1.bf16.xpose.msra.mxu0 0
  %5589 = vmatprep.subr.bf16.mxu0 0
  %5590 = vmatpush1.bf16.xpose.msra.mxu0 0
  %5591 = vmatprep.subr.bf16.mxu0 0
  %5592 = vmatpush1.bf16.xpose.msra.mxu0 0
  %5593 = vmatprep.subr.bf16.mxu0 0
  %5594 = vmatpush1.bf16.xpose.msra.mxu0 0
  %5595 = vmatprep.subr.bf16.mxu0 0
  %5596 = vmatpush1.bf16.xpose.msra.mxu0 0
  %5597 = vmatprep.subr.bf16.mxu0 0
  %5598 = vmatpush1.bf16.xpose.msra.mxu0 0
  %5599 = vmatprep.subr.bf16.mxu0 0
  %5600 = vmatpush1.bf16.xpose.msra.mxu0 0
  %5601 = vmatprep.subr.bf16.mxu0 0
  %5602 = vmatpush1.bf16.xpose.msra.mxu0 0
  %5603 = vmatprep.subr.bf16.mxu0 0
  %5604 = vmatpush1.bf16.xpose.msra.mxu0 0
  %5605 = vmatprep.subr.bf16.mxu0 0
  %5606 = vmatpush1.bf16.xpose.msra.mxu0 0
  %5607 = vmatprep.mubr.bf16.mxu0 %v5406
  %5608 = vmatmul.mubr.bf16.gmra.mrb[0].mxu0 %v5405
  %v5609 = vpop.f32.mrb[0].mxu0
  %v5610 = vadd.f32 %v5570, %v5609
  %v5611 = vpop.f32.mrb[0].mxu0
  %v5612 = vpop.f32.mrb[0].mxu0
  %v5613 = vpop.f32.mrb[0].mxu0
  %5614 = vdwg.mxu0
  %v5615 = vadd.f32 %v5325, %v5610
  %s5616 = scalar_lea.vmem %s3, 1088
  %v5617 = vld [vmem:[%s5616] sm:$0xff]
  %v5618 = vld [vmem:[%s5616 + $0x8] sm:$0xff]
  %v5619 = vld [vmem:[%s5616 + $0x10] sm:$0xff]
  %v5620 = vld [vmem:[%s5616 + $0x18] sm:$0xff]
  %v5621 = vld [vmem:[%s5616 + $0x20] sm:$0xff]
  %v5622 = vld [vmem:[%s5616 + $0x28] sm:$0xff]
  %v5623 = vld [vmem:[%s5616 + $0x30] sm:$0xff]
  %v5624 = vld [vmem:[%s5616 + $0x38] sm:$0xff]
  %v5625 = vrot.slane %v5367, 1
  %v5626 = vsel %vm1042, %v5375, %v5625
  %v5627 = vrot.slane %v5368, 1
  %v5628 = vsel %vm1042, %v5376, %v5627
  %v5629 = vrot.slane %v5369, 1
  %v5630 = vsel %vm1042, %v5377, %v5629
  %v5631 = vrot.slane %v5370, 1
  %v5632 = vsel %vm1042, %v5378, %v5631
  %v5633 = vrot.slane %v5371, 1
  %v5634 = vsel %vm1042, %v5379, %v5633
  %v5635 = vrot.slane %v5372, 1
  %v5636 = vsel %vm1042, %v5380, %v5635
  %v5637 = vrot.slane %v5373, 1
  %v5638 = vsel %vm1042, %v5381, %v5637
  %v5639 = vrot.slane %v5374, 1
  %v5640 = vsel %vm1042, %v5382, %v5639
  %v5641 = vpack.c.b16 %v5626, %v5626
  %v5642 = vpack.c.b16 %v5628, %v5628
  %v5643 = vpack.c.b16 %v5630, %v5630
  %v5644 = vpack.c.b16 %v5632, %v5632
  %v5645 = vpack.c.b16 %v5634, %v5634
  %v5646 = vpack.c.b16 %v5636, %v5636
  %v5647 = vpack.c.b16 %v5638, %v5638
  %v5648 = vpack.c.b16 %v5640, %v5640
  %v5665 = vunpack.c.l.b16 %v5617
  %v5666 = vunpack.c.h.b16 %v5617
  %v5667 = vunpack.c.l.b16 %v5618
  %v5668 = vunpack.c.h.b16 %v5618
  %v5669 = vunpack.c.l.b16 %v5619
  %v5670 = vunpack.c.h.b16 %v5619
  %v5671 = vunpack.c.l.b16 %v5620
  %v5672 = vunpack.c.h.b16 %v5620
  %v5673 = vunpack.c.l.b16 %v5621
  %v5674 = vunpack.c.h.b16 %v5621
  %v5675 = vunpack.c.l.b16 %v5622
  %v5676 = vunpack.c.h.b16 %v5622
  %v5677 = vunpack.c.l.b16 %v5623
  %v5678 = vunpack.c.h.b16 %v5623
  %v5679 = vunpack.c.l.b16 %v5624
  %v5680 = vunpack.c.h.b16 %v5624
  %v5681 = vpack.c.b16 %v5673, %v5665
  %v5682 = vpack.c.b16 %v5674, %v5666
  %v5683 = vpack.c.b16 %v5675, %v5667
  %v5684 = vpack.c.b16 %v5676, %v5668
  %v5685 = vpack.c.b16 %v5677, %v5669
  %v5686 = vpack.c.b16 %v5678, %v5670
  %v5687 = vpack.c.b16 %v5679, %v5671
  %v5688 = vpack.c.b16 %v5680, %v5672
  %5697 = vmatprep.subr.bf16.mxu0 %v5682
  %5698 = vmatpush1.bf16.xpose.msra.mxu0 %v5681
  %5699 = vmatprep.subr.bf16.mxu0 0
  %5700 = vmatpush1.bf16.xpose.msra.mxu0 0
  %5701 = vmatprep.subr.bf16.mxu0 0
  %5702 = vmatpush1.bf16.xpose.msra.mxu0 0
  %5703 = vmatprep.subr.bf16.mxu0 0
  %5704 = vmatpush1.bf16.xpose.msra.mxu0 0
  %5705 = vmatprep.subr.bf16.mxu0 0
  %5706 = vmatpush1.bf16.xpose.msra.mxu0 0
  %5707 = vmatprep.subr.bf16.mxu0 0
  %5708 = vmatpush1.bf16.xpose.msra.mxu0 0
  %5709 = vmatprep.subr.bf16.mxu0 0
  %5710 = vmatpush1.bf16.xpose.msra.mxu0 0
  %5711 = vmatprep.subr.bf16.mxu0 0
  %5712 = vmatpush1.bf16.xpose.msra.mxu0 0
  %5713 = vmatprep.subr.bf16.mxu0 0
  %5714 = vmatpush1.bf16.xpose.msra.mxu0 0
  %5715 = vmatprep.subr.bf16.mxu0 0
  %5716 = vmatpush1.bf16.xpose.msra.mxu0 0
  %5717 = vmatprep.subr.bf16.mxu0 0
  %5718 = vmatpush1.bf16.xpose.msra.mxu0 0
  %5719 = vmatprep.subr.bf16.mxu0 0
  %5720 = vmatpush1.bf16.xpose.msra.mxu0 0
  %5721 = vmatprep.subr.bf16.mxu0 0
  %5722 = vmatpush1.bf16.xpose.msra.mxu0 0
  %5723 = vmatprep.subr.bf16.mxu0 0
  %5724 = vmatpush1.bf16.xpose.msra.mxu0 0
  %5725 = vmatprep.subr.bf16.mxu0 0
  %5726 = vmatpush1.bf16.xpose.msra.mxu0 0
  %5727 = vmatprep.subr.bf16.mxu0 0
  %5728 = vmatpush1.bf16.xpose.msra.mxu0 0
  %5729 = vmatprep.mubr.bf16.mxu0 %v5642
  %5730 = vmatmul.mubr.bf16.gmra.mrb[0].mxu0 %v5641
  %v5731 = vpop.f32.mrb[0].mxu0
  %v5732 = vadd.f32 0.0, %v5731
  %v5733 = vpop.f32.mrb[0].mxu0
  %v5734 = vpop.f32.mrb[0].mxu0
  %v5735 = vpop.f32.mrb[0].mxu0
  %5736 = vdwg.mxu0
  %5737 = vmatprep.subr.bf16.mxu0 %v5684
  %5738 = vmatpush1.bf16.xpose.msra.mxu0 %v5683
  %5739 = vmatprep.subr.bf16.mxu0 0
  %5740 = vmatpush1.bf16.xpose.msra.mxu0 0
  %5741 = vmatprep.subr.bf16.mxu0 0
  %5742 = vmatpush1.bf16.xpose.msra.mxu0 0
  %5743 = vmatprep.subr.bf16.mxu0 0
  %5744 = vmatpush1.bf16.xpose.msra.mxu0 0
  %5745 = vmatprep.subr.bf16.mxu0 0
  %5746 = vmatpush1.bf16.xpose.msra.mxu0 0
  %5747 = vmatprep.subr.bf16.mxu0 0
  %5748 = vmatpush1.bf16.xpose.msra.mxu0 0
  %5749 = vmatprep.subr.bf16.mxu0 0
  %5750 = vmatpush1.bf16.xpose.msra.mxu0 0
  %5751 = vmatprep.subr.bf16.mxu0 0
  %5752 = vmatpush1.bf16.xpose.msra.mxu0 0
  %5753 = vmatprep.subr.bf16.mxu0 0
  %5754 = vmatpush1.bf16.xpose.msra.mxu0 0
  %5755 = vmatprep.subr.bf16.mxu0 0
  %5756 = vmatpush1.bf16.xpose.msra.mxu0 0
  %5757 = vmatprep.subr.bf16.mxu0 0
  %5758 = vmatpush1.bf16.xpose.msra.mxu0 0
  %5759 = vmatprep.subr.bf16.mxu0 0
  %5760 = vmatpush1.bf16.xpose.msra.mxu0 0
  %5761 = vmatprep.subr.bf16.mxu0 0
  %5762 = vmatpush1.bf16.xpose.msra.mxu0 0
  %5763 = vmatprep.subr.bf16.mxu0 0
  %5764 = vmatpush1.bf16.xpose.msra.mxu0 0
  %5765 = vmatprep.subr.bf16.mxu0 0
  %5766 = vmatpush1.bf16.xpose.msra.mxu0 0
  %5767 = vmatprep.subr.bf16.mxu0 0
  %5768 = vmatpush1.bf16.xpose.msra.mxu0 0
  %5769 = vmatprep.mubr.bf16.mxu0 %v5644
  %5770 = vmatmul.mubr.bf16.gmra.mrb[0].mxu0 %v5643
  %v5771 = vpop.f32.mrb[0].mxu0
  %v5772 = vadd.f32 %v5732, %v5771
  %v5773 = vpop.f32.mrb[0].mxu0
  %v5774 = vpop.f32.mrb[0].mxu0
  %v5775 = vpop.f32.mrb[0].mxu0
  %5776 = vdwg.mxu0
  %5777 = vmatprep.subr.bf16.mxu0 %v5686
  %5778 = vmatpush1.bf16.xpose.msra.mxu0 %v5685
  %5779 = vmatprep.subr.bf16.mxu0 0
  %5780 = vmatpush1.bf16.xpose.msra.mxu0 0
  %5781 = vmatprep.subr.bf16.mxu0 0
  %5782 = vmatpush1.bf16.xpose.msra.mxu0 0
  %5783 = vmatprep.subr.bf16.mxu0 0
  %5784 = vmatpush1.bf16.xpose.msra.mxu0 0
  %5785 = vmatprep.subr.bf16.mxu0 0
  %5786 = vmatpush1.bf16.xpose.msra.mxu0 0
  %5787 = vmatprep.subr.bf16.mxu0 0
  %5788 = vmatpush1.bf16.xpose.msra.mxu0 0
  %5789 = vmatprep.subr.bf16.mxu0 0
  %5790 = vmatpush1.bf16.xpose.msra.mxu0 0
  %5791 = vmatprep.subr.bf16.mxu0 0
  %5792 = vmatpush1.bf16.xpose.msra.mxu0 0
  %5793 = vmatprep.subr.bf16.mxu0 0
  %5794 = vmatpush1.bf16.xpose.msra.mxu0 0
  %5795 = vmatprep.subr.bf16.mxu0 0
  %5796 = vmatpush1.bf16.xpose.msra.mxu0 0
  %5797 = vmatprep.subr.bf16.mxu0 0
  %5798 = vmatpush1.bf16.xpose.msra.mxu0 0
  %5799 = vmatprep.subr.bf16.mxu0 0
  %5800 = vmatpush1.bf16.xpose.msra.mxu0 0
  %5801 = vmatprep.subr.bf16.mxu0 0
  %5802 = vmatpush1.bf16.xpose.msra.mxu0 0
  %5803 = vmatprep.subr.bf16.mxu0 0
  %5804 = vmatpush1.bf16.xpose.msra.mxu0 0
  %5805 = vmatprep.subr.bf16.mxu0 0
  %5806 = vmatpush1.bf16.xpose.msra.mxu0 0
  %5807 = vmatprep.subr.bf16.mxu0 0
  %5808 = vmatpush1.bf16.xpose.msra.mxu0 0
  %5809 = vmatprep.mubr.bf16.mxu0 %v5646
  %5810 = vmatmul.mubr.bf16.gmra.mrb[0].mxu0 %v5645
  %v5811 = vpop.f32.mrb[0].mxu0
  %v5812 = vadd.f32 %v5772, %v5811
  %v5813 = vpop.f32.mrb[0].mxu0
  %v5814 = vpop.f32.mrb[0].mxu0
  %v5815 = vpop.f32.mrb[0].mxu0
  %5816 = vdwg.mxu0
  %5817 = vmatprep.subr.bf16.mxu0 %v5688
  %5818 = vmatpush1.bf16.xpose.msra.mxu0 %v5687
  %5819 = vmatprep.subr.bf16.mxu0 0
  %5820 = vmatpush1.bf16.xpose.msra.mxu0 0
  %5821 = vmatprep.subr.bf16.mxu0 0
  %5822 = vmatpush1.bf16.xpose.msra.mxu0 0
  %5823 = vmatprep.subr.bf16.mxu0 0
  %5824 = vmatpush1.bf16.xpose.msra.mxu0 0
  %5825 = vmatprep.subr.bf16.mxu0 0
  %5826 = vmatpush1.bf16.xpose.msra.mxu0 0
  %5827 = vmatprep.subr.bf16.mxu0 0
  %5828 = vmatpush1.bf16.xpose.msra.mxu0 0
  %5829 = vmatprep.subr.bf16.mxu0 0
  %5830 = vmatpush1.bf16.xpose.msra.mxu0 0
  %5831 = vmatprep.subr.bf16.mxu0 0
  %5832 = vmatpush1.bf16.xpose.msra.mxu0 0
  %5833 = vmatprep.subr.bf16.mxu0 0
  %5834 = vmatpush1.bf16.xpose.msra.mxu0 0
  %5835 = vmatprep.subr.bf16.mxu0 0
  %5836 = vmatpush1.bf16.xpose.msra.mxu0 0
  %5837 = vmatprep.subr.bf16.mxu0 0
  %5838 = vmatpush1.bf16.xpose.msra.mxu0 0
  %5839 = vmatprep.subr.bf16.mxu0 0
  %5840 = vmatpush1.bf16.xpose.msra.mxu0 0
  %5841 = vmatprep.subr.bf16.mxu0 0
  %5842 = vmatpush1.bf16.xpose.msra.mxu0 0
  %5843 = vmatprep.subr.bf16.mxu0 0
  %5844 = vmatpush1.bf16.xpose.msra.mxu0 0
  %5845 = vmatprep.subr.bf16.mxu0 0
  %5846 = vmatpush1.bf16.xpose.msra.mxu0 0
  %5847 = vmatprep.subr.bf16.mxu0 0
  %5848 = vmatpush1.bf16.xpose.msra.mxu0 0
  %5849 = vmatprep.mubr.bf16.mxu0 %v5648
  %5850 = vmatmul.mubr.bf16.gmra.mrb[0].mxu0 %v5647
  %v5851 = vpop.f32.mrb[0].mxu0
  %v5852 = vadd.f32 %v5812, %v5851
  %v5853 = vpop.f32.mrb[0].mxu0
  %v5854 = vpop.f32.mrb[0].mxu0
  %v5855 = vpop.f32.mrb[0].mxu0
  %5856 = vdwg.mxu0
  %v5857 = vadd.f32 %v5615, %v5852
  %v5858 = vld [vmem:[#allocation2 + $0x40] sm:$0x2]
  %v5859 = vld [vmem:[#allocation2 + $0x48] sm:$0x2]
  %v5860 = vld [vmem:[#allocation2 + $0x50] sm:$0x2]
  %v5861 = vld [vmem:[#allocation2 + $0x58] sm:$0x2]
  %v5862 = vld [vmem:[#allocation2 + $0x60] sm:$0x2]
  %v5863 = vld [vmem:[#allocation2 + $0x68] sm:$0x2]
  %v5864 = vld [vmem:[#allocation2 + $0x70] sm:$0x2]
  %v5865 = vld [vmem:[#allocation2 + $0x78] sm:$0x2]
  %v5866 = vld [vmem:[#allocation2 + $0xc0] sm:$0x2]
  %v5867 = vld [vmem:[#allocation2 + $0xc8] sm:$0x2]
  %v5868 = vld [vmem:[#allocation2 + $0xd0] sm:$0x2]
  %v5869 = vld [vmem:[#allocation2 + $0xd8] sm:$0x2]
  %v5870 = vld [vmem:[#allocation2 + $0xe0] sm:$0x2]
  %v5871 = vld [vmem:[#allocation2 + $0xe8] sm:$0x2]
  %v5872 = vld [vmem:[#allocation2 + $0xf0] sm:$0x2]
  %v5873 = vld [vmem:[#allocation2 + $0xf8] sm:$0x2]
  %s5874 = scalar_lea.vmem %s3, 1152
  %v5875 = vld [vmem:[%s5874] sm:$0xff]
  %v5876 = vld [vmem:[%s5874 + $0x8] sm:$0xff]
  %v5877 = vld [vmem:[%s5874 + $0x10] sm:$0xff]
  %v5878 = vld [vmem:[%s5874 + $0x18] sm:$0xff]
  %v5879 = vld [vmem:[%s5874 + $0x20] sm:$0xff]
  %v5880 = vld [vmem:[%s5874 + $0x28] sm:$0xff]
  %v5881 = vld [vmem:[%s5874 + $0x30] sm:$0xff]
  %v5882 = vld [vmem:[%s5874 + $0x38] sm:$0xff]
  %v5899 = vunpack.c.l.b16 %v5858
  %v5900 = vunpack.c.l.b16 %v5859
  %v5901 = vunpack.c.l.b16 %v5860
  %v5902 = vunpack.c.l.b16 %v5861
  %v5903 = vunpack.c.l.b16 %v5862
  %v5904 = vunpack.c.l.b16 %v5863
  %v5905 = vunpack.c.l.b16 %v5864
  %v5906 = vunpack.c.l.b16 %v5865
  %v5907 = vunpack.c.l.b16 %v5866
  %v5908 = vunpack.c.l.b16 %v5867
  %v5909 = vunpack.c.l.b16 %v5868
  %v5910 = vunpack.c.l.b16 %v5869
  %v5911 = vunpack.c.l.b16 %v5870
  %v5912 = vunpack.c.l.b16 %v5871
  %v5913 = vunpack.c.l.b16 %v5872
  %v5914 = vunpack.c.l.b16 %v5873
  %v5915 = vrot.slane %v5899, 2
  %v5916 = vrot.slane %v5907, 1
  %v5917 = vsel %vm1042, %v5916, %v5915
  %v5918 = vrot.slane %v5900, 2
  %v5919 = vrot.slane %v5908, 1
  %v5920 = vsel %vm1042, %v5919, %v5918
  %v5921 = vrot.slane %v5901, 2
  %v5922 = vrot.slane %v5909, 1
  %v5923 = vsel %vm1042, %v5922, %v5921
  %v5924 = vrot.slane %v5902, 2
  %v5925 = vrot.slane %v5910, 1
  %v5926 = vsel %vm1042, %v5925, %v5924
  %v5927 = vrot.slane %v5903, 2
  %v5928 = vrot.slane %v5911, 1
  %v5929 = vsel %vm1042, %v5928, %v5927
  %v5930 = vrot.slane %v5904, 2
  %v5931 = vrot.slane %v5912, 1
  %v5932 = vsel %vm1042, %v5931, %v5930
  %v5933 = vrot.slane %v5905, 2
  %v5934 = vrot.slane %v5913, 1
  %v5935 = vsel %vm1042, %v5934, %v5933
  %v5936 = vrot.slane %v5906, 2
  %v5937 = vrot.slane %v5914, 1
  %v5938 = vsel %vm1042, %v5937, %v5936
  %v5939 = vpack.c.b16 %v5917, %v5917
  %v5940 = vpack.c.b16 %v5920, %v5920
  %v5941 = vpack.c.b16 %v5923, %v5923
  %v5942 = vpack.c.b16 %v5926, %v5926
  %v5943 = vpack.c.b16 %v5929, %v5929
  %v5944 = vpack.c.b16 %v5932, %v5932
  %v5945 = vpack.c.b16 %v5935, %v5935
  %v5946 = vpack.c.b16 %v5938, %v5938
  %v5963 = vunpack.c.l.b16 %v5875
  %v5964 = vunpack.c.h.b16 %v5875
  %v5965 = vunpack.c.l.b16 %v5876
  %v5966 = vunpack.c.h.b16 %v5876
  %v5967 = vunpack.c.l.b16 %v5877
  %v5968 = vunpack.c.h.b16 %v5877
  %v5969 = vunpack.c.l.b16 %v5878
  %v5970 = vunpack.c.h.b16 %v5878
  %v5971 = vunpack.c.l.b16 %v5879
  %v5972 = vunpack.c.h.b16 %v5879
  %v5973 = vunpack.c.l.b16 %v5880
  %v5974 = vunpack.c.h.b16 %v5880
  %v5975 = vunpack.c.l.b16 %v5881
  %v5976 = vunpack.c.h.b16 %v5881
  %v5977 = vunpack.c.l.b16 %v5882
  %v5978 = vunpack.c.h.b16 %v5882
  %v5979 = vpack.c.b16 %v5971, %v5963
  %v5980 = vpack.c.b16 %v5972, %v5964
  %v5981 = vpack.c.b16 %v5973, %v5965
  %v5982 = vpack.c.b16 %v5974, %v5966
  %v5983 = vpack.c.b16 %v5975, %v5967
  %v5984 = vpack.c.b16 %v5976, %v5968
  %v5985 = vpack.c.b16 %v5977, %v5969
  %v5986 = vpack.c.b16 %v5978, %v5970
  %5995 = vmatprep.subr.bf16.mxu0 %v5980
  %5996 = vmatpush1.bf16.xpose.msra.mxu0 %v5979
  %5997 = vmatprep.subr.bf16.mxu0 0
  %5998 = vmatpush1.bf16.xpose.msra.mxu0 0
  %5999 = vmatprep.subr.bf16.mxu0 0
  %6000 = vmatpush1.bf16.xpose.msra.mxu0 0
  %6001 = vmatprep.subr.bf16.mxu0 0
  %6002 = vmatpush1.bf16.xpose.msra.mxu0 0
  %6003 = vmatprep.subr.bf16.mxu0 0
  %6004 = vmatpush1.bf16.xpose.msra.mxu0 0
  %6005 = vmatprep.subr.bf16.mxu0 0
  %6006 = vmatpush1.bf16.xpose.msra.mxu0 0
  %6007 = vmatprep.subr.bf16.mxu0 0
  %6008 = vmatpush1.bf16.xpose.msra.mxu0 0
  %6009 = vmatprep.subr.bf16.mxu0 0
  %6010 = vmatpush1.bf16.xpose.msra.mxu0 0
  %6011 = vmatprep.subr.bf16.mxu0 0
  %6012 = vmatpush1.bf16.xpose.msra.mxu0 0
  %6013 = vmatprep.subr.bf16.mxu0 0
  %6014 = vmatpush1.bf16.xpose.msra.mxu0 0
  %6015 = vmatprep.subr.bf16.mxu0 0
  %6016 = vmatpush1.bf16.xpose.msra.mxu0 0
  %6017 = vmatprep.subr.bf16.mxu0 0
  %6018 = vmatpush1.bf16.xpose.msra.mxu0 0
  %6019 = vmatprep.subr.bf16.mxu0 0
  %6020 = vmatpush1.bf16.xpose.msra.mxu0 0
  %6021 = vmatprep.subr.bf16.mxu0 0
  %6022 = vmatpush1.bf16.xpose.msra.mxu0 0
  %6023 = vmatprep.subr.bf16.mxu0 0
  %6024 = vmatpush1.bf16.xpose.msra.mxu0 0
  %6025 = vmatprep.subr.bf16.mxu0 0
  %6026 = vmatpush1.bf16.xpose.msra.mxu0 0
  %6027 = vmatprep.mubr.bf16.mxu0 %v5940
  %6028 = vmatmul.mubr.bf16.gmra.mrb[0].mxu0 %v5939
  %v6029 = vpop.f32.mrb[0].mxu0
  %v6030 = vadd.f32 0.0, %v6029
  %v6031 = vpop.f32.mrb[0].mxu0
  %v6032 = vpop.f32.mrb[0].mxu0
  %v6033 = vpop.f32.mrb[0].mxu0
  %6034 = vdwg.mxu0
  %6035 = vmatprep.subr.bf16.mxu0 %v5982
  %6036 = vmatpush1.bf16.xpose.msra.mxu0 %v5981
  %6037 = vmatprep.subr.bf16.mxu0 0
  %6038 = vmatpush1.bf16.xpose.msra.mxu0 0
  %6039 = vmatprep.subr.bf16.mxu0 0
  %6040 = vmatpush1.bf16.xpose.msra.mxu0 0
  %6041 = vmatprep.subr.bf16.mxu0 0
  %6042 = vmatpush1.bf16.xpose.msra.mxu0 0
  %6043 = vmatprep.subr.bf16.mxu0 0
  %6044 = vmatpush1.bf16.xpose.msra.mxu0 0
  %6045 = vmatprep.subr.bf16.mxu0 0
  %6046 = vmatpush1.bf16.xpose.msra.mxu0 0
  %6047 = vmatprep.subr.bf16.mxu0 0
  %6048 = vmatpush1.bf16.xpose.msra.mxu0 0
  %6049 = vmatprep.subr.bf16.mxu0 0
  %6050 = vmatpush1.bf16.xpose.msra.mxu0 0
  %6051 = vmatprep.subr.bf16.mxu0 0
  %6052 = vmatpush1.bf16.xpose.msra.mxu0 0
  %6053 = vmatprep.subr.bf16.mxu0 0
  %6054 = vmatpush1.bf16.xpose.msra.mxu0 0
  %6055 = vmatprep.subr.bf16.mxu0 0
  %6056 = vmatpush1.bf16.xpose.msra.mxu0 0
  %6057 = vmatprep.subr.bf16.mxu0 0
  %6058 = vmatpush1.bf16.xpose.msra.mxu0 0
  %6059 = vmatprep.subr.bf16.mxu0 0
  %6060 = vmatpush1.bf16.xpose.msra.mxu0 0
  %6061 = vmatprep.subr.bf16.mxu0 0
  %6062 = vmatpush1.bf16.xpose.msra.mxu0 0
  %6063 = vmatprep.subr.bf16.mxu0 0
  %6064 = vmatpush1.bf16.xpose.msra.mxu0 0
  %6065 = vmatprep.subr.bf16.mxu0 0
  %6066 = vmatpush1.bf16.xpose.msra.mxu0 0
  %6067 = vmatprep.mubr.bf16.mxu0 %v5942
  %6068 = vmatmul.mubr.bf16.gmra.mrb[0].mxu0 %v5941
  %v6069 = vpop.f32.mrb[0].mxu0
  %v6070 = vadd.f32 %v6030, %v6069
  %v6071 = vpop.f32.mrb[0].mxu0
  %v6072 = vpop.f32.mrb[0].mxu0
  %v6073 = vpop.f32.mrb[0].mxu0
  %6074 = vdwg.mxu0
  %6075 = vmatprep.subr.bf16.mxu0 %v5984
  %6076 = vmatpush1.bf16.xpose.msra.mxu0 %v5983
  %6077 = vmatprep.subr.bf16.mxu0 0
  %6078 = vmatpush1.bf16.xpose.msra.mxu0 0
  %6079 = vmatprep.subr.bf16.mxu0 0
  %6080 = vmatpush1.bf16.xpose.msra.mxu0 0
  %6081 = vmatprep.subr.bf16.mxu0 0
  %6082 = vmatpush1.bf16.xpose.msra.mxu0 0
  %6083 = vmatprep.subr.bf16.mxu0 0
  %6084 = vmatpush1.bf16.xpose.msra.mxu0 0
  %6085 = vmatprep.subr.bf16.mxu0 0
  %6086 = vmatpush1.bf16.xpose.msra.mxu0 0
  %6087 = vmatprep.subr.bf16.mxu0 0
  %6088 = vmatpush1.bf16.xpose.msra.mxu0 0
  %6089 = vmatprep.subr.bf16.mxu0 0
  %6090 = vmatpush1.bf16.xpose.msra.mxu0 0
  %6091 = vmatprep.subr.bf16.mxu0 0
  %6092 = vmatpush1.bf16.xpose.msra.mxu0 0
  %6093 = vmatprep.subr.bf16.mxu0 0
  %6094 = vmatpush1.bf16.xpose.msra.mxu0 0
  %6095 = vmatprep.subr.bf16.mxu0 0
  %6096 = vmatpush1.bf16.xpose.msra.mxu0 0
  %6097 = vmatprep.subr.bf16.mxu0 0
  %6098 = vmatpush1.bf16.xpose.msra.mxu0 0
  %6099 = vmatprep.subr.bf16.mxu0 0
  %6100 = vmatpush1.bf16.xpose.msra.mxu0 0
  %6101 = vmatprep.subr.bf16.mxu0 0
  %6102 = vmatpush1.bf16.xpose.msra.mxu0 0
  %6103 = vmatprep.subr.bf16.mxu0 0
  %6104 = vmatpush1.bf16.xpose.msra.mxu0 0
  %6105 = vmatprep.subr.bf16.mxu0 0
  %6106 = vmatpush1.bf16.xpose.msra.mxu0 0
  %6107 = vmatprep.mubr.bf16.mxu0 %v5944
  %6108 = vmatmul.mubr.bf16.gmra.mrb[0].mxu0 %v5943
  %v6109 = vpop.f32.mrb[0].mxu0
  %v6110 = vadd.f32 %v6070, %v6109
  %v6111 = vpop.f32.mrb[0].mxu0
  %v6112 = vpop.f32.mrb[0].mxu0
  %v6113 = vpop.f32.mrb[0].mxu0
  %6114 = vdwg.mxu0
  %6115 = vmatprep.subr.bf16.mxu0 %v5986
  %6116 = vmatpush1.bf16.xpose.msra.mxu0 %v5985
  %6117 = vmatprep.subr.bf16.mxu0 0
  %6118 = vmatpush1.bf16.xpose.msra.mxu0 0
  %6119 = vmatprep.subr.bf16.mxu0 0
  %6120 = vmatpush1.bf16.xpose.msra.mxu0 0
  %6121 = vmatprep.subr.bf16.mxu0 0
  %6122 = vmatpush1.bf16.xpose.msra.mxu0 0
  %6123 = vmatprep.subr.bf16.mxu0 0
  %6124 = vmatpush1.bf16.xpose.msra.mxu0 0
  %6125 = vmatprep.subr.bf16.mxu0 0
  %6126 = vmatpush1.bf16.xpose.msra.mxu0 0
  %6127 = vmatprep.subr.bf16.mxu0 0
  %6128 = vmatpush1.bf16.xpose.msra.mxu0 0
  %6129 = vmatprep.subr.bf16.mxu0 0
  %6130 = vmatpush1.bf16.xpose.msra.mxu0 0
  %6131 = vmatprep.subr.bf16.mxu0 0
  %6132 = vmatpush1.bf16.xpose.msra.mxu0 0
  %6133 = vmatprep.subr.bf16.mxu0 0
  %6134 = vmatpush1.bf16.xpose.msra.mxu0 0
  %6135 = vmatprep.subr.bf16.mxu0 0
  %6136 = vmatpush1.bf16.xpose.msra.mxu0 0
  %6137 = vmatprep.subr.bf16.mxu0 0
  %6138 = vmatpush1.bf16.xpose.msra.mxu0 0
  %6139 = vmatprep.subr.bf16.mxu0 0
  %6140 = vmatpush1.bf16.xpose.msra.mxu0 0
  %6141 = vmatprep.subr.bf16.mxu0 0
  %6142 = vmatpush1.bf16.xpose.msra.mxu0 0
  %6143 = vmatprep.subr.bf16.mxu0 0
  %6144 = vmatpush1.bf16.xpose.msra.mxu0 0
  %6145 = vmatprep.subr.bf16.mxu0 0
  %6146 = vmatpush1.bf16.xpose.msra.mxu0 0
  %6147 = vmatprep.mubr.bf16.mxu0 %v5946
  %6148 = vmatmul.mubr.bf16.gmra.mrb[0].mxu0 %v5945
  %v6149 = vpop.f32.mrb[0].mxu0
  %v6150 = vadd.f32 %v6110, %v6149
  %v6151 = vpop.f32.mrb[0].mxu0
  %v6152 = vpop.f32.mrb[0].mxu0
  %v6153 = vpop.f32.mrb[0].mxu0
  %6154 = vdwg.mxu0
  %v6155 = vadd.f32 %v5857, %v6150
  %s6156 = scalar_lea.vmem %s3, 1216
  %v6157 = vld [vmem:[%s6156] sm:$0xff]
  %v6158 = vld [vmem:[%s6156 + $0x8] sm:$0xff]
  %v6159 = vld [vmem:[%s6156 + $0x10] sm:$0xff]
  %v6160 = vld [vmem:[%s6156 + $0x18] sm:$0xff]
  %v6161 = vld [vmem:[%s6156 + $0x20] sm:$0xff]
  %v6162 = vld [vmem:[%s6156 + $0x28] sm:$0xff]
  %v6163 = vld [vmem:[%s6156 + $0x30] sm:$0xff]
  %v6164 = vld [vmem:[%s6156 + $0x38] sm:$0xff]
  %v6165 = vrot.slane %v5899, 3
  %v6166 = vrot.slane %v5907, 2
  %v6167 = vsel %vm1042, %v6166, %v6165
  %v6168 = vrot.slane %v5900, 3
  %v6169 = vrot.slane %v5908, 2
  %v6170 = vsel %vm1042, %v6169, %v6168
  %v6171 = vrot.slane %v5901, 3
  %v6172 = vrot.slane %v5909, 2
  %v6173 = vsel %vm1042, %v6172, %v6171
  %v6174 = vrot.slane %v5902, 3
  %v6175 = vrot.slane %v5910, 2
  %v6176 = vsel %vm1042, %v6175, %v6174
  %v6177 = vrot.slane %v5903, 3
  %v6178 = vrot.slane %v5911, 2
  %v6179 = vsel %vm1042, %v6178, %v6177
  %v6180 = vrot.slane %v5904, 3
  %v6181 = vrot.slane %v5912, 2
  %v6182 = vsel %vm1042, %v6181, %v6180
  %v6183 = vrot.slane %v5905, 3
  %v6184 = vrot.slane %v5913, 2
  %v6185 = vsel %vm1042, %v6184, %v6183
  %v6186 = vrot.slane %v5906, 3
  %v6187 = vrot.slane %v5914, 2
  %v6188 = vsel %vm1042, %v6187, %v6186
  %v6189 = vpack.c.b16 %v6167, %v6167
  %v6190 = vpack.c.b16 %v6170, %v6170
  %v6191 = vpack.c.b16 %v6173, %v6173
  %v6192 = vpack.c.b16 %v6176, %v6176
  %v6193 = vpack.c.b16 %v6179, %v6179
  %v6194 = vpack.c.b16 %v6182, %v6182
  %v6195 = vpack.c.b16 %v6185, %v6185
  %v6196 = vpack.c.b16 %v6188, %v6188
  %v6213 = vunpack.c.l.b16 %v6157
  %v6214 = vunpack.c.h.b16 %v6157
  %v6215 = vunpack.c.l.b16 %v6158
  %v6216 = vunpack.c.h.b16 %v6158
  %v6217 = vunpack.c.l.b16 %v6159
  %v6218 = vunpack.c.h.b16 %v6159
  %v6219 = vunpack.c.l.b16 %v6160
  %v6220 = vunpack.c.h.b16 %v6160
  %v6221 = vunpack.c.l.b16 %v6161
  %v6222 = vunpack.c.h.b16 %v6161
  %v6223 = vunpack.c.l.b16 %v6162
  %v6224 = vunpack.c.h.b16 %v6162
  %v6225 = vunpack.c.l.b16 %v6163
  %v6226 = vunpack.c.h.b16 %v6163
  %v6227 = vunpack.c.l.b16 %v6164
  %v6228 = vunpack.c.h.b16 %v6164
  %v6229 = vpack.c.b16 %v6221, %v6213
  %v6230 = vpack.c.b16 %v6222, %v6214
  %v6231 = vpack.c.b16 %v6223, %v6215
  %v6232 = vpack.c.b16 %v6224, %v6216
  %v6233 = vpack.c.b16 %v6225, %v6217
  %v6234 = vpack.c.b16 %v6226, %v6218
  %v6235 = vpack.c.b16 %v6227, %v6219
  %v6236 = vpack.c.b16 %v6228, %v6220
  %6245 = vmatprep.subr.bf16.mxu0 %v6230
  %6246 = vmatpush1.bf16.xpose.msra.mxu0 %v6229
  %6247 = vmatprep.subr.bf16.mxu0 0
  %6248 = vmatpush1.bf16.xpose.msra.mxu0 0
  %6249 = vmatprep.subr.bf16.mxu0 0
  %6250 = vmatpush1.bf16.xpose.msra.mxu0 0
  %6251 = vmatprep.subr.bf16.mxu0 0
  %6252 = vmatpush1.bf16.xpose.msra.mxu0 0
  %6253 = vmatprep.subr.bf16.mxu0 0
  %6254 = vmatpush1.bf16.xpose.msra.mxu0 0
  %6255 = vmatprep.subr.bf16.mxu0 0
  %6256 = vmatpush1.bf16.xpose.msra.mxu0 0
  %6257 = vmatprep.subr.bf16.mxu0 0
  %6258 = vmatpush1.bf16.xpose.msra.mxu0 0
  %6259 = vmatprep.subr.bf16.mxu0 0
  %6260 = vmatpush1.bf16.xpose.msra.mxu0 0
  %6261 = vmatprep.subr.bf16.mxu0 0
  %6262 = vmatpush1.bf16.xpose.msra.mxu0 0
  %6263 = vmatprep.subr.bf16.mxu0 0
  %6264 = vmatpush1.bf16.xpose.msra.mxu0 0
  %6265 = vmatprep.subr.bf16.mxu0 0
  %6266 = vmatpush1.bf16.xpose.msra.mxu0 0
  %6267 = vmatprep.subr.bf16.mxu0 0
  %6268 = vmatpush1.bf16.xpose.msra.mxu0 0
  %6269 = vmatprep.subr.bf16.mxu0 0
  %6270 = vmatpush1.bf16.xpose.msra.mxu0 0
  %6271 = vmatprep.subr.bf16.mxu0 0
  %6272 = vmatpush1.bf16.xpose.msra.mxu0 0
  %6273 = vmatprep.subr.bf16.mxu0 0
  %6274 = vmatpush1.bf16.xpose.msra.mxu0 0
  %6275 = vmatprep.subr.bf16.mxu0 0
  %6276 = vmatpush1.bf16.xpose.msra.mxu0 0
  %6277 = vmatprep.mubr.bf16.mxu0 %v6190
  %6278 = vmatmul.mubr.bf16.gmra.mrb[0].mxu0 %v6189
  %v6279 = vpop.f32.mrb[0].mxu0
  %v6280 = vadd.f32 0.0, %v6279
  %v6281 = vpop.f32.mrb[0].mxu0
  %v6282 = vpop.f32.mrb[0].mxu0
  %v6283 = vpop.f32.mrb[0].mxu0
  %6284 = vdwg.mxu0
  %6285 = vmatprep.subr.bf16.mxu0 %v6232
  %6286 = vmatpush1.bf16.xpose.msra.mxu0 %v6231
  %6287 = vmatprep.subr.bf16.mxu0 0
  %6288 = vmatpush1.bf16.xpose.msra.mxu0 0
  %6289 = vmatprep.subr.bf16.mxu0 0
  %6290 = vmatpush1.bf16.xpose.msra.mxu0 0
  %6291 = vmatprep.subr.bf16.mxu0 0
  %6292 = vmatpush1.bf16.xpose.msra.mxu0 0
  %6293 = vmatprep.subr.bf16.mxu0 0
  %6294 = vmatpush1.bf16.xpose.msra.mxu0 0
  %6295 = vmatprep.subr.bf16.mxu0 0
  %6296 = vmatpush1.bf16.xpose.msra.mxu0 0
  %6297 = vmatprep.subr.bf16.mxu0 0
  %6298 = vmatpush1.bf16.xpose.msra.mxu0 0
  %6299 = vmatprep.subr.bf16.mxu0 0
  %6300 = vmatpush1.bf16.xpose.msra.mxu0 0
  %6301 = vmatprep.subr.bf16.mxu0 0
  %6302 = vmatpush1.bf16.xpose.msra.mxu0 0
  %6303 = vmatprep.subr.bf16.mxu0 0
  %6304 = vmatpush1.bf16.xpose.msra.mxu0 0
  %6305 = vmatprep.subr.bf16.mxu0 0
  %6306 = vmatpush1.bf16.xpose.msra.mxu0 0
  %6307 = vmatprep.subr.bf16.mxu0 0
  %6308 = vmatpush1.bf16.xpose.msra.mxu0 0
  %6309 = vmatprep.subr.bf16.mxu0 0
  %6310 = vmatpush1.bf16.xpose.msra.mxu0 0
  %6311 = vmatprep.subr.bf16.mxu0 0
  %6312 = vmatpush1.bf16.xpose.msra.mxu0 0
  %6313 = vmatprep.subr.bf16.mxu0 0
  %6314 = vmatpush1.bf16.xpose.msra.mxu0 0
  %6315 = vmatprep.subr.bf16.mxu0 0
  %6316 = vmatpush1.bf16.xpose.msra.mxu0 0
  %6317 = vmatprep.mubr.bf16.mxu0 %v6192
  %6318 = vmatmul.mubr.bf16.gmra.mrb[0].mxu0 %v6191
  %v6319 = vpop.f32.mrb[0].mxu0
  %v6320 = vadd.f32 %v6280, %v6319
  %v6321 = vpop.f32.mrb[0].mxu0
  %v6322 = vpop.f32.mrb[0].mxu0
  %v6323 = vpop.f32.mrb[0].mxu0
  %6324 = vdwg.mxu0
  %6325 = vmatprep.subr.bf16.mxu0 %v6234
  %6326 = vmatpush1.bf16.xpose.msra.mxu0 %v6233
  %6327 = vmatprep.subr.bf16.mxu0 0
  %6328 = vmatpush1.bf16.xpose.msra.mxu0 0
  %6329 = vmatprep.subr.bf16.mxu0 0
  %6330 = vmatpush1.bf16.xpose.msra.mxu0 0
  %6331 = vmatprep.subr.bf16.mxu0 0
  %6332 = vmatpush1.bf16.xpose.msra.mxu0 0
  %6333 = vmatprep.subr.bf16.mxu0 0
  %6334 = vmatpush1.bf16.xpose.msra.mxu0 0
  %6335 = vmatprep.subr.bf16.mxu0 0
  %6336 = vmatpush1.bf16.xpose.msra.mxu0 0
  %6337 = vmatprep.subr.bf16.mxu0 0
  %6338 = vmatpush1.bf16.xpose.msra.mxu0 0
  %6339 = vmatprep.subr.bf16.mxu0 0
  %6340 = vmatpush1.bf16.xpose.msra.mxu0 0
  %6341 = vmatprep.subr.bf16.mxu0 0
  %6342 = vmatpush1.bf16.xpose.msra.mxu0 0
  %6343 = vmatprep.subr.bf16.mxu0 0
  %6344 = vmatpush1.bf16.xpose.msra.mxu0 0
  %6345 = vmatprep.subr.bf16.mxu0 0
  %6346 = vmatpush1.bf16.xpose.msra.mxu0 0
  %6347 = vmatprep.subr.bf16.mxu0 0
  %6348 = vmatpush1.bf16.xpose.msra.mxu0 0
  %6349 = vmatprep.subr.bf16.mxu0 0
  %6350 = vmatpush1.bf16.xpose.msra.mxu0 0
  %6351 = vmatprep.subr.bf16.mxu0 0
  %6352 = vmatpush1.bf16.xpose.msra.mxu0 0
  %6353 = vmatprep.subr.bf16.mxu0 0
  %6354 = vmatpush1.bf16.xpose.msra.mxu0 0
  %6355 = vmatprep.subr.bf16.mxu0 0
  %6356 = vmatpush1.bf16.xpose.msra.mxu0 0
  %6357 = vmatprep.mubr.bf16.mxu0 %v6194
  %6358 = vmatmul.mubr.bf16.gmra.mrb[0].mxu0 %v6193
  %v6359 = vpop.f32.mrb[0].mxu0
  %v6360 = vadd.f32 %v6320, %v6359
  %v6361 = vpop.f32.mrb[0].mxu0
  %v6362 = vpop.f32.mrb[0].mxu0
  %v6363 = vpop.f32.mrb[0].mxu0
  %6364 = vdwg.mxu0
  %6365 = vmatprep.subr.bf16.mxu0 %v6236
  %6366 = vmatpush1.bf16.xpose.msra.mxu0 %v6235
  %6367 = vmatprep.subr.bf16.mxu0 0
  %6368 = vmatpush1.bf16.xpose.msra.mxu0 0
  %6369 = vmatprep.subr.bf16.mxu0 0
  %6370 = vmatpush1.bf16.xpose.msra.mxu0 0
  %6371 = vmatprep.subr.bf16.mxu0 0
  %6372 = vmatpush1.bf16.xpose.msra.mxu0 0
  %6373 = vmatprep.subr.bf16.mxu0 0
  %6374 = vmatpush1.bf16.xpose.msra.mxu0 0
  %6375 = vmatprep.subr.bf16.mxu0 0
  %6376 = vmatpush1.bf16.xpose.msra.mxu0 0
  %6377 = vmatprep.subr.bf16.mxu0 0
  %6378 = vmatpush1.bf16.xpose.msra.mxu0 0
  %6379 = vmatprep.subr.bf16.mxu0 0
  %6380 = vmatpush1.bf16.xpose.msra.mxu0 0
  %6381 = vmatprep.subr.bf16.mxu0 0
  %6382 = vmatpush1.bf16.xpose.msra.mxu0 0
  %6383 = vmatprep.subr.bf16.mxu0 0
  %6384 = vmatpush1.bf16.xpose.msra.mxu0 0
  %6385 = vmatprep.subr.bf16.mxu0 0
  %6386 = vmatpush1.bf16.xpose.msra.mxu0 0
  %6387 = vmatprep.subr.bf16.mxu0 0
  %6388 = vmatpush1.bf16.xpose.msra.mxu0 0
  %6389 = vmatprep.subr.bf16.mxu0 0
  %6390 = vmatpush1.bf16.xpose.msra.mxu0 0
  %6391 = vmatprep.subr.bf16.mxu0 0
  %6392 = vmatpush1.bf16.xpose.msra.mxu0 0
  %6393 = vmatprep.subr.bf16.mxu0 0
  %6394 = vmatpush1.bf16.xpose.msra.mxu0 0
  %6395 = vmatprep.subr.bf16.mxu0 0
  %6396 = vmatpush1.bf16.xpose.msra.mxu0 0
  %6397 = vmatprep.mubr.bf16.mxu0 %v6196
  %6398 = vmatmul.mubr.bf16.gmra.mrb[0].mxu0 %v6195
  %v6399 = vpop.f32.mrb[0].mxu0
  %v6400 = vadd.f32 %v6360, %v6399
  %v6401 = vpop.f32.mrb[0].mxu0
  %v6402 = vpop.f32.mrb[0].mxu0
  %v6403 = vpop.f32.mrb[0].mxu0
  %6404 = vdwg.mxu0
  %v6405 = vadd.f32 %v6155, %v6400
  %v6406 = vld [vmem:[#allocation2 + $0x40] sm:$0x4]
  %v6407 = vld [vmem:[#allocation2 + $0x48] sm:$0x4]
  %v6408 = vld [vmem:[#allocation2 + $0x50] sm:$0x4]
  %v6409 = vld [vmem:[#allocation2 + $0x58] sm:$0x4]
  %v6410 = vld [vmem:[#allocation2 + $0x60] sm:$0x4]
  %v6411 = vld [vmem:[#allocation2 + $0x68] sm:$0x4]
  %v6412 = vld [vmem:[#allocation2 + $0x70] sm:$0x4]
  %v6413 = vld [vmem:[#allocation2 + $0x78] sm:$0x4]
  %v6414 = vld [vmem:[#allocation2 + $0xc0] sm:$0x4]
  %v6415 = vld [vmem:[#allocation2 + $0xc8] sm:$0x4]
  %v6416 = vld [vmem:[#allocation2 + $0xd0] sm:$0x4]
  %v6417 = vld [vmem:[#allocation2 + $0xd8] sm:$0x4]
  %v6418 = vld [vmem:[#allocation2 + $0xe0] sm:$0x4]
  %v6419 = vld [vmem:[#allocation2 + $0xe8] sm:$0x4]
  %v6420 = vld [vmem:[#allocation2 + $0xf0] sm:$0x4]
  %v6421 = vld [vmem:[#allocation2 + $0xf8] sm:$0x4]
  %s6422 = scalar_lea.vmem %s3, 1280
  %v6423 = vld [vmem:[%s6422] sm:$0xff]
  %v6424 = vld [vmem:[%s6422 + $0x8] sm:$0xff]
  %v6425 = vld [vmem:[%s6422 + $0x10] sm:$0xff]
  %v6426 = vld [vmem:[%s6422 + $0x18] sm:$0xff]
  %v6427 = vld [vmem:[%s6422 + $0x20] sm:$0xff]
  %v6428 = vld [vmem:[%s6422 + $0x28] sm:$0xff]
  %v6429 = vld [vmem:[%s6422 + $0x30] sm:$0xff]
  %v6430 = vld [vmem:[%s6422 + $0x38] sm:$0xff]
  %v6447 = vunpack.c.l.b16 %v6406
  %v6448 = vunpack.c.l.b16 %v6407
  %v6449 = vunpack.c.l.b16 %v6408
  %v6450 = vunpack.c.l.b16 %v6409
  %v6451 = vunpack.c.l.b16 %v6410
  %v6452 = vunpack.c.l.b16 %v6411
  %v6453 = vunpack.c.l.b16 %v6412
  %v6454 = vunpack.c.l.b16 %v6413
  %v6455 = vunpack.c.l.b16 %v6414
  %v6456 = vunpack.c.l.b16 %v6415
  %v6457 = vunpack.c.l.b16 %v6416
  %v6458 = vunpack.c.l.b16 %v6417
  %v6459 = vunpack.c.l.b16 %v6418
  %v6460 = vunpack.c.l.b16 %v6419
  %v6461 = vunpack.c.l.b16 %v6420
  %v6462 = vunpack.c.l.b16 %v6421
  %v6463 = vrot.slane %v6447, 4
  %v6464 = vrot.slane %v6455, 3
  %v6465 = vsel %vm1042, %v6464, %v6463
  %v6466 = vrot.slane %v6448, 4
  %v6467 = vrot.slane %v6456, 3
  %v6468 = vsel %vm1042, %v6467, %v6466
  %v6469 = vrot.slane %v6449, 4
  %v6470 = vrot.slane %v6457, 3
  %v6471 = vsel %vm1042, %v6470, %v6469
  %v6472 = vrot.slane %v6450, 4
  %v6473 = vrot.slane %v6458, 3
  %v6474 = vsel %vm1042, %v6473, %v6472
  %v6475 = vrot.slane %v6451, 4
  %v6476 = vrot.slane %v6459, 3
  %v6477 = vsel %vm1042, %v6476, %v6475
  %v6478 = vrot.slane %v6452, 4
  %v6479 = vrot.slane %v6460, 3
  %v6480 = vsel %vm1042, %v6479, %v6478
  %v6481 = vrot.slane %v6453, 4
  %v6482 = vrot.slane %v6461, 3
  %v6483 = vsel %vm1042, %v6482, %v6481
  %v6484 = vrot.slane %v6454, 4
  %v6485 = vrot.slane %v6462, 3
  %v6486 = vsel %vm1042, %v6485, %v6484
  %v6487 = vpack.c.b16 %v6465, %v6465
  %v6488 = vpack.c.b16 %v6468, %v6468
  %v6489 = vpack.c.b16 %v6471, %v6471
  %v6490 = vpack.c.b16 %v6474, %v6474
  %v6491 = vpack.c.b16 %v6477, %v6477
  %v6492 = vpack.c.b16 %v6480, %v6480
  %v6493 = vpack.c.b16 %v6483, %v6483
  %v6494 = vpack.c.b16 %v6486, %v6486
  %v6511 = vunpack.c.l.b16 %v6423
  %v6512 = vunpack.c.h.b16 %v6423
  %v6513 = vunpack.c.l.b16 %v6424
  %v6514 = vunpack.c.h.b16 %v6424
  %v6515 = vunpack.c.l.b16 %v6425
  %v6516 = vunpack.c.h.b16 %v6425
  %v6517 = vunpack.c.l.b16 %v6426
  %v6518 = vunpack.c.h.b16 %v6426
  %v6519 = vunpack.c.l.b16 %v6427
  %v6520 = vunpack.c.h.b16 %v6427
  %v6521 = vunpack.c.l.b16 %v6428
  %v6522 = vunpack.c.h.b16 %v6428
  %v6523 = vunpack.c.l.b16 %v6429
  %v6524 = vunpack.c.h.b16 %v6429
  %v6525 = vunpack.c.l.b16 %v6430
  %v6526 = vunpack.c.h.b16 %v6430
  %v6527 = vpack.c.b16 %v6519, %v6511
  %v6528 = vpack.c.b16 %v6520, %v6512
  %v6529 = vpack.c.b16 %v6521, %v6513
  %v6530 = vpack.c.b16 %v6522, %v6514
  %v6531 = vpack.c.b16 %v6523, %v6515
  %v6532 = vpack.c.b16 %v6524, %v6516
  %v6533 = vpack.c.b16 %v6525, %v6517
  %v6534 = vpack.c.b16 %v6526, %v6518
  %6543 = vmatprep.subr.bf16.mxu0 %v6528
  %6544 = vmatpush1.bf16.xpose.msra.mxu0 %v6527
  %6545 = vmatprep.subr.bf16.mxu0 0
  %6546 = vmatpush1.bf16.xpose.msra.mxu0 0
  %6547 = vmatprep.subr.bf16.mxu0 0
  %6548 = vmatpush1.bf16.xpose.msra.mxu0 0
  %6549 = vmatprep.subr.bf16.mxu0 0
  %6550 = vmatpush1.bf16.xpose.msra.mxu0 0
  %6551 = vmatprep.subr.bf16.mxu0 0
  %6552 = vmatpush1.bf16.xpose.msra.mxu0 0
  %6553 = vmatprep.subr.bf16.mxu0 0
  %6554 = vmatpush1.bf16.xpose.msra.mxu0 0
  %6555 = vmatprep.subr.bf16.mxu0 0
  %6556 = vmatpush1.bf16.xpose.msra.mxu0 0
  %6557 = vmatprep.subr.bf16.mxu0 0
  %6558 = vmatpush1.bf16.xpose.msra.mxu0 0
  %6559 = vmatprep.subr.bf16.mxu0 0
  %6560 = vmatpush1.bf16.xpose.msra.mxu0 0
  %6561 = vmatprep.subr.bf16.mxu0 0
  %6562 = vmatpush1.bf16.xpose.msra.mxu0 0
  %6563 = vmatprep.subr.bf16.mxu0 0
  %6564 = vmatpush1.bf16.xpose.msra.mxu0 0
  %6565 = vmatprep.subr.bf16.mxu0 0
  %6566 = vmatpush1.bf16.xpose.msra.mxu0 0
  %6567 = vmatprep.subr.bf16.mxu0 0
  %6568 = vmatpush1.bf16.xpose.msra.mxu0 0
  %6569 = vmatprep.subr.bf16.mxu0 0
  %6570 = vmatpush1.bf16.xpose.msra.mxu0 0
  %6571 = vmatprep.subr.bf16.mxu0 0
  %6572 = vmatpush1.bf16.xpose.msra.mxu0 0
  %6573 = vmatprep.subr.bf16.mxu0 0
  %6574 = vmatpush1.bf16.xpose.msra.mxu0 0
  %6575 = vmatprep.mubr.bf16.mxu0 %v6488
  %6576 = vmatmul.mubr.bf16.gmra.mrb[0].mxu0 %v6487
  %v6577 = vpop.f32.mrb[0].mxu0
  %v6578 = vadd.f32 0.0, %v6577
  %v6579 = vpop.f32.mrb[0].mxu0
  %v6580 = vpop.f32.mrb[0].mxu0
  %v6581 = vpop.f32.mrb[0].mxu0
  %6582 = vdwg.mxu0
  %6583 = vmatprep.subr.bf16.mxu0 %v6530
  %6584 = vmatpush1.bf16.xpose.msra.mxu0 %v6529
  %6585 = vmatprep.subr.bf16.mxu0 0
  %6586 = vmatpush1.bf16.xpose.msra.mxu0 0
  %6587 = vmatprep.subr.bf16.mxu0 0
  %6588 = vmatpush1.bf16.xpose.msra.mxu0 0
  %6589 = vmatprep.subr.bf16.mxu0 0
  %6590 = vmatpush1.bf16.xpose.msra.mxu0 0
  %6591 = vmatprep.subr.bf16.mxu0 0
  %6592 = vmatpush1.bf16.xpose.msra.mxu0 0
  %6593 = vmatprep.subr.bf16.mxu0 0
  %6594 = vmatpush1.bf16.xpose.msra.mxu0 0
  %6595 = vmatprep.subr.bf16.mxu0 0
  %6596 = vmatpush1.bf16.xpose.msra.mxu0 0
  %6597 = vmatprep.subr.bf16.mxu0 0
  %6598 = vmatpush1.bf16.xpose.msra.mxu0 0
  %6599 = vmatprep.subr.bf16.mxu0 0
  %6600 = vmatpush1.bf16.xpose.msra.mxu0 0
  %6601 = vmatprep.subr.bf16.mxu0 0
  %6602 = vmatpush1.bf16.xpose.msra.mxu0 0
  %6603 = vmatprep.subr.bf16.mxu0 0
  %6604 = vmatpush1.bf16.xpose.msra.mxu0 0
  %6605 = vmatprep.subr.bf16.mxu0 0
  %6606 = vmatpush1.bf16.xpose.msra.mxu0 0
  %6607 = vmatprep.subr.bf16.mxu0 0
  %6608 = vmatpush1.bf16.xpose.msra.mxu0 0
  %6609 = vmatprep.subr.bf16.mxu0 0
  %6610 = vmatpush1.bf16.xpose.msra.mxu0 0
  %6611 = vmatprep.subr.bf16.mxu0 0
  %6612 = vmatpush1.bf16.xpose.msra.mxu0 0
  %6613 = vmatprep.subr.bf16.mxu0 0
  %6614 = vmatpush1.bf16.xpose.msra.mxu0 0
  %6615 = vmatprep.mubr.bf16.mxu0 %v6490
  %6616 = vmatmul.mubr.bf16.gmra.mrb[0].mxu0 %v6489
  %v6617 = vpop.f32.mrb[0].mxu0
  %v6618 = vadd.f32 %v6578, %v6617
  %v6619 = vpop.f32.mrb[0].mxu0
  %v6620 = vpop.f32.mrb[0].mxu0
  %v6621 = vpop.f32.mrb[0].mxu0
  %6622 = vdwg.mxu0
  %6623 = vmatprep.subr.bf16.mxu0 %v6532
  %6624 = vmatpush1.bf16.xpose.msra.mxu0 %v6531
  %6625 = vmatprep.subr.bf16.mxu0 0
  %6626 = vmatpush1.bf16.xpose.msra.mxu0 0
  %6627 = vmatprep.subr.bf16.mxu0 0
  %6628 = vmatpush1.bf16.xpose.msra.mxu0 0
  %6629 = vmatprep.subr.bf16.mxu0 0
  %6630 = vmatpush1.bf16.xpose.msra.mxu0 0
  %6631 = vmatprep.subr.bf16.mxu0 0
  %6632 = vmatpush1.bf16.xpose.msra.mxu0 0
  %6633 = vmatprep.subr.bf16.mxu0 0
  %6634 = vmatpush1.bf16.xpose.msra.mxu0 0
  %6635 = vmatprep.subr.bf16.mxu0 0
  %6636 = vmatpush1.bf16.xpose.msra.mxu0 0
  %6637 = vmatprep.subr.bf16.mxu0 0
  %6638 = vmatpush1.bf16.xpose.msra.mxu0 0
  %6639 = vmatprep.subr.bf16.mxu0 0
  %6640 = vmatpush1.bf16.xpose.msra.mxu0 0
  %6641 = vmatprep.subr.bf16.mxu0 0
  %6642 = vmatpush1.bf16.xpose.msra.mxu0 0
  %6643 = vmatprep.subr.bf16.mxu0 0
  %6644 = vmatpush1.bf16.xpose.msra.mxu0 0
  %6645 = vmatprep.subr.bf16.mxu0 0
  %6646 = vmatpush1.bf16.xpose.msra.mxu0 0
  %6647 = vmatprep.subr.bf16.mxu0 0
  %6648 = vmatpush1.bf16.xpose.msra.mxu0 0
  %6649 = vmatprep.subr.bf16.mxu0 0
  %6650 = vmatpush1.bf16.xpose.msra.mxu0 0
  %6651 = vmatprep.subr.bf16.mxu0 0
  %6652 = vmatpush1.bf16.xpose.msra.mxu0 0
  %6653 = vmatprep.subr.bf16.mxu0 0
  %6654 = vmatpush1.bf16.xpose.msra.mxu0 0
  %6655 = vmatprep.mubr.bf16.mxu0 %v6492
  %6656 = vmatmul.mubr.bf16.gmra.mrb[0].mxu0 %v6491
  %v6657 = vpop.f32.mrb[0].mxu0
  %v6658 = vadd.f32 %v6618, %v6657
  %v6659 = vpop.f32.mrb[0].mxu0
  %v6660 = vpop.f32.mrb[0].mxu0
  %v6661 = vpop.f32.mrb[0].mxu0
  %6662 = vdwg.mxu0
  %6663 = vmatprep.subr.bf16.mxu0 %v6534
  %6664 = vmatpush1.bf16.xpose.msra.mxu0 %v6533
  %6665 = vmatprep.subr.bf16.mxu0 0
  %6666 = vmatpush1.bf16.xpose.msra.mxu0 0
  %6667 = vmatprep.subr.bf16.mxu0 0
  %6668 = vmatpush1.bf16.xpose.msra.mxu0 0
  %6669 = vmatprep.subr.bf16.mxu0 0
  %6670 = vmatpush1.bf16.xpose.msra.mxu0 0
  %6671 = vmatprep.subr.bf16.mxu0 0
  %6672 = vmatpush1.bf16.xpose.msra.mxu0 0
  %6673 = vmatprep.subr.bf16.mxu0 0
  %6674 = vmatpush1.bf16.xpose.msra.mxu0 0
  %6675 = vmatprep.subr.bf16.mxu0 0
  %6676 = vmatpush1.bf16.xpose.msra.mxu0 0
  %6677 = vmatprep.subr.bf16.mxu0 0
  %6678 = vmatpush1.bf16.xpose.msra.mxu0 0
  %6679 = vmatprep.subr.bf16.mxu0 0
  %6680 = vmatpush1.bf16.xpose.msra.mxu0 0
  %6681 = vmatprep.subr.bf16.mxu0 0
  %6682 = vmatpush1.bf16.xpose.msra.mxu0 0
  %6683 = vmatprep.subr.bf16.mxu0 0
  %6684 = vmatpush1.bf16.xpose.msra.mxu0 0
  %6685 = vmatprep.subr.bf16.mxu0 0
  %6686 = vmatpush1.bf16.xpose.msra.mxu0 0
  %6687 = vmatprep.subr.bf16.mxu0 0
  %6688 = vmatpush1.bf16.xpose.msra.mxu0 0
  %6689 = vmatprep.subr.bf16.mxu0 0
  %6690 = vmatpush1.bf16.xpose.msra.mxu0 0
  %6691 = vmatprep.subr.bf16.mxu0 0
  %6692 = vmatpush1.bf16.xpose.msra.mxu0 0
  %6693 = vmatprep.subr.bf16.mxu0 0
  %6694 = vmatpush1.bf16.xpose.msra.mxu0 0
  %6695 = vmatprep.mubr.bf16.mxu0 %v6494
  %6696 = vmatmul.mubr.bf16.gmra.mrb[0].mxu0 %v6493
  %v6697 = vpop.f32.mrb[0].mxu0
  %v6698 = vadd.f32 %v6658, %v6697
  %v6699 = vpop.f32.mrb[0].mxu0
  %v6700 = vpop.f32.mrb[0].mxu0
  %v6701 = vpop.f32.mrb[0].mxu0
  %6702 = vdwg.mxu0
  %v6703 = vadd.f32 %v6405, %v6698
  %s6704 = scalar_lea.vmem %s3, 1344
  %v6705 = vld [vmem:[%s6704] sm:$0xff]
  %v6706 = vld [vmem:[%s6704 + $0x8] sm:$0xff]
  %v6707 = vld [vmem:[%s6704 + $0x10] sm:$0xff]
  %v6708 = vld [vmem:[%s6704 + $0x18] sm:$0xff]
  %v6709 = vld [vmem:[%s6704 + $0x20] sm:$0xff]
  %v6710 = vld [vmem:[%s6704 + $0x28] sm:$0xff]
  %v6711 = vld [vmem:[%s6704 + $0x30] sm:$0xff]
  %v6712 = vld [vmem:[%s6704 + $0x38] sm:$0xff]
  %v6713 = vrot.slane %v6447, 5
  %v6714 = vrot.slane %v6455, 4
  %v6715 = vsel %vm1042, %v6714, %v6713
  %v6716 = vrot.slane %v6448, 5
  %v6717 = vrot.slane %v6456, 4
  %v6718 = vsel %vm1042, %v6717, %v6716
  %v6719 = vrot.slane %v6449, 5
  %v6720 = vrot.slane %v6457, 4
  %v6721 = vsel %vm1042, %v6720, %v6719
  %v6722 = vrot.slane %v6450, 5
  %v6723 = vrot.slane %v6458, 4
  %v6724 = vsel %vm1042, %v6723, %v6722
  %v6725 = vrot.slane %v6451, 5
  %v6726 = vrot.slane %v6459, 4
  %v6727 = vsel %vm1042, %v6726, %v6725
  %v6728 = vrot.slane %v6452, 5
  %v6729 = vrot.slane %v6460, 4
  %v6730 = vsel %vm1042, %v6729, %v6728
  %v6731 = vrot.slane %v6453, 5
  %v6732 = vrot.slane %v6461, 4
  %v6733 = vsel %vm1042, %v6732, %v6731
  %v6734 = vrot.slane %v6454, 5
  %v6735 = vrot.slane %v6462, 4
  %v6736 = vsel %vm1042, %v6735, %v6734
  %v6737 = vpack.c.b16 %v6715, %v6715
  %v6738 = vpack.c.b16 %v6718, %v6718
  %v6739 = vpack.c.b16 %v6721, %v6721
  %v6740 = vpack.c.b16 %v6724, %v6724
  %v6741 = vpack.c.b16 %v6727, %v6727
  %v6742 = vpack.c.b16 %v6730, %v6730
  %v6743 = vpack.c.b16 %v6733, %v6733
  %v6744 = vpack.c.b16 %v6736, %v6736
  %v6761 = vunpack.c.l.b16 %v6705
  %v6762 = vunpack.c.h.b16 %v6705
  %v6763 = vunpack.c.l.b16 %v6706
  %v6764 = vunpack.c.h.b16 %v6706
  %v6765 = vunpack.c.l.b16 %v6707
  %v6766 = vunpack.c.h.b16 %v6707
  %v6767 = vunpack.c.l.b16 %v6708
  %v6768 = vunpack.c.h.b16 %v6708
  %v6769 = vunpack.c.l.b16 %v6709
  %v6770 = vunpack.c.h.b16 %v6709
  %v6771 = vunpack.c.l.b16 %v6710
  %v6772 = vunpack.c.h.b16 %v6710
  %v6773 = vunpack.c.l.b16 %v6711
  %v6774 = vunpack.c.h.b16 %v6711
  %v6775 = vunpack.c.l.b16 %v6712
  %v6776 = vunpack.c.h.b16 %v6712
  %v6777 = vpack.c.b16 %v6769, %v6761
  %v6778 = vpack.c.b16 %v6770, %v6762
  %v6779 = vpack.c.b16 %v6771, %v6763
  %v6780 = vpack.c.b16 %v6772, %v6764
  %v6781 = vpack.c.b16 %v6773, %v6765
  %v6782 = vpack.c.b16 %v6774, %v6766
  %v6783 = vpack.c.b16 %v6775, %v6767
  %v6784 = vpack.c.b16 %v6776, %v6768
  %6793 = vmatprep.subr.bf16.mxu0 %v6778
  %6794 = vmatpush1.bf16.xpose.msra.mxu0 %v6777
  %6795 = vmatprep.subr.bf16.mxu0 0
  %6796 = vmatpush1.bf16.xpose.msra.mxu0 0
  %6797 = vmatprep.subr.bf16.mxu0 0
  %6798 = vmatpush1.bf16.xpose.msra.mxu0 0
  %6799 = vmatprep.subr.bf16.mxu0 0
  %6800 = vmatpush1.bf16.xpose.msra.mxu0 0
  %6801 = vmatprep.subr.bf16.mxu0 0
  %6802 = vmatpush1.bf16.xpose.msra.mxu0 0
  %6803 = vmatprep.subr.bf16.mxu0 0
  %6804 = vmatpush1.bf16.xpose.msra.mxu0 0
  %6805 = vmatprep.subr.bf16.mxu0 0
  %6806 = vmatpush1.bf16.xpose.msra.mxu0 0
  %6807 = vmatprep.subr.bf16.mxu0 0
  %6808 = vmatpush1.bf16.xpose.msra.mxu0 0
  %6809 = vmatprep.subr.bf16.mxu0 0
  %6810 = vmatpush1.bf16.xpose.msra.mxu0 0
  %6811 = vmatprep.subr.bf16.mxu0 0
  %6812 = vmatpush1.bf16.xpose.msra.mxu0 0
  %6813 = vmatprep.subr.bf16.mxu0 0
  %6814 = vmatpush1.bf16.xpose.msra.mxu0 0
  %6815 = vmatprep.subr.bf16.mxu0 0
  %6816 = vmatpush1.bf16.xpose.msra.mxu0 0
  %6817 = vmatprep.subr.bf16.mxu0 0
  %6818 = vmatpush1.bf16.xpose.msra.mxu0 0
  %6819 = vmatprep.subr.bf16.mxu0 0
  %6820 = vmatpush1.bf16.xpose.msra.mxu0 0
  %6821 = vmatprep.subr.bf16.mxu0 0
  %6822 = vmatpush1.bf16.xpose.msra.mxu0 0
  %6823 = vmatprep.subr.bf16.mxu0 0
  %6824 = vmatpush1.bf16.xpose.msra.mxu0 0
  %6825 = vmatprep.mubr.bf16.mxu0 %v6738
  %6826 = vmatmul.mubr.bf16.gmra.mrb[0].mxu0 %v6737
  %v6827 = vpop.f32.mrb[0].mxu0
  %v6828 = vadd.f32 0.0, %v6827
  %v6829 = vpop.f32.mrb[0].mxu0
  %v6830 = vpop.f32.mrb[0].mxu0
  %v6831 = vpop.f32.mrb[0].mxu0
  %6832 = vdwg.mxu0
  %6833 = vmatprep.subr.bf16.mxu0 %v6780
  %6834 = vmatpush1.bf16.xpose.msra.mxu0 %v6779
  %6835 = vmatprep.subr.bf16.mxu0 0
  %6836 = vmatpush1.bf16.xpose.msra.mxu0 0
  %6837 = vmatprep.subr.bf16.mxu0 0
  %6838 = vmatpush1.bf16.xpose.msra.mxu0 0
  %6839 = vmatprep.subr.bf16.mxu0 0
  %6840 = vmatpush1.bf16.xpose.msra.mxu0 0
  %6841 = vmatprep.subr.bf16.mxu0 0
  %6842 = vmatpush1.bf16.xpose.msra.mxu0 0
  %6843 = vmatprep.subr.bf16.mxu0 0
  %6844 = vmatpush1.bf16.xpose.msra.mxu0 0
  %6845 = vmatprep.subr.bf16.mxu0 0
  %6846 = vmatpush1.bf16.xpose.msra.mxu0 0
  %6847 = vmatprep.subr.bf16.mxu0 0
  %6848 = vmatpush1.bf16.xpose.msra.mxu0 0
  %6849 = vmatprep.subr.bf16.mxu0 0
  %6850 = vmatpush1.bf16.xpose.msra.mxu0 0
  %6851 = vmatprep.subr.bf16.mxu0 0
  %6852 = vmatpush1.bf16.xpose.msra.mxu0 0
  %6853 = vmatprep.subr.bf16.mxu0 0
  %6854 = vmatpush1.bf16.xpose.msra.mxu0 0
  %6855 = vmatprep.subr.bf16.mxu0 0
  %6856 = vmatpush1.bf16.xpose.msra.mxu0 0
  %6857 = vmatprep.subr.bf16.mxu0 0
  %6858 = vmatpush1.bf16.xpose.msra.mxu0 0
  %6859 = vmatprep.subr.bf16.mxu0 0
  %6860 = vmatpush1.bf16.xpose.msra.mxu0 0
  %6861 = vmatprep.subr.bf16.mxu0 0
  %6862 = vmatpush1.bf16.xpose.msra.mxu0 0
  %6863 = vmatprep.subr.bf16.mxu0 0
  %6864 = vmatpush1.bf16.xpose.msra.mxu0 0
  %6865 = vmatprep.mubr.bf16.mxu0 %v6740
  %6866 = vmatmul.mubr.bf16.gmra.mrb[0].mxu0 %v6739
  %v6867 = vpop.f32.mrb[0].mxu0
  %v6868 = vadd.f32 %v6828, %v6867
  %v6869 = vpop.f32.mrb[0].mxu0
  %v6870 = vpop.f32.mrb[0].mxu0
  %v6871 = vpop.f32.mrb[0].mxu0
  %6872 = vdwg.mxu0
  %6873 = vmatprep.subr.bf16.mxu0 %v6782
  %6874 = vmatpush1.bf16.xpose.msra.mxu0 %v6781
  %6875 = vmatprep.subr.bf16.mxu0 0
  %6876 = vmatpush1.bf16.xpose.msra.mxu0 0
  %6877 = vmatprep.subr.bf16.mxu0 0
  %6878 = vmatpush1.bf16.xpose.msra.mxu0 0
  %6879 = vmatprep.subr.bf16.mxu0 0
  %6880 = vmatpush1.bf16.xpose.msra.mxu0 0
  %6881 = vmatprep.subr.bf16.mxu0 0
  %6882 = vmatpush1.bf16.xpose.msra.mxu0 0
  %6883 = vmatprep.subr.bf16.mxu0 0
  %6884 = vmatpush1.bf16.xpose.msra.mxu0 0
  %6885 = vmatprep.subr.bf16.mxu0 0
  %6886 = vmatpush1.bf16.xpose.msra.mxu0 0
  %6887 = vmatprep.subr.bf16.mxu0 0
  %6888 = vmatpush1.bf16.xpose.msra.mxu0 0
  %6889 = vmatprep.subr.bf16.mxu0 0
  %6890 = vmatpush1.bf16.xpose.msra.mxu0 0
  %6891 = vmatprep.subr.bf16.mxu0 0
  %6892 = vmatpush1.bf16.xpose.msra.mxu0 0
  %6893 = vmatprep.subr.bf16.mxu0 0
  %6894 = vmatpush1.bf16.xpose.msra.mxu0 0
  %6895 = vmatprep.subr.bf16.mxu0 0
  %6896 = vmatpush1.bf16.xpose.msra.mxu0 0
  %6897 = vmatprep.subr.bf16.mxu0 0
  %6898 = vmatpush1.bf16.xpose.msra.mxu0 0
  %6899 = vmatprep.subr.bf16.mxu0 0
  %6900 = vmatpush1.bf16.xpose.msra.mxu0 0
  %6901 = vmatprep.subr.bf16.mxu0 0
  %6902 = vmatpush1.bf16.xpose.msra.mxu0 0
  %6903 = vmatprep.subr.bf16.mxu0 0
  %6904 = vmatpush1.bf16.xpose.msra.mxu0 0
  %6905 = vmatprep.mubr.bf16.mxu0 %v6742
  %6906 = vmatmul.mubr.bf16.gmra.mrb[0].mxu0 %v6741
  %v6907 = vpop.f32.mrb[0].mxu0
  %v6908 = vadd.f32 %v6868, %v6907
  %v6909 = vpop.f32.mrb[0].mxu0
  %v6910 = vpop.f32.mrb[0].mxu0
  %v6911 = vpop.f32.mrb[0].mxu0
  %6912 = vdwg.mxu0
  %6913 = vmatprep.subr.bf16.mxu0 %v6784
  %6914 = vmatpush1.bf16.xpose.msra.mxu0 %v6783
  %6915 = vmatprep.subr.bf16.mxu0 0
  %6916 = vmatpush1.bf16.xpose.msra.mxu0 0
  %6917 = vmatprep.subr.bf16.mxu0 0
  %6918 = vmatpush1.bf16.xpose.msra.mxu0 0
  %6919 = vmatprep.subr.bf16.mxu0 0
  %6920 = vmatpush1.bf16.xpose.msra.mxu0 0
  %6921 = vmatprep.subr.bf16.mxu0 0
  %6922 = vmatpush1.bf16.xpose.msra.mxu0 0
  %6923 = vmatprep.subr.bf16.mxu0 0
  %6924 = vmatpush1.bf16.xpose.msra.mxu0 0
  %6925 = vmatprep.subr.bf16.mxu0 0
  %6926 = vmatpush1.bf16.xpose.msra.mxu0 0
  %6927 = vmatprep.subr.bf16.mxu0 0
  %6928 = vmatpush1.bf16.xpose.msra.mxu0 0
  %6929 = vmatprep.subr.bf16.mxu0 0
  %6930 = vmatpush1.bf16.xpose.msra.mxu0 0
  %6931 = vmatprep.subr.bf16.mxu0 0
  %6932 = vmatpush1.bf16.xpose.msra.mxu0 0
  %6933 = vmatprep.subr.bf16.mxu0 0
  %6934 = vmatpush1.bf16.xpose.msra.mxu0 0
  %6935 = vmatprep.subr.bf16.mxu0 0
  %6936 = vmatpush1.bf16.xpose.msra.mxu0 0
  %6937 = vmatprep.subr.bf16.mxu0 0
  %6938 = vmatpush1.bf16.xpose.msra.mxu0 0
  %6939 = vmatprep.subr.bf16.mxu0 0
  %6940 = vmatpush1.bf16.xpose.msra.mxu0 0
  %6941 = vmatprep.subr.bf16.mxu0 0
  %6942 = vmatpush1.bf16.xpose.msra.mxu0 0
  %6943 = vmatprep.subr.bf16.mxu0 0
  %6944 = vmatpush1.bf16.xpose.msra.mxu0 0
  %6945 = vmatprep.mubr.bf16.mxu0 %v6744
  %6946 = vmatmul.mubr.bf16.gmra.mrb[0].mxu0 %v6743
  %v6947 = vpop.f32.mrb[0].mxu0
  %v6948 = vadd.f32 %v6908, %v6947
  %v6949 = vpop.f32.mrb[0].mxu0
  %v6950 = vpop.f32.mrb[0].mxu0
  %v6951 = vpop.f32.mrb[0].mxu0
  %6952 = vdwg.mxu0
  %v6953 = vadd.f32 %v6703, %v6948
  %v6954 = vld [vmem:[#allocation2 + $0x40] sm:$0x8]
  %v6955 = vld [vmem:[#allocation2 + $0x48] sm:$0x8]
  %v6956 = vld [vmem:[#allocation2 + $0x50] sm:$0x8]
  %v6957 = vld [vmem:[#allocation2 + $0x58] sm:$0x8]
  %v6958 = vld [vmem:[#allocation2 + $0x60] sm:$0x8]
  %v6959 = vld [vmem:[#allocation2 + $0x68] sm:$0x8]
  %v6960 = vld [vmem:[#allocation2 + $0x70] sm:$0x8]
  %v6961 = vld [vmem:[#allocation2 + $0x78] sm:$0x8]
  %v6962 = vld [vmem:[#allocation2 + $0xc0] sm:$0x8]
  %v6963 = vld [vmem:[#allocation2 + $0xc8] sm:$0x8]
  %v6964 = vld [vmem:[#allocation2 + $0xd0] sm:$0x8]
  %v6965 = vld [vmem:[#allocation2 + $0xd8] sm:$0x8]
  %v6966 = vld [vmem:[#allocation2 + $0xe0] sm:$0x8]
  %v6967 = vld [vmem:[#allocation2 + $0xe8] sm:$0x8]
  %v6968 = vld [vmem:[#allocation2 + $0xf0] sm:$0x8]
  %v6969 = vld [vmem:[#allocation2 + $0xf8] sm:$0x8]
  %s6970 = scalar_lea.vmem %s3, 1408
  %v6971 = vld [vmem:[%s6970] sm:$0xff]
  %v6972 = vld [vmem:[%s6970 + $0x8] sm:$0xff]
  %v6973 = vld [vmem:[%s6970 + $0x10] sm:$0xff]
  %v6974 = vld [vmem:[%s6970 + $0x18] sm:$0xff]
  %v6975 = vld [vmem:[%s6970 + $0x20] sm:$0xff]
  %v6976 = vld [vmem:[%s6970 + $0x28] sm:$0xff]
  %v6977 = vld [vmem:[%s6970 + $0x30] sm:$0xff]
  %v6978 = vld [vmem:[%s6970 + $0x38] sm:$0xff]
  %v6995 = vunpack.c.l.b16 %v6954
  %v6996 = vunpack.c.l.b16 %v6955
  %v6997 = vunpack.c.l.b16 %v6956
  %v6998 = vunpack.c.l.b16 %v6957
  %v6999 = vunpack.c.l.b16 %v6958
  %v7000 = vunpack.c.l.b16 %v6959
  %v7001 = vunpack.c.l.b16 %v6960
  %v7002 = vunpack.c.l.b16 %v6961
  %v7003 = vunpack.c.l.b16 %v6962
  %v7004 = vunpack.c.l.b16 %v6963
  %v7005 = vunpack.c.l.b16 %v6964
  %v7006 = vunpack.c.l.b16 %v6965
  %v7007 = vunpack.c.l.b16 %v6966
  %v7008 = vunpack.c.l.b16 %v6967
  %v7009 = vunpack.c.l.b16 %v6968
  %v7010 = vunpack.c.l.b16 %v6969
  %v7011 = vrot.slane %v6995, 6
  %v7012 = vrot.slane %v7003, 5
  %v7013 = vsel %vm1042, %v7012, %v7011
  %v7014 = vrot.slane %v6996, 6
  %v7015 = vrot.slane %v7004, 5
  %v7016 = vsel %vm1042, %v7015, %v7014
  %v7017 = vrot.slane %v6997, 6
  %v7018 = vrot.slane %v7005, 5
  %v7019 = vsel %vm1042, %v7018, %v7017
  %v7020 = vrot.slane %v6998, 6
  %v7021 = vrot.slane %v7006, 5
  %v7022 = vsel %vm1042, %v7021, %v7020
  %v7023 = vrot.slane %v6999, 6
  %v7024 = vrot.slane %v7007, 5
  %v7025 = vsel %vm1042, %v7024, %v7023
  %v7026 = vrot.slane %v7000, 6
  %v7027 = vrot.slane %v7008, 5
  %v7028 = vsel %vm1042, %v7027, %v7026
  %v7029 = vrot.slane %v7001, 6
  %v7030 = vrot.slane %v7009, 5
  %v7031 = vsel %vm1042, %v7030, %v7029
  %v7032 = vrot.slane %v7002, 6
  %v7033 = vrot.slane %v7010, 5
  %v7034 = vsel %vm1042, %v7033, %v7032
  %v7035 = vpack.c.b16 %v7013, %v7013
  %v7036 = vpack.c.b16 %v7016, %v7016
  %v7037 = vpack.c.b16 %v7019, %v7019
  %v7038 = vpack.c.b16 %v7022, %v7022
  %v7039 = vpack.c.b16 %v7025, %v7025
  %v7040 = vpack.c.b16 %v7028, %v7028
  %v7041 = vpack.c.b16 %v7031, %v7031
  %v7042 = vpack.c.b16 %v7034, %v7034
  %v7059 = vunpack.c.l.b16 %v6971
  %v7060 = vunpack.c.h.b16 %v6971
  %v7061 = vunpack.c.l.b16 %v6972
  %v7062 = vunpack.c.h.b16 %v6972
  %v7063 = vunpack.c.l.b16 %v6973
  %v7064 = vunpack.c.h.b16 %v6973
  %v7065 = vunpack.c.l.b16 %v6974
  %v7066 = vunpack.c.h.b16 %v6974
  %v7067 = vunpack.c.l.b16 %v6975
  %v7068 = vunpack.c.h.b16 %v6975
  %v7069 = vunpack.c.l.b16 %v6976
  %v7070 = vunpack.c.h.b16 %v6976
  %v7071 = vunpack.c.l.b16 %v6977
  %v7072 = vunpack.c.h.b16 %v6977
  %v7073 = vunpack.c.l.b16 %v6978
  %v7074 = vunpack.c.h.b16 %v6978
  %v7075 = vpack.c.b16 %v7067, %v7059
  %v7076 = vpack.c.b16 %v7068, %v7060
  %v7077 = vpack.c.b16 %v7069, %v7061
  %v7078 = vpack.c.b16 %v7070, %v7062
  %v7079 = vpack.c.b16 %v7071, %v7063
  %v7080 = vpack.c.b16 %v7072, %v7064
  %v7081 = vpack.c.b16 %v7073, %v7065
  %v7082 = vpack.c.b16 %v7074, %v7066
  %7091 = vmatprep.subr.bf16.mxu0 %v7076
  %7092 = vmatpush1.bf16.xpose.msra.mxu0 %v7075
  %7093 = vmatprep.subr.bf16.mxu0 0
  %7094 = vmatpush1.bf16.xpose.msra.mxu0 0
  %7095 = vmatprep.subr.bf16.mxu0 0
  %7096 = vmatpush1.bf16.xpose.msra.mxu0 0
  %7097 = vmatprep.subr.bf16.mxu0 0
  %7098 = vmatpush1.bf16.xpose.msra.mxu0 0
  %7099 = vmatprep.subr.bf16.mxu0 0
  %7100 = vmatpush1.bf16.xpose.msra.mxu0 0
  %7101 = vmatprep.subr.bf16.mxu0 0
  %7102 = vmatpush1.bf16.xpose.msra.mxu0 0
  %7103 = vmatprep.subr.bf16.mxu0 0
  %7104 = vmatpush1.bf16.xpose.msra.mxu0 0
  %7105 = vmatprep.subr.bf16.mxu0 0
  %7106 = vmatpush1.bf16.xpose.msra.mxu0 0
  %7107 = vmatprep.subr.bf16.mxu0 0
  %7108 = vmatpush1.bf16.xpose.msra.mxu0 0
  %7109 = vmatprep.subr.bf16.mxu0 0
  %7110 = vmatpush1.bf16.xpose.msra.mxu0 0
  %7111 = vmatprep.subr.bf16.mxu0 0
  %7112 = vmatpush1.bf16.xpose.msra.mxu0 0
  %7113 = vmatprep.subr.bf16.mxu0 0
  %7114 = vmatpush1.bf16.xpose.msra.mxu0 0
  %7115 = vmatprep.subr.bf16.mxu0 0
  %7116 = vmatpush1.bf16.xpose.msra.mxu0 0
  %7117 = vmatprep.subr.bf16.mxu0 0
  %7118 = vmatpush1.bf16.xpose.msra.mxu0 0
  %7119 = vmatprep.subr.bf16.mxu0 0
  %7120 = vmatpush1.bf16.xpose.msra.mxu0 0
  %7121 = vmatprep.subr.bf16.mxu0 0
  %7122 = vmatpush1.bf16.xpose.msra.mxu0 0
  %7123 = vmatprep.mubr.bf16.mxu0 %v7036
  %7124 = vmatmul.mubr.bf16.gmra.mrb[0].mxu0 %v7035
  %v7125 = vpop.f32.mrb[0].mxu0
  %v7126 = vadd.f32 0.0, %v7125
  %v7127 = vpop.f32.mrb[0].mxu0
  %v7128 = vpop.f32.mrb[0].mxu0
  %v7129 = vpop.f32.mrb[0].mxu0
  %7130 = vdwg.mxu0
  %7131 = vmatprep.subr.bf16.mxu0 %v7078
  %7132 = vmatpush1.bf16.xpose.msra.mxu0 %v7077
  %7133 = vmatprep.subr.bf16.mxu0 0
  %7134 = vmatpush1.bf16.xpose.msra.mxu0 0
  %7135 = vmatprep.subr.bf16.mxu0 0
  %7136 = vmatpush1.bf16.xpose.msra.mxu0 0
  %7137 = vmatprep.subr.bf16.mxu0 0
  %7138 = vmatpush1.bf16.xpose.msra.mxu0 0
  %7139 = vmatprep.subr.bf16.mxu0 0
  %7140 = vmatpush1.bf16.xpose.msra.mxu0 0
  %7141 = vmatprep.subr.bf16.mxu0 0
  %7142 = vmatpush1.bf16.xpose.msra.mxu0 0
  %7143 = vmatprep.subr.bf16.mxu0 0
  %7144 = vmatpush1.bf16.xpose.msra.mxu0 0
  %7145 = vmatprep.subr.bf16.mxu0 0
  %7146 = vmatpush1.bf16.xpose.msra.mxu0 0
  %7147 = vmatprep.subr.bf16.mxu0 0
  %7148 = vmatpush1.bf16.xpose.msra.mxu0 0
  %7149 = vmatprep.subr.bf16.mxu0 0
  %7150 = vmatpush1.bf16.xpose.msra.mxu0 0
  %7151 = vmatprep.subr.bf16.mxu0 0
  %7152 = vmatpush1.bf16.xpose.msra.mxu0 0
  %7153 = vmatprep.subr.bf16.mxu0 0
  %7154 = vmatpush1.bf16.xpose.msra.mxu0 0
  %7155 = vmatprep.subr.bf16.mxu0 0
  %7156 = vmatpush1.bf16.xpose.msra.mxu0 0
  %7157 = vmatprep.subr.bf16.mxu0 0
  %7158 = vmatpush1.bf16.xpose.msra.mxu0 0
  %7159 = vmatprep.subr.bf16.mxu0 0
  %7160 = vmatpush1.bf16.xpose.msra.mxu0 0
  %7161 = vmatprep.subr.bf16.mxu0 0
  %7162 = vmatpush1.bf16.xpose.msra.mxu0 0
  %7163 = vmatprep.mubr.bf16.mxu0 %v7038
  %7164 = vmatmul.mubr.bf16.gmra.mrb[0].mxu0 %v7037
  %v7165 = vpop.f32.mrb[0].mxu0
  %v7166 = vadd.f32 %v7126, %v7165
  %v7167 = vpop.f32.mrb[0].mxu0
  %v7168 = vpop.f32.mrb[0].mxu0
  %v7169 = vpop.f32.mrb[0].mxu0
  %7170 = vdwg.mxu0
  %7171 = vmatprep.subr.bf16.mxu0 %v7080
  %7172 = vmatpush1.bf16.xpose.msra.mxu0 %v7079
  %7173 = vmatprep.subr.bf16.mxu0 0
  %7174 = vmatpush1.bf16.xpose.msra.mxu0 0
  %7175 = vmatprep.subr.bf16.mxu0 0
  %7176 = vmatpush1.bf16.xpose.msra.mxu0 0
  %7177 = vmatprep.subr.bf16.mxu0 0
  %7178 = vmatpush1.bf16.xpose.msra.mxu0 0
  %7179 = vmatprep.subr.bf16.mxu0 0
  %7180 = vmatpush1.bf16.xpose.msra.mxu0 0
  %7181 = vmatprep.subr.bf16.mxu0 0
  %7182 = vmatpush1.bf16.xpose.msra.mxu0 0
  %7183 = vmatprep.subr.bf16.mxu0 0
  %7184 = vmatpush1.bf16.xpose.msra.mxu0 0
  %7185 = vmatprep.subr.bf16.mxu0 0
  %7186 = vmatpush1.bf16.xpose.msra.mxu0 0
  %7187 = vmatprep.subr.bf16.mxu0 0
  %7188 = vmatpush1.bf16.xpose.msra.mxu0 0
  %7189 = vmatprep.subr.bf16.mxu0 0
  %7190 = vmatpush1.bf16.xpose.msra.mxu0 0
  %7191 = vmatprep.subr.bf16.mxu0 0
  %7192 = vmatpush1.bf16.xpose.msra.mxu0 0
  %7193 = vmatprep.subr.bf16.mxu0 0
  %7194 = vmatpush1.bf16.xpose.msra.mxu0 0
  %7195 = vmatprep.subr.bf16.mxu0 0
  %7196 = vmatpush1.bf16.xpose.msra.mxu0 0
  %7197 = vmatprep.subr.bf16.mxu0 0
  %7198 = vmatpush1.bf16.xpose.msra.mxu0 0
  %7199 = vmatprep.subr.bf16.mxu0 0
  %7200 = vmatpush1.bf16.xpose.msra.mxu0 0
  %7201 = vmatprep.subr.bf16.mxu0 0
  %7202 = vmatpush1.bf16.xpose.msra.mxu0 0
  %7203 = vmatprep.mubr.bf16.mxu0 %v7040
  %7204 = vmatmul.mubr.bf16.gmra.mrb[0].mxu0 %v7039
  %v7205 = vpop.f32.mrb[0].mxu0
  %v7206 = vadd.f32 %v7166, %v7205
  %v7207 = vpop.f32.mrb[0].mxu0
  %v7208 = vpop.f32.mrb[0].mxu0
  %v7209 = vpop.f32.mrb[0].mxu0
  %7210 = vdwg.mxu0
  %7211 = vmatprep.subr.bf16.mxu0 %v7082
  %7212 = vmatpush1.bf16.xpose.msra.mxu0 %v7081
  %7213 = vmatprep.subr.bf16.mxu0 0
  %7214 = vmatpush1.bf16.xpose.msra.mxu0 0
  %7215 = vmatprep.subr.bf16.mxu0 0
  %7216 = vmatpush1.bf16.xpose.msra.mxu0 0
  %7217 = vmatprep.subr.bf16.mxu0 0
  %7218 = vmatpush1.bf16.xpose.msra.mxu0 0
  %7219 = vmatprep.subr.bf16.mxu0 0
  %7220 = vmatpush1.bf16.xpose.msra.mxu0 0
  %7221 = vmatprep.subr.bf16.mxu0 0
  %7222 = vmatpush1.bf16.xpose.msra.mxu0 0
  %7223 = vmatprep.subr.bf16.mxu0 0
  %7224 = vmatpush1.bf16.xpose.msra.mxu0 0
  %7225 = vmatprep.subr.bf16.mxu0 0
  %7226 = vmatpush1.bf16.xpose.msra.mxu0 0
  %7227 = vmatprep.subr.bf16.mxu0 0
  %7228 = vmatpush1.bf16.xpose.msra.mxu0 0
  %7229 = vmatprep.subr.bf16.mxu0 0
  %7230 = vmatpush1.bf16.xpose.msra.mxu0 0
  %7231 = vmatprep.subr.bf16.mxu0 0
  %7232 = vmatpush1.bf16.xpose.msra.mxu0 0
  %7233 = vmatprep.subr.bf16.mxu0 0
  %7234 = vmatpush1.bf16.xpose.msra.mxu0 0
  %7235 = vmatprep.subr.bf16.mxu0 0
  %7236 = vmatpush1.bf16.xpose.msra.mxu0 0
  %7237 = vmatprep.subr.bf16.mxu0 0
  %7238 = vmatpush1.bf16.xpose.msra.mxu0 0
  %7239 = vmatprep.subr.bf16.mxu0 0
  %7240 = vmatpush1.bf16.xpose.msra.mxu0 0
  %7241 = vmatprep.subr.bf16.mxu0 0
  %7242 = vmatpush1.bf16.xpose.msra.mxu0 0
  %7243 = vmatprep.mubr.bf16.mxu0 %v7042
  %7244 = vmatmul.mubr.bf16.gmra.mrb[0].mxu0 %v7041
  %v7245 = vpop.f32.mrb[0].mxu0
  %v7246 = vadd.f32 %v7206, %v7245
  %v7247 = vpop.f32.mrb[0].mxu0
  %v7248 = vpop.f32.mrb[0].mxu0
  %v7249 = vpop.f32.mrb[0].mxu0
  %7250 = vdwg.mxu0
  %v7251 = vadd.f32 %v6953, %v7246
  %s7252 = scalar_lea.vmem %s3, 1472
  %v7253 = vld [vmem:[%s7252] sm:$0xff]
  %v7254 = vld [vmem:[%s7252 + $0x8] sm:$0xff]
  %v7255 = vld [vmem:[%s7252 + $0x10] sm:$0xff]
  %v7256 = vld [vmem:[%s7252 + $0x18] sm:$0xff]
  %v7257 = vld [vmem:[%s7252 + $0x20] sm:$0xff]
  %v7258 = vld [vmem:[%s7252 + $0x28] sm:$0xff]
  %v7259 = vld [vmem:[%s7252 + $0x30] sm:$0xff]
  %v7260 = vld [vmem:[%s7252 + $0x38] sm:$0xff]
  %v7261 = vrot.slane %v6995, 7
  %v7262 = vrot.slane %v7003, 6
  %v7263 = vsel %vm1042, %v7262, %v7261
  %v7264 = vrot.slane %v6996, 7
  %v7265 = vrot.slane %v7004, 6
  %v7266 = vsel %vm1042, %v7265, %v7264
  %v7267 = vrot.slane %v6997, 7
  %v7268 = vrot.slane %v7005, 6
  %v7269 = vsel %vm1042, %v7268, %v7267
  %v7270 = vrot.slane %v6998, 7
  %v7271 = vrot.slane %v7006, 6
  %v7272 = vsel %vm1042, %v7271, %v7270
  %v7273 = vrot.slane %v6999, 7
  %v7274 = vrot.slane %v7007, 6
  %v7275 = vsel %vm1042, %v7274, %v7273
  %v7276 = vrot.slane %v7000, 7
  %v7277 = vrot.slane %v7008, 6
  %v7278 = vsel %vm1042, %v7277, %v7276
  %v7279 = vrot.slane %v7001, 7
  %v7280 = vrot.slane %v7009, 6
  %v7281 = vsel %vm1042, %v7280, %v7279
  %v7282 = vrot.slane %v7002, 7
  %v7283 = vrot.slane %v7010, 6
  %v7284 = vsel %vm1042, %v7283, %v7282
  %v7285 = vpack.c.b16 %v7263, %v7263
  %v7286 = vpack.c.b16 %v7266, %v7266
  %v7287 = vpack.c.b16 %v7269, %v7269
  %v7288 = vpack.c.b16 %v7272, %v7272
  %v7289 = vpack.c.b16 %v7275, %v7275
  %v7290 = vpack.c.b16 %v7278, %v7278
  %v7291 = vpack.c.b16 %v7281, %v7281
  %v7292 = vpack.c.b16 %v7284, %v7284
  %v7309 = vunpack.c.l.b16 %v7253
  %v7310 = vunpack.c.h.b16 %v7253
  %v7311 = vunpack.c.l.b16 %v7254
  %v7312 = vunpack.c.h.b16 %v7254
  %v7313 = vunpack.c.l.b16 %v7255
  %v7314 = vunpack.c.h.b16 %v7255
  %v7315 = vunpack.c.l.b16 %v7256
  %v7316 = vunpack.c.h.b16 %v7256
  %v7317 = vunpack.c.l.b16 %v7257
  %v7318 = vunpack.c.h.b16 %v7257
  %v7319 = vunpack.c.l.b16 %v7258
  %v7320 = vunpack.c.h.b16 %v7258
  %v7321 = vunpack.c.l.b16 %v7259
  %v7322 = vunpack.c.h.b16 %v7259
  %v7323 = vunpack.c.l.b16 %v7260
  %v7324 = vunpack.c.h.b16 %v7260
  %v7325 = vpack.c.b16 %v7317, %v7309
  %v7326 = vpack.c.b16 %v7318, %v7310
  %v7327 = vpack.c.b16 %v7319, %v7311
  %v7328 = vpack.c.b16 %v7320, %v7312
  %v7329 = vpack.c.b16 %v7321, %v7313
  %v7330 = vpack.c.b16 %v7322, %v7314
  %v7331 = vpack.c.b16 %v7323, %v7315
  %v7332 = vpack.c.b16 %v7324, %v7316
  %7341 = vmatprep.subr.bf16.mxu0 %v7326
  %7342 = vmatpush1.bf16.xpose.msra.mxu0 %v7325
  %7343 = vmatprep.subr.bf16.mxu0 0
  %7344 = vmatpush1.bf16.xpose.msra.mxu0 0
  %7345 = vmatprep.subr.bf16.mxu0 0
  %7346 = vmatpush1.bf16.xpose.msra.mxu0 0
  %7347 = vmatprep.subr.bf16.mxu0 0
  %7348 = vmatpush1.bf16.xpose.msra.mxu0 0
  %7349 = vmatprep.subr.bf16.mxu0 0
  %7350 = vmatpush1.bf16.xpose.msra.mxu0 0
  %7351 = vmatprep.subr.bf16.mxu0 0
  %7352 = vmatpush1.bf16.xpose.msra.mxu0 0
  %7353 = vmatprep.subr.bf16.mxu0 0
  %7354 = vmatpush1.bf16.xpose.msra.mxu0 0
  %7355 = vmatprep.subr.bf16.mxu0 0
  %7356 = vmatpush1.bf16.xpose.msra.mxu0 0
  %7357 = vmatprep.subr.bf16.mxu0 0
  %7358 = vmatpush1.bf16.xpose.msra.mxu0 0
  %7359 = vmatprep.subr.bf16.mxu0 0
  %7360 = vmatpush1.bf16.xpose.msra.mxu0 0
  %7361 = vmatprep.subr.bf16.mxu0 0
  %7362 = vmatpush1.bf16.xpose.msra.mxu0 0
  %7363 = vmatprep.subr.bf16.mxu0 0
  %7364 = vmatpush1.bf16.xpose.msra.mxu0 0
  %7365 = vmatprep.subr.bf16.mxu0 0
  %7366 = vmatpush1.bf16.xpose.msra.mxu0 0
  %7367 = vmatprep.subr.bf16.mxu0 0
  %7368 = vmatpush1.bf16.xpose.msra.mxu0 0
  %7369 = vmatprep.subr.bf16.mxu0 0
  %7370 = vmatpush1.bf16.xpose.msra.mxu0 0
  %7371 = vmatprep.subr.bf16.mxu0 0
  %7372 = vmatpush1.bf16.xpose.msra.mxu0 0
  %7373 = vmatprep.mubr.bf16.mxu0 %v7286
  %7374 = vmatmul.mubr.bf16.gmra.mrb[0].mxu0 %v7285
  %v7375 = vpop.f32.mrb[0].mxu0
  %v7376 = vadd.f32 0.0, %v7375
  %v7377 = vpop.f32.mrb[0].mxu0
  %v7378 = vpop.f32.mrb[0].mxu0
  %v7379 = vpop.f32.mrb[0].mxu0
  %7380 = vdwg.mxu0
  %7381 = vmatprep.subr.bf16.mxu0 %v7328
  %7382 = vmatpush1.bf16.xpose.msra.mxu0 %v7327
  %7383 = vmatprep.subr.bf16.mxu0 0
  %7384 = vmatpush1.bf16.xpose.msra.mxu0 0
  %7385 = vmatprep.subr.bf16.mxu0 0
  %7386 = vmatpush1.bf16.xpose.msra.mxu0 0
  %7387 = vmatprep.subr.bf16.mxu0 0
  %7388 = vmatpush1.bf16.xpose.msra.mxu0 0
  %7389 = vmatprep.subr.bf16.mxu0 0
  %7390 = vmatpush1.bf16.xpose.msra.mxu0 0
  %7391 = vmatprep.subr.bf16.mxu0 0
  %7392 = vmatpush1.bf16.xpose.msra.mxu0 0
  %7393 = vmatprep.subr.bf16.mxu0 0
  %7394 = vmatpush1.bf16.xpose.msra.mxu0 0
  %7395 = vmatprep.subr.bf16.mxu0 0
  %7396 = vmatpush1.bf16.xpose.msra.mxu0 0
  %7397 = vmatprep.subr.bf16.mxu0 0
  %7398 = vmatpush1.bf16.xpose.msra.mxu0 0
  %7399 = vmatprep.subr.bf16.mxu0 0
  %7400 = vmatpush1.bf16.xpose.msra.mxu0 0
  %7401 = vmatprep.subr.bf16.mxu0 0
  %7402 = vmatpush1.bf16.xpose.msra.mxu0 0
  %7403 = vmatprep.subr.bf16.mxu0 0
  %7404 = vmatpush1.bf16.xpose.msra.mxu0 0
  %7405 = vmatprep.subr.bf16.mxu0 0
  %7406 = vmatpush1.bf16.xpose.msra.mxu0 0
  %7407 = vmatprep.subr.bf16.mxu0 0
  %7408 = vmatpush1.bf16.xpose.msra.mxu0 0
  %7409 = vmatprep.subr.bf16.mxu0 0
  %7410 = vmatpush1.bf16.xpose.msra.mxu0 0
  %7411 = vmatprep.subr.bf16.mxu0 0
  %7412 = vmatpush1.bf16.xpose.msra.mxu0 0
  %7413 = vmatprep.mubr.bf16.mxu0 %v7288
  %7414 = vmatmul.mubr.bf16.gmra.mrb[0].mxu0 %v7287
  %v7415 = vpop.f32.mrb[0].mxu0
  %v7416 = vadd.f32 %v7376, %v7415
  %v7417 = vpop.f32.mrb[0].mxu0
  %v7418 = vpop.f32.mrb[0].mxu0
  %v7419 = vpop.f32.mrb[0].mxu0
  %7420 = vdwg.mxu0
  %7421 = vmatprep.subr.bf16.mxu0 %v7330
  %7422 = vmatpush1.bf16.xpose.msra.mxu0 %v7329
  %7423 = vmatprep.subr.bf16.mxu0 0
  %7424 = vmatpush1.bf16.xpose.msra.mxu0 0
  %7425 = vmatprep.subr.bf16.mxu0 0
  %7426 = vmatpush1.bf16.xpose.msra.mxu0 0
  %7427 = vmatprep.subr.bf16.mxu0 0
  %7428 = vmatpush1.bf16.xpose.msra.mxu0 0
  %7429 = vmatprep.subr.bf16.mxu0 0
  %7430 = vmatpush1.bf16.xpose.msra.mxu0 0
  %7431 = vmatprep.subr.bf16.mxu0 0
  %7432 = vmatpush1.bf16.xpose.msra.mxu0 0
  %7433 = vmatprep.subr.bf16.mxu0 0
  %7434 = vmatpush1.bf16.xpose.msra.mxu0 0
  %7435 = vmatprep.subr.bf16.mxu0 0
  %7436 = vmatpush1.bf16.xpose.msra.mxu0 0
  %7437 = vmatprep.subr.bf16.mxu0 0
  %7438 = vmatpush1.bf16.xpose.msra.mxu0 0
  %7439 = vmatprep.subr.bf16.mxu0 0
  %7440 = vmatpush1.bf16.xpose.msra.mxu0 0
  %7441 = vmatprep.subr.bf16.mxu0 0
  %7442 = vmatpush1.bf16.xpose.msra.mxu0 0
  %7443 = vmatprep.subr.bf16.mxu0 0
  %7444 = vmatpush1.bf16.xpose.msra.mxu0 0
  %7445 = vmatprep.subr.bf16.mxu0 0
  %7446 = vmatpush1.bf16.xpose.msra.mxu0 0
  %7447 = vmatprep.subr.bf16.mxu0 0
  %7448 = vmatpush1.bf16.xpose.msra.mxu0 0
  %7449 = vmatprep.subr.bf16.mxu0 0
  %7450 = vmatpush1.bf16.xpose.msra.mxu0 0
  %7451 = vmatprep.subr.bf16.mxu0 0
  %7452 = vmatpush1.bf16.xpose.msra.mxu0 0
  %7453 = vmatprep.mubr.bf16.mxu0 %v7290
  %7454 = vmatmul.mubr.bf16.gmra.mrb[0].mxu0 %v7289
  %v7455 = vpop.f32.mrb[0].mxu0
  %v7456 = vadd.f32 %v7416, %v7455
  %v7457 = vpop.f32.mrb[0].mxu0
  %v7458 = vpop.f32.mrb[0].mxu0
  %v7459 = vpop.f32.mrb[0].mxu0
  %7460 = vdwg.mxu0
  %7461 = vmatprep.subr.bf16.mxu0 %v7332
  %7462 = vmatpush1.bf16.xpose.msra.mxu0 %v7331
  %7463 = vmatprep.subr.bf16.mxu0 0
  %7464 = vmatpush1.bf16.xpose.msra.mxu0 0
  %7465 = vmatprep.subr.bf16.mxu0 0
  %7466 = vmatpush1.bf16.xpose.msra.mxu0 0
  %7467 = vmatprep.subr.bf16.mxu0 0
  %7468 = vmatpush1.bf16.xpose.msra.mxu0 0
  %7469 = vmatprep.subr.bf16.mxu0 0
  %7470 = vmatpush1.bf16.xpose.msra.mxu0 0
  %7471 = vmatprep.subr.bf16.mxu0 0
  %7472 = vmatpush1.bf16.xpose.msra.mxu0 0
  %7473 = vmatprep.subr.bf16.mxu0 0
  %7474 = vmatpush1.bf16.xpose.msra.mxu0 0
  %7475 = vmatprep.subr.bf16.mxu0 0
  %7476 = vmatpush1.bf16.xpose.msra.mxu0 0
  %7477 = vmatprep.subr.bf16.mxu0 0
  %7478 = vmatpush1.bf16.xpose.msra.mxu0 0
  %7479 = vmatprep.subr.bf16.mxu0 0
  %7480 = vmatpush1.bf16.xpose.msra.mxu0 0
  %7481 = vmatprep.subr.bf16.mxu0 0
  %7482 = vmatpush1.bf16.xpose.msra.mxu0 0
  %7483 = vmatprep.subr.bf16.mxu0 0
  %7484 = vmatpush1.bf16.xpose.msra.mxu0 0
  %7485 = vmatprep.subr.bf16.mxu0 0
  %7486 = vmatpush1.bf16.xpose.msra.mxu0 0
  %7487 = vmatprep.subr.bf16.mxu0 0
  %7488 = vmatpush1.bf16.xpose.msra.mxu0 0
  %7489 = vmatprep.subr.bf16.mxu0 0
  %7490 = vmatpush1.bf16.xpose.msra.mxu0 0
  %7491 = vmatprep.subr.bf16.mxu0 0
  %7492 = vmatpush1.bf16.xpose.msra.mxu0 0
  %7493 = vmatprep.mubr.bf16.mxu0 %v7292
  %7494 = vmatmul.mubr.bf16.gmra.mrb[0].mxu0 %v7291
  %v7495 = vpop.f32.mrb[0].mxu0
  %v7496 = vadd.f32 %v7456, %v7495
  %v7497 = vpop.f32.mrb[0].mxu0
  %v7498 = vpop.f32.mrb[0].mxu0
  %v7499 = vpop.f32.mrb[0].mxu0
  %7500 = vdwg.mxu0
  %v7501 = vadd.f32 %v7251, %v7496
  %v7502 = vld [vmem:[#allocation2 + $0x40] sm:$0x10]
  %v7503 = vld [vmem:[#allocation2 + $0x48] sm:$0x10]
  %v7504 = vld [vmem:[#allocation2 + $0x50] sm:$0x10]
  %v7505 = vld [vmem:[#allocation2 + $0x58] sm:$0x10]
  %v7506 = vld [vmem:[#allocation2 + $0x60] sm:$0x10]
  %v7507 = vld [vmem:[#allocation2 + $0x68] sm:$0x10]
  %v7508 = vld [vmem:[#allocation2 + $0x70] sm:$0x10]
  %v7509 = vld [vmem:[#allocation2 + $0x78] sm:$0x10]
  %v7510 = vld [vmem:[#allocation2 + $0xc0] sm:$0x10]
  %v7511 = vld [vmem:[#allocation2 + $0xc8] sm:$0x10]
  %v7512 = vld [vmem:[#allocation2 + $0xd0] sm:$0x10]
  %v7513 = vld [vmem:[#allocation2 + $0xd8] sm:$0x10]
  %v7514 = vld [vmem:[#allocation2 + $0xe0] sm:$0x10]
  %v7515 = vld [vmem:[#allocation2 + $0xe8] sm:$0x10]
  %v7516 = vld [vmem:[#allocation2 + $0xf0] sm:$0x10]
  %v7517 = vld [vmem:[#allocation2 + $0xf8] sm:$0x10]
  %s7518 = scalar_lea.vmem %s3, 1536
  %v7519 = vld [vmem:[%s7518] sm:$0xff]
  %v7520 = vld [vmem:[%s7518 + $0x8] sm:$0xff]
  %v7521 = vld [vmem:[%s7518 + $0x10] sm:$0xff]
  %v7522 = vld [vmem:[%s7518 + $0x18] sm:$0xff]
  %v7523 = vld [vmem:[%s7518 + $0x20] sm:$0xff]
  %v7524 = vld [vmem:[%s7518 + $0x28] sm:$0xff]
  %v7525 = vld [vmem:[%s7518 + $0x30] sm:$0xff]
  %v7526 = vld [vmem:[%s7518 + $0x38] sm:$0xff]
  %v7543 = vunpack.c.h.b16 %v7502
  %v7544 = vunpack.c.h.b16 %v7503
  %v7545 = vunpack.c.h.b16 %v7504
  %v7546 = vunpack.c.h.b16 %v7505
  %v7547 = vunpack.c.h.b16 %v7506
  %v7548 = vunpack.c.h.b16 %v7507
  %v7549 = vunpack.c.h.b16 %v7508
  %v7550 = vunpack.c.h.b16 %v7509
  %v7551 = vunpack.c.h.b16 %v7510
  %v7552 = vunpack.c.h.b16 %v7511
  %v7553 = vunpack.c.h.b16 %v7512
  %v7554 = vunpack.c.h.b16 %v7513
  %v7555 = vunpack.c.h.b16 %v7514
  %v7556 = vunpack.c.h.b16 %v7515
  %v7557 = vunpack.c.h.b16 %v7516
  %v7558 = vunpack.c.h.b16 %v7517
  %v7559 = vrot.slane %v7551, 7
  %v7560 = vsel %vm1042, %v7559, %v7543
  %v7561 = vrot.slane %v7552, 7
  %v7562 = vsel %vm1042, %v7561, %v7544
  %v7563 = vrot.slane %v7553, 7
  %v7564 = vsel %vm1042, %v7563, %v7545
  %v7565 = vrot.slane %v7554, 7
  %v7566 = vsel %vm1042, %v7565, %v7546
  %v7567 = vrot.slane %v7555, 7
  %v7568 = vsel %vm1042, %v7567, %v7547
  %v7569 = vrot.slane %v7556, 7
  %v7570 = vsel %vm1042, %v7569, %v7548
  %v7571 = vrot.slane %v7557, 7
  %v7572 = vsel %vm1042, %v7571, %v7549
  %v7573 = vrot.slane %v7558, 7
  %v7574 = vsel %vm1042, %v7573, %v7550
  %v7575 = vpack.c.b16 %v7560, %v7560
  %v7576 = vpack.c.b16 %v7562, %v7562
  %v7577 = vpack.c.b16 %v7564, %v7564
  %v7578 = vpack.c.b16 %v7566, %v7566
  %v7579 = vpack.c.b16 %v7568, %v7568
  %v7580 = vpack.c.b16 %v7570, %v7570
  %v7581 = vpack.c.b16 %v7572, %v7572
  %v7582 = vpack.c.b16 %v7574, %v7574
  %v7599 = vunpack.c.l.b16 %v7519
  %v7600 = vunpack.c.h.b16 %v7519
  %v7601 = vunpack.c.l.b16 %v7520
  %v7602 = vunpack.c.h.b16 %v7520
  %v7603 = vunpack.c.l.b16 %v7521
  %v7604 = vunpack.c.h.b16 %v7521
  %v7605 = vunpack.c.l.b16 %v7522
  %v7606 = vunpack.c.h.b16 %v7522
  %v7607 = vunpack.c.l.b16 %v7523
  %v7608 = vunpack.c.h.b16 %v7523
  %v7609 = vunpack.c.l.b16 %v7524
  %v7610 = vunpack.c.h.b16 %v7524
  %v7611 = vunpack.c.l.b16 %v7525
  %v7612 = vunpack.c.h.b16 %v7525
  %v7613 = vunpack.c.l.b16 %v7526
  %v7614 = vunpack.c.h.b16 %v7526
  %v7615 = vpack.c.b16 %v7607, %v7599
  %v7616 = vpack.c.b16 %v7608, %v7600
  %v7617 = vpack.c.b16 %v7609, %v7601
  %v7618 = vpack.c.b16 %v7610, %v7602
  %v7619 = vpack.c.b16 %v7611, %v7603
  %v7620 = vpack.c.b16 %v7612, %v7604
  %v7621 = vpack.c.b16 %v7613, %v7605
  %v7622 = vpack.c.b16 %v7614, %v7606
  %7631 = vmatprep.subr.bf16.mxu0 %v7616
  %7632 = vmatpush1.bf16.xpose.msra.mxu0 %v7615
  %7633 = vmatprep.subr.bf16.mxu0 0
  %7634 = vmatpush1.bf16.xpose.msra.mxu0 0
  %7635 = vmatprep.subr.bf16.mxu0 0
  %7636 = vmatpush1.bf16.xpose.msra.mxu0 0
  %7637 = vmatprep.subr.bf16.mxu0 0
  %7638 = vmatpush1.bf16.xpose.msra.mxu0 0
  %7639 = vmatprep.subr.bf16.mxu0 0
  %7640 = vmatpush1.bf16.xpose.msra.mxu0 0
  %7641 = vmatprep.subr.bf16.mxu0 0
  %7642 = vmatpush1.bf16.xpose.msra.mxu0 0
  %7643 = vmatprep.subr.bf16.mxu0 0
  %7644 = vmatpush1.bf16.xpose.msra.mxu0 0
  %7645 = vmatprep.subr.bf16.mxu0 0
  %7646 = vmatpush1.bf16.xpose.msra.mxu0 0
  %7647 = vmatprep.subr.bf16.mxu0 0
  %7648 = vmatpush1.bf16.xpose.msra.mxu0 0
  %7649 = vmatprep.subr.bf16.mxu0 0
  %7650 = vmatpush1.bf16.xpose.msra.mxu0 0
  %7651 = vmatprep.subr.bf16.mxu0 0
  %7652 = vmatpush1.bf16.xpose.msra.mxu0 0
  %7653 = vmatprep.subr.bf16.mxu0 0
  %7654 = vmatpush1.bf16.xpose.msra.mxu0 0
  %7655 = vmatprep.subr.bf16.mxu0 0
  %7656 = vmatpush1.bf16.xpose.msra.mxu0 0
  %7657 = vmatprep.subr.bf16.mxu0 0
  %7658 = vmatpush1.bf16.xpose.msra.mxu0 0
  %7659 = vmatprep.subr.bf16.mxu0 0
  %7660 = vmatpush1.bf16.xpose.msra.mxu0 0
  %7661 = vmatprep.subr.bf16.mxu0 0
  %7662 = vmatpush1.bf16.xpose.msra.mxu0 0
  %7663 = vmatprep.mubr.bf16.mxu0 %v7576
  %7664 = vmatmul.mubr.bf16.gmra.mrb[0].mxu0 %v7575
  %v7665 = vpop.f32.mrb[0].mxu0
  %v7666 = vadd.f32 0.0, %v7665
  %v7667 = vpop.f32.mrb[0].mxu0
  %v7668 = vpop.f32.mrb[0].mxu0
  %v7669 = vpop.f32.mrb[0].mxu0
  %7670 = vdwg.mxu0
  %7671 = vmatprep.subr.bf16.mxu0 %v7618
  %7672 = vmatpush1.bf16.xpose.msra.mxu0 %v7617
  %7673 = vmatprep.subr.bf16.mxu0 0
  %7674 = vmatpush1.bf16.xpose.msra.mxu0 0
  %7675 = vmatprep.subr.bf16.mxu0 0
  %7676 = vmatpush1.bf16.xpose.msra.mxu0 0
  %7677 = vmatprep.subr.bf16.mxu0 0
  %7678 = vmatpush1.bf16.xpose.msra.mxu0 0
  %7679 = vmatprep.subr.bf16.mxu0 0
  %7680 = vmatpush1.bf16.xpose.msra.mxu0 0
  %7681 = vmatprep.subr.bf16.mxu0 0
  %7682 = vmatpush1.bf16.xpose.msra.mxu0 0
  %7683 = vmatprep.subr.bf16.mxu0 0
  %7684 = vmatpush1.bf16.xpose.msra.mxu0 0
  %7685 = vmatprep.subr.bf16.mxu0 0
  %7686 = vmatpush1.bf16.xpose.msra.mxu0 0
  %7687 = vmatprep.subr.bf16.mxu0 0
  %7688 = vmatpush1.bf16.xpose.msra.mxu0 0
  %7689 = vmatprep.subr.bf16.mxu0 0
  %7690 = vmatpush1.bf16.xpose.msra.mxu0 0
  %7691 = vmatprep.subr.bf16.mxu0 0
  %7692 = vmatpush1.bf16.xpose.msra.mxu0 0
  %7693 = vmatprep.subr.bf16.mxu0 0
  %7694 = vmatpush1.bf16.xpose.msra.mxu0 0
  %7695 = vmatprep.subr.bf16.mxu0 0
  %7696 = vmatpush1.bf16.xpose.msra.mxu0 0
  %7697 = vmatprep.subr.bf16.mxu0 0
  %7698 = vmatpush1.bf16.xpose.msra.mxu0 0
  %7699 = vmatprep.subr.bf16.mxu0 0
  %7700 = vmatpush1.bf16.xpose.msra.mxu0 0
  %7701 = vmatprep.subr.bf16.mxu0 0
  %7702 = vmatpush1.bf16.xpose.msra.mxu0 0
  %7703 = vmatprep.mubr.bf16.mxu0 %v7578
  %7704 = vmatmul.mubr.bf16.gmra.mrb[0].mxu0 %v7577
  %v7705 = vpop.f32.mrb[0].mxu0
  %v7706 = vadd.f32 %v7666, %v7705
  %v7707 = vpop.f32.mrb[0].mxu0
  %v7708 = vpop.f32.mrb[0].mxu0
  %v7709 = vpop.f32.mrb[0].mxu0
  %7710 = vdwg.mxu0
  %7711 = vmatprep.subr.bf16.mxu0 %v7620
  %7712 = vmatpush1.bf16.xpose.msra.mxu0 %v7619
  %7713 = vmatprep.subr.bf16.mxu0 0
  %7714 = vmatpush1.bf16.xpose.msra.mxu0 0
  %7715 = vmatprep.subr.bf16.mxu0 0
  %7716 = vmatpush1.bf16.xpose.msra.mxu0 0
  %7717 = vmatprep.subr.bf16.mxu0 0
  %7718 = vmatpush1.bf16.xpose.msra.mxu0 0
  %7719 = vmatprep.subr.bf16.mxu0 0
  %7720 = vmatpush1.bf16.xpose.msra.mxu0 0
  %7721 = vmatprep.subr.bf16.mxu0 0
  %7722 = vmatpush1.bf16.xpose.msra.mxu0 0
  %7723 = vmatprep.subr.bf16.mxu0 0
  %7724 = vmatpush1.bf16.xpose.msra.mxu0 0
  %7725 = vmatprep.subr.bf16.mxu0 0
  %7726 = vmatpush1.bf16.xpose.msra.mxu0 0
  %7727 = vmatprep.subr.bf16.mxu0 0
  %7728 = vmatpush1.bf16.xpose.msra.mxu0 0
  %7729 = vmatprep.subr.bf16.mxu0 0
  %7730 = vmatpush1.bf16.xpose.msra.mxu0 0
  %7731 = vmatprep.subr.bf16.mxu0 0
  %7732 = vmatpush1.bf16.xpose.msra.mxu0 0
  %7733 = vmatprep.subr.bf16.mxu0 0
  %7734 = vmatpush1.bf16.xpose.msra.mxu0 0
  %7735 = vmatprep.subr.bf16.mxu0 0
  %7736 = vmatpush1.bf16.xpose.msra.mxu0 0
  %7737 = vmatprep.subr.bf16.mxu0 0
  %7738 = vmatpush1.bf16.xpose.msra.mxu0 0
  %7739 = vmatprep.subr.bf16.mxu0 0
  %7740 = vmatpush1.bf16.xpose.msra.mxu0 0
  %7741 = vmatprep.subr.bf16.mxu0 0
  %7742 = vmatpush1.bf16.xpose.msra.mxu0 0
  %7743 = vmatprep.mubr.bf16.mxu0 %v7580
  %7744 = vmatmul.mubr.bf16.gmra.mrb[0].mxu0 %v7579
  %v7745 = vpop.f32.mrb[0].mxu0
  %v7746 = vadd.f32 %v7706, %v7745
  %v7747 = vpop.f32.mrb[0].mxu0
  %v7748 = vpop.f32.mrb[0].mxu0
  %v7749 = vpop.f32.mrb[0].mxu0
  %7750 = vdwg.mxu0
  %7751 = vmatprep.subr.bf16.mxu0 %v7622
  %7752 = vmatpush1.bf16.xpose.msra.mxu0 %v7621
  %7753 = vmatprep.subr.bf16.mxu0 0
  %7754 = vmatpush1.bf16.xpose.msra.mxu0 0
  %7755 = vmatprep.subr.bf16.mxu0 0
  %7756 = vmatpush1.bf16.xpose.msra.mxu0 0
  %7757 = vmatprep.subr.bf16.mxu0 0
  %7758 = vmatpush1.bf16.xpose.msra.mxu0 0
  %7759 = vmatprep.subr.bf16.mxu0 0
  %7760 = vmatpush1.bf16.xpose.msra.mxu0 0
  %7761 = vmatprep.subr.bf16.mxu0 0
  %7762 = vmatpush1.bf16.xpose.msra.mxu0 0
  %7763 = vmatprep.subr.bf16.mxu0 0
  %7764 = vmatpush1.bf16.xpose.msra.mxu0 0
  %7765 = vmatprep.subr.bf16.mxu0 0
  %7766 = vmatpush1.bf16.xpose.msra.mxu0 0
  %7767 = vmatprep.subr.bf16.mxu0 0
  %7768 = vmatpush1.bf16.xpose.msra.mxu0 0
  %7769 = vmatprep.subr.bf16.mxu0 0
  %7770 = vmatpush1.bf16.xpose.msra.mxu0 0
  %7771 = vmatprep.subr.bf16.mxu0 0
  %7772 = vmatpush1.bf16.xpose.msra.mxu0 0
  %7773 = vmatprep.subr.bf16.mxu0 0
  %7774 = vmatpush1.bf16.xpose.msra.mxu0 0
  %7775 = vmatprep.subr.bf16.mxu0 0
  %7776 = vmatpush1.bf16.xpose.msra.mxu0 0
  %7777 = vmatprep.subr.bf16.mxu0 0
  %7778 = vmatpush1.bf16.xpose.msra.mxu0 0
  %7779 = vmatprep.subr.bf16.mxu0 0
  %7780 = vmatpush1.bf16.xpose.msra.mxu0 0
  %7781 = vmatprep.subr.bf16.mxu0 0
  %7782 = vmatpush1.bf16.xpose.msra.mxu0 0
  %7783 = vmatprep.mubr.bf16.mxu0 %v7582
  %7784 = vmatmul.mubr.bf16.gmra.mrb[0].mxu0 %v7581
  %v7785 = vpop.f32.mrb[0].mxu0
  %v7786 = vadd.f32 %v7746, %v7785
  %v7787 = vpop.f32.mrb[0].mxu0
  %v7788 = vpop.f32.mrb[0].mxu0
  %v7789 = vpop.f32.mrb[0].mxu0
  %7790 = vdwg.mxu0
  %v7791 = vadd.f32 %v7501, %v7786
  %s7792 = scalar_lea.vmem %s3, 1600
  %v7793 = vld [vmem:[%s7792] sm:$0xff]
  %v7794 = vld [vmem:[%s7792 + $0x8] sm:$0xff]
  %v7795 = vld [vmem:[%s7792 + $0x10] sm:$0xff]
  %v7796 = vld [vmem:[%s7792 + $0x18] sm:$0xff]
  %v7797 = vld [vmem:[%s7792 + $0x20] sm:$0xff]
  %v7798 = vld [vmem:[%s7792 + $0x28] sm:$0xff]
  %v7799 = vld [vmem:[%s7792 + $0x30] sm:$0xff]
  %v7800 = vld [vmem:[%s7792 + $0x38] sm:$0xff]
  %v7801 = vrot.slane %v7543, 1
  %v7802 = vsel %vm1042, %v7551, %v7801
  %v7803 = vrot.slane %v7544, 1
  %v7804 = vsel %vm1042, %v7552, %v7803
  %v7805 = vrot.slane %v7545, 1
  %v7806 = vsel %vm1042, %v7553, %v7805
  %v7807 = vrot.slane %v7546, 1
  %v7808 = vsel %vm1042, %v7554, %v7807
  %v7809 = vrot.slane %v7547, 1
  %v7810 = vsel %vm1042, %v7555, %v7809
  %v7811 = vrot.slane %v7548, 1
  %v7812 = vsel %vm1042, %v7556, %v7811
  %v7813 = vrot.slane %v7549, 1
  %v7814 = vsel %vm1042, %v7557, %v7813
  %v7815 = vrot.slane %v7550, 1
  %v7816 = vsel %vm1042, %v7558, %v7815
  %v7817 = vpack.c.b16 %v7802, %v7802
  %v7818 = vpack.c.b16 %v7804, %v7804
  %v7819 = vpack.c.b16 %v7806, %v7806
  %v7820 = vpack.c.b16 %v7808, %v7808
  %v7821 = vpack.c.b16 %v7810, %v7810
  %v7822 = vpack.c.b16 %v7812, %v7812
  %v7823 = vpack.c.b16 %v7814, %v7814
  %v7824 = vpack.c.b16 %v7816, %v7816
  %v7841 = vunpack.c.l.b16 %v7793
  %v7842 = vunpack.c.h.b16 %v7793
  %v7843 = vunpack.c.l.b16 %v7794
  %v7844 = vunpack.c.h.b16 %v7794
  %v7845 = vunpack.c.l.b16 %v7795
  %v7846 = vunpack.c.h.b16 %v7795
  %v7847 = vunpack.c.l.b16 %v7796
  %v7848 = vunpack.c.h.b16 %v7796
  %v7849 = vunpack.c.l.b16 %v7797
  %v7850 = vunpack.c.h.b16 %v7797
  %v7851 = vunpack.c.l.b16 %v7798
  %v7852 = vunpack.c.h.b16 %v7798
  %v7853 = vunpack.c.l.b16 %v7799
  %v7854 = vunpack.c.h.b16 %v7799
  %v7855 = vunpack.c.l.b16 %v7800
  %v7856 = vunpack.c.h.b16 %v7800
  %v7857 = vpack.c.b16 %v7849, %v7841
  %v7858 = vpack.c.b16 %v7850, %v7842
  %v7859 = vpack.c.b16 %v7851, %v7843
  %v7860 = vpack.c.b16 %v7852, %v7844
  %v7861 = vpack.c.b16 %v7853, %v7845
  %v7862 = vpack.c.b16 %v7854, %v7846
  %v7863 = vpack.c.b16 %v7855, %v7847
  %v7864 = vpack.c.b16 %v7856, %v7848
  %7873 = vmatprep.subr.bf16.mxu0 %v7858
  %7874 = vmatpush1.bf16.xpose.msra.mxu0 %v7857
  %7875 = vmatprep.subr.bf16.mxu0 0
  %7876 = vmatpush1.bf16.xpose.msra.mxu0 0
  %7877 = vmatprep.subr.bf16.mxu0 0
  %7878 = vmatpush1.bf16.xpose.msra.mxu0 0
  %7879 = vmatprep.subr.bf16.mxu0 0
  %7880 = vmatpush1.bf16.xpose.msra.mxu0 0
  %7881 = vmatprep.subr.bf16.mxu0 0
  %7882 = vmatpush1.bf16.xpose.msra.mxu0 0
  %7883 = vmatprep.subr.bf16.mxu0 0
  %7884 = vmatpush1.bf16.xpose.msra.mxu0 0
  %7885 = vmatprep.subr.bf16.mxu0 0
  %7886 = vmatpush1.bf16.xpose.msra.mxu0 0
  %7887 = vmatprep.subr.bf16.mxu0 0
  %7888 = vmatpush1.bf16.xpose.msra.mxu0 0
  %7889 = vmatprep.subr.bf16.mxu0 0
  %7890 = vmatpush1.bf16.xpose.msra.mxu0 0
  %7891 = vmatprep.subr.bf16.mxu0 0
  %7892 = vmatpush1.bf16.xpose.msra.mxu0 0
  %7893 = vmatprep.subr.bf16.mxu0 0
  %7894 = vmatpush1.bf16.xpose.msra.mxu0 0
  %7895 = vmatprep.subr.bf16.mxu0 0
  %7896 = vmatpush1.bf16.xpose.msra.mxu0 0
  %7897 = vmatprep.subr.bf16.mxu0 0
  %7898 = vmatpush1.bf16.xpose.msra.mxu0 0
  %7899 = vmatprep.subr.bf16.mxu0 0
  %7900 = vmatpush1.bf16.xpose.msra.mxu0 0
  %7901 = vmatprep.subr.bf16.mxu0 0
  %7902 = vmatpush1.bf16.xpose.msra.mxu0 0
  %7903 = vmatprep.subr.bf16.mxu0 0
  %7904 = vmatpush1.bf16.xpose.msra.mxu0 0
  %7905 = vmatprep.mubr.bf16.mxu0 %v7818
  %7906 = vmatmul.mubr.bf16.gmra.mrb[0].mxu0 %v7817
  %v7907 = vpop.f32.mrb[0].mxu0
  %v7908 = vadd.f32 0.0, %v7907
  %v7909 = vpop.f32.mrb[0].mxu0
  %v7910 = vpop.f32.mrb[0].mxu0
  %v7911 = vpop.f32.mrb[0].mxu0
  %7912 = vdwg.mxu0
  %7913 = vmatprep.subr.bf16.mxu0 %v7860
  %7914 = vmatpush1.bf16.xpose.msra.mxu0 %v7859
  %7915 = vmatprep.subr.bf16.mxu0 0
  %7916 = vmatpush1.bf16.xpose.msra.mxu0 0
  %7917 = vmatprep.subr.bf16.mxu0 0
  %7918 = vmatpush1.bf16.xpose.msra.mxu0 0
  %7919 = vmatprep.subr.bf16.mxu0 0
  %7920 = vmatpush1.bf16.xpose.msra.mxu0 0
  %7921 = vmatprep.subr.bf16.mxu0 0
  %7922 = vmatpush1.bf16.xpose.msra.mxu0 0
  %7923 = vmatprep.subr.bf16.mxu0 0
  %7924 = vmatpush1.bf16.xpose.msra.mxu0 0
  %7925 = vmatprep.subr.bf16.mxu0 0
  %7926 = vmatpush1.bf16.xpose.msra.mxu0 0
  %7927 = vmatprep.subr.bf16.mxu0 0
  %7928 = vmatpush1.bf16.xpose.msra.mxu0 0
  %7929 = vmatprep.subr.bf16.mxu0 0
  %7930 = vmatpush1.bf16.xpose.msra.mxu0 0
  %7931 = vmatprep.subr.bf16.mxu0 0
  %7932 = vmatpush1.bf16.xpose.msra.mxu0 0
  %7933 = vmatprep.subr.bf16.mxu0 0
  %7934 = vmatpush1.bf16.xpose.msra.mxu0 0
  %7935 = vmatprep.subr.bf16.mxu0 0
  %7936 = vmatpush1.bf16.xpose.msra.mxu0 0
  %7937 = vmatprep.subr.bf16.mxu0 0
  %7938 = vmatpush1.bf16.xpose.msra.mxu0 0
  %7939 = vmatprep.subr.bf16.mxu0 0
  %7940 = vmatpush1.bf16.xpose.msra.mxu0 0
  %7941 = vmatprep.subr.bf16.mxu0 0
  %7942 = vmatpush1.bf16.xpose.msra.mxu0 0
  %7943 = vmatprep.subr.bf16.mxu0 0
  %7944 = vmatpush1.bf16.xpose.msra.mxu0 0
  %7945 = vmatprep.mubr.bf16.mxu0 %v7820
  %7946 = vmatmul.mubr.bf16.gmra.mrb[0].mxu0 %v7819
  %v7947 = vpop.f32.mrb[0].mxu0
  %v7948 = vadd.f32 %v7908, %v7947
  %v7949 = vpop.f32.mrb[0].mxu0
  %v7950 = vpop.f32.mrb[0].mxu0
  %v7951 = vpop.f32.mrb[0].mxu0
  %7952 = vdwg.mxu0
  %7953 = vmatprep.subr.bf16.mxu0 %v7862
  %7954 = vmatpush1.bf16.xpose.msra.mxu0 %v7861
  %7955 = vmatprep.subr.bf16.mxu0 0
  %7956 = vmatpush1.bf16.xpose.msra.mxu0 0
  %7957 = vmatprep.subr.bf16.mxu0 0
  %7958 = vmatpush1.bf16.xpose.msra.mxu0 0
  %7959 = vmatprep.subr.bf16.mxu0 0
  %7960 = vmatpush1.bf16.xpose.msra.mxu0 0
  %7961 = vmatprep.subr.bf16.mxu0 0
  %7962 = vmatpush1.bf16.xpose.msra.mxu0 0
  %7963 = vmatprep.subr.bf16.mxu0 0
  %7964 = vmatpush1.bf16.xpose.msra.mxu0 0
  %7965 = vmatprep.subr.bf16.mxu0 0
  %7966 = vmatpush1.bf16.xpose.msra.mxu0 0
  %7967 = vmatprep.subr.bf16.mxu0 0
  %7968 = vmatpush1.bf16.xpose.msra.mxu0 0
  %7969 = vmatprep.subr.bf16.mxu0 0
  %7970 = vmatpush1.bf16.xpose.msra.mxu0 0
  %7971 = vmatprep.subr.bf16.mxu0 0
  %7972 = vmatpush1.bf16.xpose.msra.mxu0 0
  %7973 = vmatprep.subr.bf16.mxu0 0
  %7974 = vmatpush1.bf16.xpose.msra.mxu0 0
  %7975 = vmatprep.subr.bf16.mxu0 0
  %7976 = vmatpush1.bf16.xpose.msra.mxu0 0
  %7977 = vmatprep.subr.bf16.mxu0 0
  %7978 = vmatpush1.bf16.xpose.msra.mxu0 0
  %7979 = vmatprep.subr.bf16.mxu0 0
  %7980 = vmatpush1.bf16.xpose.msra.mxu0 0
  %7981 = vmatprep.subr.bf16.mxu0 0
  %7982 = vmatpush1.bf16.xpose.msra.mxu0 0
  %7983 = vmatprep.subr.bf16.mxu0 0
  %7984 = vmatpush1.bf16.xpose.msra.mxu0 0
  %7985 = vmatprep.mubr.bf16.mxu0 %v7822
  %7986 = vmatmul.mubr.bf16.gmra.mrb[0].mxu0 %v7821
  %v7987 = vpop.f32.mrb[0].mxu0
  %v7988 = vadd.f32 %v7948, %v7987
  %v7989 = vpop.f32.mrb[0].mxu0
  %v7990 = vpop.f32.mrb[0].mxu0
  %v7991 = vpop.f32.mrb[0].mxu0
  %7992 = vdwg.mxu0
  %7993 = vmatprep.subr.bf16.mxu0 %v7864
  %7994 = vmatpush1.bf16.xpose.msra.mxu0 %v7863
  %7995 = vmatprep.subr.bf16.mxu0 0
  %7996 = vmatpush1.bf16.xpose.msra.mxu0 0
  %7997 = vmatprep.subr.bf16.mxu0 0
  %7998 = vmatpush1.bf16.xpose.msra.mxu0 0
  %7999 = vmatprep.subr.bf16.mxu0 0
  %8000 = vmatpush1.bf16.xpose.msra.mxu0 0
  %8001 = vmatprep.subr.bf16.mxu0 0
  %8002 = vmatpush1.bf16.xpose.msra.mxu0 0
  %8003 = vmatprep.subr.bf16.mxu0 0
  %8004 = vmatpush1.bf16.xpose.msra.mxu0 0
  %8005 = vmatprep.subr.bf16.mxu0 0
  %8006 = vmatpush1.bf16.xpose.msra.mxu0 0
  %8007 = vmatprep.subr.bf16.mxu0 0
  %8008 = vmatpush1.bf16.xpose.msra.mxu0 0
  %8009 = vmatprep.subr.bf16.mxu0 0
  %8010 = vmatpush1.bf16.xpose.msra.mxu0 0
  %8011 = vmatprep.subr.bf16.mxu0 0
  %8012 = vmatpush1.bf16.xpose.msra.mxu0 0
  %8013 = vmatprep.subr.bf16.mxu0 0
  %8014 = vmatpush1.bf16.xpose.msra.mxu0 0
  %8015 = vmatprep.subr.bf16.mxu0 0
  %8016 = vmatpush1.bf16.xpose.msra.mxu0 0
  %8017 = vmatprep.subr.bf16.mxu0 0
  %8018 = vmatpush1.bf16.xpose.msra.mxu0 0
  %8019 = vmatprep.subr.bf16.mxu0 0
  %8020 = vmatpush1.bf16.xpose.msra.mxu0 0
  %8021 = vmatprep.subr.bf16.mxu0 0
  %8022 = vmatpush1.bf16.xpose.msra.mxu0 0
  %8023 = vmatprep.subr.bf16.mxu0 0
  %8024 = vmatpush1.bf16.xpose.msra.mxu0 0
  %8025 = vmatprep.mubr.bf16.mxu0 %v7824
  %8026 = vmatmul.mubr.bf16.gmra.mrb[0].mxu0 %v7823
  %v8027 = vpop.f32.mrb[0].mxu0
  %v8028 = vadd.f32 %v7988, %v8027
  %v8029 = vpop.f32.mrb[0].mxu0
  %v8030 = vpop.f32.mrb[0].mxu0
  %v8031 = vpop.f32.mrb[0].mxu0
  %8032 = vdwg.mxu0
  %v8033 = vadd.f32 %v7791, %v8028
  %v8034 = vld [vmem:[#allocation2 + $0x40] sm:$0x20]
  %v8035 = vld [vmem:[#allocation2 + $0x48] sm:$0x20]
  %v8036 = vld [vmem:[#allocation2 + $0x50] sm:$0x20]
  %v8037 = vld [vmem:[#allocation2 + $0x58] sm:$0x20]
  %v8038 = vld [vmem:[#allocation2 + $0x60] sm:$0x20]
  %v8039 = vld [vmem:[#allocation2 + $0x68] sm:$0x20]
  %v8040 = vld [vmem:[#allocation2 + $0x70] sm:$0x20]
  %v8041 = vld [vmem:[#allocation2 + $0x78] sm:$0x20]
  %v8042 = vld [vmem:[#allocation2 + $0xc0] sm:$0x20]
  %v8043 = vld [vmem:[#allocation2 + $0xc8] sm:$0x20]
  %v8044 = vld [vmem:[#allocation2 + $0xd0] sm:$0x20]
  %v8045 = vld [vmem:[#allocation2 + $0xd8] sm:$0x20]
  %v8046 = vld [vmem:[#allocation2 + $0xe0] sm:$0x20]
  %v8047 = vld [vmem:[#allocation2 + $0xe8] sm:$0x20]
  %v8048 = vld [vmem:[#allocation2 + $0xf0] sm:$0x20]
  %v8049 = vld [vmem:[#allocation2 + $0xf8] sm:$0x20]
  %s8050 = scalar_lea.vmem %s3, 1664
  %v8051 = vld [vmem:[%s8050] sm:$0xff]
  %v8052 = vld [vmem:[%s8050 + $0x8] sm:$0xff]
  %v8053 = vld [vmem:[%s8050 + $0x10] sm:$0xff]
  %v8054 = vld [vmem:[%s8050 + $0x18] sm:$0xff]
  %v8055 = vld [vmem:[%s8050 + $0x20] sm:$0xff]
  %v8056 = vld [vmem:[%s8050 + $0x28] sm:$0xff]
  %v8057 = vld [vmem:[%s8050 + $0x30] sm:$0xff]
  %v8058 = vld [vmem:[%s8050 + $0x38] sm:$0xff]
  %v8075 = vunpack.c.h.b16 %v8034
  %v8076 = vunpack.c.h.b16 %v8035
  %v8077 = vunpack.c.h.b16 %v8036
  %v8078 = vunpack.c.h.b16 %v8037
  %v8079 = vunpack.c.h.b16 %v8038
  %v8080 = vunpack.c.h.b16 %v8039
  %v8081 = vunpack.c.h.b16 %v8040
  %v8082 = vunpack.c.h.b16 %v8041
  %v8083 = vunpack.c.h.b16 %v8042
  %v8084 = vunpack.c.h.b16 %v8043
  %v8085 = vunpack.c.h.b16 %v8044
  %v8086 = vunpack.c.h.b16 %v8045
  %v8087 = vunpack.c.h.b16 %v8046
  %v8088 = vunpack.c.h.b16 %v8047
  %v8089 = vunpack.c.h.b16 %v8048
  %v8090 = vunpack.c.h.b16 %v8049
  %v8091 = vrot.slane %v8075, 2
  %v8092 = vrot.slane %v8083, 1
  %v8093 = vsel %vm1042, %v8092, %v8091
  %v8094 = vrot.slane %v8076, 2
  %v8095 = vrot.slane %v8084, 1
  %v8096 = vsel %vm1042, %v8095, %v8094
  %v8097 = vrot.slane %v8077, 2
  %v8098 = vrot.slane %v8085, 1
  %v8099 = vsel %vm1042, %v8098, %v8097
  %v8100 = vrot.slane %v8078, 2
  %v8101 = vrot.slane %v8086, 1
  %v8102 = vsel %vm1042, %v8101, %v8100
  %v8103 = vrot.slane %v8079, 2
  %v8104 = vrot.slane %v8087, 1
  %v8105 = vsel %vm1042, %v8104, %v8103
  %v8106 = vrot.slane %v8080, 2
  %v8107 = vrot.slane %v8088, 1
  %v8108 = vsel %vm1042, %v8107, %v8106
  %v8109 = vrot.slane %v8081, 2
  %v8110 = vrot.slane %v8089, 1
  %v8111 = vsel %vm1042, %v8110, %v8109
  %v8112 = vrot.slane %v8082, 2
  %v8113 = vrot.slane %v8090, 1
  %v8114 = vsel %vm1042, %v8113, %v8112
  %v8115 = vpack.c.b16 %v8093, %v8093
  %v8116 = vpack.c.b16 %v8096, %v8096
  %v8117 = vpack.c.b16 %v8099, %v8099
  %v8118 = vpack.c.b16 %v8102, %v8102
  %v8119 = vpack.c.b16 %v8105, %v8105
  %v8120 = vpack.c.b16 %v8108, %v8108
  %v8121 = vpack.c.b16 %v8111, %v8111
  %v8122 = vpack.c.b16 %v8114, %v8114
  %v8139 = vunpack.c.l.b16 %v8051
  %v8140 = vunpack.c.h.b16 %v8051
  %v8141 = vunpack.c.l.b16 %v8052
  %v8142 = vunpack.c.h.b16 %v8052
  %v8143 = vunpack.c.l.b16 %v8053
  %v8144 = vunpack.c.h.b16 %v8053
  %v8145 = vunpack.c.l.b16 %v8054
  %v8146 = vunpack.c.h.b16 %v8054
  %v8147 = vunpack.c.l.b16 %v8055
  %v8148 = vunpack.c.h.b16 %v8055
  %v8149 = vunpack.c.l.b16 %v8056
  %v8150 = vunpack.c.h.b16 %v8056
  %v8151 = vunpack.c.l.b16 %v8057
  %v8152 = vunpack.c.h.b16 %v8057
  %v8153 = vunpack.c.l.b16 %v8058
  %v8154 = vunpack.c.h.b16 %v8058
  %v8155 = vpack.c.b16 %v8147, %v8139
  %v8156 = vpack.c.b16 %v8148, %v8140
  %v8157 = vpack.c.b16 %v8149, %v8141
  %v8158 = vpack.c.b16 %v8150, %v8142
  %v8159 = vpack.c.b16 %v8151, %v8143
  %v8160 = vpack.c.b16 %v8152, %v8144
  %v8161 = vpack.c.b16 %v8153, %v8145
  %v8162 = vpack.c.b16 %v8154, %v8146
  %8171 = vmatprep.subr.bf16.mxu0 %v8156
  %8172 = vmatpush1.bf16.xpose.msra.mxu0 %v8155
  %8173 = vmatprep.subr.bf16.mxu0 0
  %8174 = vmatpush1.bf16.xpose.msra.mxu0 0
  %8175 = vmatprep.subr.bf16.mxu0 0
  %8176 = vmatpush1.bf16.xpose.msra.mxu0 0
  %8177 = vmatprep.subr.bf16.mxu0 0
  %8178 = vmatpush1.bf16.xpose.msra.mxu0 0
  %8179 = vmatprep.subr.bf16.mxu0 0
  %8180 = vmatpush1.bf16.xpose.msra.mxu0 0
  %8181 = vmatprep.subr.bf16.mxu0 0
  %8182 = vmatpush1.bf16.xpose.msra.mxu0 0
  %8183 = vmatprep.subr.bf16.mxu0 0
  %8184 = vmatpush1.bf16.xpose.msra.mxu0 0
  %8185 = vmatprep.subr.bf16.mxu0 0
  %8186 = vmatpush1.bf16.xpose.msra.mxu0 0
  %8187 = vmatprep.subr.bf16.mxu0 0
  %8188 = vmatpush1.bf16.xpose.msra.mxu0 0
  %8189 = vmatprep.subr.bf16.mxu0 0
  %8190 = vmatpush1.bf16.xpose.msra.mxu0 0
  %8191 = vmatprep.subr.bf16.mxu0 0
  %8192 = vmatpush1.bf16.xpose.msra.mxu0 0
  %8193 = vmatprep.subr.bf16.mxu0 0
  %8194 = vmatpush1.bf16.xpose.msra.mxu0 0
  %8195 = vmatprep.subr.bf16.mxu0 0
  %8196 = vmatpush1.bf16.xpose.msra.mxu0 0
  %8197 = vmatprep.subr.bf16.mxu0 0
  %8198 = vmatpush1.bf16.xpose.msra.mxu0 0
  %8199 = vmatprep.subr.bf16.mxu0 0
  %8200 = vmatpush1.bf16.xpose.msra.mxu0 0
  %8201 = vmatprep.subr.bf16.mxu0 0
  %8202 = vmatpush1.bf16.xpose.msra.mxu0 0
  %8203 = vmatprep.mubr.bf16.mxu0 %v8116
  %8204 = vmatmul.mubr.bf16.gmra.mrb[0].mxu0 %v8115
  %v8205 = vpop.f32.mrb[0].mxu0
  %v8206 = vadd.f32 0.0, %v8205
  %v8207 = vpop.f32.mrb[0].mxu0
  %v8208 = vpop.f32.mrb[0].mxu0
  %v8209 = vpop.f32.mrb[0].mxu0
  %8210 = vdwg.mxu0
  %8211 = vmatprep.subr.bf16.mxu0 %v8158
  %8212 = vmatpush1.bf16.xpose.msra.mxu0 %v8157
  %8213 = vmatprep.subr.bf16.mxu0 0
  %8214 = vmatpush1.bf16.xpose.msra.mxu0 0
  %8215 = vmatprep.subr.bf16.mxu0 0
  %8216 = vmatpush1.bf16.xpose.msra.mxu0 0
  %8217 = vmatprep.subr.bf16.mxu0 0
  %8218 = vmatpush1.bf16.xpose.msra.mxu0 0
  %8219 = vmatprep.subr.bf16.mxu0 0
  %8220 = vmatpush1.bf16.xpose.msra.mxu0 0
  %8221 = vmatprep.subr.bf16.mxu0 0
  %8222 = vmatpush1.bf16.xpose.msra.mxu0 0
  %8223 = vmatprep.subr.bf16.mxu0 0
  %8224 = vmatpush1.bf16.xpose.msra.mxu0 0
  %8225 = vmatprep.subr.bf16.mxu0 0
  %8226 = vmatpush1.bf16.xpose.msra.mxu0 0
  %8227 = vmatprep.subr.bf16.mxu0 0
  %8228 = vmatpush1.bf16.xpose.msra.mxu0 0
  %8229 = vmatprep.subr.bf16.mxu0 0
  %8230 = vmatpush1.bf16.xpose.msra.mxu0 0
  %8231 = vmatprep.subr.bf16.mxu0 0
  %8232 = vmatpush1.bf16.xpose.msra.mxu0 0
  %8233 = vmatprep.subr.bf16.mxu0 0
  %8234 = vmatpush1.bf16.xpose.msra.mxu0 0
  %8235 = vmatprep.subr.bf16.mxu0 0
  %8236 = vmatpush1.bf16.xpose.msra.mxu0 0
  %8237 = vmatprep.subr.bf16.mxu0 0
  %8238 = vmatpush1.bf16.xpose.msra.mxu0 0
  %8239 = vmatprep.subr.bf16.mxu0 0
  %8240 = vmatpush1.bf16.xpose.msra.mxu0 0
  %8241 = vmatprep.subr.bf16.mxu0 0
  %8242 = vmatpush1.bf16.xpose.msra.mxu0 0
  %8243 = vmatprep.mubr.bf16.mxu0 %v8118
  %8244 = vmatmul.mubr.bf16.gmra.mrb[0].mxu0 %v8117
  %v8245 = vpop.f32.mrb[0].mxu0
  %v8246 = vadd.f32 %v8206, %v8245
  %v8247 = vpop.f32.mrb[0].mxu0
  %v8248 = vpop.f32.mrb[0].mxu0
  %v8249 = vpop.f32.mrb[0].mxu0
  %8250 = vdwg.mxu0
  %8251 = vmatprep.subr.bf16.mxu0 %v8160
  %8252 = vmatpush1.bf16.xpose.msra.mxu0 %v8159
  %8253 = vmatprep.subr.bf16.mxu0 0
  %8254 = vmatpush1.bf16.xpose.msra.mxu0 0
  %8255 = vmatprep.subr.bf16.mxu0 0
  %8256 = vmatpush1.bf16.xpose.msra.mxu0 0
  %8257 = vmatprep.subr.bf16.mxu0 0
  %8258 = vmatpush1.bf16.xpose.msra.mxu0 0
  %8259 = vmatprep.subr.bf16.mxu0 0
  %8260 = vmatpush1.bf16.xpose.msra.mxu0 0
  %8261 = vmatprep.subr.bf16.mxu0 0
  %8262 = vmatpush1.bf16.xpose.msra.mxu0 0
  %8263 = vmatprep.subr.bf16.mxu0 0
  %8264 = vmatpush1.bf16.xpose.msra.mxu0 0
  %8265 = vmatprep.subr.bf16.mxu0 0
  %8266 = vmatpush1.bf16.xpose.msra.mxu0 0
  %8267 = vmatprep.subr.bf16.mxu0 0
  %8268 = vmatpush1.bf16.xpose.msra.mxu0 0
  %8269 = vmatprep.subr.bf16.mxu0 0
  %8270 = vmatpush1.bf16.xpose.msra.mxu0 0
  %8271 = vmatprep.subr.bf16.mxu0 0
  %8272 = vmatpush1.bf16.xpose.msra.mxu0 0
  %8273 = vmatprep.subr.bf16.mxu0 0
  %8274 = vmatpush1.bf16.xpose.msra.mxu0 0
  %8275 = vmatprep.subr.bf16.mxu0 0
  %8276 = vmatpush1.bf16.xpose.msra.mxu0 0
  %8277 = vmatprep.subr.bf16.mxu0 0
  %8278 = vmatpush1.bf16.xpose.msra.mxu0 0
  %8279 = vmatprep.subr.bf16.mxu0 0
  %8280 = vmatpush1.bf16.xpose.msra.mxu0 0
  %8281 = vmatprep.subr.bf16.mxu0 0
  %8282 = vmatpush1.bf16.xpose.msra.mxu0 0
  %8283 = vmatprep.mubr.bf16.mxu0 %v8120
  %8284 = vmatmul.mubr.bf16.gmra.mrb[0].mxu0 %v8119
  %v8285 = vpop.f32.mrb[0].mxu0
  %v8286 = vadd.f32 %v8246, %v8285
  %v8287 = vpop.f32.mrb[0].mxu0
  %v8288 = vpop.f32.mrb[0].mxu0
  %v8289 = vpop.f32.mrb[0].mxu0
  %8290 = vdwg.mxu0
  %8291 = vmatprep.subr.bf16.mxu0 %v8162
  %8292 = vmatpush1.bf16.xpose.msra.mxu0 %v8161
  %8293 = vmatprep.subr.bf16.mxu0 0
  %8294 = vmatpush1.bf16.xpose.msra.mxu0 0
  %8295 = vmatprep.subr.bf16.mxu0 0
  %8296 = vmatpush1.bf16.xpose.msra.mxu0 0
  %8297 = vmatprep.subr.bf16.mxu0 0
  %8298 = vmatpush1.bf16.xpose.msra.mxu0 0
  %8299 = vmatprep.subr.bf16.mxu0 0
  %8300 = vmatpush1.bf16.xpose.msra.mxu0 0
  %8301 = vmatprep.subr.bf16.mxu0 0
  %8302 = vmatpush1.bf16.xpose.msra.mxu0 0
  %8303 = vmatprep.subr.bf16.mxu0 0
  %8304 = vmatpush1.bf16.xpose.msra.mxu0 0
  %8305 = vmatprep.subr.bf16.mxu0 0
  %8306 = vmatpush1.bf16.xpose.msra.mxu0 0
  %8307 = vmatprep.subr.bf16.mxu0 0
  %8308 = vmatpush1.bf16.xpose.msra.mxu0 0
  %8309 = vmatprep.subr.bf16.mxu0 0
  %8310 = vmatpush1.bf16.xpose.msra.mxu0 0
  %8311 = vmatprep.subr.bf16.mxu0 0
  %8312 = vmatpush1.bf16.xpose.msra.mxu0 0
  %8313 = vmatprep.subr.bf16.mxu0 0
  %8314 = vmatpush1.bf16.xpose.msra.mxu0 0
  %8315 = vmatprep.subr.bf16.mxu0 0
  %8316 = vmatpush1.bf16.xpose.msra.mxu0 0
  %8317 = vmatprep.subr.bf16.mxu0 0
  %8318 = vmatpush1.bf16.xpose.msra.mxu0 0
  %8319 = vmatprep.subr.bf16.mxu0 0
  %8320 = vmatpush1.bf16.xpose.msra.mxu0 0
  %8321 = vmatprep.subr.bf16.mxu0 0
  %8322 = vmatpush1.bf16.xpose.msra.mxu0 0
  %8323 = vmatprep.mubr.bf16.mxu0 %v8122
  %8324 = vmatmul.mubr.bf16.gmra.mrb[0].mxu0 %v8121
  %v8325 = vpop.f32.mrb[0].mxu0
  %v8326 = vadd.f32 %v8286, %v8325
  %v8327 = vpop.f32.mrb[0].mxu0
  %v8328 = vpop.f32.mrb[0].mxu0
  %v8329 = vpop.f32.mrb[0].mxu0
  %8330 = vdwg.mxu0
  %v8331 = vadd.f32 %v8033, %v8326
  %s8332 = scalar_lea.vmem %s3, 1728
  %v8333 = vld [vmem:[%s8332] sm:$0xff]
  %v8334 = vld [vmem:[%s8332 + $0x8] sm:$0xff]
  %v8335 = vld [vmem:[%s8332 + $0x10] sm:$0xff]
  %v8336 = vld [vmem:[%s8332 + $0x18] sm:$0xff]
  %v8337 = vld [vmem:[%s8332 + $0x20] sm:$0xff]
  %v8338 = vld [vmem:[%s8332 + $0x28] sm:$0xff]
  %v8339 = vld [vmem:[%s8332 + $0x30] sm:$0xff]
  %v8340 = vld [vmem:[%s8332 + $0x38] sm:$0xff]
  %v8341 = vrot.slane %v8075, 3
  %v8342 = vrot.slane %v8083, 2
  %v8343 = vsel %vm1042, %v8342, %v8341
  %v8344 = vrot.slane %v8076, 3
  %v8345 = vrot.slane %v8084, 2
  %v8346 = vsel %vm1042, %v8345, %v8344
  %v8347 = vrot.slane %v8077, 3
  %v8348 = vrot.slane %v8085, 2
  %v8349 = vsel %vm1042, %v8348, %v8347
  %v8350 = vrot.slane %v8078, 3
  %v8351 = vrot.slane %v8086, 2
  %v8352 = vsel %vm1042, %v8351, %v8350
  %v8353 = vrot.slane %v8079, 3
  %v8354 = vrot.slane %v8087, 2
  %v8355 = vsel %vm1042, %v8354, %v8353
  %v8356 = vrot.slane %v8080, 3
  %v8357 = vrot.slane %v8088, 2
  %v8358 = vsel %vm1042, %v8357, %v8356
  %v8359 = vrot.slane %v8081, 3
  %v8360 = vrot.slane %v8089, 2
  %v8361 = vsel %vm1042, %v8360, %v8359
  %v8362 = vrot.slane %v8082, 3
  %v8363 = vrot.slane %v8090, 2
  %v8364 = vsel %vm1042, %v8363, %v8362
  %v8365 = vpack.c.b16 %v8343, %v8343
  %v8366 = vpack.c.b16 %v8346, %v8346
  %v8367 = vpack.c.b16 %v8349, %v8349
  %v8368 = vpack.c.b16 %v8352, %v8352
  %v8369 = vpack.c.b16 %v8355, %v8355
  %v8370 = vpack.c.b16 %v8358, %v8358
  %v8371 = vpack.c.b16 %v8361, %v8361
  %v8372 = vpack.c.b16 %v8364, %v8364
  %v8389 = vunpack.c.l.b16 %v8333
  %v8390 = vunpack.c.h.b16 %v8333
  %v8391 = vunpack.c.l.b16 %v8334
  %v8392 = vunpack.c.h.b16 %v8334
  %v8393 = vunpack.c.l.b16 %v8335
  %v8394 = vunpack.c.h.b16 %v8335
  %v8395 = vunpack.c.l.b16 %v8336
  %v8396 = vunpack.c.h.b16 %v8336
  %v8397 = vunpack.c.l.b16 %v8337
  %v8398 = vunpack.c.h.b16 %v8337
  %v8399 = vunpack.c.l.b16 %v8338
  %v8400 = vunpack.c.h.b16 %v8338
  %v8401 = vunpack.c.l.b16 %v8339
  %v8402 = vunpack.c.h.b16 %v8339
  %v8403 = vunpack.c.l.b16 %v8340
  %v8404 = vunpack.c.h.b16 %v8340
  %v8405 = vpack.c.b16 %v8397, %v8389
  %v8406 = vpack.c.b16 %v8398, %v8390
  %v8407 = vpack.c.b16 %v8399, %v8391
  %v8408 = vpack.c.b16 %v8400, %v8392
  %v8409 = vpack.c.b16 %v8401, %v8393
  %v8410 = vpack.c.b16 %v8402, %v8394
  %v8411 = vpack.c.b16 %v8403, %v8395
  %v8412 = vpack.c.b16 %v8404, %v8396
  %8421 = vmatprep.subr.bf16.mxu0 %v8406
  %8422 = vmatpush1.bf16.xpose.msra.mxu0 %v8405
  %8423 = vmatprep.subr.bf16.mxu0 0
  %8424 = vmatpush1.bf16.xpose.msra.mxu0 0
  %8425 = vmatprep.subr.bf16.mxu0 0
  %8426 = vmatpush1.bf16.xpose.msra.mxu0 0
  %8427 = vmatprep.subr.bf16.mxu0 0
  %8428 = vmatpush1.bf16.xpose.msra.mxu0 0
  %8429 = vmatprep.subr.bf16.mxu0 0
  %8430 = vmatpush1.bf16.xpose.msra.mxu0 0
  %8431 = vmatprep.subr.bf16.mxu0 0
  %8432 = vmatpush1.bf16.xpose.msra.mxu0 0
  %8433 = vmatprep.subr.bf16.mxu0 0
  %8434 = vmatpush1.bf16.xpose.msra.mxu0 0
  %8435 = vmatprep.subr.bf16.mxu0 0
  %8436 = vmatpush1.bf16.xpose.msra.mxu0 0
  %8437 = vmatprep.subr.bf16.mxu0 0
  %8438 = vmatpush1.bf16.xpose.msra.mxu0 0
  %8439 = vmatprep.subr.bf16.mxu0 0
  %8440 = vmatpush1.bf16.xpose.msra.mxu0 0
  %8441 = vmatprep.subr.bf16.mxu0 0
  %8442 = vmatpush1.bf16.xpose.msra.mxu0 0
  %8443 = vmatprep.subr.bf16.mxu0 0
  %8444 = vmatpush1.bf16.xpose.msra.mxu0 0
  %8445 = vmatprep.subr.bf16.mxu0 0
  %8446 = vmatpush1.bf16.xpose.msra.mxu0 0
  %8447 = vmatprep.subr.bf16.mxu0 0
  %8448 = vmatpush1.bf16.xpose.msra.mxu0 0
  %8449 = vmatprep.subr.bf16.mxu0 0
  %8450 = vmatpush1.bf16.xpose.msra.mxu0 0
  %8451 = vmatprep.subr.bf16.mxu0 0
  %8452 = vmatpush1.bf16.xpose.msra.mxu0 0
  %8453 = vmatprep.mubr.bf16.mxu0 %v8366
  %8454 = vmatmul.mubr.bf16.gmra.mrb[0].mxu0 %v8365
  %v8455 = vpop.f32.mrb[0].mxu0
  %v8456 = vadd.f32 0.0, %v8455
  %v8457 = vpop.f32.mrb[0].mxu0
  %v8458 = vpop.f32.mrb[0].mxu0
  %v8459 = vpop.f32.mrb[0].mxu0
  %8460 = vdwg.mxu0
  %8461 = vmatprep.subr.bf16.mxu0 %v8408
  %8462 = vmatpush1.bf16.xpose.msra.mxu0 %v8407
  %8463 = vmatprep.subr.bf16.mxu0 0
  %8464 = vmatpush1.bf16.xpose.msra.mxu0 0
  %8465 = vmatprep.subr.bf16.mxu0 0
  %8466 = vmatpush1.bf16.xpose.msra.mxu0 0
  %8467 = vmatprep.subr.bf16.mxu0 0
  %8468 = vmatpush1.bf16.xpose.msra.mxu0 0
  %8469 = vmatprep.subr.bf16.mxu0 0
  %8470 = vmatpush1.bf16.xpose.msra.mxu0 0
  %8471 = vmatprep.subr.bf16.mxu0 0
  %8472 = vmatpush1.bf16.xpose.msra.mxu0 0
  %8473 = vmatprep.subr.bf16.mxu0 0
  %8474 = vmatpush1.bf16.xpose.msra.mxu0 0
  %8475 = vmatprep.subr.bf16.mxu0 0
  %8476 = vmatpush1.bf16.xpose.msra.mxu0 0
  %8477 = vmatprep.subr.bf16.mxu0 0
  %8478 = vmatpush1.bf16.xpose.msra.mxu0 0
  %8479 = vmatprep.subr.bf16.mxu0 0
  %8480 = vmatpush1.bf16.xpose.msra.mxu0 0
  %8481 = vmatprep.subr.bf16.mxu0 0
  %8482 = vmatpush1.bf16.xpose.msra.mxu0 0
  %8483 = vmatprep.subr.bf16.mxu0 0
  %8484 = vmatpush1.bf16.xpose.msra.mxu0 0
  %8485 = vmatprep.subr.bf16.mxu0 0
  %8486 = vmatpush1.bf16.xpose.msra.mxu0 0
  %8487 = vmatprep.subr.bf16.mxu0 0
  %8488 = vmatpush1.bf16.xpose.msra.mxu0 0
  %8489 = vmatprep.subr.bf16.mxu0 0
  %8490 = vmatpush1.bf16.xpose.msra.mxu0 0
  %8491 = vmatprep.subr.bf16.mxu0 0
  %8492 = vmatpush1.bf16.xpose.msra.mxu0 0
  %8493 = vmatprep.mubr.bf16.mxu0 %v8368
  %8494 = vmatmul.mubr.bf16.gmra.mrb[0].mxu0 %v8367
  %v8495 = vpop.f32.mrb[0].mxu0
  %v8496 = vadd.f32 %v8456, %v8495
  %v8497 = vpop.f32.mrb[0].mxu0
  %v8498 = vpop.f32.mrb[0].mxu0
  %v8499 = vpop.f32.mrb[0].mxu0
  %8500 = vdwg.mxu0
  %8501 = vmatprep.subr.bf16.mxu0 %v8410
  %8502 = vmatpush1.bf16.xpose.msra.mxu0 %v8409
  %8503 = vmatprep.subr.bf16.mxu0 0
  %8504 = vmatpush1.bf16.xpose.msra.mxu0 0
  %8505 = vmatprep.subr.bf16.mxu0 0
  %8506 = vmatpush1.bf16.xpose.msra.mxu0 0
  %8507 = vmatprep.subr.bf16.mxu0 0
  %8508 = vmatpush1.bf16.xpose.msra.mxu0 0
  %8509 = vmatprep.subr.bf16.mxu0 0
  %8510 = vmatpush1.bf16.xpose.msra.mxu0 0
  %8511 = vmatprep.subr.bf16.mxu0 0
  %8512 = vmatpush1.bf16.xpose.msra.mxu0 0
  %8513 = vmatprep.subr.bf16.mxu0 0
  %8514 = vmatpush1.bf16.xpose.msra.mxu0 0
  %8515 = vmatprep.subr.bf16.mxu0 0
  %8516 = vmatpush1.bf16.xpose.msra.mxu0 0
  %8517 = vmatprep.subr.bf16.mxu0 0
  %8518 = vmatpush1.bf16.xpose.msra.mxu0 0
  %8519 = vmatprep.subr.bf16.mxu0 0
  %8520 = vmatpush1.bf16.xpose.msra.mxu0 0
  %8521 = vmatprep.subr.bf16.mxu0 0
  %8522 = vmatpush1.bf16.xpose.msra.mxu0 0
  %8523 = vmatprep.subr.bf16.mxu0 0
  %8524 = vmatpush1.bf16.xpose.msra.mxu0 0
  %8525 = vmatprep.subr.bf16.mxu0 0
  %8526 = vmatpush1.bf16.xpose.msra.mxu0 0
  %8527 = vmatprep.subr.bf16.mxu0 0
  %8528 = vmatpush1.bf16.xpose.msra.mxu0 0
  %8529 = vmatprep.subr.bf16.mxu0 0
  %8530 = vmatpush1.bf16.xpose.msra.mxu0 0
  %8531 = vmatprep.subr.bf16.mxu0 0
  %8532 = vmatpush1.bf16.xpose.msra.mxu0 0
  %8533 = vmatprep.mubr.bf16.mxu0 %v8370
  %8534 = vmatmul.mubr.bf16.gmra.mrb[0].mxu0 %v8369
  %v8535 = vpop.f32.mrb[0].mxu0
  %v8536 = vadd.f32 %v8496, %v8535
  %v8537 = vpop.f32.mrb[0].mxu0
  %v8538 = vpop.f32.mrb[0].mxu0
  %v8539 = vpop.f32.mrb[0].mxu0
  %8540 = vdwg.mxu0
  %8541 = vmatprep.subr.bf16.mxu0 %v8412
  %8542 = vmatpush1.bf16.xpose.msra.mxu0 %v8411
  %8543 = vmatprep.subr.bf16.mxu0 0
  %8544 = vmatpush1.bf16.xpose.msra.mxu0 0
  %8545 = vmatprep.subr.bf16.mxu0 0
  %8546 = vmatpush1.bf16.xpose.msra.mxu0 0
  %8547 = vmatprep.subr.bf16.mxu0 0
  %8548 = vmatpush1.bf16.xpose.msra.mxu0 0
  %8549 = vmatprep.subr.bf16.mxu0 0
  %8550 = vmatpush1.bf16.xpose.msra.mxu0 0
  %8551 = vmatprep.subr.bf16.mxu0 0
  %8552 = vmatpush1.bf16.xpose.msra.mxu0 0
  %8553 = vmatprep.subr.bf16.mxu0 0
  %8554 = vmatpush1.bf16.xpose.msra.mxu0 0
  %8555 = vmatprep.subr.bf16.mxu0 0
  %8556 = vmatpush1.bf16.xpose.msra.mxu0 0
  %8557 = vmatprep.subr.bf16.mxu0 0
  %8558 = vmatpush1.bf16.xpose.msra.mxu0 0
  %8559 = vmatprep.subr.bf16.mxu0 0
  %8560 = vmatpush1.bf16.xpose.msra.mxu0 0
  %8561 = vmatprep.subr.bf16.mxu0 0
  %8562 = vmatpush1.bf16.xpose.msra.mxu0 0
  %8563 = vmatprep.subr.bf16.mxu0 0
  %8564 = vmatpush1.bf16.xpose.msra.mxu0 0
  %8565 = vmatprep.subr.bf16.mxu0 0
  %8566 = vmatpush1.bf16.xpose.msra.mxu0 0
  %8567 = vmatprep.subr.bf16.mxu0 0
  %8568 = vmatpush1.bf16.xpose.msra.mxu0 0
  %8569 = vmatprep.subr.bf16.mxu0 0
  %8570 = vmatpush1.bf16.xpose.msra.mxu0 0
  %8571 = vmatprep.subr.bf16.mxu0 0
  %8572 = vmatpush1.bf16.xpose.msra.mxu0 0
  %8573 = vmatprep.mubr.bf16.mxu0 %v8372
  %8574 = vmatmul.mubr.bf16.gmra.mrb[0].mxu0 %v8371
  %v8575 = vpop.f32.mrb[0].mxu0
  %v8576 = vadd.f32 %v8536, %v8575
  %v8577 = vpop.f32.mrb[0].mxu0
  %v8578 = vpop.f32.mrb[0].mxu0
  %v8579 = vpop.f32.mrb[0].mxu0
  %8580 = vdwg.mxu0
  %v8581 = vadd.f32 %v8331, %v8576
  %v8582 = vld [vmem:[#allocation2 + $0x40] sm:$0x40]
  %v8583 = vld [vmem:[#allocation2 + $0x48] sm:$0x40]
  %v8584 = vld [vmem:[#allocation2 + $0x50] sm:$0x40]
  %v8585 = vld [vmem:[#allocation2 + $0x58] sm:$0x40]
  %v8586 = vld [vmem:[#allocation2 + $0x60] sm:$0x40]
  %v8587 = vld [vmem:[#allocation2 + $0x68] sm:$0x40]
  %v8588 = vld [vmem:[#allocation2 + $0x70] sm:$0x40]
  %v8589 = vld [vmem:[#allocation2 + $0x78] sm:$0x40]
  %v8590 = vld [vmem:[#allocation2 + $0xc0] sm:$0x40]
  %v8591 = vld [vmem:[#allocation2 + $0xc8] sm:$0x40]
  %v8592 = vld [vmem:[#allocation2 + $0xd0] sm:$0x40]
  %v8593 = vld [vmem:[#allocation2 + $0xd8] sm:$0x40]
  %v8594 = vld [vmem:[#allocation2 + $0xe0] sm:$0x40]
  %v8595 = vld [vmem:[#allocation2 + $0xe8] sm:$0x40]
  %v8596 = vld [vmem:[#allocation2 + $0xf0] sm:$0x40]
  %v8597 = vld [vmem:[#allocation2 + $0xf8] sm:$0x40]
  %s8598 = scalar_lea.vmem %s3, 1792
  %v8599 = vld [vmem:[%s8598] sm:$0xff]
  %v8600 = vld [vmem:[%s8598 + $0x8] sm:$0xff]
  %v8601 = vld [vmem:[%s8598 + $0x10] sm:$0xff]
  %v8602 = vld [vmem:[%s8598 + $0x18] sm:$0xff]
  %v8603 = vld [vmem:[%s8598 + $0x20] sm:$0xff]
  %v8604 = vld [vmem:[%s8598 + $0x28] sm:$0xff]
  %v8605 = vld [vmem:[%s8598 + $0x30] sm:$0xff]
  %v8606 = vld [vmem:[%s8598 + $0x38] sm:$0xff]
  %v8623 = vunpack.c.h.b16 %v8582
  %v8624 = vunpack.c.h.b16 %v8583
  %v8625 = vunpack.c.h.b16 %v8584
  %v8626 = vunpack.c.h.b16 %v8585
  %v8627 = vunpack.c.h.b16 %v8586
  %v8628 = vunpack.c.h.b16 %v8587
  %v8629 = vunpack.c.h.b16 %v8588
  %v8630 = vunpack.c.h.b16 %v8589
  %v8631 = vunpack.c.h.b16 %v8590
  %v8632 = vunpack.c.h.b16 %v8591
  %v8633 = vunpack.c.h.b16 %v8592
  %v8634 = vunpack.c.h.b16 %v8593
  %v8635 = vunpack.c.h.b16 %v8594
  %v8636 = vunpack.c.h.b16 %v8595
  %v8637 = vunpack.c.h.b16 %v8596
  %v8638 = vunpack.c.h.b16 %v8597
  %v8639 = vrot.slane %v8623, 4
  %v8640 = vrot.slane %v8631, 3
  %v8641 = vsel %vm1042, %v8640, %v8639
  %v8642 = vrot.slane %v8624, 4
  %v8643 = vrot.slane %v8632, 3
  %v8644 = vsel %vm1042, %v8643, %v8642
  %v8645 = vrot.slane %v8625, 4
  %v8646 = vrot.slane %v8633, 3
  %v8647 = vsel %vm1042, %v8646, %v8645
  %v8648 = vrot.slane %v8626, 4
  %v8649 = vrot.slane %v8634, 3
  %v8650 = vsel %vm1042, %v8649, %v8648
  %v8651 = vrot.slane %v8627, 4
  %v8652 = vrot.slane %v8635, 3
  %v8653 = vsel %vm1042, %v8652, %v8651
  %v8654 = vrot.slane %v8628, 4
  %v8655 = vrot.slane %v8636, 3
  %v8656 = vsel %vm1042, %v8655, %v8654
  %v8657 = vrot.slane %v8629, 4
  %v8658 = vrot.slane %v8637, 3
  %v8659 = vsel %vm1042, %v8658, %v8657
  %v8660 = vrot.slane %v8630, 4
  %v8661 = vrot.slane %v8638, 3
  %v8662 = vsel %vm1042, %v8661, %v8660
  %v8663 = vpack.c.b16 %v8641, %v8641
  %v8664 = vpack.c.b16 %v8644, %v8644
  %v8665 = vpack.c.b16 %v8647, %v8647
  %v8666 = vpack.c.b16 %v8650, %v8650
  %v8667 = vpack.c.b16 %v8653, %v8653
  %v8668 = vpack.c.b16 %v8656, %v8656
  %v8669 = vpack.c.b16 %v8659, %v8659
  %v8670 = vpack.c.b16 %v8662, %v8662
  %v8687 = vunpack.c.l.b16 %v8599
  %v8688 = vunpack.c.h.b16 %v8599
  %v8689 = vunpack.c.l.b16 %v8600
  %v8690 = vunpack.c.h.b16 %v8600
  %v8691 = vunpack.c.l.b16 %v8601
  %v8692 = vunpack.c.h.b16 %v8601
  %v8693 = vunpack.c.l.b16 %v8602
  %v8694 = vunpack.c.h.b16 %v8602
  %v8695 = vunpack.c.l.b16 %v8603
  %v8696 = vunpack.c.h.b16 %v8603
  %v8697 = vunpack.c.l.b16 %v8604
  %v8698 = vunpack.c.h.b16 %v8604
  %v8699 = vunpack.c.l.b16 %v8605
  %v8700 = vunpack.c.h.b16 %v8605
  %v8701 = vunpack.c.l.b16 %v8606
  %v8702 = vunpack.c.h.b16 %v8606
  %v8703 = vpack.c.b16 %v8695, %v8687
  %v8704 = vpack.c.b16 %v8696, %v8688
  %v8705 = vpack.c.b16 %v8697, %v8689
  %v8706 = vpack.c.b16 %v8698, %v8690
  %v8707 = vpack.c.b16 %v8699, %v8691
  %v8708 = vpack.c.b16 %v8700, %v8692
  %v8709 = vpack.c.b16 %v8701, %v8693
  %v8710 = vpack.c.b16 %v8702, %v8694
  %8719 = vmatprep.subr.bf16.mxu0 %v8704
  %8720 = vmatpush1.bf16.xpose.msra.mxu0 %v8703
  %8721 = vmatprep.subr.bf16.mxu0 0
  %8722 = vmatpush1.bf16.xpose.msra.mxu0 0
  %8723 = vmatprep.subr.bf16.mxu0 0
  %8724 = vmatpush1.bf16.xpose.msra.mxu0 0
  %8725 = vmatprep.subr.bf16.mxu0 0
  %8726 = vmatpush1.bf16.xpose.msra.mxu0 0
  %8727 = vmatprep.subr.bf16.mxu0 0
  %8728 = vmatpush1.bf16.xpose.msra.mxu0 0
  %8729 = vmatprep.subr.bf16.mxu0 0
  %8730 = vmatpush1.bf16.xpose.msra.mxu0 0
  %8731 = vmatprep.subr.bf16.mxu0 0
  %8732 = vmatpush1.bf16.xpose.msra.mxu0 0
  %8733 = vmatprep.subr.bf16.mxu0 0
  %8734 = vmatpush1.bf16.xpose.msra.mxu0 0
  %8735 = vmatprep.subr.bf16.mxu0 0
  %8736 = vmatpush1.bf16.xpose.msra.mxu0 0
  %8737 = vmatprep.subr.bf16.mxu0 0
  %8738 = vmatpush1.bf16.xpose.msra.mxu0 0
  %8739 = vmatprep.subr.bf16.mxu0 0
  %8740 = vmatpush1.bf16.xpose.msra.mxu0 0
  %8741 = vmatprep.subr.bf16.mxu0 0
  %8742 = vmatpush1.bf16.xpose.msra.mxu0 0
  %8743 = vmatprep.subr.bf16.mxu0 0
  %8744 = vmatpush1.bf16.xpose.msra.mxu0 0
  %8745 = vmatprep.subr.bf16.mxu0 0
  %8746 = vmatpush1.bf16.xpose.msra.mxu0 0
  %8747 = vmatprep.subr.bf16.mxu0 0
  %8748 = vmatpush1.bf16.xpose.msra.mxu0 0
  %8749 = vmatprep.subr.bf16.mxu0 0
  %8750 = vmatpush1.bf16.xpose.msra.mxu0 0
  %8751 = vmatprep.mubr.bf16.mxu0 %v8664
  %8752 = vmatmul.mubr.bf16.gmra.mrb[0].mxu0 %v8663
  %v8753 = vpop.f32.mrb[0].mxu0
  %v8754 = vadd.f32 0.0, %v8753
  %v8755 = vpop.f32.mrb[0].mxu0
  %v8756 = vpop.f32.mrb[0].mxu0
  %v8757 = vpop.f32.mrb[0].mxu0
  %8758 = vdwg.mxu0
  %8759 = vmatprep.subr.bf16.mxu0 %v8706
  %8760 = vmatpush1.bf16.xpose.msra.mxu0 %v8705
  %8761 = vmatprep.subr.bf16.mxu0 0
  %8762 = vmatpush1.bf16.xpose.msra.mxu0 0
  %8763 = vmatprep.subr.bf16.mxu0 0
  %8764 = vmatpush1.bf16.xpose.msra.mxu0 0
  %8765 = vmatprep.subr.bf16.mxu0 0
  %8766 = vmatpush1.bf16.xpose.msra.mxu0 0
  %8767 = vmatprep.subr.bf16.mxu0 0
  %8768 = vmatpush1.bf16.xpose.msra.mxu0 0
  %8769 = vmatprep.subr.bf16.mxu0 0
  %8770 = vmatpush1.bf16.xpose.msra.mxu0 0
  %8771 = vmatprep.subr.bf16.mxu0 0
  %8772 = vmatpush1.bf16.xpose.msra.mxu0 0
  %8773 = vmatprep.subr.bf16.mxu0 0
  %8774 = vmatpush1.bf16.xpose.msra.mxu0 0
  %8775 = vmatprep.subr.bf16.mxu0 0
  %8776 = vmatpush1.bf16.xpose.msra.mxu0 0
  %8777 = vmatprep.subr.bf16.mxu0 0
  %8778 = vmatpush1.bf16.xpose.msra.mxu0 0
  %8779 = vmatprep.subr.bf16.mxu0 0
  %8780 = vmatpush1.bf16.xpose.msra.mxu0 0
  %8781 = vmatprep.subr.bf16.mxu0 0
  %8782 = vmatpush1.bf16.xpose.msra.mxu0 0
  %8783 = vmatprep.subr.bf16.mxu0 0
  %8784 = vmatpush1.bf16.xpose.msra.mxu0 0
  %8785 = vmatprep.subr.bf16.mxu0 0
  %8786 = vmatpush1.bf16.xpose.msra.mxu0 0
  %8787 = vmatprep.subr.bf16.mxu0 0
  %8788 = vmatpush1.bf16.xpose.msra.mxu0 0
  %8789 = vmatprep.subr.bf16.mxu0 0
  %8790 = vmatpush1.bf16.xpose.msra.mxu0 0
  %8791 = vmatprep.mubr.bf16.mxu0 %v8666
  %8792 = vmatmul.mubr.bf16.gmra.mrb[0].mxu0 %v8665
  %v8793 = vpop.f32.mrb[0].mxu0
  %v8794 = vadd.f32 %v8754, %v8793
  %v8795 = vpop.f32.mrb[0].mxu0
  %v8796 = vpop.f32.mrb[0].mxu0
  %v8797 = vpop.f32.mrb[0].mxu0
  %8798 = vdwg.mxu0
  %8799 = vmatprep.subr.bf16.mxu0 %v8708
  %8800 = vmatpush1.bf16.xpose.msra.mxu0 %v8707
  %8801 = vmatprep.subr.bf16.mxu0 0
  %8802 = vmatpush1.bf16.xpose.msra.mxu0 0
  %8803 = vmatprep.subr.bf16.mxu0 0
  %8804 = vmatpush1.bf16.xpose.msra.mxu0 0
  %8805 = vmatprep.subr.bf16.mxu0 0
  %8806 = vmatpush1.bf16.xpose.msra.mxu0 0
  %8807 = vmatprep.subr.bf16.mxu0 0
  %8808 = vmatpush1.bf16.xpose.msra.mxu0 0
  %8809 = vmatprep.subr.bf16.mxu0 0
  %8810 = vmatpush1.bf16.xpose.msra.mxu0 0
  %8811 = vmatprep.subr.bf16.mxu0 0
  %8812 = vmatpush1.bf16.xpose.msra.mxu0 0
  %8813 = vmatprep.subr.bf16.mxu0 0
  %8814 = vmatpush1.bf16.xpose.msra.mxu0 0
  %8815 = vmatprep.subr.bf16.mxu0 0
  %8816 = vmatpush1.bf16.xpose.msra.mxu0 0
  %8817 = vmatprep.subr.bf16.mxu0 0
  %8818 = vmatpush1.bf16.xpose.msra.mxu0 0
  %8819 = vmatprep.subr.bf16.mxu0 0
  %8820 = vmatpush1.bf16.xpose.msra.mxu0 0
  %8821 = vmatprep.subr.bf16.mxu0 0
  %8822 = vmatpush1.bf16.xpose.msra.mxu0 0
  %8823 = vmatprep.subr.bf16.mxu0 0
  %8824 = vmatpush1.bf16.xpose.msra.mxu0 0
  %8825 = vmatprep.subr.bf16.mxu0 0
  %8826 = vmatpush1.bf16.xpose.msra.mxu0 0
  %8827 = vmatprep.subr.bf16.mxu0 0
  %8828 = vmatpush1.bf16.xpose.msra.mxu0 0
  %8829 = vmatprep.subr.bf16.mxu0 0
  %8830 = vmatpush1.bf16.xpose.msra.mxu0 0
  %8831 = vmatprep.mubr.bf16.mxu0 %v8668
  %8832 = vmatmul.mubr.bf16.gmra.mrb[0].mxu0 %v8667
  %v8833 = vpop.f32.mrb[0].mxu0
  %v8834 = vadd.f32 %v8794, %v8833
  %v8835 = vpop.f32.mrb[0].mxu0
  %v8836 = vpop.f32.mrb[0].mxu0
  %v8837 = vpop.f32.mrb[0].mxu0
  %8838 = vdwg.mxu0
  %8839 = vmatprep.subr.bf16.mxu0 %v8710
  %8840 = vmatpush1.bf16.xpose.msra.mxu0 %v8709
  %8841 = vmatprep.subr.bf16.mxu0 0
  %8842 = vmatpush1.bf16.xpose.msra.mxu0 0
  %8843 = vmatprep.subr.bf16.mxu0 0
  %8844 = vmatpush1.bf16.xpose.msra.mxu0 0
  %8845 = vmatprep.subr.bf16.mxu0 0
  %8846 = vmatpush1.bf16.xpose.msra.mxu0 0
  %8847 = vmatprep.subr.bf16.mxu0 0
  %8848 = vmatpush1.bf16.xpose.msra.mxu0 0
  %8849 = vmatprep.subr.bf16.mxu0 0
  %8850 = vmatpush1.bf16.xpose.msra.mxu0 0
  %8851 = vmatprep.subr.bf16.mxu0 0
  %8852 = vmatpush1.bf16.xpose.msra.mxu0 0
  %8853 = vmatprep.subr.bf16.mxu0 0
  %8854 = vmatpush1.bf16.xpose.msra.mxu0 0
  %8855 = vmatprep.subr.bf16.mxu0 0
  %8856 = vmatpush1.bf16.xpose.msra.mxu0 0
  %8857 = vmatprep.subr.bf16.mxu0 0
  %8858 = vmatpush1.bf16.xpose.msra.mxu0 0
  %8859 = vmatprep.subr.bf16.mxu0 0
  %8860 = vmatpush1.bf16.xpose.msra.mxu0 0
  %8861 = vmatprep.subr.bf16.mxu0 0
  %8862 = vmatpush1.bf16.xpose.msra.mxu0 0
  %8863 = vmatprep.subr.bf16.mxu0 0
  %8864 = vmatpush1.bf16.xpose.msra.mxu0 0
  %8865 = vmatprep.subr.bf16.mxu0 0
  %8866 = vmatpush1.bf16.xpose.msra.mxu0 0
  %8867 = vmatprep.subr.bf16.mxu0 0
  %8868 = vmatpush1.bf16.xpose.msra.mxu0 0
  %8869 = vmatprep.subr.bf16.mxu0 0
  %8870 = vmatpush1.bf16.xpose.msra.mxu0 0
  %8871 = vmatprep.mubr.bf16.mxu0 %v8670
  %8872 = vmatmul.mubr.bf16.gmra.mrb[0].mxu0 %v8669
  %v8873 = vpop.f32.mrb[0].mxu0
  %v8874 = vadd.f32 %v8834, %v8873
  %v8875 = vpop.f32.mrb[0].mxu0
  %v8876 = vpop.f32.mrb[0].mxu0
  %v8877 = vpop.f32.mrb[0].mxu0
  %8878 = vdwg.mxu0
  %v8879 = vadd.f32 %v8581, %v8874
  %s8880 = scalar_lea.vmem %s3, 1856
  %v8881 = vld [vmem:[%s8880] sm:$0xff]
  %v8882 = vld [vmem:[%s8880 + $0x8] sm:$0xff]
  %v8883 = vld [vmem:[%s8880 + $0x10] sm:$0xff]
  %v8884 = vld [vmem:[%s8880 + $0x18] sm:$0xff]
  %v8885 = vld [vmem:[%s8880 + $0x20] sm:$0xff]
  %v8886 = vld [vmem:[%s8880 + $0x28] sm:$0xff]
  %v8887 = vld [vmem:[%s8880 + $0x30] sm:$0xff]
  %v8888 = vld [vmem:[%s8880 + $0x38] sm:$0xff]
  %v8889 = vrot.slane %v8623, 5
  %v8890 = vrot.slane %v8631, 4
  %v8891 = vsel %vm1042, %v8890, %v8889
  %v8892 = vrot.slane %v8624, 5
  %v8893 = vrot.slane %v8632, 4
  %v8894 = vsel %vm1042, %v8893, %v8892
  %v8895 = vrot.slane %v8625, 5
  %v8896 = vrot.slane %v8633, 4
  %v8897 = vsel %vm1042, %v8896, %v8895
  %v8898 = vrot.slane %v8626, 5
  %v8899 = vrot.slane %v8634, 4
  %v8900 = vsel %vm1042, %v8899, %v8898
  %v8901 = vrot.slane %v8627, 5
  %v8902 = vrot.slane %v8635, 4
  %v8903 = vsel %vm1042, %v8902, %v8901
  %v8904 = vrot.slane %v8628, 5
  %v8905 = vrot.slane %v8636, 4
  %v8906 = vsel %vm1042, %v8905, %v8904
  %v8907 = vrot.slane %v8629, 5
  %v8908 = vrot.slane %v8637, 4
  %v8909 = vsel %vm1042, %v8908, %v8907
  %v8910 = vrot.slane %v8630, 5
  %v8911 = vrot.slane %v8638, 4
  %v8912 = vsel %vm1042, %v8911, %v8910
  %v8913 = vpack.c.b16 %v8891, %v8891
  %v8914 = vpack.c.b16 %v8894, %v8894
  %v8915 = vpack.c.b16 %v8897, %v8897
  %v8916 = vpack.c.b16 %v8900, %v8900
  %v8917 = vpack.c.b16 %v8903, %v8903
  %v8918 = vpack.c.b16 %v8906, %v8906
  %v8919 = vpack.c.b16 %v8909, %v8909
  %v8920 = vpack.c.b16 %v8912, %v8912
  %v8937 = vunpack.c.l.b16 %v8881
  %v8938 = vunpack.c.h.b16 %v8881
  %v8939 = vunpack.c.l.b16 %v8882
  %v8940 = vunpack.c.h.b16 %v8882
  %v8941 = vunpack.c.l.b16 %v8883
  %v8942 = vunpack.c.h.b16 %v8883
  %v8943 = vunpack.c.l.b16 %v8884
  %v8944 = vunpack.c.h.b16 %v8884
  %v8945 = vunpack.c.l.b16 %v8885
  %v8946 = vunpack.c.h.b16 %v8885
  %v8947 = vunpack.c.l.b16 %v8886
  %v8948 = vunpack.c.h.b16 %v8886
  %v8949 = vunpack.c.l.b16 %v8887
  %v8950 = vunpack.c.h.b16 %v8887
  %v8951 = vunpack.c.l.b16 %v8888
  %v8952 = vunpack.c.h.b16 %v8888
  %v8953 = vpack.c.b16 %v8945, %v8937
  %v8954 = vpack.c.b16 %v8946, %v8938
  %v8955 = vpack.c.b16 %v8947, %v8939
  %v8956 = vpack.c.b16 %v8948, %v8940
  %v8957 = vpack.c.b16 %v8949, %v8941
  %v8958 = vpack.c.b16 %v8950, %v8942
  %v8959 = vpack.c.b16 %v8951, %v8943
  %v8960 = vpack.c.b16 %v8952, %v8944
  %8969 = vmatprep.subr.bf16.mxu0 %v8954
  %8970 = vmatpush1.bf16.xpose.msra.mxu0 %v8953
  %8971 = vmatprep.subr.bf16.mxu0 0
  %8972 = vmatpush1.bf16.xpose.msra.mxu0 0
  %8973 = vmatprep.subr.bf16.mxu0 0
  %8974 = vmatpush1.bf16.xpose.msra.mxu0 0
  %8975 = vmatprep.subr.bf16.mxu0 0
  %8976 = vmatpush1.bf16.xpose.msra.mxu0 0
  %8977 = vmatprep.subr.bf16.mxu0 0
  %8978 = vmatpush1.bf16.xpose.msra.mxu0 0
  %8979 = vmatprep.subr.bf16.mxu0 0
  %8980 = vmatpush1.bf16.xpose.msra.mxu0 0
  %8981 = vmatprep.subr.bf16.mxu0 0
  %8982 = vmatpush1.bf16.xpose.msra.mxu0 0
  %8983 = vmatprep.subr.bf16.mxu0 0
  %8984 = vmatpush1.bf16.xpose.msra.mxu0 0
  %8985 = vmatprep.subr.bf16.mxu0 0
  %8986 = vmatpush1.bf16.xpose.msra.mxu0 0
  %8987 = vmatprep.subr.bf16.mxu0 0
  %8988 = vmatpush1.bf16.xpose.msra.mxu0 0
  %8989 = vmatprep.subr.bf16.mxu0 0
  %8990 = vmatpush1.bf16.xpose.msra.mxu0 0
  %8991 = vmatprep.subr.bf16.mxu0 0
  %8992 = vmatpush1.bf16.xpose.msra.mxu0 0
  %8993 = vmatprep.subr.bf16.mxu0 0
  %8994 = vmatpush1.bf16.xpose.msra.mxu0 0
  %8995 = vmatprep.subr.bf16.mxu0 0
  %8996 = vmatpush1.bf16.xpose.msra.mxu0 0
  %8997 = vmatprep.subr.bf16.mxu0 0
  %8998 = vmatpush1.bf16.xpose.msra.mxu0 0
  %8999 = vmatprep.subr.bf16.mxu0 0
  %9000 = vmatpush1.bf16.xpose.msra.mxu0 0
  %9001 = vmatprep.mubr.bf16.mxu0 %v8914
  %9002 = vmatmul.mubr.bf16.gmra.mrb[0].mxu0 %v8913
  %v9003 = vpop.f32.mrb[0].mxu0
  %v9004 = vadd.f32 0.0, %v9003
  %v9005 = vpop.f32.mrb[0].mxu0
  %v9006 = vpop.f32.mrb[0].mxu0
  %v9007 = vpop.f32.mrb[0].mxu0
  %9008 = vdwg.mxu0
  %9009 = vmatprep.subr.bf16.mxu0 %v8956
  %9010 = vmatpush1.bf16.xpose.msra.mxu0 %v8955
  %9011 = vmatprep.subr.bf16.mxu0 0
  %9012 = vmatpush1.bf16.xpose.msra.mxu0 0
  %9013 = vmatprep.subr.bf16.mxu0 0
  %9014 = vmatpush1.bf16.xpose.msra.mxu0 0
  %9015 = vmatprep.subr.bf16.mxu0 0
  %9016 = vmatpush1.bf16.xpose.msra.mxu0 0
  %9017 = vmatprep.subr.bf16.mxu0 0
  %9018 = vmatpush1.bf16.xpose.msra.mxu0 0
  %9019 = vmatprep.subr.bf16.mxu0 0
  %9020 = vmatpush1.bf16.xpose.msra.mxu0 0
  %9021 = vmatprep.subr.bf16.mxu0 0
  %9022 = vmatpush1.bf16.xpose.msra.mxu0 0
  %9023 = vmatprep.subr.bf16.mxu0 0
  %9024 = vmatpush1.bf16.xpose.msra.mxu0 0
  %9025 = vmatprep.subr.bf16.mxu0 0
  %9026 = vmatpush1.bf16.xpose.msra.mxu0 0
  %9027 = vmatprep.subr.bf16.mxu0 0
  %9028 = vmatpush1.bf16.xpose.msra.mxu0 0
  %9029 = vmatprep.subr.bf16.mxu0 0
  %9030 = vmatpush1.bf16.xpose.msra.mxu0 0
  %9031 = vmatprep.subr.bf16.mxu0 0
  %9032 = vmatpush1.bf16.xpose.msra.mxu0 0
  %9033 = vmatprep.subr.bf16.mxu0 0
  %9034 = vmatpush1.bf16.xpose.msra.mxu0 0
  %9035 = vmatprep.subr.bf16.mxu0 0
  %9036 = vmatpush1.bf16.xpose.msra.mxu0 0
  %9037 = vmatprep.subr.bf16.mxu0 0
  %9038 = vmatpush1.bf16.xpose.msra.mxu0 0
  %9039 = vmatprep.subr.bf16.mxu0 0
  %9040 = vmatpush1.bf16.xpose.msra.mxu0 0
  %9041 = vmatprep.mubr.bf16.mxu0 %v8916
  %9042 = vmatmul.mubr.bf16.gmra.mrb[0].mxu0 %v8915
  %v9043 = vpop.f32.mrb[0].mxu0
  %v9044 = vadd.f32 %v9004, %v9043
  %v9045 = vpop.f32.mrb[0].mxu0
  %v9046 = vpop.f32.mrb[0].mxu0
  %v9047 = vpop.f32.mrb[0].mxu0
  %9048 = vdwg.mxu0
  %9049 = vmatprep.subr.bf16.mxu0 %v8958
  %9050 = vmatpush1.bf16.xpose.msra.mxu0 %v8957
  %9051 = vmatprep.subr.bf16.mxu0 0
  %9052 = vmatpush1.bf16.xpose.msra.mxu0 0
  %9053 = vmatprep.subr.bf16.mxu0 0
  %9054 = vmatpush1.bf16.xpose.msra.mxu0 0
  %9055 = vmatprep.subr.bf16.mxu0 0
  %9056 = vmatpush1.bf16.xpose.msra.mxu0 0
  %9057 = vmatprep.subr.bf16.mxu0 0
  %9058 = vmatpush1.bf16.xpose.msra.mxu0 0
  %9059 = vmatprep.subr.bf16.mxu0 0
  %9060 = vmatpush1.bf16.xpose.msra.mxu0 0
  %9061 = vmatprep.subr.bf16.mxu0 0
  %9062 = vmatpush1.bf16.xpose.msra.mxu0 0
  %9063 = vmatprep.subr.bf16.mxu0 0
  %9064 = vmatpush1.bf16.xpose.msra.mxu0 0
  %9065 = vmatprep.subr.bf16.mxu0 0
  %9066 = vmatpush1.bf16.xpose.msra.mxu0 0
  %9067 = vmatprep.subr.bf16.mxu0 0
  %9068 = vmatpush1.bf16.xpose.msra.mxu0 0
  %9069 = vmatprep.subr.bf16.mxu0 0
  %9070 = vmatpush1.bf16.xpose.msra.mxu0 0
  %9071 = vmatprep.subr.bf16.mxu0 0
  %9072 = vmatpush1.bf16.xpose.msra.mxu0 0
  %9073 = vmatprep.subr.bf16.mxu0 0
  %9074 = vmatpush1.bf16.xpose.msra.mxu0 0
  %9075 = vmatprep.subr.bf16.mxu0 0
  %9076 = vmatpush1.bf16.xpose.msra.mxu0 0
  %9077 = vmatprep.subr.bf16.mxu0 0
  %9078 = vmatpush1.bf16.xpose.msra.mxu0 0
  %9079 = vmatprep.subr.bf16.mxu0 0
  %9080 = vmatpush1.bf16.xpose.msra.mxu0 0
  %9081 = vmatprep.mubr.bf16.mxu0 %v8918
  %9082 = vmatmul.mubr.bf16.gmra.mrb[0].mxu0 %v8917
  %v9083 = vpop.f32.mrb[0].mxu0
  %v9084 = vadd.f32 %v9044, %v9083
  %v9085 = vpop.f32.mrb[0].mxu0
  %v9086 = vpop.f32.mrb[0].mxu0
  %v9087 = vpop.f32.mrb[0].mxu0
  %9088 = vdwg.mxu0
  %9089 = vmatprep.subr.bf16.mxu0 %v8960
  %9090 = vmatpush1.bf16.xpose.msra.mxu0 %v8959
  %9091 = vmatprep.subr.bf16.mxu0 0
  %9092 = vmatpush1.bf16.xpose.msra.mxu0 0
  %9093 = vmatprep.subr.bf16.mxu0 0
  %9094 = vmatpush1.bf16.xpose.msra.mxu0 0
  %9095 = vmatprep.subr.bf16.mxu0 0
  %9096 = vmatpush1.bf16.xpose.msra.mxu0 0
  %9097 = vmatprep.subr.bf16.mxu0 0
  %9098 = vmatpush1.bf16.xpose.msra.mxu0 0
  %9099 = vmatprep.subr.bf16.mxu0 0
  %9100 = vmatpush1.bf16.xpose.msra.mxu0 0
  %9101 = vmatprep.subr.bf16.mxu0 0
  %9102 = vmatpush1.bf16.xpose.msra.mxu0 0
  %9103 = vmatprep.subr.bf16.mxu0 0
  %9104 = vmatpush1.bf16.xpose.msra.mxu0 0
  %9105 = vmatprep.subr.bf16.mxu0 0
  %9106 = vmatpush1.bf16.xpose.msra.mxu0 0
  %9107 = vmatprep.subr.bf16.mxu0 0
  %9108 = vmatpush1.bf16.xpose.msra.mxu0 0
  %9109 = vmatprep.subr.bf16.mxu0 0
  %9110 = vmatpush1.bf16.xpose.msra.mxu0 0
  %9111 = vmatprep.subr.bf16.mxu0 0
  %9112 = vmatpush1.bf16.xpose.msra.mxu0 0
  %9113 = vmatprep.subr.bf16.mxu0 0
  %9114 = vmatpush1.bf16.xpose.msra.mxu0 0
  %9115 = vmatprep.subr.bf16.mxu0 0
  %9116 = vmatpush1.bf16.xpose.msra.mxu0 0
  %9117 = vmatprep.subr.bf16.mxu0 0
  %9118 = vmatpush1.bf16.xpose.msra.mxu0 0
  %9119 = vmatprep.subr.bf16.mxu0 0
  %9120 = vmatpush1.bf16.xpose.msra.mxu0 0
  %9121 = vmatprep.mubr.bf16.mxu0 %v8920
  %9122 = vmatmul.mubr.bf16.gmra.mrb[0].mxu0 %v8919
  %v9123 = vpop.f32.mrb[0].mxu0
  %v9124 = vadd.f32 %v9084, %v9123
  %v9125 = vpop.f32.mrb[0].mxu0
  %v9126 = vpop.f32.mrb[0].mxu0
  %v9127 = vpop.f32.mrb[0].mxu0
  %9128 = vdwg.mxu0
  %v9129 = vadd.f32 %v8879, %v9124
  %v9130 = vld [vmem:[#allocation2 + $0x40] sm:$0x80]
  %v9131 = vld [vmem:[#allocation2 + $0x48] sm:$0x80]
  %v9132 = vld [vmem:[#allocation2 + $0x50] sm:$0x80]
  %v9133 = vld [vmem:[#allocation2 + $0x58] sm:$0x80]
  %v9134 = vld [vmem:[#allocation2 + $0x60] sm:$0x80]
  %v9135 = vld [vmem:[#allocation2 + $0x68] sm:$0x80]
  %v9136 = vld [vmem:[#allocation2 + $0x70] sm:$0x80]
  %v9137 = vld [vmem:[#allocation2 + $0x78] sm:$0x80]
  %v9138 = vld [vmem:[#allocation2 + $0xc0] sm:$0x80]
  %v9139 = vld [vmem:[#allocation2 + $0xc8] sm:$0x80]
  %v9140 = vld [vmem:[#allocation2 + $0xd0] sm:$0x80]
  %v9141 = vld [vmem:[#allocation2 + $0xd8] sm:$0x80]
  %v9142 = vld [vmem:[#allocation2 + $0xe0] sm:$0x80]
  %v9143 = vld [vmem:[#allocation2 + $0xe8] sm:$0x80]
  %v9144 = vld [vmem:[#allocation2 + $0xf0] sm:$0x80]
  %v9145 = vld [vmem:[#allocation2 + $0xf8] sm:$0x80]
  %s9146 = scalar_lea.vmem %s3, 1920
  %v9147 = vld [vmem:[%s9146] sm:$0xff]
  %v9148 = vld [vmem:[%s9146 + $0x8] sm:$0xff]
  %v9149 = vld [vmem:[%s9146 + $0x10] sm:$0xff]
  %v9150 = vld [vmem:[%s9146 + $0x18] sm:$0xff]
  %v9151 = vld [vmem:[%s9146 + $0x20] sm:$0xff]
  %v9152 = vld [vmem:[%s9146 + $0x28] sm:$0xff]
  %v9153 = vld [vmem:[%s9146 + $0x30] sm:$0xff]
  %v9154 = vld [vmem:[%s9146 + $0x38] sm:$0xff]
  %v9171 = vunpack.c.h.b16 %v9130
  %v9172 = vunpack.c.h.b16 %v9131
  %v9173 = vunpack.c.h.b16 %v9132
  %v9174 = vunpack.c.h.b16 %v9133
  %v9175 = vunpack.c.h.b16 %v9134
  %v9176 = vunpack.c.h.b16 %v9135
  %v9177 = vunpack.c.h.b16 %v9136
  %v9178 = vunpack.c.h.b16 %v9137
  %v9179 = vunpack.c.h.b16 %v9138
  %v9180 = vunpack.c.h.b16 %v9139
  %v9181 = vunpack.c.h.b16 %v9140
  %v9182 = vunpack.c.h.b16 %v9141
  %v9183 = vunpack.c.h.b16 %v9142
  %v9184 = vunpack.c.h.b16 %v9143
  %v9185 = vunpack.c.h.b16 %v9144
  %v9186 = vunpack.c.h.b16 %v9145
  %v9187 = vrot.slane %v9171, 6
  %v9188 = vrot.slane %v9179, 5
  %v9189 = vsel %vm1042, %v9188, %v9187
  %v9190 = vrot.slane %v9172, 6
  %v9191 = vrot.slane %v9180, 5
  %v9192 = vsel %vm1042, %v9191, %v9190
  %v9193 = vrot.slane %v9173, 6
  %v9194 = vrot.slane %v9181, 5
  %v9195 = vsel %vm1042, %v9194, %v9193
  %v9196 = vrot.slane %v9174, 6
  %v9197 = vrot.slane %v9182, 5
  %v9198 = vsel %vm1042, %v9197, %v9196
  %v9199 = vrot.slane %v9175, 6
  %v9200 = vrot.slane %v9183, 5
  %v9201 = vsel %vm1042, %v9200, %v9199
  %v9202 = vrot.slane %v9176, 6
  %v9203 = vrot.slane %v9184, 5
  %v9204 = vsel %vm1042, %v9203, %v9202
  %v9205 = vrot.slane %v9177, 6
  %v9206 = vrot.slane %v9185, 5
  %v9207 = vsel %vm1042, %v9206, %v9205
  %v9208 = vrot.slane %v9178, 6
  %v9209 = vrot.slane %v9186, 5
  %v9210 = vsel %vm1042, %v9209, %v9208
  %v9211 = vpack.c.b16 %v9189, %v9189
  %v9212 = vpack.c.b16 %v9192, %v9192
  %v9213 = vpack.c.b16 %v9195, %v9195
  %v9214 = vpack.c.b16 %v9198, %v9198
  %v9215 = vpack.c.b16 %v9201, %v9201
  %v9216 = vpack.c.b16 %v9204, %v9204
  %v9217 = vpack.c.b16 %v9207, %v9207
  %v9218 = vpack.c.b16 %v9210, %v9210
  %v9235 = vunpack.c.l.b16 %v9147
  %v9236 = vunpack.c.h.b16 %v9147
  %v9237 = vunpack.c.l.b16 %v9148
  %v9238 = vunpack.c.h.b16 %v9148
  %v9239 = vunpack.c.l.b16 %v9149
  %v9240 = vunpack.c.h.b16 %v9149
  %v9241 = vunpack.c.l.b16 %v9150
  %v9242 = vunpack.c.h.b16 %v9150
  %v9243 = vunpack.c.l.b16 %v9151
  %v9244 = vunpack.c.h.b16 %v9151
  %v9245 = vunpack.c.l.b16 %v9152
  %v9246 = vunpack.c.h.b16 %v9152
  %v9247 = vunpack.c.l.b16 %v9153
  %v9248 = vunpack.c.h.b16 %v9153
  %v9249 = vunpack.c.l.b16 %v9154
  %v9250 = vunpack.c.h.b16 %v9154
  %v9251 = vpack.c.b16 %v9243, %v9235
  %v9252 = vpack.c.b16 %v9244, %v9236
  %v9253 = vpack.c.b16 %v9245, %v9237
  %v9254 = vpack.c.b16 %v9246, %v9238
  %v9255 = vpack.c.b16 %v9247, %v9239
  %v9256 = vpack.c.b16 %v9248, %v9240
  %v9257 = vpack.c.b16 %v9249, %v9241
  %v9258 = vpack.c.b16 %v9250, %v9242
  %9267 = vmatprep.subr.bf16.mxu0 %v9252
  %9268 = vmatpush1.bf16.xpose.msra.mxu0 %v9251
  %9269 = vmatprep.subr.bf16.mxu0 0
  %9270 = vmatpush1.bf16.xpose.msra.mxu0 0
  %9271 = vmatprep.subr.bf16.mxu0 0
  %9272 = vmatpush1.bf16.xpose.msra.mxu0 0
  %9273 = vmatprep.subr.bf16.mxu0 0
  %9274 = vmatpush1.bf16.xpose.msra.mxu0 0
  %9275 = vmatprep.subr.bf16.mxu0 0
  %9276 = vmatpush1.bf16.xpose.msra.mxu0 0
  %9277 = vmatprep.subr.bf16.mxu0 0
  %9278 = vmatpush1.bf16.xpose.msra.mxu0 0
  %9279 = vmatprep.subr.bf16.mxu0 0
  %9280 = vmatpush1.bf16.xpose.msra.mxu0 0
  %9281 = vmatprep.subr.bf16.mxu0 0
  %9282 = vmatpush1.bf16.xpose.msra.mxu0 0
  %9283 = vmatprep.subr.bf16.mxu0 0
  %9284 = vmatpush1.bf16.xpose.msra.mxu0 0
  %9285 = vmatprep.subr.bf16.mxu0 0
  %9286 = vmatpush1.bf16.xpose.msra.mxu0 0
  %9287 = vmatprep.subr.bf16.mxu0 0
  %9288 = vmatpush1.bf16.xpose.msra.mxu0 0
  %9289 = vmatprep.subr.bf16.mxu0 0
  %9290 = vmatpush1.bf16.xpose.msra.mxu0 0
  %9291 = vmatprep.subr.bf16.mxu0 0
  %9292 = vmatpush1.bf16.xpose.msra.mxu0 0
  %9293 = vmatprep.subr.bf16.mxu0 0
  %9294 = vmatpush1.bf16.xpose.msra.mxu0 0
  %9295 = vmatprep.subr.bf16.mxu0 0
  %9296 = vmatpush1.bf16.xpose.msra.mxu0 0
  %9297 = vmatprep.subr.bf16.mxu0 0
  %9298 = vmatpush1.bf16.xpose.msra.mxu0 0
  %9299 = vmatprep.mubr.bf16.mxu0 %v9212
  %9300 = vmatmul.mubr.bf16.gmra.mrb[0].mxu0 %v9211
  %v9301 = vpop.f32.mrb[0].mxu0
  %v9302 = vadd.f32 0.0, %v9301
  %v9303 = vpop.f32.mrb[0].mxu0
  %v9304 = vpop.f32.mrb[0].mxu0
  %v9305 = vpop.f32.mrb[0].mxu0
  %9306 = vdwg.mxu0
  %9307 = vmatprep.subr.bf16.mxu0 %v9254
  %9308 = vmatpush1.bf16.xpose.msra.mxu0 %v9253
  %9309 = vmatprep.subr.bf16.mxu0 0
  %9310 = vmatpush1.bf16.xpose.msra.mxu0 0
  %9311 = vmatprep.subr.bf16.mxu0 0
  %9312 = vmatpush1.bf16.xpose.msra.mxu0 0
  %9313 = vmatprep.subr.bf16.mxu0 0
  %9314 = vmatpush1.bf16.xpose.msra.mxu0 0
  %9315 = vmatprep.subr.bf16.mxu0 0
  %9316 = vmatpush1.bf16.xpose.msra.mxu0 0
  %9317 = vmatprep.subr.bf16.mxu0 0
  %9318 = vmatpush1.bf16.xpose.msra.mxu0 0
  %9319 = vmatprep.subr.bf16.mxu0 0
  %9320 = vmatpush1.bf16.xpose.msra.mxu0 0
  %9321 = vmatprep.subr.bf16.mxu0 0
  %9322 = vmatpush1.bf16.xpose.msra.mxu0 0
  %9323 = vmatprep.subr.bf16.mxu0 0
  %9324 = vmatpush1.bf16.xpose.msra.mxu0 0
  %9325 = vmatprep.subr.bf16.mxu0 0
  %9326 = vmatpush1.bf16.xpose.msra.mxu0 0
  %9327 = vmatprep.subr.bf16.mxu0 0
  %9328 = vmatpush1.bf16.xpose.msra.mxu0 0
  %9329 = vmatprep.subr.bf16.mxu0 0
  %9330 = vmatpush1.bf16.xpose.msra.mxu0 0
  %9331 = vmatprep.subr.bf16.mxu0 0
  %9332 = vmatpush1.bf16.xpose.msra.mxu0 0
  %9333 = vmatprep.subr.bf16.mxu0 0
  %9334 = vmatpush1.bf16.xpose.msra.mxu0 0
  %9335 = vmatprep.subr.bf16.mxu0 0
  %9336 = vmatpush1.bf16.xpose.msra.mxu0 0
  %9337 = vmatprep.subr.bf16.mxu0 0
  %9338 = vmatpush1.bf16.xpose.msra.mxu0 0
  %9339 = vmatprep.mubr.bf16.mxu0 %v9214
  %9340 = vmatmul.mubr.bf16.gmra.mrb[0].mxu0 %v9213
  %v9341 = vpop.f32.mrb[0].mxu0
  %v9342 = vadd.f32 %v9302, %v9341
  %v9343 = vpop.f32.mrb[0].mxu0
  %v9344 = vpop.f32.mrb[0].mxu0
  %v9345 = vpop.f32.mrb[0].mxu0
  %9346 = vdwg.mxu0
  %9347 = vmatprep.subr.bf16.mxu0 %v9256
  %9348 = vmatpush1.bf16.xpose.msra.mxu0 %v9255
  %9349 = vmatprep.subr.bf16.mxu0 0
  %9350 = vmatpush1.bf16.xpose.msra.mxu0 0
  %9351 = vmatprep.subr.bf16.mxu0 0
  %9352 = vmatpush1.bf16.xpose.msra.mxu0 0
  %9353 = vmatprep.subr.bf16.mxu0 0
  %9354 = vmatpush1.bf16.xpose.msra.mxu0 0
  %9355 = vmatprep.subr.bf16.mxu0 0
  %9356 = vmatpush1.bf16.xpose.msra.mxu0 0
  %9357 = vmatprep.subr.bf16.mxu0 0
  %9358 = vmatpush1.bf16.xpose.msra.mxu0 0
  %9359 = vmatprep.subr.bf16.mxu0 0
  %9360 = vmatpush1.bf16.xpose.msra.mxu0 0
  %9361 = vmatprep.subr.bf16.mxu0 0
  %9362 = vmatpush1.bf16.xpose.msra.mxu0 0
  %9363 = vmatprep.subr.bf16.mxu0 0
  %9364 = vmatpush1.bf16.xpose.msra.mxu0 0
  %9365 = vmatprep.subr.bf16.mxu0 0
  %9366 = vmatpush1.bf16.xpose.msra.mxu0 0
  %9367 = vmatprep.subr.bf16.mxu0 0
  %9368 = vmatpush1.bf16.xpose.msra.mxu0 0
  %9369 = vmatprep.subr.bf16.mxu0 0
  %9370 = vmatpush1.bf16.xpose.msra.mxu0 0
  %9371 = vmatprep.subr.bf16.mxu0 0
  %9372 = vmatpush1.bf16.xpose.msra.mxu0 0
  %9373 = vmatprep.subr.bf16.mxu0 0
  %9374 = vmatpush1.bf16.xpose.msra.mxu0 0
  %9375 = vmatprep.subr.bf16.mxu0 0
  %9376 = vmatpush1.bf16.xpose.msra.mxu0 0
  %9377 = vmatprep.subr.bf16.mxu0 0
  %9378 = vmatpush1.bf16.xpose.msra.mxu0 0
  %9379 = vmatprep.mubr.bf16.mxu0 %v9216
  %9380 = vmatmul.mubr.bf16.gmra.mrb[0].mxu0 %v9215
  %v9381 = vpop.f32.mrb[0].mxu0
  %v9382 = vadd.f32 %v9342, %v9381
  %v9383 = vpop.f32.mrb[0].mxu0
  %v9384 = vpop.f32.mrb[0].mxu0
  %v9385 = vpop.f32.mrb[0].mxu0
  %9386 = vdwg.mxu0
  %9387 = vmatprep.subr.bf16.mxu0 %v9258
  %9388 = vmatpush1.bf16.xpose.msra.mxu0 %v9257
  %9389 = vmatprep.subr.bf16.mxu0 0
  %9390 = vmatpush1.bf16.xpose.msra.mxu0 0
  %9391 = vmatprep.subr.bf16.mxu0 0
  %9392 = vmatpush1.bf16.xpose.msra.mxu0 0
  %9393 = vmatprep.subr.bf16.mxu0 0
  %9394 = vmatpush1.bf16.xpose.msra.mxu0 0
  %9395 = vmatprep.subr.bf16.mxu0 0
  %9396 = vmatpush1.bf16.xpose.msra.mxu0 0
  %9397 = vmatprep.subr.bf16.mxu0 0
  %9398 = vmatpush1.bf16.xpose.msra.mxu0 0
  %9399 = vmatprep.subr.bf16.mxu0 0
  %9400 = vmatpush1.bf16.xpose.msra.mxu0 0
  %9401 = vmatprep.subr.bf16.mxu0 0
  %9402 = vmatpush1.bf16.xpose.msra.mxu0 0
  %9403 = vmatprep.subr.bf16.mxu0 0
  %9404 = vmatpush1.bf16.xpose.msra.mxu0 0
  %9405 = vmatprep.subr.bf16.mxu0 0
  %9406 = vmatpush1.bf16.xpose.msra.mxu0 0
  %9407 = vmatprep.subr.bf16.mxu0 0
  %9408 = vmatpush1.bf16.xpose.msra.mxu0 0
  %9409 = vmatprep.subr.bf16.mxu0 0
  %9410 = vmatpush1.bf16.xpose.msra.mxu0 0
  %9411 = vmatprep.subr.bf16.mxu0 0
  %9412 = vmatpush1.bf16.xpose.msra.mxu0 0
  %9413 = vmatprep.subr.bf16.mxu0 0
  %9414 = vmatpush1.bf16.xpose.msra.mxu0 0
  %9415 = vmatprep.subr.bf16.mxu0 0
  %9416 = vmatpush1.bf16.xpose.msra.mxu0 0
  %9417 = vmatprep.subr.bf16.mxu0 0
  %9418 = vmatpush1.bf16.xpose.msra.mxu0 0
  %9419 = vmatprep.mubr.bf16.mxu0 %v9218
  %9420 = vmatmul.mubr.bf16.gmra.mrb[0].mxu0 %v9217
  %v9421 = vpop.f32.mrb[0].mxu0
  %v9422 = vadd.f32 %v9382, %v9421
  %v9423 = vpop.f32.mrb[0].mxu0
  %v9424 = vpop.f32.mrb[0].mxu0
  %v9425 = vpop.f32.mrb[0].mxu0
  %9426 = vdwg.mxu0
  %v9427 = vadd.f32 %v9129, %v9422
  %s9428 = scalar_lea.vmem %s3, 1984
  %v9429 = vld [vmem:[%s9428] sm:$0xff]
  %v9430 = vld [vmem:[%s9428 + $0x8] sm:$0xff]
  %v9431 = vld [vmem:[%s9428 + $0x10] sm:$0xff]
  %v9432 = vld [vmem:[%s9428 + $0x18] sm:$0xff]
  %v9433 = vld [vmem:[%s9428 + $0x20] sm:$0xff]
  %v9434 = vld [vmem:[%s9428 + $0x28] sm:$0xff]
  %v9435 = vld [vmem:[%s9428 + $0x30] sm:$0xff]
  %v9436 = vld [vmem:[%s9428 + $0x38] sm:$0xff]
  %v9437 = vrot.slane %v9171, 7
  %v9438 = vrot.slane %v9179, 6
  %v9439 = vsel %vm1042, %v9438, %v9437
  %v9440 = vrot.slane %v9172, 7
  %v9441 = vrot.slane %v9180, 6
  %v9442 = vsel %vm1042, %v9441, %v9440
  %v9443 = vrot.slane %v9173, 7
  %v9444 = vrot.slane %v9181, 6
  %v9445 = vsel %vm1042, %v9444, %v9443
  %v9446 = vrot.slane %v9174, 7
  %v9447 = vrot.slane %v9182, 6
  %v9448 = vsel %vm1042, %v9447, %v9446
  %v9449 = vrot.slane %v9175, 7
  %v9450 = vrot.slane %v9183, 6
  %v9451 = vsel %vm1042, %v9450, %v9449
  %v9452 = vrot.slane %v9176, 7
  %v9453 = vrot.slane %v9184, 6
  %v9454 = vsel %vm1042, %v9453, %v9452
  %v9455 = vrot.slane %v9177, 7
  %v9456 = vrot.slane %v9185, 6
  %v9457 = vsel %vm1042, %v9456, %v9455
  %v9458 = vrot.slane %v9178, 7
  %v9459 = vrot.slane %v9186, 6
  %v9460 = vsel %vm1042, %v9459, %v9458
  %v9461 = vpack.c.b16 %v9439, %v9439
  %v9462 = vpack.c.b16 %v9442, %v9442
  %v9463 = vpack.c.b16 %v9445, %v9445
  %v9464 = vpack.c.b16 %v9448, %v9448
  %v9465 = vpack.c.b16 %v9451, %v9451
  %v9466 = vpack.c.b16 %v9454, %v9454
  %v9467 = vpack.c.b16 %v9457, %v9457
  %v9468 = vpack.c.b16 %v9460, %v9460
  %v9485 = vunpack.c.l.b16 %v9429
  %v9486 = vunpack.c.h.b16 %v9429
  %v9487 = vunpack.c.l.b16 %v9430
  %v9488 = vunpack.c.h.b16 %v9430
  %v9489 = vunpack.c.l.b16 %v9431
  %v9490 = vunpack.c.h.b16 %v9431
  %v9491 = vunpack.c.l.b16 %v9432
  %v9492 = vunpack.c.h.b16 %v9432
  %v9493 = vunpack.c.l.b16 %v9433
  %v9494 = vunpack.c.h.b16 %v9433
  %v9495 = vunpack.c.l.b16 %v9434
  %v9496 = vunpack.c.h.b16 %v9434
  %v9497 = vunpack.c.l.b16 %v9435
  %v9498 = vunpack.c.h.b16 %v9435
  %v9499 = vunpack.c.l.b16 %v9436
  %v9500 = vunpack.c.h.b16 %v9436
  %v9501 = vpack.c.b16 %v9493, %v9485
  %v9502 = vpack.c.b16 %v9494, %v9486
  %v9503 = vpack.c.b16 %v9495, %v9487
  %v9504 = vpack.c.b16 %v9496, %v9488
  %v9505 = vpack.c.b16 %v9497, %v9489
  %v9506 = vpack.c.b16 %v9498, %v9490
  %v9507 = vpack.c.b16 %v9499, %v9491
  %v9508 = vpack.c.b16 %v9500, %v9492
  %9517 = vmatprep.subr.bf16.mxu0 %v9502
  %9518 = vmatpush1.bf16.xpose.msra.mxu0 %v9501
  %9519 = vmatprep.subr.bf16.mxu0 0
  %9520 = vmatpush1.bf16.xpose.msra.mxu0 0
  %9521 = vmatprep.subr.bf16.mxu0 0
  %9522 = vmatpush1.bf16.xpose.msra.mxu0 0
  %9523 = vmatprep.subr.bf16.mxu0 0
  %9524 = vmatpush1.bf16.xpose.msra.mxu0 0
  %9525 = vmatprep.subr.bf16.mxu0 0
  %9526 = vmatpush1.bf16.xpose.msra.mxu0 0
  %9527 = vmatprep.subr.bf16.mxu0 0
  %9528 = vmatpush1.bf16.xpose.msra.mxu0 0
  %9529 = vmatprep.subr.bf16.mxu0 0
  %9530 = vmatpush1.bf16.xpose.msra.mxu0 0
  %9531 = vmatprep.subr.bf16.mxu0 0
  %9532 = vmatpush1.bf16.xpose.msra.mxu0 0
  %9533 = vmatprep.subr.bf16.mxu0 0
  %9534 = vmatpush1.bf16.xpose.msra.mxu0 0
  %9535 = vmatprep.subr.bf16.mxu0 0
  %9536 = vmatpush1.bf16.xpose.msra.mxu0 0
  %9537 = vmatprep.subr.bf16.mxu0 0
  %9538 = vmatpush1.bf16.xpose.msra.mxu0 0
  %9539 = vmatprep.subr.bf16.mxu0 0
  %9540 = vmatpush1.bf16.xpose.msra.mxu0 0
  %9541 = vmatprep.subr.bf16.mxu0 0
  %9542 = vmatpush1.bf16.xpose.msra.mxu0 0
  %9543 = vmatprep.subr.bf16.mxu0 0
  %9544 = vmatpush1.bf16.xpose.msra.mxu0 0
  %9545 = vmatprep.subr.bf16.mxu0 0
  %9546 = vmatpush1.bf16.xpose.msra.mxu0 0
  %9547 = vmatprep.subr.bf16.mxu0 0
  %9548 = vmatpush1.bf16.xpose.msra.mxu0 0
  %9549 = vmatprep.mubr.bf16.mxu0 %v9462
  %9550 = vmatmul.mubr.bf16.gmra.mrb[0].mxu0 %v9461
  %v9551 = vpop.f32.mrb[0].mxu0
  %v9552 = vadd.f32 0.0, %v9551
  %v9553 = vpop.f32.mrb[0].mxu0
  %v9554 = vpop.f32.mrb[0].mxu0
  %v9555 = vpop.f32.mrb[0].mxu0
  %9556 = vdwg.mxu0
  %9557 = vmatprep.subr.bf16.mxu0 %v9504
  %9558 = vmatpush1.bf16.xpose.msra.mxu0 %v9503
  %9559 = vmatprep.subr.bf16.mxu0 0
  %9560 = vmatpush1.bf16.xpose.msra.mxu0 0
  %9561 = vmatprep.subr.bf16.mxu0 0
  %9562 = vmatpush1.bf16.xpose.msra.mxu0 0
  %9563 = vmatprep.subr.bf16.mxu0 0
  %9564 = vmatpush1.bf16.xpose.msra.mxu0 0
  %9565 = vmatprep.subr.bf16.mxu0 0
  %9566 = vmatpush1.bf16.xpose.msra.mxu0 0
  %9567 = vmatprep.subr.bf16.mxu0 0
  %9568 = vmatpush1.bf16.xpose.msra.mxu0 0
  %9569 = vmatprep.subr.bf16.mxu0 0
  %9570 = vmatpush1.bf16.xpose.msra.mxu0 0
  %9571 = vmatprep.subr.bf16.mxu0 0
  %9572 = vmatpush1.bf16.xpose.msra.mxu0 0
  %9573 = vmatprep.subr.bf16.mxu0 0
  %9574 = vmatpush1.bf16.xpose.msra.mxu0 0
  %9575 = vmatprep.subr.bf16.mxu0 0
  %9576 = vmatpush1.bf16.xpose.msra.mxu0 0
  %9577 = vmatprep.subr.bf16.mxu0 0
  %9578 = vmatpush1.bf16.xpose.msra.mxu0 0
  %9579 = vmatprep.subr.bf16.mxu0 0
  %9580 = vmatpush1.bf16.xpose.msra.mxu0 0
  %9581 = vmatprep.subr.bf16.mxu0 0
  %9582 = vmatpush1.bf16.xpose.msra.mxu0 0
  %9583 = vmatprep.subr.bf16.mxu0 0
  %9584 = vmatpush1.bf16.xpose.msra.mxu0 0
  %9585 = vmatprep.subr.bf16.mxu0 0
  %9586 = vmatpush1.bf16.xpose.msra.mxu0 0
  %9587 = vmatprep.subr.bf16.mxu0 0
  %9588 = vmatpush1.bf16.xpose.msra.mxu0 0
  %9589 = vmatprep.mubr.bf16.mxu0 %v9464
  %9590 = vmatmul.mubr.bf16.gmra.mrb[0].mxu0 %v9463
  %v9591 = vpop.f32.mrb[0].mxu0
  %v9592 = vadd.f32 %v9552, %v9591
  %v9593 = vpop.f32.mrb[0].mxu0
  %v9594 = vpop.f32.mrb[0].mxu0
  %v9595 = vpop.f32.mrb[0].mxu0
  %9596 = vdwg.mxu0
  %9597 = vmatprep.subr.bf16.mxu0 %v9506
  %9598 = vmatpush1.bf16.xpose.msra.mxu0 %v9505
  %9599 = vmatprep.subr.bf16.mxu0 0
  %9600 = vmatpush1.bf16.xpose.msra.mxu0 0
  %9601 = vmatprep.subr.bf16.mxu0 0
  %9602 = vmatpush1.bf16.xpose.msra.mxu0 0
  %9603 = vmatprep.subr.bf16.mxu0 0
  %9604 = vmatpush1.bf16.xpose.msra.mxu0 0
  %9605 = vmatprep.subr.bf16.mxu0 0
  %9606 = vmatpush1.bf16.xpose.msra.mxu0 0
  %9607 = vmatprep.subr.bf16.mxu0 0
  %9608 = vmatpush1.bf16.xpose.msra.mxu0 0
  %9609 = vmatprep.subr.bf16.mxu0 0
  %9610 = vmatpush1.bf16.xpose.msra.mxu0 0
  %9611 = vmatprep.subr.bf16.mxu0 0
  %9612 = vmatpush1.bf16.xpose.msra.mxu0 0
  %9613 = vmatprep.subr.bf16.mxu0 0
  %9614 = vmatpush1.bf16.xpose.msra.mxu0 0
  %9615 = vmatprep.subr.bf16.mxu0 0
  %9616 = vmatpush1.bf16.xpose.msra.mxu0 0
  %9617 = vmatprep.subr.bf16.mxu0 0
  %9618 = vmatpush1.bf16.xpose.msra.mxu0 0
  %9619 = vmatprep.subr.bf16.mxu0 0
  %9620 = vmatpush1.bf16.xpose.msra.mxu0 0
  %9621 = vmatprep.subr.bf16.mxu0 0
  %9622 = vmatpush1.bf16.xpose.msra.mxu0 0
  %9623 = vmatprep.subr.bf16.mxu0 0
  %9624 = vmatpush1.bf16.xpose.msra.mxu0 0
  %9625 = vmatprep.subr.bf16.mxu0 0
  %9626 = vmatpush1.bf16.xpose.msra.mxu0 0
  %9627 = vmatprep.subr.bf16.mxu0 0
  %9628 = vmatpush1.bf16.xpose.msra.mxu0 0
  %9629 = vmatprep.mubr.bf16.mxu0 %v9466
  %9630 = vmatmul.mubr.bf16.gmra.mrb[0].mxu0 %v9465
  %v9631 = vpop.f32.mrb[0].mxu0
  %v9632 = vadd.f32 %v9592, %v9631
  %v9633 = vpop.f32.mrb[0].mxu0
  %v9634 = vpop.f32.mrb[0].mxu0
  %v9635 = vpop.f32.mrb[0].mxu0
  %9636 = vdwg.mxu0
  %9637 = vmatprep.subr.bf16.mxu0 %v9508
  %9638 = vmatpush1.bf16.xpose.msra.mxu0 %v9507
  %9639 = vmatprep.subr.bf16.mxu0 0
  %9640 = vmatpush1.bf16.xpose.msra.mxu0 0
  %9641 = vmatprep.subr.bf16.mxu0 0
  %9642 = vmatpush1.bf16.xpose.msra.mxu0 0
  %9643 = vmatprep.subr.bf16.mxu0 0
  %9644 = vmatpush1.bf16.xpose.msra.mxu0 0
  %9645 = vmatprep.subr.bf16.mxu0 0
  %9646 = vmatpush1.bf16.xpose.msra.mxu0 0
  %9647 = vmatprep.subr.bf16.mxu0 0
  %9648 = vmatpush1.bf16.xpose.msra.mxu0 0
  %9649 = vmatprep.subr.bf16.mxu0 0
  %9650 = vmatpush1.bf16.xpose.msra.mxu0 0
  %9651 = vmatprep.subr.bf16.mxu0 0
  %9652 = vmatpush1.bf16.xpose.msra.mxu0 0
  %9653 = vmatprep.subr.bf16.mxu0 0
  %9654 = vmatpush1.bf16.xpose.msra.mxu0 0
  %9655 = vmatprep.subr.bf16.mxu0 0
  %9656 = vmatpush1.bf16.xpose.msra.mxu0 0
  %9657 = vmatprep.subr.bf16.mxu0 0
  %9658 = vmatpush1.bf16.xpose.msra.mxu0 0
  %9659 = vmatprep.subr.bf16.mxu0 0
  %9660 = vmatpush1.bf16.xpose.msra.mxu0 0
  %9661 = vmatprep.subr.bf16.mxu0 0
  %9662 = vmatpush1.bf16.xpose.msra.mxu0 0
  %9663 = vmatprep.subr.bf16.mxu0 0
  %9664 = vmatpush1.bf16.xpose.msra.mxu0 0
  %9665 = vmatprep.subr.bf16.mxu0 0
  %9666 = vmatpush1.bf16.xpose.msra.mxu0 0
  %9667 = vmatprep.subr.bf16.mxu0 0
  %9668 = vmatpush1.bf16.xpose.msra.mxu0 0
  %9669 = vmatprep.mubr.bf16.mxu0 %v9468
  %9670 = vmatmul.mubr.bf16.gmra.mrb[0].mxu0 %v9467
  %v9671 = vpop.f32.mrb[0].mxu0
  %v9672 = vadd.f32 %v9632, %v9671
  %v9673 = vpop.f32.mrb[0].mxu0
  %v9674 = vpop.f32.mrb[0].mxu0
  %v9675 = vpop.f32.mrb[0].mxu0
  %9676 = vdwg.mxu0
  %v9677 = vadd.f32 %v9427, %v9672
  %v9678 = vld [vmem:[%s4] sm:$0x1]
  %v9680 = vlaneseq
  %v9681 = vshrl.u32 %v9680, 7
  %v9682 = vsub.s32 0, %v9681
  %v9683 = vrot.slane %v9678, %v9682
  %v9685 = vadd.f32 %v9677, %v9683
  %vm9686 = vcmask 123904
  %9687 = vst.msk [vmem:[%s5] sm:$0x3] %vm9686, %v9685
  // Predicated region
  $region22: #{encoder2d_forward.1} parent=0 // pred_check
    _
  $region23: #{encoder2d_forward.1} parent=0 // pred_check_branch
    %9689 = sbr.rel (0) target = $region25
  $region24: #{encoder2d_forward.1} parent=0 // pred_region
    _
  $region25: #{encoder2d_forward.1} parent=0 // pred_fallthru
    _
  // Predicated region
  $region26: #{encoder2d_forward.1} parent=0 // pred_check
    _
  $region27: #{encoder2d_forward.1} parent=0 // pred_check_branch
    %9691 = sbr.rel (0) target = $region29
  $region28: #{encoder2d_forward.1} parent=0 // pred_region
    _
  $region29: #{encoder2d_forward.1} parent=0 // pred_fallthru
    _

</llo_original>
